<compile_context>
chip_gen: v6e
topology: v6e:2x2x1
jax: 0.10.0
libtpu: 0.0.40
codegen_flags: <defaults>
</compile_context>

<pallas_src>
import numpy as np
import jax
import jax.numpy as jnp
from jax.experimental import pallas as pl
from jax.experimental.pallas import tpu as pltpu

# ----------------------- small deterministic config -----------------------
B = 2            # batch
C = 3            # image channels
IMG = 32         # image_res (small)
PATCH = 16       # patch size (as in the module)
D = 64           # embed dim == text hidden width (scaled down from 768)
NH = 4           # attention heads
HD = D // NH     # head dim
VIT_DEPTH = 2    # scaled down from 12
BERT_LAYERS = 2  # scaled down from 12 (all layers get cross-attention)
MLP = 4 * D      # mlp_ratio = 4
SEQ = 8          # question length
VOCAB = 100
MAXPOS = 16
NUM_ANS = 10     # len(answer_list)

NPATCH = (IMG // PATCH) ** 2
SV = NPATCH + 1                 # ViT sequence length (cls + patches)
SCALE = HD ** -0.5

VMEM_SPEC = pl.BlockSpec(memory_space=pltpu.MemorySpace.VMEM)

_VIT_LAYER_KEYS = ("ln1_g", "ln1_b", "qkv_w", "qkv_b", "proj_w", "proj_b",
                   "ln2_g", "ln2_b", "fc1_w", "fc1_b", "fc2_w", "fc2_b")
_BERT_LAYER_KEYS = ("qkv_w", "qkv_b", "ao_w", "ao_b", "ao_ln_g", "ao_ln_b",
                    "cq_w", "cq_b", "ckv_w", "ckv_b", "co_w", "co_b",
                    "co_ln_g", "co_ln_b", "i_w", "i_b", "o_w", "o_b",
                    "o_ln_g", "o_ln_b")


def _cparams(grid_dims=0):
    kw = dict(vmem_limit_bytes=32 * 1024 * 1024)
    if grid_dims:
        # The layer axis carries the activation in VMEM scratch -> sequential.
        # TODO(synk): add a leading "parallel" row-tile axis at real shapes so
        # v7x's two TensorCores split the batch/rows.
        kw["dimension_semantics"] = ("arbitrary",) * grid_dims
    return pltpu.CompilerParams(**kw)


def _const_spec(shape):
    nd = len(shape)
    return pl.BlockSpec(tuple(shape), lambda l: (0,) * nd)


def _stacked_spec(shape):
    # (L, a, b) weight stack -> one (1, a, b) layer slab per grid step.
    return pl.BlockSpec((1,) + tuple(shape[1:]), lambda l: (l, 0, 0))


# --------------------------- in-kernel helpers ---------------------------
def _mm(x, w):
    # bf16 operands on the MXU, f32 accumulation.
    return jnp.dot(x.astype(jnp.bfloat16), w.astype(jnp.bfloat16),
                   preferred_element_type=jnp.float32)


def _ln(x, g, b, eps):
    x = x.astype(jnp.float32)
    mu = jnp.mean(x, axis=-1, keepdims=True)
    var = jnp.mean((x - mu) ** 2, axis=-1, keepdims=True)
    return (x - mu) * jax.lax.rsqrt(var + eps) * g + b


def _gelu(x):
    # TODO(synk): tanh-approx GELU (exact erf GELU is not reliably lowered by Mosaic)
    c = float(np.sqrt(2.0 / np.pi))
    return 0.5 * x * (1.0 + jnp.tanh(c * (x + 0.044715 * x * x * x)))


def _mha(q, k, v, bias):
    # q: (Mq, D), k/v: (Mk, D) with the batch folded into the rows.  `bias` is
    # an (Mq, Mk) additive f32 bias carrying both the key-padding mask and the
    # cross-batch block mask, so no per-batch loop / reshape is needed.
    # Head split/merge stays in-kernel (lane slices / lane concat); the bf16
    # cast is hoisted out of the per-head loop.
    q = q.astype(jnp.bfloat16)
    k = k.astype(jnp.bfloat16)
    v = v.astype(jnp.bfloat16)
    outs = []
    for h in range(NH):
        sl = slice(h * HD, (h + 1) * HD)
        s = jax.lax.dot_general(q[:, sl], k[:, sl], (((1,), (1,)), ((), ())),
                                preferred_element_type=jnp.float32) * SCALE
        s = s + bias
        m = jnp.max(s, axis=-1, keepdims=True)
        p = jnp.exp(s - m)
        p = p * pl.reciprocal(jnp.sum(p, axis=-1, keepdims=True), approx=True)
        outs.append(jnp.dot(p.astype(jnp.bfloat16), v[:, sl],
                            preferred_element_type=jnp.float32))
    # TODO(synk): at real head counts replace this unrolled loop with a single
    # batched dot_general over an (NH, S, HD) layout (pltpu.einshape).
    return jnp.concatenate(outs, axis=-1)


def _cross_batch_bias(nb, sq, sk):
    # (nb*sq, nb*sk) additive bias: 0 within a batch, -1e9 across batches.
    qb = np.repeat(np.arange(nb), sq)[:, None]
    kb = np.repeat(np.arange(nb), sk)[None, :]
    return jnp.asarray(np.where(qb == kb, 0.0, -1e9).astype(np.float32))


# ------------------------------ Pallas kernels ------------------------------
def _patch_embed_kernel(patches_ref, w_ref, b_ref, o_ref):
    # Conv2d(kernel=stride=PATCH) realised as a single matmul on patch rows.
    o_ref[...] = (_mm(patches_ref[...], w_ref[...]) + b_ref[...]).astype(o_ref.dtype)


def _vit_blocks_kernel(x_ref, lnf_g, lnf_b, bias_ref,
                       ln1_g, ln1_b, qkv_w, qkv_b, proj_w, proj_b,
                       ln2_g, ln2_b, fc1_w, fc1_b, fc2_w, fc2_b,
                       o_ref, h_scr):
    # One grid step == one pre-norm ViT block; activation carried in h_scr.
    l = pl.program_id(0)

    @pl.when(l == 0)
    def _():
        h_scr[...] = x_ref[...].astype(jnp.float32)

    x = h_scr[...]
    h = _ln(x, ln1_g[0], ln1_b[0], 1e-6)
    qkv = _mm(h, qkv_w[0]) + qkv_b[0]                         # (B*SV, 3D)
    ctx = _mha(qkv[:, :D], qkv[:, D:2 * D], qkv[:, 2 * D:], bias_ref[...])
    x = x + _mm(ctx, proj_w[0]) + proj_b[0]
    h = _ln(x, ln2_g[0], ln2_b[0], 1e-6)
    h = _gelu(_mm(h, fc1_w[0]) + fc1_b[0])
    x = x + _mm(h, fc2_w[0]) + fc2_b[0]
    h_scr[...] = x

    @pl.when(l == pl.num_programs(0) - 1)
    def _():
        # final ViT LayerNorm folded into the last grid step
        o_ref[...] = _ln(x, lnf_g[...], lnf_b[...], 1e-6).astype(o_ref.dtype)


def _bert_layers_kernel(emb_ref, eln_g, eln_b, img_ref, bias_s_ref, bias_x_ref,
                        qkv_w, qkv_b, ao_w, ao_b, ao_ln_g, ao_ln_b,
                        cq_w, cq_b, ckv_w, ckv_b, co_w, co_b, co_ln_g, co_ln_b,
                        i_w, i_b, o_w, o_b, o_ln_g, o_ln_b,
                        out_ref, h_scr):
    # One grid step == one post-norm BERT layer with cross-attention:
    #   self-MHA -> +res LN -> cross-MHA(image) -> +res LN -> FFN -> +res LN.
    l = pl.program_id(0)

    @pl.when(l == 0)
    def _():
        # embedding LayerNorm folded into the first grid step
        h_scr[...] = _ln(emb_ref[...], eln_g[...], eln_b[...], 1e-12)

    h = h_scr[...]
    img = img_ref[...]                                        # (B*SV, D) bf16

    # --- self attention (padding + cross-batch bias precomputed outside) ---
    qkv = _mm(h, qkv_w[0]) + qkv_b[0]
    ctx = _mha(qkv[:, :D], qkv[:, D:2 * D], qkv[:, 2 * D:], bias_s_ref[...])
    h = _ln(h + _mm(ctx, ao_w[0]) + ao_b[0], ao_ln_g[0], ao_ln_b[0], 1e-12)

    # --- cross attention to image embeds (image_atts all-ones) ---
    qc = _mm(h, cq_w[0]) + cq_b[0]
    kv = _mm(img, ckv_w[0]) + ckv_b[0]                        # (B*SV, 2D)
    ctx = _mha(qc, kv[:, :D], kv[:, D:], bias_x_ref[...])
    h = _ln(h + _mm(ctx, co_w[0]) + co_b[0], co_ln_g[0], co_ln_b[0], 1e-12)

    # --- feed-forward ---
    inter = _gelu(_mm(h, i_w[0]) + i_b[0])
    h = _ln(h + _mm(inter, o_w[0]) + o_b[0], o_ln_g[0], o_ln_b[0], 1e-12)
    h_scr[...] = h

    @pl.when(l == pl.num_programs(0) - 1)
    def _():
        out_ref[...] = h.astype(out_ref.dtype)


def _clf_loss_kernel(h_ref, w1_ref, b1_ref, w2_ref, b2_ref, t_ref, loss_ref):
    # classifier on the CLS tokens (batched) fused with log-softmax + KL-div.
    Bn = t_ref.shape[0]
    cls = jnp.concatenate(
        [h_ref[b * SEQ:b * SEQ + 1, :] for b in range(Bn)], axis=0
    ).astype(jnp.float32)                                      # (B, D)
    hid = jnp.maximum(_mm(cls, w1_ref[...]) + b1_ref[...], 0.0)
    z = _mm(hid, w2_ref[...]) + b2_ref[...]                    # (B, NUM_ANS)
    m = jnp.max(z, axis=-1, keepdims=True)
    lse = jnp.log(jnp.sum(jnp.exp(z - m), axis=-1, keepdims=True)) + m
    logp = z - lse                                             # log_softmax
    t = t_ref[...].astype(jnp.float32)
    safe_t = jnp.where(t > 0, t, 1.0)
    kl = jnp.where(t > 0, t * (jnp.log(safe_t) - logp), 0.0)
    loss_ref[...] = jnp.sum(kl, keepdims=True) / float(Bn)     # reduction='batchmean'


# ------------------------------ parameter init ------------------------------
def init_params(key):
    keys = iter(jax.random.split(key, 64))

    def w(shape, s=0.02):
        # matmul weights stored in bf16 (native MXU path, halves weight DMA)
        return (s * jax.random.normal(next(keys), shape, dtype=jnp.float32)
                ).astype(jnp.bfloat16)

    def f32(shape, s=0.02):
        return s * jax.random.normal(next(keys), shape, dtype=jnp.float32)

    zeros = lambda shape: jnp.zeros(shape, jnp.float32)
    ones = lambda shape: jnp.ones(shape, jnp.float32)

    Lv, Lb = VIT_DEPTH, BERT_LAYERS
    # per-layer weights are STACKED along a leading layer axis (layer grid).
    vit = {
        "patch_w": w((C * PATCH * PATCH, D)), "patch_b": zeros((1, D)),
        "cls_token": f32((1, 1, D)), "pos_embed": f32((1, SV, D)),
        "lnf_g": ones((1, D)), "lnf_b": zeros((1, D)),
        "ln1_g": ones((Lv, 1, D)), "ln1_b": zeros((Lv, 1, D)),
        "qkv_w": w((Lv, D, 3 * D)), "qkv_b": zeros((Lv, 1, 3 * D)),
        "proj_w": w((Lv, D, D)), "proj_b": zeros((Lv, 1, D)),
        "ln2_g": ones((Lv, 1, D)), "ln2_b": zeros((Lv, 1, D)),
        "fc1_w": w((Lv, D, MLP)), "fc1_b": zeros((Lv, 1, MLP)),
        "fc2_w": w((Lv, MLP, D)), "fc2_b": zeros((Lv, 1, D)),
    }
    bert = {
        "word_emb": f32((VOCAB, D)), "pos_emb": f32((MAXPOS, D)),
        "type_emb": f32((2, D)),
        "emb_ln_g": ones((1, D)), "emb_ln_b": zeros((1, D)),
        "qkv_w": w((Lb, D, 3 * D)), "qkv_b": zeros((Lb, 1, 3 * D)),
        "ao_w": w((Lb, D, D)), "ao_b": zeros((Lb, 1, D)),
        "ao_ln_g": ones((Lb, 1, D)), "ao_ln_b": zeros((Lb, 1, D)),
        "cq_w": w((Lb, D, D)), "cq_b": zeros((Lb, 1, D)),
        "ckv_w": w((Lb, D, 2 * D)), "ckv_b": zeros((Lb, 1, 2 * D)),
        "co_w": w((Lb, D, D)), "co_b": zeros((Lb, 1, D)),
        "co_ln_g": ones((Lb, 1, D)), "co_ln_b": zeros((Lb, 1, D)),
        "i_w": w((Lb, D, MLP)), "i_b": zeros((Lb, 1, MLP)),
        "o_w": w((Lb, MLP, D)), "o_b": zeros((Lb, 1, D)),
        "o_ln_g": ones((Lb, 1, D)), "o_ln_b": zeros((Lb, 1, D)),
    }
    clf = {"w1": w((D, D)), "b1": zeros((1, D)),
           "w2": w((D, NUM_ANS)), "b2": zeros((1, NUM_ANS))}
    return {"vit": vit, "bert": bert, "clf": clf}


# ------------------------------ model forward ------------------------------
def vit_forward(p, image):
    Bn = image.shape[0]
    gh = gw = IMG // PATCH
    # patchify (== Conv2d(kernel=stride=PATCH)) -- one-time glue reshape/transpose
    patches = image.reshape(Bn, C, gh, PATCH, gw, PATCH)
    patches = patches.transpose(0, 2, 4, 1, 3, 5).reshape(Bn * NPATCH, C * PATCH * PATCH)
    pe = pl.pallas_call(
        _patch_embed_kernel,
        out_shape=jax.ShapeDtypeStruct((Bn * NPATCH, D), jnp.float32),
        in_specs=[VMEM_SPEC] * 3, out_specs=VMEM_SPEC,
        compiler_params=_cparams(),
    )(patches, p["patch_w"], p["patch_b"])

    # cls token + positional embedding (tiny one-time glue), batch folded into rows
    x = jnp.concatenate([jnp.broadcast_to(p["cls_token"], (Bn, 1, D)),
                         pe.reshape(Bn, NPATCH, D)], axis=1) + p["pos_embed"]
    x = x.reshape(Bn * SV, D)
    bias = _cross_batch_bias(Bn, SV, SV)      # hoisted out of the kernels

    M = Bn * SV
    in_specs = ([_const_spec((M, D)), _const_spec((1, D)), _const_spec((1, D)),
                 _const_spec((M, M))] +
                [_stacked_spec(p[k].shape) for k in _VIT_LAYER_KEYS])
    wbytes = 2 * sum(int(np.prod(p[k].shape)) for k in _VIT_LAYER_KEYS)
    flops = VIT_DEPTH * (2 * M * D * (3 * D + D + 2 * MLP) + 4 * M * M * D)
    return pl.pallas_call(
        _vit_blocks_kernel,
        out_shape=jax.ShapeDtypeStruct((M, D), jnp.bfloat16),
        grid=(VIT_DEPTH,),
        in_specs=in_specs,
        out_specs=_const_spec((M, D)),
        scratch_shapes=[pltpu.VMEM((M, D), jnp.float32)],
        compiler_params=_cparams(grid_dims=1),
        cost_estimate=pl.CostEstimate(
            flops=flops,
            transcendentals=VIT_DEPTH * M * (MLP + NH * M),
            bytes_accessed=wbytes + 8 * M * D),
    )(x, p["lnf_g"], p["lnf_b"], bias, *[p[k] for k in _VIT_LAYER_KEYS])


def bert_forward(p, input_ids, attention_mask, image_embeds):
    Bn, S = input_ids.shape
    # embedding gather + sum is glue; its LayerNorm is folded into grid step 0
    we = jnp.take(p["word_emb"], input_ids, axis=0)
    emb = we + p["pos_emb"][:S][None, :, :] + p["type_emb"][0][None, None, :]
    emb = emb.reshape(Bn * S, D)

    # additive attention biases, computed ONCE and reused by every layer:
    #   self-attn : key-padding mask + cross-batch block mask
    #   cross-attn: image_atts are all ones -> only the cross-batch block mask
    pad = (1.0 - attention_mask.astype(jnp.float32).reshape(1, Bn * S)) * -10000.0
    bias_self = _cross_batch_bias(Bn, S, S) + pad
    bias_cross = _cross_batch_bias(Bn, S, SV)

    M, MI = Bn * S, Bn * SV
    in_specs = ([_const_spec((M, D)), _const_spec((1, D)), _const_spec((1, D)),
                 _const_spec((MI, D)), _const_spec((M, M)), _const_spec((M, MI))] +
                [_stacked_spec(p[k].shape) for k in _BERT_LAYER_KEYS])
    wbytes = 2 * sum(int(np.prod(p[k].shape)) for k in _BERT_LAYER_KEYS)
    flops = BERT_LAYERS * (2 * M * D * (3 * D + 4 * D + 2 * MLP)
                           + 2 * MI * D * 2 * D + 4 * M * M * D + 4 * M * MI * D)
    return pl.pallas_call(
        _bert_layers_kernel,
        out_shape=jax.ShapeDtypeStruct((M, D), jnp.bfloat16),
        grid=(BERT_LAYERS,),
        in_specs=in_specs,
        out_specs=_const_spec((M, D)),
        scratch_shapes=[pltpu.VMEM((M, D), jnp.float32)],
        compiler_params=_cparams(grid_dims=1),
        cost_estimate=pl.CostEstimate(
            flops=flops,
            transcendentals=BERT_LAYERS * M * (MLP + NH * (M + MI)),
            bytes_accessed=wbytes + 4 * (M * D + MI * D + M * M + M * MI)),
    )(emb, p["emb_ln_g"], p["emb_ln_b"], image_embeds, bias_self, bias_cross,
      *[p[k] for k in _BERT_LAYER_KEYS])


def classifier_loss(c, hidden, target):
    return pl.pallas_call(
        _clf_loss_kernel,
        out_shape=jax.ShapeDtypeStruct((1, 1), jnp.float32),
        in_specs=[VMEM_SPEC] * 6, out_specs=VMEM_SPEC,
        compiler_params=_cparams(),
        cost_estimate=pl.CostEstimate(
            flops=2 * B * D * (D + NUM_ANS),
            transcendentals=2 * B * NUM_ANS,
            bytes_accessed=2 * B * SEQ * D + 2 * D * (D + NUM_ANS) + 4 * B * NUM_ANS),
    )(hidden, c["w1"], c["b1"], c["w2"], c["b2"], target)


@jax.jit
def albef_forward_train(params, image, input_ids, attention_mask, target):
    image_embeds = vit_forward(params["vit"], image)                  # (B*SV, D) bf16
    hidden = bert_forward(params["bert"], input_ids, attention_mask,
                          image_embeds)                               # (B*SEQ, D) bf16
    loss = classifier_loss(params["clf"], hidden, target)
    return loss[0, 0]


# ------------------------------------ main ------------------------------------
if __name__ == "__main__":
    root = jax.random.PRNGKey(0)
    pkey, dkey = jax.random.split(root)
    params = init_params(pkey)

    k_img, k_ids = jax.random.split(dkey)
    image = jax.random.normal(k_img, (B, C, IMG, IMG), dtype=jnp.float32)
    input_ids = jax.random.randint(k_ids, (B, SEQ), 0, VOCAB, dtype=jnp.int32)
    attention_mask = jnp.array([[1] * SEQ, [1] * 6 + [0] * 2], dtype=jnp.float32)

    # --- train-path target construction (host-side, mirrors the PyTorch loop) ---
    answer_list = [f"ans{i}" for i in range(NUM_ANS)]
    answer_map = {a: i for i, a in enumerate(answer_list)}
    k_counts = [2, 1]
    answers = ["ans1", "ans3", "ans7"]
    weights = [0.6, 0.4, 1.0]
    assert len(answers) == len(weights) == sum(k_counts)
    target_np = np.zeros((B, NUM_ANS), dtype=np.float32)
    idx = 0
    for i in range(B):
        for _ in range(k_counts[i]):
            a, wgt = answers[idx], weights[idx]
            if a in answer_map:
                target_np[i, answer_map[a]] += wgt
            idx += 1
    target = jnp.asarray(target_np)

    loss = albef_forward_train(params, image, input_ids, attention_mask, target)
    loss = jax.block_until_ready(loss)
    assert np.isfinite(np.asarray(loss)), "loss is not finite"
    print("KERNEL_OK")
</pallas_src>

<mosaic_0001>
module attributes {stable_mosaic.version = 11 : i64} {
  func.func @_patch_embed_kernel(%arg0: memref<8x768xf32, #tpu.memory_space<vmem>>, %arg1: memref<768x64xbf16, #tpu.memory_space<vmem>>, %arg2: memref<1x64xf32, #tpu.memory_space<vmem>>, %arg3: memref<8x64xf32, #tpu.memory_space<vmem>>) attributes {dimension_semantics = [], scalar_prefetch = 0 : i64, scratch_operands = 0 : i64, tpu.core_type = #tpu.core_type<tc>} {
    %c0 = arith.constant 0 : index
    %c0_0 = arith.constant 0 : index
    %0 = vector.load %arg0[%c0, %c0_0] : memref<8x768xf32, #tpu.memory_space<vmem>>, vector<8x768xf32>
    %c0_1 = arith.constant 0 : index
    %c0_2 = arith.constant 0 : index
    %1 = vector.load %arg1[%c0_1, %c0_2] : memref<768x64xbf16, #tpu.memory_space<vmem>>, vector<768x64xbf16>
    %2 = arith.truncf %0 : vector<8x768xf32> to vector<8x768xbf16>
    %cst = arith.constant dense<0.000000e+00> : vector<8x64xf32>
    %3 = tpu.matmul %2, %1, %cst {dimension_numbers = #tpu.dot_dimension_numbers<[1], [0], [0], [1], [0, 0, 1, 1], [], []>} : vector<8x768xbf16>, vector<768x64xbf16>, vector<8x64xf32> -> vector<8x64xf32>
    %c0_3 = arith.constant 0 : index
    %c0_4 = arith.constant 0 : index
    %4 = vector.load %arg2[%c0_3, %c0_4] : memref<1x64xf32, #tpu.memory_space<vmem>>, vector<1x64xf32>
    %5 = vector.broadcast %4 : vector<1x64xf32> to vector<8x64xf32>
    %6 = arith.addf %3, %5 : vector<8x64xf32>
    %c0_5 = arith.constant 0 : index
    %c0_6 = arith.constant 0 : index
    %7 = vector.load %arg3[%c0_5, %c0_6] : memref<8x64xf32, #tpu.memory_space<vmem>>, vector<8x64xf32>
    tpu.vector_store %arg3[%c0_5, %c0_6], %6 {strides = array<i32>} : memref<8x64xf32, #tpu.memory_space<vmem>>, vector<8x64xf32>,
    return
  }
}

module attributes {stable_mosaic.version = 11 : i64} {
  func.func @_vit_blocks_kernel(%arg0: i32, %arg1: memref<10x64xf32, #tpu.memory_space<vmem>>, %arg2: memref<1x64xf32, #tpu.memory_space<vmem>>, %arg3: memref<1x64xf32, #tpu.memory_space<vmem>>, %arg4: memref<10x10xf32, #tpu.memory_space<vmem>>, %arg5: memref<1x1x64xf32, #tpu.memory_space<vmem>>, %arg6: memref<1x1x64xf32, #tpu.memory_space<vmem>>, %arg7: memref<1x64x192xbf16, #tpu.memory_space<vmem>>, %arg8: memref<1x1x192xf32, #tpu.memory_space<vmem>>, %arg9: memref<1x64x64xbf16, #tpu.memory_space<vmem>>, %arg10: memref<1x1x64xf32, #tpu.memory_space<vmem>>, %arg11: memref<1x1x64xf32, #tpu.memory_space<vmem>>, %arg12: memref<1x1x64xf32, #tpu.memory_space<vmem>>, %arg13: memref<1x64x256xbf16, #tpu.memory_space<vmem>>, %arg14: memref<1x1x256xf32, #tpu.memory_space<vmem>>, %arg15: memref<1x256x64xbf16, #tpu.memory_space<vmem>>, %arg16: memref<1x1x64xf32, #tpu.memory_space<vmem>>, %arg17: memref<10x64xbf16, #tpu.memory_space<vmem>>, %arg18: memref<10x64xf32, #tpu.memory_space<vmem>>) attributes {dimension_semantics = [#tpu.dimension_semantics<arbitrary>], iteration_bounds = array<i64: 2>, scalar_prefetch = 0 : i64, scratch_operands = 1 : i64, tpu.core_type = #tpu.core_type<tc>, window_params = [{pipeline_mode = #tpu.pipeline_mode<synchronous>, transform_indices = @transform_0, window_bounds = array<i64: 10, 64>}, {pipeline_mode = #tpu.pipeline_mode<synchronous>, transform_indices = @transform_1, window_bounds = array<i64: 1, 64>}, {pipeline_mode = #tpu.pipeline_mode<synchronous>, transform_indices = @transform_2, window_bounds = array<i64: 1, 64>}, {pipeline_mode = #tpu.pipeline_mode<synchronous>, transform_indices = @transform_3, window_bounds = array<i64: 10, 10>}, {transform_indices = @transform_4, window_bounds = array<i64: 1, 1, 64>}, {transform_indices = @transform_5, window_bounds = array<i64: 1, 1, 64>}, {transform_indices = @transform_6, window_bounds = array<i64: 1, 64, 192>}, {transform_indices = @transform_7, window_bounds = array<i64: 1, 1, 192>}, {transform_indices = @transform_8, window_bounds = array<i64: 1, 64, 64>}, {transform_indices = @transform_9, window_bounds = array<i64: 1, 1, 64>}, {transform_indices = @transform_10, window_bounds = array<i64: 1, 1, 64>}, {transform_indices = @transform_11, window_bounds = array<i64: 1, 1, 64>}, {transform_indices = @transform_12, window_bounds = array<i64: 1, 64, 256>}, {transform_indices = @transform_13, window_bounds = array<i64: 1, 1, 256>}, {transform_indices = @transform_14, window_bounds = array<i64: 1, 256, 64>}, {transform_indices = @transform_15, window_bounds = array<i64: 1, 1, 64>}, {pipeline_mode = #tpu.pipeline_mode<synchronous>, transform_indices = @transform_16, window_bounds = array<i64: 10, 64>}]} {
    %c0_i32 = arith.constant 0 : i32
    %0 = arith.cmpi eq, %arg0, %c0_i32 : i32
    %1 = arith.extui %0 : i1 to i32
    %c0_i32_0 = arith.constant 0 : i32
    %2 = arith.cmpi ne, %1, %c0_i32_0 : i32
    scf.if %2 {
      %c0_80 = arith.constant 0 : index
      %c0_81 = arith.constant 0 : index
      %191 = vector.load %arg1[%c0_80, %c0_81] : memref<10x64xf32, #tpu.memory_space<vmem>>, vector<10x64xf32>
      %c0_82 = arith.constant 0 : index
      %c0_83 = arith.constant 0 : index
      %192 = vector.load %arg18[%c0_82, %c0_83] : memref<10x64xf32, #tpu.memory_space<vmem>>, vector<10x64xf32>
      tpu.vector_store %arg18[%c0_82, %c0_83], %191 {strides = array<i32>} : memref<10x64xf32, #tpu.memory_space<vmem>>, vector<10x64xf32>,
    } else {
    }
    %c0 = arith.constant 0 : index
    %c0_1 = arith.constant 0 : index
    %3 = vector.load %arg18[%c0, %c0_1] : memref<10x64xf32, #tpu.memory_space<vmem>>, vector<10x64xf32>
    %c0_2 = arith.constant 0 : index
    %c0_3 = arith.constant 0 : index
    %c0_4 = arith.constant 0 : index
    %4 = vector.load %arg5[%c0_2, %c0_3, %c0_4] : memref<1x1x64xf32, #tpu.memory_space<vmem>>, vector<1x1x64xf32>
    %5 = vector.shape_cast %4 : vector<1x1x64xf32> to vector<1x64xf32>
    %c0_5 = arith.constant 0 : index
    %c0_6 = arith.constant 0 : index
    %c0_7 = arith.constant 0 : index
    %6 = vector.load %arg6[%c0_5, %c0_6, %c0_7] : memref<1x1x64xf32, #tpu.memory_space<vmem>>, vector<1x1x64xf32>
    %7 = vector.shape_cast %6 : vector<1x1x64xf32> to vector<1x64xf32>
    %cst = arith.constant dense<0.000000e+00> : vector<10xf32>
    %8 = vector.multi_reduction <add>, %3, %cst [1] : vector<10x64xf32> to vector<10xf32>
    %9 = vector.shape_cast %8 : vector<10xf32> to vector<10x1xf32>
    %cst_8 = arith.constant 6.400000e+01 : f32
    %10 = vector.broadcast %cst_8 : f32 to vector<10x1xf32>
    %11 = arith.divf %9, %10 : vector<10x1xf32>
    %12 = vector.broadcast %11 : vector<10x1xf32> to vector<10x64xf32>
    %13 = arith.subf %3, %12 : vector<10x64xf32>
    %14 = arith.mulf %13, %13 : vector<10x64xf32>
    %cst_9 = arith.constant dense<0.000000e+00> : vector<10xf32>
    %15 = vector.multi_reduction <add>, %14, %cst_9 [1] : vector<10x64xf32> to vector<10xf32>
    %16 = vector.shape_cast %15 : vector<10xf32> to vector<10x1xf32>
    %cst_10 = arith.constant 6.400000e+01 : f32
    %17 = vector.broadcast %cst_10 : f32 to vector<10x1xf32>
    %18 = arith.divf %16, %17 : vector<10x1xf32>
    %19 = vector.broadcast %11 : vector<10x1xf32> to vector<10x64xf32>
    %20 = arith.subf %3, %19 : vector<10x64xf32>
    %cst_11 = arith.constant 9.99999997E-7 : f32
    %21 = vector.broadcast %cst_11 : f32 to vector<10x1xf32>
    %22 = arith.addf %18, %21 : vector<10x1xf32>
    %23 = math.rsqrt %22 : vector<10x1xf32>
    %24 = vector.broadcast %23 : vector<10x1xf32> to vector<10x64xf32>
    %25 = arith.mulf %20, %24 : vector<10x64xf32>
    %26 = vector.broadcast %5 : vector<1x64xf32> to vector<10x64xf32>
    %27 = arith.mulf %25, %26 : vector<10x64xf32>
    %28 = vector.broadcast %7 : vector<1x64xf32> to vector<10x64xf32>
    %29 = arith.addf %27, %28 : vector<10x64xf32>
    %c0_12 = arith.constant 0 : index
    %c0_13 = arith.constant 0 : index
    %c0_14 = arith.constant 0 : index
    %30 = vector.load %arg7[%c0_12, %c0_13, %c0_14] : memref<1x64x192xbf16, #tpu.memory_space<vmem>>, vector<1x64x192xbf16>
    %31 = vector.shape_cast %30 : vector<1x64x192xbf16> to vector<64x192xbf16>
    %32 = arith.truncf %29 : vector<10x64xf32> to vector<10x64xbf16>
    %cst_15 = arith.constant dense<0.000000e+00> : vector<10x192xf32>
    %33 = tpu.matmul %32, %31, %cst_15 {dimension_numbers = #tpu.dot_dimension_numbers<[1], [0], [0], [1], [0, 0, 1, 1], [], []>} : vector<10x64xbf16>, vector<64x192xbf16>, vector<10x192xf32> -> vector<10x192xf32>
    %c0_16 = arith.constant 0 : index
    %c0_17 = arith.constant 0 : index
    %c0_18 = arith.constant 0 : index
    %34 = vector.load %arg8[%c0_16, %c0_17, %c0_18] : memref<1x1x192xf32, #tpu.memory_space<vmem>>, vector<1x1x192xf32>
    %35 = vector.shape_cast %34 : vector<1x1x192xf32> to vector<1x192xf32>
    %36 = vector.broadcast %35 : vector<1x192xf32> to vector<10x192xf32>
    %37 = arith.addf %33, %36 : vector<10x192xf32>
    %38 = vector.extract_strided_slice %37 {offsets = [0, 0], sizes = [10, 64], strides = [1, 1]} : vector<10x192xf32> to vector<10x64xf32>
    %39 = vector.extract_strided_slice %37 {offsets = [0, 64], sizes = [10, 64], strides = [1, 1]} : vector<10x192xf32> to vector<10x64xf32>
    %40 = vector.extract_strided_slice %37 {offsets = [0, 128], sizes = [10, 64], strides = [1, 1]} : vector<10x192xf32> to vector<10x64xf32>
    %c0_19 = arith.constant 0 : index
    %c0_20 = arith.constant 0 : index
    %41 = vector.load %arg4[%c0_19, %c0_20] : memref<10x10xf32, #tpu.memory_space<vmem>>, vector<10x10xf32>
    %42 = arith.truncf %38 : vector<10x64xf32> to vector<10x64xbf16>
    %43 = arith.truncf %39 : vector<10x64xf32> to vector<10x64xbf16>
    %44 = arith.truncf %40 : vector<10x64xf32> to vector<10x64xbf16>
    %45 = vector.extract_strided_slice %42 {offsets = [0, 0], sizes = [10, 16], strides = [1, 1]} : vector<10x64xbf16> to vector<10x16xbf16>
    %46 = vector.extract_strided_slice %43 {offsets = [0, 0], sizes = [10, 16], strides = [1, 1]} : vector<10x64xbf16> to vector<10x16xbf16>
    %cst_21 = arith.constant dense<0.000000e+00> : vector<10x10xf32>
    %47 = tpu.matmul %45, %46, %cst_21 {dimension_numbers = #tpu.dot_dimension_numbers<[1], [1], [0], [0], [0, 0, 1, 0], [], []>} : vector<10x16xbf16>, vector<10x16xbf16>, vector<10x10xf32> -> vector<10x10xf32>
    %cst_22 = arith.constant 2.500000e-01 : f32
    %48 = vector.broadcast %cst_22 : f32 to vector<10x10xf32>
    %49 = arith.mulf %47, %48 : vector<10x10xf32>
    %50 = arith.addf %49, %41 : vector<10x10xf32>
    %cst_23 = arith.constant dense<0xFF800000> : vector<10xf32>
    %51 = vector.multi_reduction <maximumf>, %50, %cst_23 [1] : vector<10x10xf32> to vector<10xf32>
    %52 = vector.shape_cast %51 : vector<10xf32> to vector<10x1xf32>
    %53 = vector.broadcast %52 : vector<10x1xf32> to vector<10x10xf32>
    %54 = arith.subf %50, %53 : vector<10x10xf32>
    %55 = math.exp %54 : vector<10x10xf32>
    %cst_24 = arith.constant dense<0.000000e+00> : vector<10xf32>
    %56 = vector.multi_reduction <add>, %55, %cst_24 [1] : vector<10x10xf32> to vector<10xf32>
    %57 = vector.shape_cast %56 : vector<10xf32> to vector<10x1xf32>
    %58 = tpu.reciprocal %57 {approx = true} : vector<10x1xf32> -> vector<10x1xf32>
    %59 = vector.broadcast %58 : vector<10x1xf32> to vector<10x10xf32>
    %60 = arith.mulf %55, %59 : vector<10x10xf32>
    %61 = arith.truncf %60 : vector<10x10xf32> to vector<10x10xbf16>
    %62 = vector.extract_strided_slice %44 {offsets = [0, 0], sizes = [10, 16], strides = [1, 1]} : vector<10x64xbf16> to vector<10x16xbf16>
    %cst_25 = arith.constant dense<0.000000e+00> : vector<10x16xf32>
    %63 = tpu.matmul %61, %62, %cst_25 {dimension_numbers = #tpu.dot_dimension_numbers<[1], [0], [0], [1], [0, 0, 1, 1], [], []>} : vector<10x10xbf16>, vector<10x16xbf16>, vector<10x16xf32> -> vector<10x16xf32>
    %64 = vector.extract_strided_slice %42 {offsets = [0, 16], sizes = [10, 16], strides = [1, 1]} : vector<10x64xbf16> to vector<10x16xbf16>
    %65 = vector.extract_strided_slice %43 {offsets = [0, 16], sizes = [10, 16], strides = [1, 1]} : vector<10x64xbf16> to vector<10x16xbf16>
    %cst_26 = arith.constant dense<0.000000e+00> : vector<10x10xf32>
    %66 = tpu.matmul %64, %65, %cst_26 {dimension_numbers = #tpu.dot_dimension_numbers<[1], [1], [0], [0], [0, 0, 1, 0], [], []>} : vector<10x16xbf16>, vector<10x16xbf16>, vector<10x10xf32> -> vector<10x10xf32>
    %cst_27 = arith.constant 2.500000e-01 : f32
    %67 = vector.broadcast %cst_27 : f32 to vector<10x10xf32>
    %68 = arith.mulf %66, %67 : vector<10x10xf32>
    %69 = arith.addf %68, %41 : vector<10x10xf32>
    %cst_28 = arith.constant dense<0xFF800000> : vector<10xf32>
    %70 = vector.multi_reduction <maximumf>, %69, %cst_28 [1] : vector<10x10xf32> to vector<10xf32>
    %71 = vector.shape_cast %70 : vector<10xf32> to vector<10x1xf32>
    %72 = vector.broadcast %71 : vector<10x1xf32> to vector<10x10xf32>
    %73 = arith.subf %69, %72 : vector<10x10xf32>
    %74 = math.exp %73 : vector<10x10xf32>
    %cst_29 = arith.constant dense<0.000000e+00> : vector<10xf32>
    %75 = vector.multi_reduction <add>, %74, %cst_29 [1] : vector<10x10xf32> to vector<10xf32>
    %76 = vector.shape_cast %75 : vector<10xf32> to vector<10x1xf32>
    %77 = tpu.reciprocal %76 {approx = true} : vector<10x1xf32> -> vector<10x1xf32>
    %78 = vector.broadcast %77 : vector<10x1xf32> to vector<10x10xf32>
    %79 = arith.mulf %74, %78 : vector<10x10xf32>
    %80 = arith.truncf %79 : vector<10x10xf32> to vector<10x10xbf16>
    %81 = vector.extract_strided_slice %44 {offsets = [0, 16], sizes = [10, 16], strides = [1, 1]} : vector<10x64xbf16> to vector<10x16xbf16>
    %cst_30 = arith.constant dense<0.000000e+00> : vector<10x16xf32>
    %82 = tpu.matmul %80, %81, %cst_30 {dimension_numbers = #tpu.dot_dimension_numbers<[1], [0], [0], [1], [0, 0, 1, 1], [], []>} : vector<10x10xbf16>, vector<10x16xbf16>, vector<10x16xf32> -> vector<10x16xf32>
    %83 = vector.extract_strided_slice %42 {offsets = [0, 32], sizes = [10, 16], strides = [1, 1]} : vector<10x64xbf16> to vector<10x16xbf16>
    %84 = vector.extract_strided_slice %43 {offsets = [0, 32], sizes = [10, 16], strides = [1, 1]} : vector<10x64xbf16> to vector<10x16xbf16>
    %cst_31 = arith.constant dense<0.000000e+00> : vector<10x10xf32>
    %85 = tpu.matmul %83, %84, %cst_31 {dimension_numbers = #tpu.dot_dimension_numbers<[1], [1], [0], [0], [0, 0, 1, 0], [], []>} : vector<10x16xbf16>, vector<10x16xbf16>, vector<10x10xf32> -> vector<10x10xf32>
    %cst_32 = arith.constant 2.500000e-01 : f32
    %86 = vector.broadcast %cst_32 : f32 to vector<10x10xf32>
    %87 = arith.mulf %85, %86 : vector<10x10xf32>
    %88 = arith.addf %87, %41 : vector<10x10xf32>
    %cst_33 = arith.constant dense<0xFF800000> : vector<10xf32>
    %89 = vector.multi_reduction <maximumf>, %88, %cst_33 [1] : vector<10x10xf32> to vector<10xf32>
    %90 = vector.shape_cast %89 : vector<10xf32> to vector<10x1xf32>
    %91 = vector.broadcast %90 : vector<10x1xf32> to vector<10x10xf32>
    %92 = arith.subf %88, %91 : vector<10x10xf32>
    %93 = math.exp %92 : vector<10x10xf32>
    %cst_34 = arith.constant dense<0.000000e+00> : vector<10xf32>
    %94 = vector.multi_reduction <add>, %93, %cst_34 [1] : vector<10x10xf32> to vector<10xf32>
    %95 = vector.shape_cast %94 : vector<10xf32> to vector<10x1xf32>
    %96 = tpu.reciprocal %95 {approx = true} : vector<10x1xf32> -> vector<10x1xf32>
    %97 = vector.broadcast %96 : vector<10x1xf32> to vector<10x10xf32>
    %98 = arith.mulf %93, %97 : vector<10x10xf32>
    %99 = arith.truncf %98 : vector<10x10xf32> to vector<10x10xbf16>
    %100 = vector.extract_strided_slice %44 {offsets = [0, 32], sizes = [10, 16], strides = [1, 1]} : vector<10x64xbf16> to vector<10x16xbf16>
    %cst_35 = arith.constant dense<0.000000e+00> : vector<10x16xf32>
    %101 = tpu.matmul %99, %100, %cst_35 {dimension_numbers = #tpu.dot_dimension_numbers<[1], [0], [0], [1], [0, 0, 1, 1], [], []>} : vector<10x10xbf16>, vector<10x16xbf16>, vector<10x16xf32> -> vector<10x16xf32>
    %102 = vector.extract_strided_slice %42 {offsets = [0, 48], sizes = [10, 16], strides = [1, 1]} : vector<10x64xbf16> to vector<10x16xbf16>
    %103 = vector.extract_strided_slice %43 {offsets = [0, 48], sizes = [10, 16], strides = [1, 1]} : vector<10x64xbf16> to vector<10x16xbf16>
    %cst_36 = arith.constant dense<0.000000e+00> : vector<10x10xf32>
    %104 = tpu.matmul %102, %103, %cst_36 {dimension_numbers = #tpu.dot_dimension_numbers<[1], [1], [0], [0], [0, 0, 1, 0], [], []>} : vector<10x16xbf16>, vector<10x16xbf16>, vector<10x10xf32> -> vector<10x10xf32>
    %cst_37 = arith.constant 2.500000e-01 : f32
    %105 = vector.broadcast %cst_37 : f32 to vector<10x10xf32>
    %106 = arith.mulf %104, %105 : vector<10x10xf32>
    %107 = arith.addf %106, %41 : vector<10x10xf32>
    %cst_38 = arith.constant dense<0xFF800000> : vector<10xf32>
    %108 = vector.multi_reduction <maximumf>, %107, %cst_38 [1] : vector<10x10xf32> to vector<10xf32>
    %109 = vector.shape_cast %108 : vector<10xf32> to vector<10x1xf32>
    %110 = vector.broadcast %109 : vector<10x1xf32> to vector<10x10xf32>
    %111 = arith.subf %107, %110 : vector<10x10xf32>
    %112 = math.exp %111 : vector<10x10xf32>
    %cst_39 = arith.constant dense<0.000000e+00> : vector<10xf32>
    %113 = vector.multi_reduction <add>, %112, %cst_39 [1] : vector<10x10xf32> to vector<10xf32>
    %114 = vector.shape_cast %113 : vector<10xf32> to vector<10x1xf32>
    %115 = tpu.reciprocal %114 {approx = true} : vector<10x1xf32> -> vector<10x1xf32>
    %116 = vector.broadcast %115 : vector<10x1xf32> to vector<10x10xf32>
    %117 = arith.mulf %112, %116 : vector<10x10xf32>
    %118 = arith.truncf %117 : vector<10x10xf32> to vector<10x10xbf16>
    %119 = vector.extract_strided_slice %44 {offsets = [0, 48], sizes = [10, 16], strides = [1, 1]} : vector<10x64xbf16> to vector<10x16xbf16>
    %cst_40 = arith.constant dense<0.000000e+00> : vector<10x16xf32>
    %120 = tpu.matmul %118, %119, %cst_40 {dimension_numbers = #tpu.dot_dimension_numbers<[1], [0], [0], [1], [0, 0, 1, 1], [], []>} : vector<10x10xbf16>, vector<10x16xbf16>, vector<10x16xf32> -> vector<10x16xf32>
    %121 = tpu.concatenate %63, %82, %101, %120 in 1 : vector<10x16xf32>, vector<10x16xf32>, vector<10x16xf32>, vector<10x16xf32> -> vector<10x64xf32>
    %c0_41 = arith.constant 0 : index
    %c0_42 = arith.constant 0 : index
    %c0_43 = arith.constant 0 : index
    %122 = vector.load %arg9[%c0_41, %c0_42, %c0_43] : memref<1x64x64xbf16, #tpu.memory_space<vmem>>, vector<1x64x64xbf16>
    %123 = vector.shape_cast %122 : vector<1x64x64xbf16> to vector<64x64xbf16>
    %124 = arith.truncf %121 : vector<10x64xf32> to vector<10x64xbf16>
    %cst_44 = arith.constant dense<0.000000e+00> : vector<10x64xf32>
    %125 = tpu.matmul %124, %123, %cst_44 {dimension_numbers = #tpu.dot_dimension_numbers<[1], [0], [0], [1], [0, 0, 1, 1], [], []>} : vector<10x64xbf16>, vector<64x64xbf16>, vector<10x64xf32> -> vector<10x64xf32>
    %126 = arith.addf %3, %125 : vector<10x64xf32>
    %c0_45 = arith.constant 0 : index
    %c0_46 = arith.constant 0 : index
    %c0_47 = arith.constant 0 : index
    %127 = vector.load %arg10[%c0_45, %c0_46, %c0_47] : memref<1x1x64xf32, #tpu.memory_space<vmem>>, vector<1x1x64xf32>
    %128 = vector.shape_cast %127 : vector<1x1x64xf32> to vector<1x64xf32>
    %129 = vector.broadcast %128 : vector<1x64xf32> to vector<10x64xf32>
    %130 = arith.addf %126, %129 : vector<10x64xf32>
    %c0_48 = arith.constant 0 : index
    %c0_49 = arith.constant 0 : index
    %c0_50 = arith.constant 0 : index
    %131 = vector.load %arg11[%c0_48, %c0_49, %c0_50] : memref<1x1x64xf32, #tpu.memory_space<vmem>>, vector<1x1x64xf32>
    %132 = vector.shape_cast %131 : vector<1x1x64xf32> to vector<1x64xf32>
    %c0_51 = arith.constant 0 : index
    %c0_52 = arith.constant 0 : index
    %c0_53 = arith.constant 0 : index
    %133 = vector.load %arg12[%c0_51, %c0_52, %c0_53] : memref<1x1x64xf32, #tpu.memory_space<vmem>>, vector<1x1x64xf32>
    %134 = vector.shape_cast %133 : vector<1x1x64xf32> to vector<1x64xf32>
    %cst_54 = arith.constant dense<0.000000e+00> : vector<10xf32>
    %135 = vector.multi_reduction <add>, %130, %cst_54 [1] : vector<10x64xf32> to vector<10xf32>
    %136 = vector.shape_cast %135 : vector<10xf32> to vector<10x1xf32>
    %cst_55 = arith.constant 6.400000e+01 : f32
    %137 = vector.broadcast %cst_55 : f32 to vector<10x1xf32>
    %138 = arith.divf %136, %137 : vector<10x1xf32>
    %139 = vector.broadcast %138 : vector<10x1xf32> to vector<10x64xf32>
    %140 = arith.subf %130, %139 : vector<10x64xf32>
    %141 = arith.mulf %140, %140 : vector<10x64xf32>
    %cst_56 = arith.constant dense<0.000000e+00> : vector<10xf32>
    %142 = vector.multi_reduction <add>, %141, %cst_56 [1] : vector<10x64xf32> to vector<10xf32>
    %143 = vector.shape_cast %142 : vector<10xf32> to vector<10x1xf32>
    %cst_57 = arith.constant 6.400000e+01 : f32
    %144 = vector.broadcast %cst_57 : f32 to vector<10x1xf32>
    %145 = arith.divf %143, %144 : vector<10x1xf32>
    %146 = vector.broadcast %138 : vector<10x1xf32> to vector<10x64xf32>
    %147 = arith.subf %130, %146 : vector<10x64xf32>
    %cst_58 = arith.constant 9.99999997E-7 : f32
    %148 = vector.broadcast %cst_58 : f32 to vector<10x1xf32>
    %149 = arith.addf %145, %148 : vector<10x1xf32>
    %150 = math.rsqrt %149 : vector<10x1xf32>
    %151 = vector.broadcast %150 : vector<10x1xf32> to vector<10x64xf32>
    %152 = arith.mulf %147, %151 : vector<10x64xf32>
    %153 = vector.broadcast %132 : vector<1x64xf32> to vector<10x64xf32>
    %154 = arith.mulf %152, %153 : vector<10x64xf32>
    %155 = vector.broadcast %134 : vector<1x64xf32> to vector<10x64xf32>
    %156 = arith.addf %154, %155 : vector<10x64xf32>
    %c0_59 = arith.constant 0 : index
    %c0_60 = arith.constant 0 : index
    %c0_61 = arith.constant 0 : index
    %157 = vector.load %arg13[%c0_59, %c0_60, %c0_61] : memref<1x64x256xbf16, #tpu.memory_space<vmem>>, vector<1x64x256xbf16>
    %158 = vector.shape_cast %157 : vector<1x64x256xbf16> to vector<64x256xbf16>
    %159 = arith.truncf %156 : vector<10x64xf32> to vector<10x64xbf16>
    %cst_62 = arith.constant dense<0.000000e+00> : vector<10x256xf32>
    %160 = tpu.matmul %159, %158, %cst_62 {dimension_numbers = #tpu.dot_dimension_numbers<[1], [0], [0], [1], [0, 0, 1, 1], [], []>} : vector<10x64xbf16>, vector<64x256xbf16>, vector<10x256xf32> -> vector<10x256xf32>
    %c0_63 = arith.constant 0 : index
    %c0_64 = arith.constant 0 : index
    %c0_65 = arith.constant 0 : index
    %161 = vector.load %arg14[%c0_63, %c0_64, %c0_65] : memref<1x1x256xf32, #tpu.memory_space<vmem>>, vector<1x1x256xf32>
    %162 = vector.shape_cast %161 : vector<1x1x256xf32> to vector<1x256xf32>
    %163 = vector.broadcast %162 : vector<1x256xf32> to vector<10x256xf32>
    %164 = arith.addf %160, %163 : vector<10x256xf32>
    %cst_66 = arith.constant 5.000000e-01 : f32
    %165 = vector.broadcast %cst_66 : f32 to vector<10x256xf32>
    %166 = arith.mulf %165, %164 : vector<10x256xf32>
    %cst_67 = arith.constant 4.471500e-02 : f32
    %167 = vector.broadcast %cst_67 : f32 to vector<10x256xf32>
    %168 = arith.mulf %167, %164 : vector<10x256xf32>
    %169 = arith.mulf %168, %164 : vector<10x256xf32>
    %170 = arith.mulf %169, %164 : vector<10x256xf32>
    %171 = arith.addf %164, %170 : vector<10x256xf32>
    %cst_68 = arith.constant 0.797884583 : f32
    %172 = vector.broadcast %cst_68 : f32 to vector<10x256xf32>
    %173 = arith.mulf %172, %171 : vector<10x256xf32>
    %174 = math.tanh %173 : vector<10x256xf32>
    %cst_69 = arith.constant 1.000000e+00 : f32
    %175 = vector.broadcast %cst_69 : f32 to vector<10x256xf32>
    %176 = arith.addf %175, %174 : vector<10x256xf32>
    %177 = arith.mulf %166, %176 : vector<10x256xf32>
    %c0_70 = arith.constant 0 : index
    %c0_71 = arith.constant 0 : index
    %c0_72 = arith.constant 0 : index
    %178 = vector.load %arg15[%c0_70, %c0_71, %c0_72] : memref<1x256x64xbf16, #tpu.memory_space<vmem>>, vector<1x256x64xbf16>
    %179 = vector.shape_cast %178 : vector<1x256x64xbf16> to vector<256x64xbf16>
    %180 = arith.truncf %177 : vector<10x256xf32> to vector<10x256xbf16>
    %cst_73 = arith.constant dense<0.000000e+00> : vector<10x64xf32>
    %181 = tpu.matmul %180, %179, %cst_73 {dimension_numbers = #tpu.dot_dimension_numbers<[1], [0], [0], [1], [0, 0, 1, 1], [], []>} : vector<10x256xbf16>, vector<256x64xbf16>, vector<10x64xf32> -> vector<10x64xf32>
    %182 = arith.addf %130, %181 : vector<10x64xf32>
    %c0_74 = arith.constant 0 : index
    %c0_75 = arith.constant 0 : index
    %c0_76 = arith.constant 0 : index
    %183 = vector.load %arg16[%c0_74, %c0_75, %c0_76] : memref<1x1x64xf32, #tpu.memory_space<vmem>>, vector<1x1x64xf32>
    %184 = vector.shape_cast %183 : vector<1x1x64xf32> to vector<1x64xf32>
    %185 = vector.broadcast %184 : vector<1x64xf32> to vector<10x64xf32>
    %186 = arith.addf %182, %185 : vector<10x64xf32>
    %c0_77 = arith.constant 0 : index
    %c0_78 = arith.constant 0 : index
    %187 = vector.load %arg18[%c0_77, %c0_78] : memref<10x64xf32, #tpu.memory_space<vmem>>, vector<10x64xf32>
    tpu.vector_store %arg18[%c0_77, %c0_78], %186 {strides = array<i32>} : memref<10x64xf32, #tpu.memory_space<vmem>>, vector<10x64xf32>,
    %c1_i32 = arith.constant 1 : i32
    %188 = arith.cmpi eq, %arg0, %c1_i32 : i32
    %189 = arith.extui %188 : i1 to i32
    %c0_i32_79 = arith.constant 0 : i32
    %190 = arith.cmpi ne, %189, %c0_i32_79 : i32
    scf.if %190 {
      %c0_80 = arith.constant 0 : index
      %c0_81 = arith.constant 0 : index
      %191 = vector.load %arg2[%c0_80, %c0_81] : memref<1x64xf32, #tpu.memory_space<vmem>>, vector<1x64xf32>
      %c0_82 = arith.constant 0 : index
      %c0_83 = arith.constant 0 : index
      %192 = vector.load %arg3[%c0_82, %c0_83] : memref<1x64xf32, #tpu.memory_space<vmem>>, vector<1x64xf32>
      %cst_84 = arith.constant dense<0.000000e+00> : vector<10xf32>
      %193 = vector.multi_reduction <add>, %186, %cst_84 [1] : vector<10x64xf32> to vector<10xf32>
      %194 = vector.shape_cast %193 : vector<10xf32> to vector<10x1xf32>
      %cst_85 = arith.constant 6.400000e+01 : f32
      %195 = vector.broadcast %cst_85 : f32 to vector<10x1xf32>
      %196 = arith.divf %194, %195 : vector<10x1xf32>
      %197 = vector.broadcast %196 : vector<10x1xf32> to vector<10x64xf32>
      %198 = arith.subf %186, %197 : vector<10x64xf32>
      %199 = arith.mulf %198, %198 : vector<10x64xf32>
      %cst_86 = arith.constant dense<0.000000e+00> : vector<10xf32>
      %200 = vector.multi_reduction <add>, %199, %cst_86 [1] : vector<10x64xf32> to vector<10xf32>
      %201 = vector.shape_cast %200 : vector<10xf32> to vector<10x1xf32>
      %cst_87 = arith.constant 6.400000e+01 : f32
      %202 = vector.broadcast %cst_87 : f32 to vector<10x1xf32>
      %203 = arith.divf %201, %202 : vector<10x1xf32>
      %204 = vector.broadcast %196 : vector<10x1xf32> to vector<10x64xf32>
      %205 = arith.subf %186, %204 : vector<10x64xf32>
      %cst_88 = arith.constant 9.99999997E-7 : f32
      %206 = vector.broadcast %cst_88 : f32 to vector<10x1xf32>
      %207 = arith.addf %203, %206 : vector<10x1xf32>
      %208 = math.rsqrt %207 : vector<10x1xf32>
      %209 = vector.broadcast %208 : vector<10x1xf32> to vector<10x64xf32>
      %210 = arith.mulf %205, %209 : vector<10x64xf32>
      %211 = vector.broadcast %191 : vector<1x64xf32> to vector<10x64xf32>
      %212 = arith.mulf %210, %211 : vector<10x64xf32>
      %213 = vector.broadcast %192 : vector<1x64xf32> to vector<10x64xf32>
      %214 = arith.addf %212, %213 : vector<10x64xf32>
      %215 = arith.truncf %214 : vector<10x64xf32> to vector<10x64xbf16>
      %c0_89 = arith.constant 0 : index
      %c0_90 = arith.constant 0 : index
      %216 = vector.load %arg17[%c0_89, %c0_90] : memref<10x64xbf16, #tpu.memory_space<vmem>>, vector<10x64xbf16>
      tpu.vector_store %arg17[%c0_89, %c0_90], %215 {strides = array<i32>} : memref<10x64xbf16, #tpu.memory_space<vmem>>, vector<10x64xbf16>,
    } else {
    }
    return
  }
  func.func @transform_0(%arg0: i32) -> (i32, i32) {
    %c0_i32 = arith.constant 0 : i32
    %c0_i32_0 = arith.constant 0 : i32
    %c0_i32_1 = arith.constant 0 : i32
    return %c0_i32, %c0_i32_0 : i32, i32
  }
  func.func @transform_1(%arg0: i32) -> (i32, i32) {
    %c0_i32 = arith.constant 0 : i32
    %c0_i32_0 = arith.constant 0 : i32
    %c0_i32_1 = arith.constant 0 : i32
    return %c0_i32, %c0_i32_0 : i32, i32
  }
  func.func @transform_2(%arg0: i32) -> (i32, i32) {
    %c0_i32 = arith.constant 0 : i32
    %c0_i32_0 = arith.constant 0 : i32
    %c0_i32_1 = arith.constant 0 : i32
    return %c0_i32, %c0_i32_0 : i32, i32
  }
  func.func @transform_3(%arg0: i32) -> (i32, i32) {
    %c0_i32 = arith.constant 0 : i32
    %c0_i32_0 = arith.constant 0 : i32
    %c0_i32_1 = arith.constant 0 : i32
    return %c0_i32, %c0_i32_0 : i32, i32
  }
  func.func @transform_4(%arg0: i32) -> (i32, i32, i32) {
    %c0_i32 = arith.constant 0 : i32
    %c0_i32_0 = arith.constant 0 : i32
    %c0_i32_1 = arith.constant 0 : i32
    return %arg0, %c0_i32, %c0_i32_0 : i32, i32, i32
  }
  func.func @transform_5(%arg0: i32) -> (i32, i32, i32) {
    %c0_i32 = arith.constant 0 : i32
    %c0_i32_0 = arith.constant 0 : i32
    %c0_i32_1 = arith.constant 0 : i32
    return %arg0, %c0_i32, %c0_i32_0 : i32, i32, i32
  }
  func.func @transform_6(%arg0: i32) -> (i32, i32, i32) {
    %c0_i32 = arith.constant 0 : i32
    %c0_i32_0 = arith.constant 0 : i32
    %c0_i32_1 = arith.constant 0 : i32
    return %arg0, %c0_i32, %c0_i32_0 : i32, i32, i32
  }
  func.func @transform_7(%arg0: i32) -> (i32, i32, i32) {
    %c0_i32 = arith.constant 0 : i32
    %c0_i32_0 = arith.constant 0 : i32
    %c0_i32_1 = arith.constant 0 : i32
    return %arg0, %c0_i32, %c0_i32_0 : i32, i32, i32
  }
  func.func @transform_8(%arg0: i32) -> (i32, i32, i32) {
    %c0_i32 = arith.constant 0 : i32
    %c0_i32_0 = arith.constant 0 : i32
    %c0_i32_1 = arith.constant 0 : i32
    return %arg0, %c0_i32, %c0_i32_0 : i32, i32, i32
  }
  func.func @transform_9(%arg0: i32) -> (i32, i32, i32) {
    %c0_i32 = arith.constant 0 : i32
    %c0_i32_0 = arith.constant 0 : i32
    %c0_i32_1 = arith.constant 0 : i32
    return %arg0, %c0_i32, %c0_i32_0 : i32, i32, i32
  }
  func.func @transform_10(%arg0: i32) -> (i32, i32, i32) {
    %c0_i32 = arith.constant 0 : i32
    %c0_i32_0 = arith.constant 0 : i32
    %c0_i32_1 = arith.constant 0 : i32
    return %arg0, %c0_i32, %c0_i32_0 : i32, i32, i32
  }
  func.func @transform_11(%arg0: i32) -> (i32, i32, i32) {
    %c0_i32 = arith.constant 0 : i32
    %c0_i32_0 = arith.constant 0 : i32
    %c0_i32_1 = arith.constant 0 : i32
    return %arg0, %c0_i32, %c0_i32_0 : i32, i32, i32
  }
  func.func @transform_12(%arg0: i32) -> (i32, i32, i32) {
    %c0_i32 = arith.constant 0 : i32
    %c0_i32_0 = arith.constant 0 : i32
    %c0_i32_1 = arith.constant 0 : i32
    return %arg0, %c0_i32, %c0_i32_0 : i32, i32, i32
  }
  func.func @transform_13(%arg0: i32) -> (i32, i32, i32) {
    %c0_i32 = arith.constant 0 : i32
    %c0_i32_0 = arith.constant 0 : i32
    %c0_i32_1 = arith.constant 0 : i32
    return %arg0, %c0_i32, %c0_i32_0 : i32, i32, i32
  }
  func.func @transform_14(%arg0: i32) -> (i32, i32, i32) {
    %c0_i32 = arith.constant 0 : i32
    %c0_i32_0 = arith.constant 0 : i32
    %c0_i32_1 = arith.constant 0 : i32
    return %arg0, %c0_i32, %c0_i32_0 : i32, i32, i32
  }
  func.func @transform_15(%arg0: i32) -> (i32, i32, i32) {
    %c0_i32 = arith.constant 0 : i32
    %c0_i32_0 = arith.constant 0 : i32
    %c0_i32_1 = arith.constant 0 : i32
    return %arg0, %c0_i32, %c0_i32_0 : i32, i32, i32
  }
  func.func @transform_16(%arg0: i32) -> (i32, i32) {
    %c0_i32 = arith.constant 0 : i32
    %c0_i32_0 = arith.constant 0 : i32
    %c0_i32_1 = arith.constant 0 : i32
    return %c0_i32, %c0_i32_0 : i32, i32
  }
}

module attributes {stable_mosaic.version = 11 : i64} {
  func.func @_bert_layers_kernel(%arg0: i32, %arg1: memref<16x64xf32, #tpu.memory_space<vmem>>, %arg2: memref<1x64xf32, #tpu.memory_space<vmem>>, %arg3: memref<1x64xf32, #tpu.memory_space<vmem>>, %arg4: memref<10x64xbf16, #tpu.memory_space<vmem>>, %arg5: memref<16x16xf32, #tpu.memory_space<vmem>>, %arg6: memref<16x10xf32, #tpu.memory_space<vmem>>, %arg7: memref<1x64x192xbf16, #tpu.memory_space<vmem>>, %arg8: memref<1x1x192xf32, #tpu.memory_space<vmem>>, %arg9: memref<1x64x64xbf16, #tpu.memory_space<vmem>>, %arg10: memref<1x1x64xf32, #tpu.memory_space<vmem>>, %arg11: memref<1x1x64xf32, #tpu.memory_space<vmem>>, %arg12: memref<1x1x64xf32, #tpu.memory_space<vmem>>, %arg13: memref<1x64x64xbf16, #tpu.memory_space<vmem>>, %arg14: memref<1x1x64xf32, #tpu.memory_space<vmem>>, %arg15: memref<1x64x128xbf16, #tpu.memory_space<vmem>>, %arg16: memref<1x1x128xf32, #tpu.memory_space<vmem>>, %arg17: memref<1x64x64xbf16, #tpu.memory_space<vmem>>, %arg18: memref<1x1x64xf32, #tpu.memory_space<vmem>>, %arg19: memref<1x1x64xf32, #tpu.memory_space<vmem>>, %arg20: memref<1x1x64xf32, #tpu.memory_space<vmem>>, %arg21: memref<1x64x256xbf16, #tpu.memory_space<vmem>>, %arg22: memref<1x1x256xf32, #tpu.memory_space<vmem>>, %arg23: memref<1x256x64xbf16, #tpu.memory_space<vmem>>, %arg24: memref<1x1x64xf32, #tpu.memory_space<vmem>>, %arg25: memref<1x1x64xf32, #tpu.memory_space<vmem>>, %arg26: memref<1x1x64xf32, #tpu.memory_space<vmem>>, %arg27: memref<16x64xbf16, #tpu.memory_space<vmem>>, %arg28: memref<16x64xf32, #tpu.memory_space<vmem>>) attributes {dimension_semantics = [#tpu.dimension_semantics<arbitrary>], iteration_bounds = array<i64: 2>, scalar_prefetch = 0 : i64, scratch_operands = 1 : i64, tpu.core_type = #tpu.core_type<tc>, window_params = [{pipeline_mode = #tpu.pipeline_mode<synchronous>, transform_indices = @transform_0, window_bounds = array<i64: 16, 64>}, {pipeline_mode = #tpu.pipeline_mode<synchronous>, transform_indices = @transform_1, window_bounds = array<i64: 1, 64>}, {pipeline_mode = #tpu.pipeline_mode<synchronous>, transform_indices = @transform_2, window_bounds = array<i64: 1, 64>}, {pipeline_mode = #tpu.pipeline_mode<synchronous>, transform_indices = @transform_3, window_bounds = array<i64: 10, 64>}, {pipeline_mode = #tpu.pipeline_mode<synchronous>, transform_indices = @transform_4, window_bounds = array<i64: 16, 16>}, {pipeline_mode = #tpu.pipeline_mode<synchronous>, transform_indices = @transform_5, window_bounds = array<i64: 16, 10>}, {transform_indices = @transform_6, window_bounds = array<i64: 1, 64, 192>}, {transform_indices = @transform_7, window_bounds = array<i64: 1, 1, 192>}, {transform_indices = @transform_8, window_bounds = array<i64: 1, 64, 64>}, {transform_indices = @transform_9, window_bounds = array<i64: 1, 1, 64>}, {transform_indices = @transform_10, window_bounds = array<i64: 1, 1, 64>}, {transform_indices = @transform_11, window_bounds = array<i64: 1, 1, 64>}, {transform_indices = @transform_12, window_bounds = array<i64: 1, 64, 64>}, {transform_indices = @transform_13, window_bounds = array<i64: 1, 1, 64>}, {transform_indices = @transform_14, window_bounds = array<i64: 1, 64, 128>}, {transform_indices = @transform_15, window_bounds = array<i64: 1, 1, 128>}, {transform_indices = @transform_16, window_bounds = array<i64: 1, 64, 64>}, {transform_indices = @transform_17, window_bounds = array<i64: 1, 1, 64>}, {transform_indices = @transform_18, window_bounds = array<i64: 1, 1, 64>}, {transform_indices = @transform_19, window_bounds = array<i64: 1, 1, 64>}, {transform_indices = @transform_20, window_bounds = array<i64: 1, 64, 256>}, {transform_indices = @transform_21, window_bounds = array<i64: 1, 1, 256>}, {transform_indices = @transform_22, window_bounds = array<i64: 1, 256, 64>}, {transform_indices = @transform_23, window_bounds = array<i64: 1, 1, 64>}, {transform_indices = @transform_24, window_bounds = array<i64: 1, 1, 64>}, {transform_indices = @transform_25, window_bounds = array<i64: 1, 1, 64>}, {pipeline_mode = #tpu.pipeline_mode<synchronous>, transform_indices = @transform_26, window_bounds = array<i64: 16, 64>}]} {
    %c0_i32 = arith.constant 0 : i32
    %0 = arith.cmpi eq, %arg0, %c0_i32 : i32
    %1 = arith.extui %0 : i1 to i32
    %c0_i32_0 = arith.constant 0 : i32
    %2 = arith.cmpi ne, %1, %c0_i32_0 : i32
    scf.if %2 {
      %c0_136 = arith.constant 0 : index
      %c0_137 = arith.constant 0 : index
      %325 = vector.load %arg1[%c0_136, %c0_137] : memref<16x64xf32, #tpu.memory_space<vmem>>, vector<16x64xf32>
      %c0_138 = arith.constant 0 : index
      %c0_139 = arith.constant 0 : index
      %326 = vector.load %arg2[%c0_138, %c0_139] : memref<1x64xf32, #tpu.memory_space<vmem>>, vector<1x64xf32>
      %c0_140 = arith.constant 0 : index
      %c0_141 = arith.constant 0 : index
      %327 = vector.load %arg3[%c0_140, %c0_141] : memref<1x64xf32, #tpu.memory_space<vmem>>, vector<1x64xf32>
      %cst_142 = arith.constant dense<0.000000e+00> : vector<16xf32>
      %328 = vector.multi_reduction <add>, %325, %cst_142 [1] : vector<16x64xf32> to vector<16xf32>
      %329 = vector.shape_cast %328 : vector<16xf32> to vector<16x1xf32>
      %cst_143 = arith.constant 6.400000e+01 : f32
      %330 = vector.broadcast %cst_143 : f32 to vector<16x1xf32>
      %331 = arith.divf %329, %330 : vector<16x1xf32>
      %332 = vector.broadcast %331 : vector<16x1xf32> to vector<16x64xf32>
      %333 = arith.subf %325, %332 : vector<16x64xf32>
      %334 = arith.mulf %333, %333 : vector<16x64xf32>
      %cst_144 = arith.constant dense<0.000000e+00> : vector<16xf32>
      %335 = vector.multi_reduction <add>, %334, %cst_144 [1] : vector<16x64xf32> to vector<16xf32>
      %336 = vector.shape_cast %335 : vector<16xf32> to vector<16x1xf32>
      %cst_145 = arith.constant 6.400000e+01 : f32
      %337 = vector.broadcast %cst_145 : f32 to vector<16x1xf32>
      %338 = arith.divf %336, %337 : vector<16x1xf32>
      %339 = vector.broadcast %331 : vector<16x1xf32> to vector<16x64xf32>
      %340 = arith.subf %325, %339 : vector<16x64xf32>
      %cst_146 = arith.constant 9.99999996E-13 : f32
      %341 = vector.broadcast %cst_146 : f32 to vector<16x1xf32>
      %342 = arith.addf %338, %341 : vector<16x1xf32>
      %343 = math.rsqrt %342 : vector<16x1xf32>
      %344 = vector.broadcast %343 : vector<16x1xf32> to vector<16x64xf32>
      %345 = arith.mulf %340, %344 : vector<16x64xf32>
      %346 = vector.broadcast %326 : vector<1x64xf32> to vector<16x64xf32>
      %347 = arith.mulf %345, %346 : vector<16x64xf32>
      %348 = vector.broadcast %327 : vector<1x64xf32> to vector<16x64xf32>
      %349 = arith.addf %347, %348 : vector<16x64xf32>
      %c0_147 = arith.constant 0 : index
      %c0_148 = arith.constant 0 : index
      %350 = vector.load %arg28[%c0_147, %c0_148] : memref<16x64xf32, #tpu.memory_space<vmem>>, vector<16x64xf32>
      tpu.vector_store %arg28[%c0_147, %c0_148], %349 {strides = array<i32>} : memref<16x64xf32, #tpu.memory_space<vmem>>, vector<16x64xf32>,
    } else {
    }
    %c0 = arith.constant 0 : index
    %c0_1 = arith.constant 0 : index
    %3 = vector.load %arg28[%c0, %c0_1] : memref<16x64xf32, #tpu.memory_space<vmem>>, vector<16x64xf32>
    %c0_2 = arith.constant 0 : index
    %c0_3 = arith.constant 0 : index
    %4 = vector.load %arg4[%c0_2, %c0_3] : memref<10x64xbf16, #tpu.memory_space<vmem>>, vector<10x64xbf16>
    %c0_4 = arith.constant 0 : index
    %c0_5 = arith.constant 0 : index
    %c0_6 = arith.constant 0 : index
    %5 = vector.load %arg7[%c0_4, %c0_5, %c0_6] : memref<1x64x192xbf16, #tpu.memory_space<vmem>>, vector<1x64x192xbf16>
    %6 = vector.shape_cast %5 : vector<1x64x192xbf16> to vector<64x192xbf16>
    %7 = arith.truncf %3 : vector<16x64xf32> to vector<16x64xbf16>
    %cst = arith.constant dense<0.000000e+00> : vector<16x192xf32>
    %8 = tpu.matmul %7, %6, %cst {dimension_numbers = #tpu.dot_dimension_numbers<[1], [0], [0], [1], [0, 0, 1, 1], [], []>} : vector<16x64xbf16>, vector<64x192xbf16>, vector<16x192xf32> -> vector<16x192xf32>
    %c0_7 = arith.constant 0 : index
    %c0_8 = arith.constant 0 : index
    %c0_9 = arith.constant 0 : index
    %9 = vector.load %arg8[%c0_7, %c0_8, %c0_9] : memref<1x1x192xf32, #tpu.memory_space<vmem>>, vector<1x1x192xf32>
    %10 = vector.shape_cast %9 : vector<1x1x192xf32> to vector<1x192xf32>
    %11 = vector.broadcast %10 : vector<1x192xf32> to vector<16x192xf32>
    %12 = arith.addf %8, %11 : vector<16x192xf32>
    %13 = vector.extract_strided_slice %12 {offsets = [0, 0], sizes = [16, 64], strides = [1, 1]} : vector<16x192xf32> to vector<16x64xf32>
    %14 = vector.extract_strided_slice %12 {offsets = [0, 64], sizes = [16, 64], strides = [1, 1]} : vector<16x192xf32> to vector<16x64xf32>
    %15 = vector.extract_strided_slice %12 {offsets = [0, 128], sizes = [16, 64], strides = [1, 1]} : vector<16x192xf32> to vector<16x64xf32>
    %c0_10 = arith.constant 0 : index
    %c0_11 = arith.constant 0 : index
    %16 = vector.load %arg5[%c0_10, %c0_11] : memref<16x16xf32, #tpu.memory_space<vmem>>, vector<16x16xf32>
    %17 = arith.truncf %13 : vector<16x64xf32> to vector<16x64xbf16>
    %18 = arith.truncf %14 : vector<16x64xf32> to vector<16x64xbf16>
    %19 = arith.truncf %15 : vector<16x64xf32> to vector<16x64xbf16>
    %20 = vector.extract_strided_slice %17 {offsets = [0, 0], sizes = [16, 16], strides = [1, 1]} : vector<16x64xbf16> to vector<16x16xbf16>
    %21 = vector.extract_strided_slice %18 {offsets = [0, 0], sizes = [16, 16], strides = [1, 1]} : vector<16x64xbf16> to vector<16x16xbf16>
    %cst_12 = arith.constant dense<0.000000e+00> : vector<16x16xf32>
    %22 = tpu.matmul %20, %21, %cst_12 {dimension_numbers = #tpu.dot_dimension_numbers<[1], [1], [0], [0], [0, 0, 1, 0], [], []>} : vector<16x16xbf16>, vector<16x16xbf16>, vector<16x16xf32> -> vector<16x16xf32>
    %cst_13 = arith.constant 2.500000e-01 : f32
    %23 = vector.broadcast %cst_13 : f32 to vector<16x16xf32>
    %24 = arith.mulf %22, %23 : vector<16x16xf32>
    %25 = arith.addf %24, %16 : vector<16x16xf32>
    %cst_14 = arith.constant dense<0xFF800000> : vector<16xf32>
    %26 = vector.multi_reduction <maximumf>, %25, %cst_14 [1] : vector<16x16xf32> to vector<16xf32>
    %27 = vector.shape_cast %26 : vector<16xf32> to vector<16x1xf32>
    %28 = vector.broadcast %27 : vector<16x1xf32> to vector<16x16xf32>
    %29 = arith.subf %25, %28 : vector<16x16xf32>
    %30 = math.exp %29 : vector<16x16xf32>
    %cst_15 = arith.constant dense<0.000000e+00> : vector<16xf32>
    %31 = vector.multi_reduction <add>, %30, %cst_15 [1] : vector<16x16xf32> to vector<16xf32>
    %32 = vector.shape_cast %31 : vector<16xf32> to vector<16x1xf32>
    %33 = tpu.reciprocal %32 {approx = true} : vector<16x1xf32> -> vector<16x1xf32>
    %34 = vector.broadcast %33 : vector<16x1xf32> to vector<16x16xf32>
    %35 = arith.mulf %30, %34 : vector<16x16xf32>
    %36 = arith.truncf %35 : vector<16x16xf32> to vector<16x16xbf16>
    %37 = vector.extract_strided_slice %19 {offsets = [0, 0], sizes = [16, 16], strides = [1, 1]} : vector<16x64xbf16> to vector<16x16xbf16>
    %cst_16 = arith.constant dense<0.000000e+00> : vector<16x16xf32>
    %38 = tpu.matmul %36, %37, %cst_16 {dimension_numbers = #tpu.dot_dimension_numbers<[1], [0], [0], [1], [0, 0, 1, 1], [], []>} : vector<16x16xbf16>, vector<16x16xbf16>, vector<16x16xf32> -> vector<16x16xf32>
    %39 = vector.extract_strided_slice %17 {offsets = [0, 16], sizes = [16, 16], strides = [1, 1]} : vector<16x64xbf16> to vector<16x16xbf16>
    %40 = vector.extract_strided_slice %18 {offsets = [0, 16], sizes = [16, 16], strides = [1, 1]} : vector<16x64xbf16> to vector<16x16xbf16>
    %cst_17 = arith.constant dense<0.000000e+00> : vector<16x16xf32>
    %41 = tpu.matmul %39, %40, %cst_17 {dimension_numbers = #tpu.dot_dimension_numbers<[1], [1], [0], [0], [0, 0, 1, 0], [], []>} : vector<16x16xbf16>, vector<16x16xbf16>, vector<16x16xf32> -> vector<16x16xf32>
    %cst_18 = arith.constant 2.500000e-01 : f32
    %42 = vector.broadcast %cst_18 : f32 to vector<16x16xf32>
    %43 = arith.mulf %41, %42 : vector<16x16xf32>
    %44 = arith.addf %43, %16 : vector<16x16xf32>
    %cst_19 = arith.constant dense<0xFF800000> : vector<16xf32>
    %45 = vector.multi_reduction <maximumf>, %44, %cst_19 [1] : vector<16x16xf32> to vector<16xf32>
    %46 = vector.shape_cast %45 : vector<16xf32> to vector<16x1xf32>
    %47 = vector.broadcast %46 : vector<16x1xf32> to vector<16x16xf32>
    %48 = arith.subf %44, %47 : vector<16x16xf32>
    %49 = math.exp %48 : vector<16x16xf32>
    %cst_20 = arith.constant dense<0.000000e+00> : vector<16xf32>
    %50 = vector.multi_reduction <add>, %49, %cst_20 [1] : vector<16x16xf32> to vector<16xf32>
    %51 = vector.shape_cast %50 : vector<16xf32> to vector<16x1xf32>
    %52 = tpu.reciprocal %51 {approx = true} : vector<16x1xf32> -> vector<16x1xf32>
    %53 = vector.broadcast %52 : vector<16x1xf32> to vector<16x16xf32>
    %54 = arith.mulf %49, %53 : vector<16x16xf32>
    %55 = arith.truncf %54 : vector<16x16xf32> to vector<16x16xbf16>
    %56 = vector.extract_strided_slice %19 {offsets = [0, 16], sizes = [16, 16], strides = [1, 1]} : vector<16x64xbf16> to vector<16x16xbf16>
    %cst_21 = arith.constant dense<0.000000e+00> : vector<16x16xf32>
    %57 = tpu.matmul %55, %56, %cst_21 {dimension_numbers = #tpu.dot_dimension_numbers<[1], [0], [0], [1], [0, 0, 1, 1], [], []>} : vector<16x16xbf16>, vector<16x16xbf16>, vector<16x16xf32> -> vector<16x16xf32>
    %58 = vector.extract_strided_slice %17 {offsets = [0, 32], sizes = [16, 16], strides = [1, 1]} : vector<16x64xbf16> to vector<16x16xbf16>
    %59 = vector.extract_strided_slice %18 {offsets = [0, 32], sizes = [16, 16], strides = [1, 1]} : vector<16x64xbf16> to vector<16x16xbf16>
    %cst_22 = arith.constant dense<0.000000e+00> : vector<16x16xf32>
    %60 = tpu.matmul %58, %59, %cst_22 {dimension_numbers = #tpu.dot_dimension_numbers<[1], [1], [0], [0], [0, 0, 1, 0], [], []>} : vector<16x16xbf16>, vector<16x16xbf16>, vector<16x16xf32> -> vector<16x16xf32>
    %cst_23 = arith.constant 2.500000e-01 : f32
    %61 = vector.broadcast %cst_23 : f32 to vector<16x16xf32>
    %62 = arith.mulf %60, %61 : vector<16x16xf32>
    %63 = arith.addf %62, %16 : vector<16x16xf32>
    %cst_24 = arith.constant dense<0xFF800000> : vector<16xf32>
    %64 = vector.multi_reduction <maximumf>, %63, %cst_24 [1] : vector<16x16xf32> to vector<16xf32>
    %65 = vector.shape_cast %64 : vector<16xf32> to vector<16x1xf32>
    %66 = vector.broadcast %65 : vector<16x1xf32> to vector<16x16xf32>
    %67 = arith.subf %63, %66 : vector<16x16xf32>
    %68 = math.exp %67 : vector<16x16xf32>
    %cst_25 = arith.constant dense<0.000000e+00> : vector<16xf32>
    %69 = vector.multi_reduction <add>, %68, %cst_25 [1] : vector<16x16xf32> to vector<16xf32>
    %70 = vector.shape_cast %69 : vector<16xf32> to vector<16x1xf32>
    %71 = tpu.reciprocal %70 {approx = true} : vector<16x1xf32> -> vector<16x1xf32>
    %72 = vector.broadcast %71 : vector<16x1xf32> to vector<16x16xf32>
    %73 = arith.mulf %68, %72 : vector<16x16xf32>
    %74 = arith.truncf %73 : vector<16x16xf32> to vector<16x16xbf16>
    %75 = vector.extract_strided_slice %19 {offsets = [0, 32], sizes = [16, 16], strides = [1, 1]} : vector<16x64xbf16> to vector<16x16xbf16>
    %cst_26 = arith.constant dense<0.000000e+00> : vector<16x16xf32>
    %76 = tpu.matmul %74, %75, %cst_26 {dimension_numbers = #tpu.dot_dimension_numbers<[1], [0], [0], [1], [0, 0, 1, 1], [], []>} : vector<16x16xbf16>, vector<16x16xbf16>, vector<16x16xf32> -> vector<16x16xf32>
    %77 = vector.extract_strided_slice %17 {offsets = [0, 48], sizes = [16, 16], strides = [1, 1]} : vector<16x64xbf16> to vector<16x16xbf16>
    %78 = vector.extract_strided_slice %18 {offsets = [0, 48], sizes = [16, 16], strides = [1, 1]} : vector<16x64xbf16> to vector<16x16xbf16>
    %cst_27 = arith.constant dense<0.000000e+00> : vector<16x16xf32>
    %79 = tpu.matmul %77, %78, %cst_27 {dimension_numbers = #tpu.dot_dimension_numbers<[1], [1], [0], [0], [0, 0, 1, 0], [], []>} : vector<16x16xbf16>, vector<16x16xbf16>, vector<16x16xf32> -> vector<16x16xf32>
    %cst_28 = arith.constant 2.500000e-01 : f32
    %80 = vector.broadcast %cst_28 : f32 to vector<16x16xf32>
    %81 = arith.mulf %79, %80 : vector<16x16xf32>
    %82 = arith.addf %81, %16 : vector<16x16xf32>
    %cst_29 = arith.constant dense<0xFF800000> : vector<16xf32>
    %83 = vector.multi_reduction <maximumf>, %82, %cst_29 [1] : vector<16x16xf32> to vector<16xf32>
    %84 = vector.shape_cast %83 : vector<16xf32> to vector<16x1xf32>
    %85 = vector.broadcast %84 : vector<16x1xf32> to vector<16x16xf32>
    %86 = arith.subf %82, %85 : vector<16x16xf32>
    %87 = math.exp %86 : vector<16x16xf32>
    %cst_30 = arith.constant dense<0.000000e+00> : vector<16xf32>
    %88 = vector.multi_reduction <add>, %87, %cst_30 [1] : vector<16x16xf32> to vector<16xf32>
    %89 = vector.shape_cast %88 : vector<16xf32> to vector<16x1xf32>
    %90 = tpu.reciprocal %89 {approx = true} : vector<16x1xf32> -> vector<16x1xf32>
    %91 = vector.broadcast %90 : vector<16x1xf32> to vector<16x16xf32>
    %92 = arith.mulf %87, %91 : vector<16x16xf32>
    %93 = arith.truncf %92 : vector<16x16xf32> to vector<16x16xbf16>
    %94 = vector.extract_strided_slice %19 {offsets = [0, 48], sizes = [16, 16], strides = [1, 1]} : vector<16x64xbf16> to vector<16x16xbf16>
    %cst_31 = arith.constant dense<0.000000e+00> : vector<16x16xf32>
    %95 = tpu.matmul %93, %94, %cst_31 {dimension_numbers = #tpu.dot_dimension_numbers<[1], [0], [0], [1], [0, 0, 1, 1], [], []>} : vector<16x16xbf16>, vector<16x16xbf16>, vector<16x16xf32> -> vector<16x16xf32>
    %96 = tpu.concatenate %38, %57, %76, %95 in 1 : vector<16x16xf32>, vector<16x16xf32>, vector<16x16xf32>, vector<16x16xf32> -> vector<16x64xf32>
    %c0_32 = arith.constant 0 : index
    %c0_33 = arith.constant 0 : index
    %c0_34 = arith.constant 0 : index
    %97 = vector.load %arg9[%c0_32, %c0_33, %c0_34] : memref<1x64x64xbf16, #tpu.memory_space<vmem>>, vector<1x64x64xbf16>
    %98 = vector.shape_cast %97 : vector<1x64x64xbf16> to vector<64x64xbf16>
    %99 = arith.truncf %96 : vector<16x64xf32> to vector<16x64xbf16>
    %cst_35 = arith.constant dense<0.000000e+00> : vector<16x64xf32>
    %100 = tpu.matmul %99, %98, %cst_35 {dimension_numbers = #tpu.dot_dimension_numbers<[1], [0], [0], [1], [0, 0, 1, 1], [], []>} : vector<16x64xbf16>, vector<64x64xbf16>, vector<16x64xf32> -> vector<16x64xf32>
    %101 = arith.addf %3, %100 : vector<16x64xf32>
    %c0_36 = arith.constant 0 : index
    %c0_37 = arith.constant 0 : index
    %c0_38 = arith.constant 0 : index
    %102 = vector.load %arg10[%c0_36, %c0_37, %c0_38] : memref<1x1x64xf32, #tpu.memory_space<vmem>>, vector<1x1x64xf32>
    %103 = vector.shape_cast %102 : vector<1x1x64xf32> to vector<1x64xf32>
    %104 = vector.broadcast %103 : vector<1x64xf32> to vector<16x64xf32>
    %105 = arith.addf %101, %104 : vector<16x64xf32>
    %c0_39 = arith.constant 0 : index
    %c0_40 = arith.constant 0 : index
    %c0_41 = arith.constant 0 : index
    %106 = vector.load %arg11[%c0_39, %c0_40, %c0_41] : memref<1x1x64xf32, #tpu.memory_space<vmem>>, vector<1x1x64xf32>
    %107 = vector.shape_cast %106 : vector<1x1x64xf32> to vector<1x64xf32>
    %c0_42 = arith.constant 0 : index
    %c0_43 = arith.constant 0 : index
    %c0_44 = arith.constant 0 : index
    %108 = vector.load %arg12[%c0_42, %c0_43, %c0_44] : memref<1x1x64xf32, #tpu.memory_space<vmem>>, vector<1x1x64xf32>
    %109 = vector.shape_cast %108 : vector<1x1x64xf32> to vector<1x64xf32>
    %cst_45 = arith.constant dense<0.000000e+00> : vector<16xf32>
    %110 = vector.multi_reduction <add>, %105, %cst_45 [1] : vector<16x64xf32> to vector<16xf32>
    %111 = vector.shape_cast %110 : vector<16xf32> to vector<16x1xf32>
    %cst_46 = arith.constant 6.400000e+01 : f32
    %112 = vector.broadcast %cst_46 : f32 to vector<16x1xf32>
    %113 = arith.divf %111, %112 : vector<16x1xf32>
    %114 = vector.broadcast %113 : vector<16x1xf32> to vector<16x64xf32>
    %115 = arith.subf %105, %114 : vector<16x64xf32>
    %116 = arith.mulf %115, %115 : vector<16x64xf32>
    %cst_47 = arith.constant dense<0.000000e+00> : vector<16xf32>
    %117 = vector.multi_reduction <add>, %116, %cst_47 [1] : vector<16x64xf32> to vector<16xf32>
    %118 = vector.shape_cast %117 : vector<16xf32> to vector<16x1xf32>
    %cst_48 = arith.constant 6.400000e+01 : f32
    %119 = vector.broadcast %cst_48 : f32 to vector<16x1xf32>
    %120 = arith.divf %118, %119 : vector<16x1xf32>
    %121 = vector.broadcast %113 : vector<16x1xf32> to vector<16x64xf32>
    %122 = arith.subf %105, %121 : vector<16x64xf32>
    %cst_49 = arith.constant 9.99999996E-13 : f32
    %123 = vector.broadcast %cst_49 : f32 to vector<16x1xf32>
    %124 = arith.addf %120, %123 : vector<16x1xf32>
    %125 = math.rsqrt %124 : vector<16x1xf32>
    %126 = vector.broadcast %125 : vector<16x1xf32> to vector<16x64xf32>
    %127 = arith.mulf %122, %126 : vector<16x64xf32>
    %128 = vector.broadcast %107 : vector<1x64xf32> to vector<16x64xf32>
    %129 = arith.mulf %127, %128 : vector<16x64xf32>
    %130 = vector.broadcast %109 : vector<1x64xf32> to vector<16x64xf32>
    %131 = arith.addf %129, %130 : vector<16x64xf32>
    %c0_50 = arith.constant 0 : index
    %c0_51 = arith.constant 0 : index
    %c0_52 = arith.constant 0 : index
    %132 = vector.load %arg13[%c0_50, %c0_51, %c0_52] : memref<1x64x64xbf16, #tpu.memory_space<vmem>>, vector<1x64x64xbf16>
    %133 = vector.shape_cast %132 : vector<1x64x64xbf16> to vector<64x64xbf16>
    %134 = arith.truncf %131 : vector<16x64xf32> to vector<16x64xbf16>
    %cst_53 = arith.constant dense<0.000000e+00> : vector<16x64xf32>
    %135 = tpu.matmul %134, %133, %cst_53 {dimension_numbers = #tpu.dot_dimension_numbers<[1], [0], [0], [1], [0, 0, 1, 1], [], []>} : vector<16x64xbf16>, vector<64x64xbf16>, vector<16x64xf32> -> vector<16x64xf32>
    %c0_54 = arith.constant 0 : index
    %c0_55 = arith.constant 0 : index
    %c0_56 = arith.constant 0 : index
    %136 = vector.load %arg14[%c0_54, %c0_55, %c0_56] : memref<1x1x64xf32, #tpu.memory_space<vmem>>, vector<1x1x64xf32>
    %137 = vector.shape_cast %136 : vector<1x1x64xf32> to vector<1x64xf32>
    %138 = vector.broadcast %137 : vector<1x64xf32> to vector<16x64xf32>
    %139 = arith.addf %135, %138 : vector<16x64xf32>
    %c0_57 = arith.constant 0 : index
    %c0_58 = arith.constant 0 : index
    %c0_59 = arith.constant 0 : index
    %140 = vector.load %arg15[%c0_57, %c0_58, %c0_59] : memref<1x64x128xbf16, #tpu.memory_space<vmem>>, vector<1x64x128xbf16>
    %141 = vector.shape_cast %140 : vector<1x64x128xbf16> to vector<64x128xbf16>
    %cst_60 = arith.constant dense<0.000000e+00> : vector<10x128xf32>
    %142 = tpu.matmul %4, %141, %cst_60 {dimension_numbers = #tpu.dot_dimension_numbers<[1], [0], [0], [1], [0, 0, 1, 1], [], []>} : vector<10x64xbf16>, vector<64x128xbf16>, vector<10x128xf32> -> vector<10x128xf32>
    %c0_61 = arith.constant 0 : index
    %c0_62 = arith.constant 0 : index
    %c0_63 = arith.constant 0 : index
    %143 = vector.load %arg16[%c0_61, %c0_62, %c0_63] : memref<1x1x128xf32, #tpu.memory_space<vmem>>, vector<1x1x128xf32>
    %144 = vector.shape_cast %143 : vector<1x1x128xf32> to vector<1x128xf32>
    %145 = vector.broadcast %144 : vector<1x128xf32> to vector<10x128xf32>
    %146 = arith.addf %142, %145 : vector<10x128xf32>
    %147 = vector.extract_strided_slice %146 {offsets = [0, 0], sizes = [10, 64], strides = [1, 1]} : vector<10x128xf32> to vector<10x64xf32>
    %148 = vector.extract_strided_slice %146 {offsets = [0, 64], sizes = [10, 64], strides = [1, 1]} : vector<10x128xf32> to vector<10x64xf32>
    %c0_64 = arith.constant 0 : index
    %c0_65 = arith.constant 0 : index
    %149 = vector.load %arg6[%c0_64, %c0_65] : memref<16x10xf32, #tpu.memory_space<vmem>>, vector<16x10xf32>
    %150 = arith.truncf %139 : vector<16x64xf32> to vector<16x64xbf16>
    %151 = arith.truncf %147 : vector<10x64xf32> to vector<10x64xbf16>
    %152 = arith.truncf %148 : vector<10x64xf32> to vector<10x64xbf16>
    %153 = vector.extract_strided_slice %150 {offsets = [0, 0], sizes = [16, 16], strides = [1, 1]} : vector<16x64xbf16> to vector<16x16xbf16>
    %154 = vector.extract_strided_slice %151 {offsets = [0, 0], sizes = [10, 16], strides = [1, 1]} : vector<10x64xbf16> to vector<10x16xbf16>
    %cst_66 = arith.constant dense<0.000000e+00> : vector<16x10xf32>
    %155 = tpu.matmul %153, %154, %cst_66 {dimension_numbers = #tpu.dot_dimension_numbers<[1], [1], [0], [0], [0, 0, 1, 0], [], []>} : vector<16x16xbf16>, vector<10x16xbf16>, vector<16x10xf32> -> vector<16x10xf32>
    %cst_67 = arith.constant 2.500000e-01 : f32
    %156 = vector.broadcast %cst_67 : f32 to vector<16x10xf32>
    %157 = arith.mulf %155, %156 : vector<16x10xf32>
    %158 = arith.addf %157, %149 : vector<16x10xf32>
    %cst_68 = arith.constant dense<0xFF800000> : vector<16xf32>
    %159 = vector.multi_reduction <maximumf>, %158, %cst_68 [1] : vector<16x10xf32> to vector<16xf32>
    %160 = vector.shape_cast %159 : vector<16xf32> to vector<16x1xf32>
    %161 = vector.broadcast %160 : vector<16x1xf32> to vector<16x10xf32>
    %162 = arith.subf %158, %161 : vector<16x10xf32>
    %163 = math.exp %162 : vector<16x10xf32>
    %cst_69 = arith.constant dense<0.000000e+00> : vector<16xf32>
    %164 = vector.multi_reduction <add>, %163, %cst_69 [1] : vector<16x10xf32> to vector<16xf32>
    %165 = vector.shape_cast %164 : vector<16xf32> to vector<16x1xf32>
    %166 = tpu.reciprocal %165 {approx = true} : vector<16x1xf32> -> vector<16x1xf32>
    %167 = vector.broadcast %166 : vector<16x1xf32> to vector<16x10xf32>
    %168 = arith.mulf %163, %167 : vector<16x10xf32>
    %169 = arith.truncf %168 : vector<16x10xf32> to vector<16x10xbf16>
    %170 = vector.extract_strided_slice %152 {offsets = [0, 0], sizes = [10, 16], strides = [1, 1]} : vector<10x64xbf16> to vector<10x16xbf16>
    %cst_70 = arith.constant dense<0.000000e+00> : vector<16x16xf32>
    %171 = tpu.matmul %169, %170, %cst_70 {dimension_numbers = #tpu.dot_dimension_numbers<[1], [0], [0], [1], [0, 0, 1, 1], [], []>} : vector<16x10xbf16>, vector<10x16xbf16>, vector<16x16xf32> -> vector<16x16xf32>
    %172 = vector.extract_strided_slice %150 {offsets = [0, 16], sizes = [16, 16], strides = [1, 1]} : vector<16x64xbf16> to vector<16x16xbf16>
    %173 = vector.extract_strided_slice %151 {offsets = [0, 16], sizes = [10, 16], strides = [1, 1]} : vector<10x64xbf16> to vector<10x16xbf16>
    %cst_71 = arith.constant dense<0.000000e+00> : vector<16x10xf32>
    %174 = tpu.matmul %172, %173, %cst_71 {dimension_numbers = #tpu.dot_dimension_numbers<[1], [1], [0], [0], [0, 0, 1, 0], [], []>} : vector<16x16xbf16>, vector<10x16xbf16>, vector<16x10xf32> -> vector<16x10xf32>
    %cst_72 = arith.constant 2.500000e-01 : f32
    %175 = vector.broadcast %cst_72 : f32 to vector<16x10xf32>
    %176 = arith.mulf %174, %175 : vector<16x10xf32>
    %177 = arith.addf %176, %149 : vector<16x10xf32>
    %cst_73 = arith.constant dense<0xFF800000> : vector<16xf32>
    %178 = vector.multi_reduction <maximumf>, %177, %cst_73 [1] : vector<16x10xf32> to vector<16xf32>
    %179 = vector.shape_cast %178 : vector<16xf32> to vector<16x1xf32>
    %180 = vector.broadcast %179 : vector<16x1xf32> to vector<16x10xf32>
    %181 = arith.subf %177, %180 : vector<16x10xf32>
    %182 = math.exp %181 : vector<16x10xf32>
    %cst_74 = arith.constant dense<0.000000e+00> : vector<16xf32>
    %183 = vector.multi_reduction <add>, %182, %cst_74 [1] : vector<16x10xf32> to vector<16xf32>
    %184 = vector.shape_cast %183 : vector<16xf32> to vector<16x1xf32>
    %185 = tpu.reciprocal %184 {approx = true} : vector<16x1xf32> -> vector<16x1xf32>
    %186 = vector.broadcast %185 : vector<16x1xf32> to vector<16x10xf32>
    %187 = arith.mulf %182, %186 : vector<16x10xf32>
    %188 = arith.truncf %187 : vector<16x10xf32> to vector<16x10xbf16>
    %189 = vector.extract_strided_slice %152 {offsets = [0, 16], sizes = [10, 16], strides = [1, 1]} : vector<10x64xbf16> to vector<10x16xbf16>
    %cst_75 = arith.constant dense<0.000000e+00> : vector<16x16xf32>
    %190 = tpu.matmul %188, %189, %cst_75 {dimension_numbers = #tpu.dot_dimension_numbers<[1], [0], [0], [1], [0, 0, 1, 1], [], []>} : vector<16x10xbf16>, vector<10x16xbf16>, vector<16x16xf32> -> vector<16x16xf32>
    %191 = vector.extract_strided_slice %150 {offsets = [0, 32], sizes = [16, 16], strides = [1, 1]} : vector<16x64xbf16> to vector<16x16xbf16>
    %192 = vector.extract_strided_slice %151 {offsets = [0, 32], sizes = [10, 16], strides = [1, 1]} : vector<10x64xbf16> to vector<10x16xbf16>
    %cst_76 = arith.constant dense<0.000000e+00> : vector<16x10xf32>
    %193 = tpu.matmul %191, %192, %cst_76 {dimension_numbers = #tpu.dot_dimension_numbers<[1], [1], [0], [0], [0, 0, 1, 0], [], []>} : vector<16x16xbf16>, vector<10x16xbf16>, vector<16x10xf32> -> vector<16x10xf32>
    %cst_77 = arith.constant 2.500000e-01 : f32
    %194 = vector.broadcast %cst_77 : f32 to vector<16x10xf32>
    %195 = arith.mulf %193, %194 : vector<16x10xf32>
    %196 = arith.addf %195, %149 : vector<16x10xf32>
    %cst_78 = arith.constant dense<0xFF800000> : vector<16xf32>
    %197 = vector.multi_reduction <maximumf>, %196, %cst_78 [1] : vector<16x10xf32> to vector<16xf32>
    %198 = vector.shape_cast %197 : vector<16xf32> to vector<16x1xf32>
    %199 = vector.broadcast %198 : vector<16x1xf32> to vector<16x10xf32>
    %200 = arith.subf %196, %199 : vector<16x10xf32>
    %201 = math.exp %200 : vector<16x10xf32>
    %cst_79 = arith.constant dense<0.000000e+00> : vector<16xf32>
    %202 = vector.multi_reduction <add>, %201, %cst_79 [1] : vector<16x10xf32> to vector<16xf32>
    %203 = vector.shape_cast %202 : vector<16xf32> to vector<16x1xf32>
    %204 = tpu.reciprocal %203 {approx = true} : vector<16x1xf32> -> vector<16x1xf32>
    %205 = vector.broadcast %204 : vector<16x1xf32> to vector<16x10xf32>
    %206 = arith.mulf %201, %205 : vector<16x10xf32>
    %207 = arith.truncf %206 : vector<16x10xf32> to vector<16x10xbf16>
    %208 = vector.extract_strided_slice %152 {offsets = [0, 32], sizes = [10, 16], strides = [1, 1]} : vector<10x64xbf16> to vector<10x16xbf16>
    %cst_80 = arith.constant dense<0.000000e+00> : vector<16x16xf32>
    %209 = tpu.matmul %207, %208, %cst_80 {dimension_numbers = #tpu.dot_dimension_numbers<[1], [0], [0], [1], [0, 0, 1, 1], [], []>} : vector<16x10xbf16>, vector<10x16xbf16>, vector<16x16xf32> -> vector<16x16xf32>
    %210 = vector.extract_strided_slice %150 {offsets = [0, 48], sizes = [16, 16], strides = [1, 1]} : vector<16x64xbf16> to vector<16x16xbf16>
    %211 = vector.extract_strided_slice %151 {offsets = [0, 48], sizes = [10, 16], strides = [1, 1]} : vector<10x64xbf16> to vector<10x16xbf16>
    %cst_81 = arith.constant dense<0.000000e+00> : vector<16x10xf32>
    %212 = tpu.matmul %210, %211, %cst_81 {dimension_numbers = #tpu.dot_dimension_numbers<[1], [1], [0], [0], [0, 0, 1, 0], [], []>} : vector<16x16xbf16>, vector<10x16xbf16>, vector<16x10xf32> -> vector<16x10xf32>
    %cst_82 = arith.constant 2.500000e-01 : f32
    %213 = vector.broadcast %cst_82 : f32 to vector<16x10xf32>
    %214 = arith.mulf %212, %213 : vector<16x10xf32>
    %215 = arith.addf %214, %149 : vector<16x10xf32>
    %cst_83 = arith.constant dense<0xFF800000> : vector<16xf32>
    %216 = vector.multi_reduction <maximumf>, %215, %cst_83 [1] : vector<16x10xf32> to vector<16xf32>
    %217 = vector.shape_cast %216 : vector<16xf32> to vector<16x1xf32>
    %218 = vector.broadcast %217 : vector<16x1xf32> to vector<16x10xf32>
    %219 = arith.subf %215, %218 : vector<16x10xf32>
    %220 = math.exp %219 : vector<16x10xf32>
    %cst_84 = arith.constant dense<0.000000e+00> : vector<16xf32>
    %221 = vector.multi_reduction <add>, %220, %cst_84 [1] : vector<16x10xf32> to vector<16xf32>
    %222 = vector.shape_cast %221 : vector<16xf32> to vector<16x1xf32>
    %223 = tpu.reciprocal %222 {approx = true} : vector<16x1xf32> -> vector<16x1xf32>
    %224 = vector.broadcast %223 : vector<16x1xf32> to vector<16x10xf32>
    %225 = arith.mulf %220, %224 : vector<16x10xf32>
    %226 = arith.truncf %225 : vector<16x10xf32> to vector<16x10xbf16>
    %227 = vector.extract_strided_slice %152 {offsets = [0, 48], sizes = [10, 16], strides = [1, 1]} : vector<10x64xbf16> to vector<10x16xbf16>
    %cst_85 = arith.constant dense<0.000000e+00> : vector<16x16xf32>
    %228 = tpu.matmul %226, %227, %cst_85 {dimension_numbers = #tpu.dot_dimension_numbers<[1], [0], [0], [1], [0, 0, 1, 1], [], []>} : vector<16x10xbf16>, vector<10x16xbf16>, vector<16x16xf32> -> vector<16x16xf32>
    %229 = tpu.concatenate %171, %190, %209, %228 in 1 : vector<16x16xf32>, vector<16x16xf32>, vector<16x16xf32>, vector<16x16xf32> -> vector<16x64xf32>
    %c0_86 = arith.constant 0 : index
    %c0_87 = arith.constant 0 : index
    %c0_88 = arith.constant 0 : index
    %230 = vector.load %arg17[%c0_86, %c0_87, %c0_88] : memref<1x64x64xbf16, #tpu.memory_space<vmem>>, vector<1x64x64xbf16>
    %231 = vector.shape_cast %230 : vector<1x64x64xbf16> to vector<64x64xbf16>
    %232 = arith.truncf %229 : vector<16x64xf32> to vector<16x64xbf16>
    %cst_89 = arith.constant dense<0.000000e+00> : vector<16x64xf32>
    %233 = tpu.matmul %232, %231, %cst_89 {dimension_numbers = #tpu.dot_dimension_numbers<[1], [0], [0], [1], [0, 0, 1, 1], [], []>} : vector<16x64xbf16>, vector<64x64xbf16>, vector<16x64xf32> -> vector<16x64xf32>
    %234 = arith.addf %131, %233 : vector<16x64xf32>
    %c0_90 = arith.constant 0 : index
    %c0_91 = arith.constant 0 : index
    %c0_92 = arith.constant 0 : index
    %235 = vector.load %arg18[%c0_90, %c0_91, %c0_92] : memref<1x1x64xf32, #tpu.memory_space<vmem>>, vector<1x1x64xf32>
    %236 = vector.shape_cast %235 : vector<1x1x64xf32> to vector<1x64xf32>
    %237 = vector.broadcast %236 : vector<1x64xf32> to vector<16x64xf32>
    %238 = arith.addf %234, %237 : vector<16x64xf32>
    %c0_93 = arith.constant 0 : index
    %c0_94 = arith.constant 0 : index
    %c0_95 = arith.constant 0 : index
    %239 = vector.load %arg19[%c0_93, %c0_94, %c0_95] : memref<1x1x64xf32, #tpu.memory_space<vmem>>, vector<1x1x64xf32>
    %240 = vector.shape_cast %239 : vector<1x1x64xf32> to vector<1x64xf32>
    %c0_96 = arith.constant 0 : index
    %c0_97 = arith.constant 0 : index
    %c0_98 = arith.constant 0 : index
    %241 = vector.load %arg20[%c0_96, %c0_97, %c0_98] : memref<1x1x64xf32, #tpu.memory_space<vmem>>, vector<1x1x64xf32>
    %242 = vector.shape_cast %241 : vector<1x1x64xf32> to vector<1x64xf32>
    %cst_99 = arith.constant dense<0.000000e+00> : vector<16xf32>
    %243 = vector.multi_reduction <add>, %238, %cst_99 [1] : vector<16x64xf32> to vector<16xf32>
    %244 = vector.shape_cast %243 : vector<16xf32> to vector<16x1xf32>
    %cst_100 = arith.constant 6.400000e+01 : f32
    %245 = vector.broadcast %cst_100 : f32 to vector<16x1xf32>
    %246 = arith.divf %244, %245 : vector<16x1xf32>
    %247 = vector.broadcast %246 : vector<16x1xf32> to vector<16x64xf32>
    %248 = arith.subf %238, %247 : vector<16x64xf32>
    %249 = arith.mulf %248, %248 : vector<16x64xf32>
    %cst_101 = arith.constant dense<0.000000e+00> : vector<16xf32>
    %250 = vector.multi_reduction <add>, %249, %cst_101 [1] : vector<16x64xf32> to vector<16xf32>
    %251 = vector.shape_cast %250 : vector<16xf32> to vector<16x1xf32>
    %cst_102 = arith.constant 6.400000e+01 : f32
    %252 = vector.broadcast %cst_102 : f32 to vector<16x1xf32>
    %253 = arith.divf %251, %252 : vector<16x1xf32>
    %254 = vector.broadcast %246 : vector<16x1xf32> to vector<16x64xf32>
    %255 = arith.subf %238, %254 : vector<16x64xf32>
    %cst_103 = arith.constant 9.99999996E-13 : f32
    %256 = vector.broadcast %cst_103 : f32 to vector<16x1xf32>
    %257 = arith.addf %253, %256 : vector<16x1xf32>
    %258 = math.rsqrt %257 : vector<16x1xf32>
    %259 = vector.broadcast %258 : vector<16x1xf32> to vector<16x64xf32>
    %260 = arith.mulf %255, %259 : vector<16x64xf32>
    %261 = vector.broadcast %240 : vector<1x64xf32> to vector<16x64xf32>
    %262 = arith.mulf %260, %261 : vector<16x64xf32>
    %263 = vector.broadcast %242 : vector<1x64xf32> to vector<16x64xf32>
    %264 = arith.addf %262, %263 : vector<16x64xf32>
    %c0_104 = arith.constant 0 : index
    %c0_105 = arith.constant 0 : index
    %c0_106 = arith.constant 0 : index
    %265 = vector.load %arg21[%c0_104, %c0_105, %c0_106] : memref<1x64x256xbf16, #tpu.memory_space<vmem>>, vector<1x64x256xbf16>
    %266 = vector.shape_cast %265 : vector<1x64x256xbf16> to vector<64x256xbf16>
    %267 = arith.truncf %264 : vector<16x64xf32> to vector<16x64xbf16>
    %cst_107 = arith.constant dense<0.000000e+00> : vector<16x256xf32>
    %268 = tpu.matmul %267, %266, %cst_107 {dimension_numbers = #tpu.dot_dimension_numbers<[1], [0], [0], [1], [0, 0, 1, 1], [], []>} : vector<16x64xbf16>, vector<64x256xbf16>, vector<16x256xf32> -> vector<16x256xf32>
    %c0_108 = arith.constant 0 : index
    %c0_109 = arith.constant 0 : index
    %c0_110 = arith.constant 0 : index
    %269 = vector.load %arg22[%c0_108, %c0_109, %c0_110] : memref<1x1x256xf32, #tpu.memory_space<vmem>>, vector<1x1x256xf32>
    %270 = vector.shape_cast %269 : vector<1x1x256xf32> to vector<1x256xf32>
    %271 = vector.broadcast %270 : vector<1x256xf32> to vector<16x256xf32>
    %272 = arith.addf %268, %271 : vector<16x256xf32>
    %cst_111 = arith.constant 5.000000e-01 : f32
    %273 = vector.broadcast %cst_111 : f32 to vector<16x256xf32>
    %274 = arith.mulf %273, %272 : vector<16x256xf32>
    %cst_112 = arith.constant 4.471500e-02 : f32
    %275 = vector.broadcast %cst_112 : f32 to vector<16x256xf32>
    %276 = arith.mulf %275, %272 : vector<16x256xf32>
    %277 = arith.mulf %276, %272 : vector<16x256xf32>
    %278 = arith.mulf %277, %272 : vector<16x256xf32>
    %279 = arith.addf %272, %278 : vector<16x256xf32>
    %cst_113 = arith.constant 0.797884583 : f32
    %280 = vector.broadcast %cst_113 : f32 to vector<16x256xf32>
    %281 = arith.mulf %280, %279 : vector<16x256xf32>
    %282 = math.tanh %281 : vector<16x256xf32>
    %cst_114 = arith.constant 1.000000e+00 : f32
    %283 = vector.broadcast %cst_114 : f32 to vector<16x256xf32>
    %284 = arith.addf %283, %282 : vector<16x256xf32>
    %285 = arith.mulf %274, %284 : vector<16x256xf32>
    %c0_115 = arith.constant 0 : index
    %c0_116 = arith.constant 0 : index
    %c0_117 = arith.constant 0 : index
    %286 = vector.load %arg23[%c0_115, %c0_116, %c0_117] : memref<1x256x64xbf16, #tpu.memory_space<vmem>>, vector<1x256x64xbf16>
    %287 = vector.shape_cast %286 : vector<1x256x64xbf16> to vector<256x64xbf16>
    %288 = arith.truncf %285 : vector<16x256xf32> to vector<16x256xbf16>
    %cst_118 = arith.constant dense<0.000000e+00> : vector<16x64xf32>
    %289 = tpu.matmul %288, %287, %cst_118 {dimension_numbers = #tpu.dot_dimension_numbers<[1], [0], [0], [1], [0, 0, 1, 1], [], []>} : vector<16x256xbf16>, vector<256x64xbf16>, vector<16x64xf32> -> vector<16x64xf32>
    %290 = arith.addf %264, %289 : vector<16x64xf32>
    %c0_119 = arith.constant 0 : index
    %c0_120 = arith.constant 0 : index
    %c0_121 = arith.constant 0 : index
    %291 = vector.load %arg24[%c0_119, %c0_120, %c0_121] : memref<1x1x64xf32, #tpu.memory_space<vmem>>, vector<1x1x64xf32>
    %292 = vector.shape_cast %291 : vector<1x1x64xf32> to vector<1x64xf32>
    %293 = vector.broadcast %292 : vector<1x64xf32> to vector<16x64xf32>
    %294 = arith.addf %290, %293 : vector<16x64xf32>
    %c0_122 = arith.constant 0 : index
    %c0_123 = arith.constant 0 : index
    %c0_124 = arith.constant 0 : index
    %295 = vector.load %arg25[%c0_122, %c0_123, %c0_124] : memref<1x1x64xf32, #tpu.memory_space<vmem>>, vector<1x1x64xf32>
    %296 = vector.shape_cast %295 : vector<1x1x64xf32> to vector<1x64xf32>
    %c0_125 = arith.constant 0 : index
    %c0_126 = arith.constant 0 : index
    %c0_127 = arith.constant 0 : index
    %297 = vector.load %arg26[%c0_125, %c0_126, %c0_127] : memref<1x1x64xf32, #tpu.memory_space<vmem>>, vector<1x1x64xf32>
    %298 = vector.shape_cast %297 : vector<1x1x64xf32> to vector<1x64xf32>
    %cst_128 = arith.constant dense<0.000000e+00> : vector<16xf32>
    %299 = vector.multi_reduction <add>, %294, %cst_128 [1] : vector<16x64xf32> to vector<16xf32>
    %300 = vector.shape_cast %299 : vector<16xf32> to vector<16x1xf32>
    %cst_129 = arith.constant 6.400000e+01 : f32
    %301 = vector.broadcast %cst_129 : f32 to vector<16x1xf32>
    %302 = arith.divf %300, %301 : vector<16x1xf32>
    %303 = vector.broadcast %302 : vector<16x1xf32> to vector<16x64xf32>
    %304 = arith.subf %294, %303 : vector<16x64xf32>
    %305 = arith.mulf %304, %304 : vector<16x64xf32>
    %cst_130 = arith.constant dense<0.000000e+00> : vector<16xf32>
    %306 = vector.multi_reduction <add>, %305, %cst_130 [1] : vector<16x64xf32> to vector<16xf32>
    %307 = vector.shape_cast %306 : vector<16xf32> to vector<16x1xf32>
    %cst_131 = arith.constant 6.400000e+01 : f32
    %308 = vector.broadcast %cst_131 : f32 to vector<16x1xf32>
    %309 = arith.divf %307, %308 : vector<16x1xf32>
    %310 = vector.broadcast %302 : vector<16x1xf32> to vector<16x64xf32>
    %311 = arith.subf %294, %310 : vector<16x64xf32>
    %cst_132 = arith.constant 9.99999996E-13 : f32
    %312 = vector.broadcast %cst_132 : f32 to vector<16x1xf32>
    %313 = arith.addf %309, %312 : vector<16x1xf32>
    %314 = math.rsqrt %313 : vector<16x1xf32>
    %315 = vector.broadcast %314 : vector<16x1xf32> to vector<16x64xf32>
    %316 = arith.mulf %311, %315 : vector<16x64xf32>
    %317 = vector.broadcast %296 : vector<1x64xf32> to vector<16x64xf32>
    %318 = arith.mulf %316, %317 : vector<16x64xf32>
    %319 = vector.broadcast %298 : vector<1x64xf32> to vector<16x64xf32>
    %320 = arith.addf %318, %319 : vector<16x64xf32>
    %c0_133 = arith.constant 0 : index
    %c0_134 = arith.constant 0 : index
    %321 = vector.load %arg28[%c0_133, %c0_134] : memref<16x64xf32, #tpu.memory_space<vmem>>, vector<16x64xf32>
    tpu.vector_store %arg28[%c0_133, %c0_134], %320 {strides = array<i32>} : memref<16x64xf32, #tpu.memory_space<vmem>>, vector<16x64xf32>,
    %c1_i32 = arith.constant 1 : i32
    %322 = arith.cmpi eq, %arg0, %c1_i32 : i32
    %323 = arith.extui %322 : i1 to i32
    %c0_i32_135 = arith.constant 0 : i32
    %324 = arith.cmpi ne, %323, %c0_i32_135 : i32
    scf.if %324 {
      %325 = arith.truncf %320 : vector<16x64xf32> to vector<16x64xbf16>
      %c0_136 = arith.constant 0 : index
      %c0_137 = arith.constant 0 : index
      %326 = vector.load %arg27[%c0_136, %c0_137] : memref<16x64xbf16, #tpu.memory_space<vmem>>, vector<16x64xbf16>
      tpu.vector_store %arg27[%c0_136, %c0_137], %325 {strides = array<i32>} : memref<16x64xbf16, #tpu.memory_space<vmem>>, vector<16x64xbf16>,
    } else {
    }
    return
  }
  func.func @transform_0(%arg0: i32) -> (i32, i32) {
    %c0_i32 = arith.constant 0 : i32
    %c0_i32_0 = arith.constant 0 : i32
    %c0_i32_1 = arith.constant 0 : i32
    return %c0_i32, %c0_i32_0 : i32, i32
  }
  func.func @transform_1(%arg0: i32) -> (i32, i32) {
    %c0_i32 = arith.constant 0 : i32
    %c0_i32_0 = arith.constant 0 : i32
    %c0_i32_1 = arith.constant 0 : i32
    return %c0_i32, %c0_i32_0 : i32, i32
  }
  func.func @transform_2(%arg0: i32) -> (i32, i32) {
    %c0_i32 = arith.constant 0 : i32
    %c0_i32_0 = arith.constant 0 : i32
    %c0_i32_1 = arith.constant 0 : i32
    return %c0_i32, %c0_i32_0 : i32, i32
  }
  func.func @transform_3(%arg0: i32) -> (i32, i32) {
    %c0_i32 = arith.constant 0 : i32
    %c0_i32_0 = arith.constant 0 : i32
    %c0_i32_1 = arith.constant 0 : i32
    return %c0_i32, %c0_i32_0 : i32, i32
  }
  func.func @transform_4(%arg0: i32) -> (i32, i32) {
    %c0_i32 = arith.constant 0 : i32
    %c0_i32_0 = arith.constant 0 : i32
    %c0_i32_1 = arith.constant 0 : i32
    return %c0_i32, %c0_i32_0 : i32, i32
  }
  func.func @transform_5(%arg0: i32) -> (i32, i32) {
    %c0_i32 = arith.constant 0 : i32
    %c0_i32_0 = arith.constant 0 : i32
    %c0_i32_1 = arith.constant 0 : i32
    return %c0_i32, %c0_i32_0 : i32, i32
  }
  func.func @transform_6(%arg0: i32) -> (i32, i32, i32) {
    %c0_i32 = arith.constant 0 : i32
    %c0_i32_0 = arith.constant 0 : i32
    %c0_i32_1 = arith.constant 0 : i32
    return %arg0, %c0_i32, %c0_i32_0 : i32, i32, i32
  }
  func.func @transform_7(%arg0: i32) -> (i32, i32, i32) {
    %c0_i32 = arith.constant 0 : i32
    %c0_i32_0 = arith.constant 0 : i32
    %c0_i32_1 = arith.constant 0 : i32
    return %arg0, %c0_i32, %c0_i32_0 : i32, i32, i32
  }
  func.func @transform_8(%arg0: i32) -> (i32, i32, i32) {
    %c0_i32 = arith.constant 0 : i32
    %c0_i32_0 = arith.constant 0 : i32
    %c0_i32_1 = arith.constant 0 : i32
    return %arg0, %c0_i32, %c0_i32_0 : i32, i32, i32
  }
  func.func @transform_9(%arg0: i32) -> (i32, i32, i32) {
    %c0_i32 = arith.constant 0 : i32
    %c0_i32_0 = arith.constant 0 : i32
    %c0_i32_1 = arith.constant 0 : i32
    return %arg0, %c0_i32, %c0_i32_0 : i32, i32, i32
  }
  func.func @transform_10(%arg0: i32) -> (i32, i32, i32) {
    %c0_i32 = arith.constant 0 : i32
    %c0_i32_0 = arith.constant 0 : i32
    %c0_i32_1 = arith.constant 0 : i32
    return %arg0, %c0_i32, %c0_i32_0 : i32, i32, i32
  }
  func.func @transform_11(%arg0: i32) -> (i32, i32, i32) {
    %c0_i32 = arith.constant 0 : i32
    %c0_i32_0 = arith.constant 0 : i32
    %c0_i32_1 = arith.constant 0 : i32
    return %arg0, %c0_i32, %c0_i32_0 : i32, i32, i32
  }
  func.func @transform_12(%arg0: i32) -> (i32, i32, i32) {
    %c0_i32 = arith.constant 0 : i32
    %c0_i32_0 = arith.constant 0 : i32
    %c0_i32_1 = arith.constant 0 : i32
    return %arg0, %c0_i32, %c0_i32_0 : i32, i32, i32
  }
  func.func @transform_13(%arg0: i32) -> (i32, i32, i32) {
    %c0_i32 = arith.constant 0 : i32
    %c0_i32_0 = arith.constant 0 : i32
    %c0_i32_1 = arith.constant 0 : i32
    return %arg0, %c0_i32, %c0_i32_0 : i32, i32, i32
  }
  func.func @transform_14(%arg0: i32) -> (i32, i32, i32) {
    %c0_i32 = arith.constant 0 : i32
    %c0_i32_0 = arith.constant 0 : i32
    %c0_i32_1 = arith.constant 0 : i32
    return %arg0, %c0_i32, %c0_i32_0 : i32, i32, i32
  }
  func.func @transform_15(%arg0: i32) -> (i32, i32, i32) {
    %c0_i32 = arith.constant 0 : i32
    %c0_i32_0 = arith.constant 0 : i32
    %c0_i32_1 = arith.constant 0 : i32
    return %arg0, %c0_i32, %c0_i32_0 : i32, i32, i32
  }
  func.func @transform_16(%arg0: i32) -> (i32, i32, i32) {
    %c0_i32 = arith.constant 0 : i32
    %c0_i32_0 = arith.constant 0 : i32
    %c0_i32_1 = arith.constant 0 : i32
    return %arg0, %c0_i32, %c0_i32_0 : i32, i32, i32
  }
  func.func @transform_17(%arg0: i32) -> (i32, i32, i32) {
    %c0_i32 = arith.constant 0 : i32
    %c0_i32_0 = arith.constant 0 : i32
    %c0_i32_1 = arith.constant 0 : i32
    return %arg0, %c0_i32, %c0_i32_0 : i32, i32, i32
  }
  func.func @transform_18(%arg0: i32) -> (i32, i32, i32) {
    %c0_i32 = arith.constant 0 : i32
    %c0_i32_0 = arith.constant 0 : i32
    %c0_i32_1 = arith.constant 0 : i32
    return %arg0, %c0_i32, %c0_i32_0 : i32, i32, i32
  }
  func.func @transform_19(%arg0: i32) -> (i32, i32, i32) {
    %c0_i32 = arith.constant 0 : i32
    %c0_i32_0 = arith.constant 0 : i32
    %c0_i32_1 = arith.constant 0 : i32
    return %arg0, %c0_i32, %c0_i32_0 : i32, i32, i32
  }
  func.func @transform_20(%arg0: i32) -> (i32, i32, i32) {
    %c0_i32 = arith.constant 0 : i32
    %c0_i32_0 = arith.constant 0 : i32
    %c0_i32_1 = arith.constant 0 : i32
    return %arg0, %c0_i32, %c0_i32_0 : i32, i32, i32
  }
  func.func @transform_21(%arg0: i32) -> (i32, i32, i32) {
    %c0_i32 = arith.constant 0 : i32
    %c0_i32_0 = arith.constant 0 : i32
    %c0_i32_1 = arith.constant 0 : i32
    return %arg0, %c0_i32, %c0_i32_0 : i32, i32, i32
  }
  func.func @transform_22(%arg0: i32) -> (i32, i32, i32) {
    %c0_i32 = arith.constant 0 : i32
    %c0_i32_0 = arith.constant 0 : i32
    %c0_i32_1 = arith.constant 0 : i32
    return %arg0, %c0_i32, %c0_i32_0 : i32, i32, i32
  }
  func.func @transform_23(%arg0: i32) -> (i32, i32, i32) {
    %c0_i32 = arith.constant 0 : i32
    %c0_i32_0 = arith.constant 0 : i32
    %c0_i32_1 = arith.constant 0 : i32
    return %arg0, %c0_i32, %c0_i32_0 : i32, i32, i32
  }
  func.func @transform_24(%arg0: i32) -> (i32, i32, i32) {
    %c0_i32 = arith.constant 0 : i32
    %c0_i32_0 = arith.constant 0 : i32
    %c0_i32_1 = arith.constant 0 : i32
    return %arg0, %c0_i32, %c0_i32_0 : i32, i32, i32
  }
  func.func @transform_25(%arg0: i32) -> (i32, i32, i32) {
    %c0_i32 = arith.constant 0 : i32
    %c0_i32_0 = arith.constant 0 : i32
    %c0_i32_1 = arith.constant 0 : i32
    return %arg0, %c0_i32, %c0_i32_0 : i32, i32, i32
  }
  func.func @transform_26(%arg0: i32) -> (i32, i32) {
    %c0_i32 = arith.constant 0 : i32
    %c0_i32_0 = arith.constant 0 : i32
    %c0_i32_1 = arith.constant 0 : i32
    return %c0_i32, %c0_i32_0 : i32, i32
  }
}

module attributes {stable_mosaic.version = 11 : i64} {
  func.func @_clf_loss_kernel(%arg0: memref<16x64xbf16, #tpu.memory_space<vmem>>, %arg1: memref<64x64xbf16, #tpu.memory_space<vmem>>, %arg2: memref<1x64xf32, #tpu.memory_space<vmem>>, %arg3: memref<64x10xbf16, #tpu.memory_space<vmem>>, %arg4: memref<1x10xf32, #tpu.memory_space<vmem>>, %arg5: memref<2x10xf32, #tpu.memory_space<vmem>>, %arg6: memref<1x1xf32, #tpu.memory_space<vmem>>) attributes {dimension_semantics = [], scalar_prefetch = 0 : i64, scratch_operands = 0 : i64, tpu.core_type = #tpu.core_type<tc>} {
    %c0 = arith.constant 0 : index
    %c0_0 = arith.constant 0 : index
    %0 = vector.load %arg0[%c0, %c0_0] : memref<16x64xbf16, #tpu.memory_space<vmem>>, vector<1x64xbf16>
    %c8 = arith.constant 8 : index
    %c0_1 = arith.constant 0 : index
    %1 = vector.load %arg0[%c8, %c0_1] : memref<16x64xbf16, #tpu.memory_space<vmem>>, vector<1x64xbf16>
    %2 = tpu.concatenate %0, %1 in 0 : vector<1x64xbf16>, vector<1x64xbf16> -> vector<2x64xbf16>
    %3 = arith.extf %2 : vector<2x64xbf16> to vector<2x64xf32>
    %c0_2 = arith.constant 0 : index
    %c0_3 = arith.constant 0 : index
    %4 = vector.load %arg1[%c0_2, %c0_3] : memref<64x64xbf16, #tpu.memory_space<vmem>>, vector<64x64xbf16>
    %5 = arith.truncf %3 : vector<2x64xf32> to vector<2x64xbf16>
    %cst = arith.constant dense<0.000000e+00> : vector<2x64xf32>
    %6 = tpu.matmul %5, %4, %cst {dimension_numbers = #tpu.dot_dimension_numbers<[1], [0], [0], [1], [0, 0, 1, 1], [], []>} : vector<2x64xbf16>, vector<64x64xbf16>, vector<2x64xf32> -> vector<2x64xf32>
    %c0_4 = arith.constant 0 : index
    %c0_5 = arith.constant 0 : index
    %7 = vector.load %arg2[%c0_4, %c0_5] : memref<1x64xf32, #tpu.memory_space<vmem>>, vector<1x64xf32>
    %8 = vector.broadcast %7 : vector<1x64xf32> to vector<2x64xf32>
    %9 = arith.addf %6, %8 : vector<2x64xf32>
    %cst_6 = arith.constant 0.000000e+00 : f32
    %10 = vector.broadcast %cst_6 : f32 to vector<2x64xf32>
    %11 = arith.maximumf %9, %10 : vector<2x64xf32>
    %c0_7 = arith.constant 0 : index
    %c0_8 = arith.constant 0 : index
    %12 = vector.load %arg3[%c0_7, %c0_8] : memref<64x10xbf16, #tpu.memory_space<vmem>>, vector<64x10xbf16>
    %13 = arith.truncf %11 : vector<2x64xf32> to vector<2x64xbf16>
    %cst_9 = arith.constant dense<0.000000e+00> : vector<2x10xf32>
    %14 = tpu.matmul %13, %12, %cst_9 {dimension_numbers = #tpu.dot_dimension_numbers<[1], [0], [0], [1], [0, 0, 1, 1], [], []>} : vector<2x64xbf16>, vector<64x10xbf16>, vector<2x10xf32> -> vector<2x10xf32>
    %c0_10 = arith.constant 0 : index
    %c0_11 = arith.constant 0 : index
    %15 = vector.load %arg4[%c0_10, %c0_11] : memref<1x10xf32, #tpu.memory_space<vmem>>, vector<1x10xf32>
    %16 = vector.broadcast %15 : vector<1x10xf32> to vector<2x10xf32>
    %17 = arith.addf %14, %16 : vector<2x10xf32>
    %cst_12 = arith.constant dense<0xFF800000> : vector<2xf32>
    %18 = vector.multi_reduction <maximumf>, %17, %cst_12 [1] : vector<2x10xf32> to vector<2xf32>
    %19 = vector.shape_cast %18 : vector<2xf32> to vector<2x1xf32>
    %20 = vector.broadcast %19 : vector<2x1xf32> to vector<2x10xf32>
    %21 = arith.subf %17, %20 : vector<2x10xf32>
    %22 = math.exp %21 : vector<2x10xf32>
    %cst_13 = arith.constant dense<0.000000e+00> : vector<2xf32>
    %23 = vector.multi_reduction <add>, %22, %cst_13 [1] : vector<2x10xf32> to vector<2xf32>
    %24 = vector.shape_cast %23 : vector<2xf32> to vector<2x1xf32>
    %25 = math.log %24 : vector<2x1xf32>
    %26 = arith.addf %25, %19 : vector<2x1xf32>
    %27 = vector.broadcast %26 : vector<2x1xf32> to vector<2x10xf32>
    %28 = arith.subf %17, %27 : vector<2x10xf32>
    %c0_14 = arith.constant 0 : index
    %c0_15 = arith.constant 0 : index
    %29 = vector.load %arg5[%c0_14, %c0_15] : memref<2x10xf32, #tpu.memory_space<vmem>>, vector<2x10xf32>
    %cst_16 = arith.constant 0.000000e+00 : f32
    %30 = vector.broadcast %cst_16 : f32 to vector<2x10xf32>
    %31 = arith.cmpf ogt, %29, %30 : vector<2x10xf32>
    %cst_17 = arith.constant 1.000000e+00 : f32
    %32 = vector.broadcast %cst_17 : f32 to vector<2x10xf32>
    %33 = arith.select %31, %29, %32 : vector<2x10xi1>, vector<2x10xf32>
    %cst_18 = arith.constant 0.000000e+00 : f32
    %34 = vector.broadcast %cst_18 : f32 to vector<2x10xf32>
    %35 = arith.cmpf ogt, %29, %34 : vector<2x10xf32>
    %36 = math.log %33 : vector<2x10xf32>
    %37 = arith.subf %36, %28 : vector<2x10xf32>
    %38 = arith.mulf %29, %37 : vector<2x10xf32>
    %cst_19 = arith.constant 0.000000e+00 : f32
    %39 = vector.broadcast %cst_19 : f32 to vector<2x10xf32>
    %40 = arith.select %35, %38, %39 : vector<2x10xi1>, vector<2x10xf32>
    %41 = vector.shape_cast %40 : vector<2x10xf32> to vector<1x2x10xf32>
    %cst_20 = arith.constant dense<0.000000e+00> : vector<1xf32>
    %42 = vector.multi_reduction <add>, %41, %cst_20 [1, 2] : vector<1x2x10xf32> to vector<1xf32>
    %43 = vector.shape_cast %42 : vector<1xf32> to vector<1x1x1xf32>
    %44 = vector.extract %43[0, 0, 0] : f32 from vector<1x1x1xf32>
    %45 = vector.broadcast %44 : f32 to vector<1x1xf32>
    %cst_21 = arith.constant 2.000000e+00 : f32
    %46 = vector.broadcast %cst_21 : f32 to vector<1x1xf32>
    %47 = arith.divf %45, %46 : vector<1x1xf32>
    %c0_22 = arith.constant 0 : index
    %c0_23 = arith.constant 0 : index
    %48 = vector.load %arg6[%c0_22, %c0_23] : memref<1x1xf32, #tpu.memory_space<vmem>>, vector<1x1xf32>
    tpu.vector_store %arg6[%c0_22, %c0_23], %47 {strides = array<i32>} : memref<1x1xf32, #tpu.memory_space<vmem>>, vector<1x1xf32>,
    return
  }
}

</mosaic_0001>

<llo_original>
// kernel: albef_forward_train.4
$region0: #{albef_forward_train.4}
  #allocation0 [shape = 'u32[]', space=smem, size = 0x4, offset = 0x4, fixed_abs, tag = 'smem constant byte address 0x4 - core index']
  #allocation1 [shape = 'u32[144,128]{1,0:T(1,128)}', space=vmem, size = 0x12000, scoped, tag = 'internal scratch']
  %s0 = inlined_call_operand.vmem [shape: f32[8,768], index: 0, kind: input, shape index: {}]
  %s1 = inlined_call_operand.vmem [shape: bf16[768,64], index: 1, kind: input, shape index: {}]
  %s2 = inlined_call_operand.vmem [shape: f32[1,64], index: 2, kind: input, shape index: {}]
  %s3 = inlined_call_operand.vmem [shape: f32[8,64], index: 3, kind: output, shape index: {}]
  %s4 = sld [smem:[#allocation0]]
  $region22: #{albef_forward_train.4} parent=0
    _
  %s6 = ssub.s32 1, %s4
  %s7 = scalar_select 0, %s6, %s4
  // Predicated region
  $region2: #{albef_forward_train.4} parent=0 // pred_check
    _
  $region3: #{albef_forward_train.4} parent=0 // pred_check_branch
    %9 = sbr.rel (0) target = $region5
  $region4: #{albef_forward_train.4} parent=0 // pred_region
    _
  $region5: #{albef_forward_train.4} parent=0 // pred_fallthru
    _
  // Predicated region
  $region6: #{albef_forward_train.4} parent=0 // pred_check
    _
  $region7: #{albef_forward_train.4} parent=0 // pred_check_branch
    %11 = sbr.rel (0) target = $region9
  $region8: #{albef_forward_train.4} parent=0 // pred_region
    _
  $region9: #{albef_forward_train.4} parent=0 // pred_fallthru
    _
  // Predicated region
  $region10: #{albef_forward_train.4} parent=0 // pred_check
    _
  $region11: #{albef_forward_train.4} parent=0 // pred_check_branch
    %13 = sbr.rel (0) target = $region13
  $region12: #{albef_forward_train.4} parent=0 // pred_region
    _
  $region13: #{albef_forward_train.4} parent=0 // pred_fallthru
    _
  %v15 = vld [vmem:[%s0] sm:$0xff]
  %v16 = vld [vmem:[%s0 + $0x8] sm:$0xff]
  %v17 = vld [vmem:[%s0 + $0x10] sm:$0xff]
  %v18 = vld [vmem:[%s0 + $0x18] sm:$0xff]
  %v19 = vld [vmem:[%s0 + $0x20] sm:$0xff]
  %v20 = vld [vmem:[%s0 + $0x28] sm:$0xff]
  %v21 = vld [vmem:[%s1] sm:$0xf]
  %v22 = vld [vmem:[%s1 + $0x4] sm:$0xf]
  %v23 = vld [vmem:[%s1 + $0x8] sm:$0xf]
  %v24 = vld [vmem:[%s1 + $0xc] sm:$0xf]
  %v25 = vld [vmem:[%s1 + $0x10] sm:$0xf]
  %v26 = vld [vmem:[%s1 + $0x14] sm:$0xf]
  %v27 = vld [vmem:[%s1 + $0x18] sm:$0xf]
  %v28 = vld [vmem:[%s1 + $0x1c] sm:$0xf]
  %v29 = vld [vmem:[%s1 + $0x20] sm:$0xf]
  %v30 = vld [vmem:[%s1 + $0x24] sm:$0xf]
  %v31 = vld [vmem:[%s1 + $0x28] sm:$0xf]
  %v32 = vld [vmem:[%s1 + $0x2c] sm:$0xf]
  %v33 = vld [vmem:[%s1 + $0x30] sm:$0xf]
  %v34 = vld [vmem:[%s1 + $0x34] sm:$0xf]
  %v35 = vld [vmem:[%s1 + $0x38] sm:$0xf]
  %v36 = vld [vmem:[%s1 + $0x3c] sm:$0xf]
  %v37 = vld [vmem:[%s1 + $0x40] sm:$0xf]
  %v38 = vld [vmem:[%s1 + $0x44] sm:$0xf]
  %v39 = vld [vmem:[%s1 + $0x48] sm:$0xf]
  %v40 = vld [vmem:[%s1 + $0x4c] sm:$0xf]
  %v41 = vld [vmem:[%s1 + $0x50] sm:$0xf]
  %v42 = vld [vmem:[%s1 + $0x54] sm:$0xf]
  %v43 = vld [vmem:[%s1 + $0x58] sm:$0xf]
  %v44 = vld [vmem:[%s1 + $0x5c] sm:$0xf]
  %v45 = vld [vmem:[%s1 + $0x60] sm:$0xf]
  %v46 = vld [vmem:[%s1 + $0x64] sm:$0xf]
  %v47 = vld [vmem:[%s1 + $0x68] sm:$0xf]
  %v48 = vld [vmem:[%s1 + $0x6c] sm:$0xf]
  %v49 = vld [vmem:[%s1 + $0x70] sm:$0xf]
  %v50 = vld [vmem:[%s1 + $0x74] sm:$0xf]
  %v51 = vld [vmem:[%s1 + $0x78] sm:$0xf]
  %v52 = vld [vmem:[%s1 + $0x7c] sm:$0xf]
  %v53 = vld [vmem:[%s1 + $0x80] sm:$0xf]
  %v54 = vld [vmem:[%s1 + $0x84] sm:$0xf]
  %v55 = vld [vmem:[%s1 + $0x88] sm:$0xf]
  %v56 = vld [vmem:[%s1 + $0x8c] sm:$0xf]
  %v57 = vld [vmem:[%s1 + $0x90] sm:$0xf]
  %v58 = vld [vmem:[%s1 + $0x94] sm:$0xf]
  %v59 = vld [vmem:[%s1 + $0x98] sm:$0xf]
  %v60 = vld [vmem:[%s1 + $0x9c] sm:$0xf]
  %v61 = vld [vmem:[%s1 + $0xa0] sm:$0xf]
  %v62 = vld [vmem:[%s1 + $0xa4] sm:$0xf]
  %v63 = vld [vmem:[%s1 + $0xa8] sm:$0xf]
  %v64 = vld [vmem:[%s1 + $0xac] sm:$0xf]
  %v65 = vld [vmem:[%s1 + $0xb0] sm:$0xf]
  %v66 = vld [vmem:[%s1 + $0xb4] sm:$0xf]
  %v67 = vld [vmem:[%s1 + $0xb8] sm:$0xf]
  %v68 = vld [vmem:[%s1 + $0xbc] sm:$0xf]
  %v69 = vld [vmem:[%s1 + $0xc0] sm:$0xf]
  %v70 = vld [vmem:[%s1 + $0xc4] sm:$0xf]
  %v71 = vld [vmem:[%s1 + $0xc8] sm:$0xf]
  %v72 = vld [vmem:[%s1 + $0xcc] sm:$0xf]
  %v73 = vld [vmem:[%s1 + $0xd0] sm:$0xf]
  %v74 = vld [vmem:[%s1 + $0xd4] sm:$0xf]
  %v75 = vld [vmem:[%s1 + $0xd8] sm:$0xf]
  %v76 = vld [vmem:[%s1 + $0xdc] sm:$0xf]
  %v77 = vld [vmem:[%s1 + $0xe0] sm:$0xf]
  %v78 = vld [vmem:[%s1 + $0xe4] sm:$0xf]
  %v79 = vld [vmem:[%s1 + $0xe8] sm:$0xf]
  %v80 = vld [vmem:[%s1 + $0xec] sm:$0xf]
  %v81 = vld [vmem:[%s1 + $0xf0] sm:$0xf]
  %v82 = vld [vmem:[%s1 + $0xf4] sm:$0xf]
  %v83 = vld [vmem:[%s1 + $0xf8] sm:$0xf]
  %v84 = vld [vmem:[%s1 + $0xfc] sm:$0xf]
  %v85 = vld [vmem:[%s1 + $0x100] sm:$0xf]
  %v86 = vld [vmem:[%s1 + $0x104] sm:$0xf]
  %v87 = vld [vmem:[%s1 + $0x108] sm:$0xf]
  %v88 = vld [vmem:[%s1 + $0x10c] sm:$0xf]
  %v89 = vld [vmem:[%s1 + $0x110] sm:$0xf]
  %v90 = vld [vmem:[%s1 + $0x114] sm:$0xf]
  %v91 = vld [vmem:[%s1 + $0x118] sm:$0xf]
  %v92 = vld [vmem:[%s1 + $0x11c] sm:$0xf]
  %v93 = vld [vmem:[%s1 + $0x120] sm:$0xf]
  %v94 = vld [vmem:[%s1 + $0x124] sm:$0xf]
  %v95 = vld [vmem:[%s1 + $0x128] sm:$0xf]
  %v96 = vld [vmem:[%s1 + $0x12c] sm:$0xf]
  %v97 = vld [vmem:[%s1 + $0x130] sm:$0xf]
  %v98 = vld [vmem:[%s1 + $0x134] sm:$0xf]
  %v99 = vld [vmem:[%s1 + $0x138] sm:$0xf]
  %v100 = vld [vmem:[%s1 + $0x13c] sm:$0xf]
  %v101 = vld [vmem:[%s1 + $0x140] sm:$0xf]
  %v102 = vld [vmem:[%s1 + $0x144] sm:$0xf]
  %v103 = vld [vmem:[%s1 + $0x148] sm:$0xf]
  %v104 = vld [vmem:[%s1 + $0x14c] sm:$0xf]
  %v105 = vld [vmem:[%s1 + $0x150] sm:$0xf]
  %v106 = vld [vmem:[%s1 + $0x154] sm:$0xf]
  %v107 = vld [vmem:[%s1 + $0x158] sm:$0xf]
  %v108 = vld [vmem:[%s1 + $0x15c] sm:$0xf]
  %v109 = vld [vmem:[%s1 + $0x160] sm:$0xf]
  %v110 = vld [vmem:[%s1 + $0x164] sm:$0xf]
  %v111 = vld [vmem:[%s1 + $0x168] sm:$0xf]
  %v112 = vld [vmem:[%s1 + $0x16c] sm:$0xf]
  %v113 = vld [vmem:[%s1 + $0x170] sm:$0xf]
  %v114 = vld [vmem:[%s1 + $0x174] sm:$0xf]
  %v115 = vld [vmem:[%s1 + $0x178] sm:$0xf]
  %v116 = vld [vmem:[%s1 + $0x17c] sm:$0xf]
  %v117 = vpack.c.bf16 %v15, %v15
  %v118 = vpack.c.bf16 %v16, %v16
  %v119 = vpack.c.bf16 %v17, %v17
  %v120 = vpack.c.bf16 %v18, %v18
  %v121 = vpack.c.bf16 %v19, %v19
  %v122 = vpack.c.bf16 %v20, %v20
  %v123 = vld [vmem:[%s2] sm:$0x1]
  %v125 = vlaneseq
  %v126 = vshrl.u32 %v125, 7
  %v127 = vsub.s32 0, %v126
  %v128 = vrot.slane %v123, %v127
  %v226 = vunpack.c.l.b16 %v21
  %v227 = vunpack.c.l.b16 %v22
  %v228 = vunpack.c.l.b16 %v23
  %v229 = vunpack.c.l.b16 %v24
  %v230 = vunpack.c.l.b16 %v25
  %v231 = vunpack.c.l.b16 %v26
  %v232 = vunpack.c.l.b16 %v27
  %v233 = vunpack.c.l.b16 %v28
  %v234 = vunpack.c.l.b16 %v29
  %v235 = vunpack.c.l.b16 %v30
  %v236 = vunpack.c.l.b16 %v31
  %v237 = vunpack.c.l.b16 %v32
  %v238 = vunpack.c.l.b16 %v33
  %v239 = vunpack.c.l.b16 %v34
  %v240 = vunpack.c.l.b16 %v35
  %v241 = vunpack.c.l.b16 %v36
  %v242 = vunpack.c.l.b16 %v37
  %v243 = vunpack.c.l.b16 %v38
  %v244 = vunpack.c.l.b16 %v39
  %v245 = vunpack.c.l.b16 %v40
  %v246 = vunpack.c.l.b16 %v41
  %v247 = vunpack.c.l.b16 %v42
  %v248 = vunpack.c.l.b16 %v43
  %v249 = vunpack.c.l.b16 %v44
  %v250 = vunpack.c.l.b16 %v45
  %v251 = vunpack.c.l.b16 %v46
  %v252 = vunpack.c.l.b16 %v47
  %v253 = vunpack.c.l.b16 %v48
  %v254 = vunpack.c.l.b16 %v49
  %v255 = vunpack.c.l.b16 %v50
  %v256 = vunpack.c.l.b16 %v51
  %v257 = vunpack.c.l.b16 %v52
  %v258 = vunpack.c.l.b16 %v53
  %v259 = vunpack.c.l.b16 %v54
  %v260 = vunpack.c.l.b16 %v55
  %v261 = vunpack.c.l.b16 %v56
  %v262 = vunpack.c.l.b16 %v57
  %v263 = vunpack.c.l.b16 %v58
  %v264 = vunpack.c.l.b16 %v59
  %v265 = vunpack.c.l.b16 %v60
  %v266 = vunpack.c.l.b16 %v61
  %v267 = vunpack.c.l.b16 %v62
  %v268 = vunpack.c.l.b16 %v63
  %v269 = vunpack.c.l.b16 %v64
  %v270 = vunpack.c.l.b16 %v65
  %v271 = vunpack.c.l.b16 %v66
  %v272 = vunpack.c.l.b16 %v67
  %v273 = vunpack.c.l.b16 %v68
  %v274 = vunpack.c.l.b16 %v69
  %v275 = vunpack.c.l.b16 %v70
  %v276 = vunpack.c.l.b16 %v71
  %v277 = vunpack.c.l.b16 %v72
  %v278 = vunpack.c.l.b16 %v73
  %v279 = vunpack.c.l.b16 %v74
  %v280 = vunpack.c.l.b16 %v75
  %v281 = vunpack.c.l.b16 %v76
  %v282 = vunpack.c.l.b16 %v77
  %v283 = vunpack.c.l.b16 %v78
  %v284 = vunpack.c.l.b16 %v79
  %v285 = vunpack.c.l.b16 %v80
  %v286 = vunpack.c.l.b16 %v81
  %v287 = vunpack.c.l.b16 %v82
  %v288 = vunpack.c.l.b16 %v83
  %v289 = vunpack.c.l.b16 %v84
  %v290 = vunpack.c.l.b16 %v85
  %v291 = vunpack.c.l.b16 %v86
  %v292 = vunpack.c.l.b16 %v87
  %v293 = vunpack.c.l.b16 %v88
  %v294 = vunpack.c.l.b16 %v89
  %v295 = vunpack.c.l.b16 %v90
  %v296 = vunpack.c.l.b16 %v91
  %v297 = vunpack.c.l.b16 %v92
  %v298 = vunpack.c.l.b16 %v93
  %v299 = vunpack.c.l.b16 %v94
  %v300 = vunpack.c.l.b16 %v95
  %v301 = vunpack.c.l.b16 %v96
  %v302 = vunpack.c.l.b16 %v97
  %v303 = vunpack.c.l.b16 %v98
  %v304 = vunpack.c.l.b16 %v99
  %v305 = vunpack.c.l.b16 %v100
  %v306 = vunpack.c.l.b16 %v101
  %v307 = vunpack.c.l.b16 %v102
  %v308 = vunpack.c.l.b16 %v103
  %v309 = vunpack.c.l.b16 %v104
  %v310 = vunpack.c.l.b16 %v105
  %v311 = vunpack.c.l.b16 %v106
  %v312 = vunpack.c.l.b16 %v107
  %v313 = vunpack.c.l.b16 %v108
  %v314 = vunpack.c.l.b16 %v109
  %v315 = vunpack.c.l.b16 %v110
  %v316 = vunpack.c.l.b16 %v111
  %v317 = vunpack.c.l.b16 %v112
  %v318 = vunpack.c.l.b16 %v113
  %v319 = vunpack.c.l.b16 %v114
  %v320 = vunpack.c.l.b16 %v115
  %v321 = vunpack.c.l.b16 %v116
  %v322 = vpack.c.b16 %v227, %v226
  %v323 = vpack.c.b16 %v229, %v228
  %v324 = vpack.c.b16 %v231, %v230
  %v325 = vpack.c.b16 %v233, %v232
  %v326 = vpack.c.b16 %v235, %v234
  %v327 = vpack.c.b16 %v237, %v236
  %v328 = vpack.c.b16 %v239, %v238
  %v329 = vpack.c.b16 %v241, %v240
  %v330 = vpack.c.b16 %v243, %v242
  %v331 = vpack.c.b16 %v245, %v244
  %v332 = vpack.c.b16 %v247, %v246
  %v333 = vpack.c.b16 %v249, %v248
  %v334 = vpack.c.b16 %v251, %v250
  %v335 = vpack.c.b16 %v253, %v252
  %v336 = vpack.c.b16 %v255, %v254
  %v337 = vpack.c.b16 %v257, %v256
  %v338 = vpack.c.b16 %v259, %v258
  %v339 = vpack.c.b16 %v261, %v260
  %v340 = vpack.c.b16 %v263, %v262
  %v341 = vpack.c.b16 %v265, %v264
  %v342 = vpack.c.b16 %v267, %v266
  %v343 = vpack.c.b16 %v269, %v268
  %v344 = vpack.c.b16 %v271, %v270
  %v345 = vpack.c.b16 %v273, %v272
  %v346 = vpack.c.b16 %v275, %v274
  %v347 = vpack.c.b16 %v277, %v276
  %v348 = vpack.c.b16 %v279, %v278
  %v349 = vpack.c.b16 %v281, %v280
  %v350 = vpack.c.b16 %v283, %v282
  %v351 = vpack.c.b16 %v285, %v284
  %v352 = vpack.c.b16 %v287, %v286
  %v353 = vpack.c.b16 %v289, %v288
  %v354 = vpack.c.b16 %v291, %v290
  %v355 = vpack.c.b16 %v293, %v292
  %v356 = vpack.c.b16 %v295, %v294
  %v357 = vpack.c.b16 %v297, %v296
  %v358 = vpack.c.b16 %v299, %v298
  %v359 = vpack.c.b16 %v301, %v300
  %v360 = vpack.c.b16 %v303, %v302
  %v361 = vpack.c.b16 %v305, %v304
  %v362 = vpack.c.b16 %v307, %v306
  %v363 = vpack.c.b16 %v309, %v308
  %v364 = vpack.c.b16 %v311, %v310
  %v365 = vpack.c.b16 %v313, %v312
  %v366 = vpack.c.b16 %v315, %v314
  %v367 = vpack.c.b16 %v317, %v316
  %v368 = vpack.c.b16 %v319, %v318
  %v369 = vpack.c.b16 %v321, %v320
  %418 = vmatprep.subr.bf16.mxu0 0
  %419 = vmatpush1.bf16.msra.mxu0 %v329
  %420 = vmatprep.subr.bf16.mxu0 0
  %421 = vmatpush1.bf16.msra.mxu0 %v328
  %422 = vmatprep.subr.bf16.mxu0 0
  %423 = vmatpush1.bf16.msra.mxu0 %v327
  %424 = vmatprep.subr.bf16.mxu0 0
  %425 = vmatpush1.bf16.msra.mxu0 %v326
  %426 = vmatprep.subr.bf16.mxu0 0
  %427 = vmatpush1.bf16.msra.mxu0 %v325
  %428 = vmatprep.subr.bf16.mxu0 0
  %429 = vmatpush1.bf16.msra.mxu0 %v324
  %430 = vmatprep.subr.bf16.mxu0 0
  %431 = vmatpush1.bf16.msra.mxu0 %v323
  %432 = vmatprep.subr.bf16.mxu0 0
  %433 = vmatpush1.bf16.msra.mxu0 %v322
  %434 = vmatprep.subr.bf16.mxu0 0
  %435 = vmatpush2.bf16.msra.mxu0 %v337
  %436 = vmatprep.subr.bf16.mxu0 0
  %437 = vmatpush2.bf16.msra.mxu0 %v336
  %438 = vmatprep.subr.bf16.mxu0 0
  %439 = vmatpush2.bf16.msra.mxu0 %v335
  %440 = vmatprep.subr.bf16.mxu0 0
  %441 = vmatpush2.bf16.msra.mxu0 %v334
  %442 = vmatprep.subr.bf16.mxu0 0
  %443 = vmatpush2.bf16.msra.mxu0 %v333
  %444 = vmatprep.subr.bf16.mxu0 0
  %445 = vmatpush2.bf16.msra.mxu0 %v332
  %446 = vmatprep.subr.bf16.mxu0 0
  %447 = vmatpush2.bf16.msra.mxu0 %v331
  %448 = vmatprep.subr.bf16.mxu0 0
  %449 = vmatpush2.bf16.msra.mxu0 %v330
  %450 = vmatprep.mubr.bf16.mxu0 %v118
  %451 = vmatmul.mubr.bf16.gmra.mxu0 %v117
  %v452 = vpop.f32.mrf.mxu0
  %v453 = vadd.f32 %v128, %v452
  %v454 = vpop.f32.mrf.mxu0
  %v455 = vpop.f32.mrf.mxu0
  %v456 = vpop.f32.mrf.mxu0
  %457 = vdwg.mxu0
  %458 = vmatprep.subr.bf16.mxu0 0
  %459 = vmatpush1.bf16.msra.mxu0 %v345
  %460 = vmatprep.subr.bf16.mxu0 0
  %461 = vmatpush1.bf16.msra.mxu0 %v344
  %462 = vmatprep.subr.bf16.mxu0 0
  %463 = vmatpush1.bf16.msra.mxu0 %v343
  %464 = vmatprep.subr.bf16.mxu0 0
  %465 = vmatpush1.bf16.msra.mxu0 %v342
  %466 = vmatprep.subr.bf16.mxu0 0
  %467 = vmatpush1.bf16.msra.mxu0 %v341
  %468 = vmatprep.subr.bf16.mxu0 0
  %469 = vmatpush1.bf16.msra.mxu0 %v340
  %470 = vmatprep.subr.bf16.mxu0 0
  %471 = vmatpush1.bf16.msra.mxu0 %v339
  %472 = vmatprep.subr.bf16.mxu0 0
  %473 = vmatpush1.bf16.msra.mxu0 %v338
  %474 = vmatprep.subr.bf16.mxu0 0
  %475 = vmatpush2.bf16.msra.mxu0 %v353
  %476 = vmatprep.subr.bf16.mxu0 0
  %477 = vmatpush2.bf16.msra.mxu0 %v352
  %478 = vmatprep.subr.bf16.mxu0 0
  %479 = vmatpush2.bf16.msra.mxu0 %v351
  %480 = vmatprep.subr.bf16.mxu0 0
  %481 = vmatpush2.bf16.msra.mxu0 %v350
  %482 = vmatprep.subr.bf16.mxu0 0
  %483 = vmatpush2.bf16.msra.mxu0 %v349
  %484 = vmatprep.subr.bf16.mxu0 0
  %485 = vmatpush2.bf16.msra.mxu0 %v348
  %486 = vmatprep.subr.bf16.mxu0 0
  %487 = vmatpush2.bf16.msra.mxu0 %v347
  %488 = vmatprep.subr.bf16.mxu0 0
  %489 = vmatpush2.bf16.msra.mxu0 %v346
  %490 = vmatprep.mubr.bf16.mxu0 %v120
  %491 = vmatmul.mubr.bf16.gmra.mxu0 %v119
  %v492 = vpop.f32.mrf.mxu0
  %v493 = vadd.f32 %v453, %v492
  %v494 = vpop.f32.mrf.mxu0
  %v495 = vpop.f32.mrf.mxu0
  %v496 = vpop.f32.mrf.mxu0
  %497 = vdwg.mxu0
  %498 = vmatprep.subr.bf16.mxu0 0
  %499 = vmatpush1.bf16.msra.mxu0 %v361
  %500 = vmatprep.subr.bf16.mxu0 0
  %501 = vmatpush1.bf16.msra.mxu0 %v360
  %502 = vmatprep.subr.bf16.mxu0 0
  %503 = vmatpush1.bf16.msra.mxu0 %v359
  %504 = vmatprep.subr.bf16.mxu0 0
  %505 = vmatpush1.bf16.msra.mxu0 %v358
  %506 = vmatprep.subr.bf16.mxu0 0
  %507 = vmatpush1.bf16.msra.mxu0 %v357
  %508 = vmatprep.subr.bf16.mxu0 0
  %509 = vmatpush1.bf16.msra.mxu0 %v356
  %510 = vmatprep.subr.bf16.mxu0 0
  %511 = vmatpush1.bf16.msra.mxu0 %v355
  %512 = vmatprep.subr.bf16.mxu0 0
  %513 = vmatpush1.bf16.msra.mxu0 %v354
  %514 = vmatprep.subr.bf16.mxu0 0
  %515 = vmatpush2.bf16.msra.mxu0 %v369
  %516 = vmatprep.subr.bf16.mxu0 0
  %517 = vmatpush2.bf16.msra.mxu0 %v368
  %518 = vmatprep.subr.bf16.mxu0 0
  %519 = vmatpush2.bf16.msra.mxu0 %v367
  %520 = vmatprep.subr.bf16.mxu0 0
  %521 = vmatpush2.bf16.msra.mxu0 %v366
  %522 = vmatprep.subr.bf16.mxu0 0
  %523 = vmatpush2.bf16.msra.mxu0 %v365
  %524 = vmatprep.subr.bf16.mxu0 0
  %525 = vmatpush2.bf16.msra.mxu0 %v364
  %526 = vmatprep.subr.bf16.mxu0 0
  %527 = vmatpush2.bf16.msra.mxu0 %v363
  %528 = vmatprep.subr.bf16.mxu0 0
  %529 = vmatpush2.bf16.msra.mxu0 %v362
  %530 = vmatprep.mubr.bf16.mxu0 %v122
  %531 = vmatmul.mubr.bf16.gmra.mxu0 %v121
  %v532 = vpop.f32.mrf.mxu0
  %v533 = vadd.f32 %v493, %v532
  %v534 = vpop.f32.mrf.mxu0
  %v535 = vpop.f32.mrf.mxu0
  %v536 = vpop.f32.mrf.mxu0
  %537 = vdwg.mxu0
  %vm538 = vcmask 523264
  %539 = vst.msk [vmem:[%s3] sm:$0xff] %vm538, %v533
  // Predicated region
  $region14: #{albef_forward_train.4} parent=0 // pred_check
    _
  $region15: #{albef_forward_train.4} parent=0 // pred_check_branch
    %541 = sbr.rel (0) target = $region17
  $region16: #{albef_forward_train.4} parent=0 // pred_region
    _
  $region17: #{albef_forward_train.4} parent=0 // pred_fallthru
    _
  // Predicated region
  $region18: #{albef_forward_train.4} parent=0 // pred_check
    _
  $region19: #{albef_forward_train.4} parent=0 // pred_check_branch
    %543 = sbr.rel (0) target = $region21
  $region20: #{albef_forward_train.4} parent=0 // pred_region
    _
  $region21: #{albef_forward_train.4} parent=0 // pred_fallthru
    _

// kernel: albef_forward_train.7
$region0: #{albef_forward_train.7}
  #allocation0 [shape = 'u32[]', space=smem, size = 0x4, offset = 0x4, fixed_abs, tag = 'smem constant byte address 0x4 - core index']
  #allocation1 [shape = 'u32[144,128]{1,0:T(1,128)}', space=vmem, size = 0x12000, scoped, tag = 'internal scratch']
  %s0 = inlined_call_operand.vmem [shape: bf16[16,64], index: 0, kind: input, shape index: {}]
  %s1 = inlined_call_operand.vmem [shape: bf16[64,64], index: 1, kind: input, shape index: {}]
  %s2 = inlined_call_operand.vmem [shape: f32[1,64], index: 2, kind: input, shape index: {}]
  %s3 = inlined_call_operand.vmem [shape: bf16[64,10], index: 3, kind: input, shape index: {}]
  %s4 = inlined_call_operand.vmem [shape: f32[1,10], index: 4, kind: input, shape index: {}]
  %s5 = inlined_call_operand.vmem [shape: f32[2,10], index: 5, kind: input, shape index: {}]
  %s6 = inlined_call_operand.hbm [shape: f32[1,1], index: 6, kind: output, shape index: {}]
  %s7 = sld [smem:[#allocation0]]
  $region34: #{albef_forward_train.7} parent=0
    _
  %s9 = ssub.s32 1, %s7
  %s10 = scalar_select 0, %s9, %s7
  $region1: #{albef_forward_train.7} parent=0
    #allocation2 [shape = 'u8[512]{0}', space=vmem, size = 0x400, scoped, tag = 'output window, operand 0, single buffered']
    #allocation3 [shape = 's32[1]{0}', space=sflag, size = 0x4, scoped, tag = 'scoped memory for albef_forward_train.7']
    %11 = vsyncpa [#allocation3], 0
    // Predicated region
    $region2: #{albef_forward_train.7} parent=1 // pred_check
      _
    $region3: #{albef_forward_train.7} parent=1 // pred_check_branch
      %13 = sbr.rel (0) target = $region5
    $region4: #{albef_forward_train.7} parent=1 // pred_region
      _
    $region5: #{albef_forward_train.7} parent=1 // pred_fallthru
      _
    // Predicated region
    $region6: #{albef_forward_train.7} parent=1 // pred_check
      _
    $region7: #{albef_forward_train.7} parent=1 // pred_check_branch
      %15 = sbr.rel (0) target = $region9
    $region8: #{albef_forward_train.7} parent=1 // pred_region
      _
    $region9: #{albef_forward_train.7} parent=1 // pred_fallthru
      _
    // Predicated region
    $region10: #{albef_forward_train.7} parent=1 // pred_check
      _
    $region11: #{albef_forward_train.7} parent=1 // pred_check_branch
      %17 = sbr.rel (0) target = $region13
    $region12: #{albef_forward_train.7} parent=1 // pred_region
      _
    $region13: #{albef_forward_train.7} parent=1 // pred_fallthru
      _
    // Predicated region
    $region14: #{albef_forward_train.7} parent=1 // pred_check
      _
    $region15: #{albef_forward_train.7} parent=1 // pred_check_branch
      %19 = sbr.rel (0) target = $region17
    $region16: #{albef_forward_train.7} parent=1 // pred_region
      _
    $region17: #{albef_forward_train.7} parent=1 // pred_fallthru
      _
    // Predicated region
    $region18: #{albef_forward_train.7} parent=1 // pred_check
      _
    $region19: #{albef_forward_train.7} parent=1 // pred_check_branch
      %21 = sbr.rel (0) target = $region21
    $region20: #{albef_forward_train.7} parent=1 // pred_region
      _
    $region21: #{albef_forward_train.7} parent=1 // pred_fallthru
      _
    // Predicated region
    $region22: #{albef_forward_train.7} parent=1 // pred_check
      _
    $region23: #{albef_forward_train.7} parent=1 // pred_check_branch
      %23 = sbr.rel (0) target = $region25
    $region24: #{albef_forward_train.7} parent=1 // pred_region
      _
    $region25: #{albef_forward_train.7} parent=1 // pred_fallthru
      _
    %v25 = vld [vmem:[%s0] sm:$0x1]
    %v26 = vld [vmem:[%s0 + $0x4] sm:$0x1]
    %v28 = vunpack.c.l.b16 %v26
    %v29 = vpack.c.b16 %v28, %v28
    %v31 = vshll.u32 %v29, 16
    %vm34 = vcmask 1040384
    %vm35 = vsmask.f32 256
    %vm36 = vmand %vm34, %vm35
    %v37 = vsel %vm36, %v25, %v31
    %v38 = vld [vmem:[%s1] sm:$0xf]
    %v39 = vld [vmem:[%s1 + $0x4] sm:$0xf]
    %v40 = vld [vmem:[%s1 + $0x8] sm:$0xf]
    %v41 = vld [vmem:[%s1 + $0xc] sm:$0xf]
    %v42 = vld [vmem:[%s1 + $0x10] sm:$0xf]
    %v43 = vld [vmem:[%s1 + $0x14] sm:$0xf]
    %v44 = vld [vmem:[%s1 + $0x18] sm:$0xf]
    %v45 = vld [vmem:[%s1 + $0x1c] sm:$0xf]
    %v46 = vld [vmem:[%s2] sm:$0x1]
    %v48 = vlaneseq
    %v49 = vshrl.u32 %v48, 7
    %v50 = vsub.s32 0, %v49
    %v51 = vrot.slane %v46, %v50
    %v61 = vunpack.c.l.b16 %v38
    %v62 = vunpack.c.l.b16 %v39
    %v63 = vunpack.c.l.b16 %v40
    %v64 = vunpack.c.l.b16 %v41
    %v65 = vunpack.c.l.b16 %v42
    %v66 = vunpack.c.l.b16 %v43
    %v67 = vunpack.c.l.b16 %v44
    %v68 = vunpack.c.l.b16 %v45
    %v69 = vpack.c.b16 %v62, %v61
    %v70 = vpack.c.b16 %v64, %v63
    %v71 = vpack.c.b16 %v66, %v65
    %v72 = vpack.c.b16 %v68, %v67
    %vm77 = vcmask 523264
    %v79 = vsel %vm77, %v37, 0
    %81 = vmatprep.subr.bf16.mxu0 0
    %82 = vmatpush1.bf16.msra.mxu0 0
    %83 = vmatprep.subr.bf16.mxu0 0
    %84 = vmatpush1.bf16.msra.mxu0 0
    %85 = vmatprep.subr.bf16.mxu0 0
    %86 = vmatpush1.bf16.msra.mxu0 0
    %87 = vmatprep.subr.bf16.mxu0 0
    %88 = vmatpush1.bf16.msra.mxu0 0
    %89 = vmatprep.subr.bf16.mxu0 0
    %90 = vmatpush1.bf16.msra.mxu0 %v72
    %91 = vmatprep.subr.bf16.mxu0 0
    %92 = vmatpush1.bf16.msra.mxu0 %v71
    %93 = vmatprep.subr.bf16.mxu0 0
    %94 = vmatpush1.bf16.msra.mxu0 %v70
    %95 = vmatprep.subr.bf16.mxu0 0
    %96 = vmatpush1.bf16.msra.mxu0 %v69
    %97 = vmatprep.subr.bf16.mxu0 0
    %98 = vmatpush2.bf16.msra.mxu0 0
    %99 = vmatprep.subr.bf16.mxu0 0
    %100 = vmatpush2.bf16.msra.mxu0 0
    %101 = vmatprep.subr.bf16.mxu0 0
    %102 = vmatpush2.bf16.msra.mxu0 0
    %103 = vmatprep.subr.bf16.mxu0 0
    %104 = vmatpush2.bf16.msra.mxu0 0
    %105 = vmatprep.subr.bf16.mxu0 0
    %106 = vmatpush2.bf16.msra.mxu0 0
    %107 = vmatprep.subr.bf16.mxu0 0
    %108 = vmatpush2.bf16.msra.mxu0 0
    %109 = vmatprep.subr.bf16.mxu0 0
    %110 = vmatpush2.bf16.msra.mxu0 0
    %111 = vmatprep.subr.bf16.mxu0 0
    %112 = vmatpush2.bf16.msra.mxu0 0
    %113 = vmatprep.mubr.bf16.mxu0 0
    %114 = vmatmul.mubr.bf16.gmra.mxu0 %v79
    %v115 = vpop.f32.mrf.mxu0
    %v116 = vadd.f32 %v51, %v115
    %v117 = vpop.f32.mrf.mxu0
    %v118 = vpop.f32.mrf.mxu0
    %v119 = vpop.f32.mrf.mxu0
    %120 = vdwg.mxu0
    %v121 = vmax.f32 %v116, 0.0
    %v122 = vld [vmem:[%s3] sm:$0xf]
    %v123 = vld [vmem:[%s3 + $0x4] sm:$0xf]
    %v124 = vld [vmem:[%s3 + $0x8] sm:$0xf]
    %v125 = vld [vmem:[%s3 + $0xc] sm:$0xf]
    %v126 = vld [vmem:[%s3 + $0x10] sm:$0xf]
    %v127 = vld [vmem:[%s3 + $0x14] sm:$0xf]
    %v128 = vld [vmem:[%s3 + $0x18] sm:$0xf]
    %v129 = vld [vmem:[%s3 + $0x1c] sm:$0xf]
    %v130 = vpack.c.bf16 %v121, %v121
    %v131 = vld [vmem:[%s4] sm:$0x1]
    %v133 = vlaneseq
    %v134 = vshrl.u32 %v133, 7
    %v135 = vsub.s32 0, %v134
    %v136 = vrot.slane %v131, %v135
    %v146 = vunpack.c.l.b16 %v122
    %v147 = vunpack.c.l.b16 %v123
    %v148 = vunpack.c.l.b16 %v124
    %v149 = vunpack.c.l.b16 %v125
    %v150 = vunpack.c.l.b16 %v126
    %v151 = vunpack.c.l.b16 %v127
    %v152 = vunpack.c.l.b16 %v128
    %v153 = vunpack.c.l.b16 %v129
    %v154 = vpack.c.b16 %v147, %v146
    %v155 = vpack.c.b16 %v149, %v148
    %v156 = vpack.c.b16 %v151, %v150
    %v157 = vpack.c.b16 %v153, %v152
    %v163 = vsel %vm77, %v130, 0
    %165 = vmatprep.subr.bf16.mxu0 0
    %166 = vmatpush1.bf16.msra.mxu0 0
    %167 = vmatprep.subr.bf16.mxu0 0
    %168 = vmatpush1.bf16.msra.mxu0 0
    %169 = vmatprep.subr.bf16.mxu0 0
    %170 = vmatpush1.bf16.msra.mxu0 0
    %171 = vmatprep.subr.bf16.mxu0 0
    %172 = vmatpush1.bf16.msra.mxu0 0
    %173 = vmatprep.subr.bf16.mxu0 0
    %174 = vmatpush1.bf16.msra.mxu0 %v157
    %175 = vmatprep.subr.bf16.mxu0 0
    %176 = vmatpush1.bf16.msra.mxu0 %v156
    %177 = vmatprep.subr.bf16.mxu0 0
    %178 = vmatpush1.bf16.msra.mxu0 %v155
    %179 = vmatprep.subr.bf16.mxu0 0
    %180 = vmatpush1.bf16.msra.mxu0 %v154
    %181 = vmatprep.subr.bf16.mxu0 0
    %182 = vmatpush2.bf16.msra.mxu0 0
    %183 = vmatprep.subr.bf16.mxu0 0
    %184 = vmatpush2.bf16.msra.mxu0 0
    %185 = vmatprep.subr.bf16.mxu0 0
    %186 = vmatpush2.bf16.msra.mxu0 0
    %187 = vmatprep.subr.bf16.mxu0 0
    %188 = vmatpush2.bf16.msra.mxu0 0
    %189 = vmatprep.subr.bf16.mxu0 0
    %190 = vmatpush2.bf16.msra.mxu0 0
    %191 = vmatprep.subr.bf16.mxu0 0
    %192 = vmatpush2.bf16.msra.mxu0 0
    %193 = vmatprep.subr.bf16.mxu0 0
    %194 = vmatpush2.bf16.msra.mxu0 0
    %195 = vmatprep.subr.bf16.mxu0 0
    %196 = vmatpush2.bf16.msra.mxu0 0
    %197 = vmatprep.mubr.bf16.mxu0 0
    %198 = vmatmul.mubr.bf16.gmra.mxu0 %v163
    %v199 = vpop.f32.mrf.mxu0
    %v200 = vadd.f32 %v136, %v199
    %v201 = vpop.f32.mrf.mxu0
    %v202 = vpop.f32.mrf.mxu0
    %v203 = vpop.f32.mrf.mxu0
    %204 = vdwg.mxu0
    %vm205 = vcmask 74752
    %v206 = vsel %vm205, %v200, -inf
    %207 = vmax.xlane.f32.xlu0 %v206
    %v208 = vpop.xlane.xlu0 %207
    %v209 = vsub.f32 %v200, %v208
    %v210 = vmul.f32 %v209, 1.442695
    %v211 = vpow.pop %v210
    %v212 = vsel %vm205, %v211, 0.0
    %213 = vadd.xlane.f32.xlu0 %v212
    %v214 = vpop.xlane.xlu0 %213
    %v215 = vlog2.pop %v214
    %v216 = vmul.f32 %v215, 0.6931472
    %v217 = vadd.f32 %v216, %v208
    %v218 = vsub.f32 %v200, %v217
    %v219 = vld [vmem:[%s5] sm:$0x3]
    %vm220 = vcmp.gt.f32.partialorder %v219, 0.0
    %v221 = vsel %vm220, %v219, 1.0
    %v222 = vlog2.pop %v221
    %v223 = vmul.f32 %v222, 0.6931472
    %v224 = vsub.f32 %v223, %v218
    %v225 = vmul.f32 %v219, %v224
    %v226 = vsel %vm220, %v225, 0.0
    %v227 = vsel %vm205, %v226, 0.0
    %228 = vadd.xlane.f32.xlu0 %v227
    %v229 = vpop.xlane.xlu0 %228
    %v230 = vrot.slane %v229, 4
    %v231 = vadd.f32 %v229, %v230
    %v232 = vrot.slane %v231, 2
    %v233 = vadd.f32 %v231, %v232
    %v234 = vrot.slane %v233, 1
    %v235 = vadd.f32 %v233, %v234
    %s236 = vtos %v235
    %v237 = vstv %s236
    %v238 = vrcp.pop 2.0
    %v239 = vmul.f32 %v237, %v238
    %vm240 = vcmask 0
    %241 = vst.msk [vmem:[#allocation2] sm:$0x1] %vm240, %v239
    // Predicated region
    $region26: #{albef_forward_train.7} parent=1 // pred_check
      _
    $region27: #{albef_forward_train.7} parent=1 // pred_check_branch
      %243 = sbr.rel (0) target = $region29
    $region28: #{albef_forward_train.7} parent=1 // pred_region
      %s245 = ssub.s32 16, 16
      %246 = vsyncadd [#allocation3], %s245
      %s248 = sshll.u32 [#allocation2], 4
      %s249 = int_to_ptr.vmem [resolvable:$true] %s248
      %251 = dma.vmem_to_hbm [thread:$0]  %s249, 16, %s6, [#allocation3]
    $region29: #{albef_forward_train.7} parent=1 // pred_fallthru
      _
    // Predicated region
    $region30: #{albef_forward_train.7} parent=1 // pred_check
      _
    $region31: #{albef_forward_train.7} parent=1 // pred_check_branch
      %253 = sbr.rel (0) target = $region33
    $region32: #{albef_forward_train.7} parent=1 // pred_region
      %254 = dma.done [#allocation3], 16
    $region33: #{albef_forward_train.7} parent=1 // pred_fallthru
      _
    %255 = vsyncpa [#allocation3], 1

// kernel: albef_forward_train.5
$region0: #{albef_forward_train.5}
  #allocation0 [shape = 'u32[]', space=smem, size = 0x4, offset = 0x4, fixed_abs, tag = 'smem constant byte address 0x4 - core index']
  #allocation1 [shape = 'u32[144,128]{1,0:T(1,128)}', space=vmem, size = 0x12000, scoped, tag = 'internal scratch']
  #allocation2 [shape = 'f32[10,64]{1,0:T(8,128)}', space=vmem, size = 0x2000, scoped, tag = 'scratch operand']
  %s0 = inlined_call_operand.vmem [shape: f32[10,64], index: 0, kind: input, shape index: {}]
  %s1 = inlined_call_operand.vmem [shape: f32[1,64], index: 1, kind: input, shape index: {}]
  %s2 = inlined_call_operand.vmem [shape: f32[1,64], index: 2, kind: input, shape index: {}]
  %s3 = inlined_call_operand.vmem [shape: f32[10,10], index: 3, kind: input, shape index: {}]
  %s4 = inlined_call_operand.vmem [shape: f32[2,1,64], index: 4, kind: input, shape index: {}]
  %s5 = inlined_call_operand.vmem [shape: f32[2,1,64], index: 5, kind: input, shape index: {}]
  %s6 = inlined_call_operand.vmem [shape: bf16[2,64,192], index: 6, kind: input, shape index: {}]
  %s7 = inlined_call_operand.vmem [shape: f32[2,1,192], index: 7, kind: input, shape index: {}]
  %s8 = inlined_call_operand.vmem [shape: bf16[2,64,64], index: 8, kind: input, shape index: {}]
  %s9 = inlined_call_operand.vmem [shape: f32[2,1,64], index: 9, kind: input, shape index: {}]
  %s10 = inlined_call_operand.vmem [shape: f32[2,1,64], index: 10, kind: input, shape index: {}]
  %s11 = inlined_call_operand.vmem [shape: f32[2,1,64], index: 11, kind: input, shape index: {}]
  %s12 = inlined_call_operand.vmem [shape: bf16[2,64,256], index: 12, kind: input, shape index: {}]
  %s13 = inlined_call_operand.vmem [shape: f32[2,1,256], index: 13, kind: input, shape index: {}]
  %s14 = inlined_call_operand.vmem [shape: bf16[2,256,64], index: 14, kind: input, shape index: {}]
  %s15 = inlined_call_operand.vmem [shape: f32[2,1,64], index: 15, kind: input, shape index: {}]
  %s16 = inlined_call_operand.vmem [shape: bf16[10,64], index: 16, kind: output, shape index: {}]
  %s17 = sld [smem:[#allocation0]]
  $region105: #{albef_forward_train.5} parent=0
    _
  %s19 = ssub.s32 1, %s17
  %s20 = scalar_select 0, %s19, %s17
  loop: start=0, step=1, limit=4
  $region2: #{albef_forward_train.5} parent=0 // loop_pre_header
    _
  $region3: #{albef_forward_train.5} parent=0 // loop_header
    %s22 = sphi 0, %s26
    %p23 = scmp.ge.s32.totalorder %s22, 4
    %s30 = sphi 0, %s30
    %s32 = sphi 0, %s30
    %s33 = sphi 0, %s32
    %s47 = sphi 0, %s33
    %s51 = sphi 0, %s51
    %s53 = sphi 0, %s51
    %s54 = sphi 0, %s53
    %s68 = sphi 0, %s54
    %s72 = sphi 0, %s72
    %s74 = sphi 0, %s72
    %s75 = sphi 0, %s74
    %s89 = sphi 0, %s75
    %s93 = sphi 0, %s93
    %s95 = sphi 0, %s93
    %s96 = sphi 0, %s95
    %s110 = sphi 0, %s96
    %s116 = sphi 0, %s118
    %s119 = sphi 0, %s116
    %s120 = sphi 0, %s119
    %s136 = sphi 0, %s120
    %s142 = sphi 0, %s144
    %s145 = sphi 0, %s142
    %s146 = sphi 0, %s145
    %s162 = sphi 0, %s146
    %s168 = sphi 0, %s170
    %s171 = sphi 0, %s168
    %s172 = sphi 0, %s171
    %s188 = sphi 0, %s172
    %s194 = sphi 0, %s196
    %s197 = sphi 0, %s194
    %s198 = sphi 0, %s197
    %s214 = sphi 0, %s198
    %s220 = sphi 0, %s222
    %s223 = sphi 0, %s220
    %s224 = sphi 0, %s223
    %s240 = sphi 0, %s224
    %s246 = sphi 0, %s248
    %s249 = sphi 0, %s246
    %s250 = sphi 0, %s249
    %s266 = sphi 0, %s250
    %s272 = sphi 0, %s274
    %s275 = sphi 0, %s272
    %s276 = sphi 0, %s275
    %s292 = sphi 0, %s276
    %s298 = sphi 0, %s300
    %s301 = sphi 0, %s298
    %s302 = sphi 0, %s301
    %s318 = sphi 0, %s302
    %s324 = sphi 0, %s326
    %s327 = sphi 0, %s324
    %s328 = sphi 0, %s327
    %s344 = sphi 0, %s328
    %s350 = sphi 0, %s352
    %s353 = sphi 0, %s350
    %s354 = sphi 0, %s353
    %s370 = sphi 0, %s354
    %s376 = sphi 0, %s378
    %s379 = sphi 0, %s376
    %s380 = sphi 0, %s379
    %s396 = sphi 0, %s380
    %s402 = sphi 0, %s404
    %s405 = sphi 0, %s402
    %s406 = sphi 0, %s405
    %s422 = sphi 0, %s406
    %s426 = sphi 0, %s426
    %s428 = sphi 0, %s426
    %s429 = sphi 0, %s428
    %s443 = sphi 0, %s429
  $region4: #{albef_forward_train.5} parent=0 // loop_header_branch
    %25 = sbr.rel (%p23) target = $region8
  $region5: #{albef_forward_train.5} parent=0 // loop_body
    %s27 = ssub.s32 %s22, 1
    %s28 = ssub.s32 %s22, 2
    %s29 = sadd.s32 %s22, 1
    %s31 = sadd.s32 %s30, 1
    %p34 = scmp.eq.s32.totalorder %s22, 1
    %p35 = scmp.ne.s32.totalorder %s30, %s32
    %p36 = scmp.eq.s32.totalorder %s22, 0
    %p37 = por %p35, %p36
    %p38 = scmp.ne.s32.totalorder %s30, %s32
    %p39 = scmp.eq.s32.totalorder %s27, 1
    %p40 = por %p38, %p39
    %p41 = scmp.ne.s32.totalorder %s32, %s33
    %p42 = scmp.eq.s32.totalorder %s27, 0
    %p43 = por %p41, %p42
    %p44 = scmp.ne.s32.totalorder %s32, %s33
    %p45 = scmp.eq.s32.totalorder %s28, 1
    %p46 = por %p44, %p45
    %p48 = scmp.ne.s32.totalorder %s33, %s47
    %p49 = scmp.eq.s32.totalorder %s28, 0
    %p50 = por %p48, %p49
    %s52 = sadd.s32 %s51, 1
    %p55 = scmp.eq.s32.totalorder %s22, 1
    %p56 = scmp.ne.s32.totalorder %s51, %s53
    %p57 = scmp.eq.s32.totalorder %s22, 0
    %p58 = por %p56, %p57
    %p59 = scmp.ne.s32.totalorder %s51, %s53
    %p60 = scmp.eq.s32.totalorder %s27, 1
    %p61 = por %p59, %p60
    %p62 = scmp.ne.s32.totalorder %s53, %s54
    %p63 = scmp.eq.s32.totalorder %s27, 0
    %p64 = por %p62, %p63
    %p65 = scmp.ne.s32.totalorder %s53, %s54
    %p66 = scmp.eq.s32.totalorder %s28, 1
    %p67 = por %p65, %p66
    %p69 = scmp.ne.s32.totalorder %s54, %s68
    %p70 = scmp.eq.s32.totalorder %s28, 0
    %p71 = por %p69, %p70
    %s73 = sadd.s32 %s72, 1
    %p76 = scmp.eq.s32.totalorder %s22, 1
    %p77 = scmp.ne.s32.totalorder %s72, %s74
    %p78 = scmp.eq.s32.totalorder %s22, 0
    %p79 = por %p77, %p78
    %p80 = scmp.ne.s32.totalorder %s72, %s74
    %p81 = scmp.eq.s32.totalorder %s27, 1
    %p82 = por %p80, %p81
    %p83 = scmp.ne.s32.totalorder %s74, %s75
    %p84 = scmp.eq.s32.totalorder %s27, 0
    %p85 = por %p83, %p84
    %p86 = scmp.ne.s32.totalorder %s74, %s75
    %p87 = scmp.eq.s32.totalorder %s28, 1
    %p88 = por %p86, %p87
    %p90 = scmp.ne.s32.totalorder %s75, %s89
    %p91 = scmp.eq.s32.totalorder %s28, 0
    %p92 = por %p90, %p91
    %s94 = sadd.s32 %s93, 1
    %p97 = scmp.eq.s32.totalorder %s22, 1
    %p98 = scmp.ne.s32.totalorder %s93, %s95
    %p99 = scmp.eq.s32.totalorder %s22, 0
    %p100 = por %p98, %p99
    %p101 = scmp.ne.s32.totalorder %s93, %s95
    %p102 = scmp.eq.s32.totalorder %s27, 1
    %p103 = por %p101, %p102
    %p104 = scmp.ne.s32.totalorder %s95, %s96
    %p105 = scmp.eq.s32.totalorder %s27, 0
    %p106 = por %p104, %p105
    %p107 = scmp.ne.s32.totalorder %s95, %s96
    %p108 = scmp.eq.s32.totalorder %s28, 1
    %p109 = por %p107, %p108
    %p111 = scmp.ne.s32.totalorder %s96, %s110
    %p112 = scmp.eq.s32.totalorder %s28, 0
    %p113 = por %p111, %p112
    %s114 = ssub.s32 %s22, %s29
    %p115 = scmp.eq.s32.totalorder %s114, 0
    %s117 = sadd.s32 %s116, 1
    %s118 = scalar_select %p115, %s116, %s117
    %p121 = pneg %p115
    %p122 = scmp.eq.s32.totalorder %s22, 1
    %p123 = por %p121, %p122
    %p124 = scmp.ne.s32.totalorder %s116, %s119
    %p125 = scmp.eq.s32.totalorder %s22, 0
    %p126 = por %p124, %p125
    %p127 = scmp.ne.s32.totalorder %s116, %s119
    %p128 = scmp.eq.s32.totalorder %s27, 1
    %p129 = por %p127, %p128
    %p130 = scmp.ne.s32.totalorder %s119, %s120
    %p131 = scmp.eq.s32.totalorder %s27, 0
    %p132 = por %p130, %p131
    %p133 = scmp.ne.s32.totalorder %s119, %s120
    %p134 = scmp.eq.s32.totalorder %s28, 1
    %p135 = por %p133, %p134
    %p137 = scmp.ne.s32.totalorder %s120, %s136
    %p138 = scmp.eq.s32.totalorder %s28, 0
    %p139 = por %p137, %p138
    %s140 = ssub.s32 %s22, %s29
    %p141 = scmp.eq.s32.totalorder %s140, 0
    %s143 = sadd.s32 %s142, 1
    %s144 = scalar_select %p141, %s142, %s143
    %p147 = pneg %p141
    %p148 = scmp.eq.s32.totalorder %s22, 1
    %p149 = por %p147, %p148
    %p150 = scmp.ne.s32.totalorder %s142, %s145
    %p151 = scmp.eq.s32.totalorder %s22, 0
    %p152 = por %p150, %p151
    %p153 = scmp.ne.s32.totalorder %s142, %s145
    %p154 = scmp.eq.s32.totalorder %s27, 1
    %p155 = por %p153, %p154
    %p156 = scmp.ne.s32.totalorder %s145, %s146
    %p157 = scmp.eq.s32.totalorder %s27, 0
    %p158 = por %p156, %p157
    %p159 = scmp.ne.s32.totalorder %s145, %s146
    %p160 = scmp.eq.s32.totalorder %s28, 1
    %p161 = por %p159, %p160
    %p163 = scmp.ne.s32.totalorder %s146, %s162
    %p164 = scmp.eq.s32.totalorder %s28, 0
    %p165 = por %p163, %p164
    %s166 = ssub.s32 %s22, %s29
    %p167 = scmp.eq.s32.totalorder %s166, 0
    %s169 = sadd.s32 %s168, 1
    %s170 = scalar_select %p167, %s168, %s169
    %p173 = pneg %p167
    %p174 = scmp.eq.s32.totalorder %s22, 1
    %p175 = por %p173, %p174
    %p176 = scmp.ne.s32.totalorder %s168, %s171
    %p177 = scmp.eq.s32.totalorder %s22, 0
    %p178 = por %p176, %p177
    %p179 = scmp.ne.s32.totalorder %s168, %s171
    %p180 = scmp.eq.s32.totalorder %s27, 1
    %p181 = por %p179, %p180
    %p182 = scmp.ne.s32.totalorder %s171, %s172
    %p183 = scmp.eq.s32.totalorder %s27, 0
    %p184 = por %p182, %p183
    %p185 = scmp.ne.s32.totalorder %s171, %s172
    %p186 = scmp.eq.s32.totalorder %s28, 1
    %p187 = por %p185, %p186
    %p189 = scmp.ne.s32.totalorder %s172, %s188
    %p190 = scmp.eq.s32.totalorder %s28, 0
    %p191 = por %p189, %p190
    %s192 = ssub.s32 %s22, %s29
    %p193 = scmp.eq.s32.totalorder %s192, 0
    %s195 = sadd.s32 %s194, 1
    %s196 = scalar_select %p193, %s194, %s195
    %p199 = pneg %p193
    %p200 = scmp.eq.s32.totalorder %s22, 1
    %p201 = por %p199, %p200
    %p202 = scmp.ne.s32.totalorder %s194, %s197
    %p203 = scmp.eq.s32.totalorder %s22, 0
    %p204 = por %p202, %p203
    %p205 = scmp.ne.s32.totalorder %s194, %s197
    %p206 = scmp.eq.s32.totalorder %s27, 1
    %p207 = por %p205, %p206
    %p208 = scmp.ne.s32.totalorder %s197, %s198
    %p209 = scmp.eq.s32.totalorder %s27, 0
    %p210 = por %p208, %p209
    %p211 = scmp.ne.s32.totalorder %s197, %s198
    %p212 = scmp.eq.s32.totalorder %s28, 1
    %p213 = por %p211, %p212
    %p215 = scmp.ne.s32.totalorder %s198, %s214
    %p216 = scmp.eq.s32.totalorder %s28, 0
    %p217 = por %p215, %p216
    %s218 = ssub.s32 %s22, %s29
    %p219 = scmp.eq.s32.totalorder %s218, 0
    %s221 = sadd.s32 %s220, 1
    %s222 = scalar_select %p219, %s220, %s221
    %p225 = pneg %p219
    %p226 = scmp.eq.s32.totalorder %s22, 1
    %p227 = por %p225, %p226
    %p228 = scmp.ne.s32.totalorder %s220, %s223
    %p229 = scmp.eq.s32.totalorder %s22, 0
    %p230 = por %p228, %p229
    %p231 = scmp.ne.s32.totalorder %s220, %s223
    %p232 = scmp.eq.s32.totalorder %s27, 1
    %p233 = por %p231, %p232
    %p234 = scmp.ne.s32.totalorder %s223, %s224
    %p235 = scmp.eq.s32.totalorder %s27, 0
    %p236 = por %p234, %p235
    %p237 = scmp.ne.s32.totalorder %s223, %s224
    %p238 = scmp.eq.s32.totalorder %s28, 1
    %p239 = por %p237, %p238
    %p241 = scmp.ne.s32.totalorder %s224, %s240
    %p242 = scmp.eq.s32.totalorder %s28, 0
    %p243 = por %p241, %p242
    %s244 = ssub.s32 %s22, %s29
    %p245 = scmp.eq.s32.totalorder %s244, 0
    %s247 = sadd.s32 %s246, 1
    %s248 = scalar_select %p245, %s246, %s247
    %p251 = pneg %p245
    %p252 = scmp.eq.s32.totalorder %s22, 1
    %p253 = por %p251, %p252
    %p254 = scmp.ne.s32.totalorder %s246, %s249
    %p255 = scmp.eq.s32.totalorder %s22, 0
    %p256 = por %p254, %p255
    %p257 = scmp.ne.s32.totalorder %s246, %s249
    %p258 = scmp.eq.s32.totalorder %s27, 1
    %p259 = por %p257, %p258
    %p260 = scmp.ne.s32.totalorder %s249, %s250
    %p261 = scmp.eq.s32.totalorder %s27, 0
    %p262 = por %p260, %p261
    %p263 = scmp.ne.s32.totalorder %s249, %s250
    %p264 = scmp.eq.s32.totalorder %s28, 1
    %p265 = por %p263, %p264
    %p267 = scmp.ne.s32.totalorder %s250, %s266
    %p268 = scmp.eq.s32.totalorder %s28, 0
    %p269 = por %p267, %p268
    %s270 = ssub.s32 %s22, %s29
    %p271 = scmp.eq.s32.totalorder %s270, 0
    %s273 = sadd.s32 %s272, 1
    %s274 = scalar_select %p271, %s272, %s273
    %p277 = pneg %p271
    %p278 = scmp.eq.s32.totalorder %s22, 1
    %p279 = por %p277, %p278
    %p280 = scmp.ne.s32.totalorder %s272, %s275
    %p281 = scmp.eq.s32.totalorder %s22, 0
    %p282 = por %p280, %p281
    %p283 = scmp.ne.s32.totalorder %s272, %s275
    %p284 = scmp.eq.s32.totalorder %s27, 1
    %p285 = por %p283, %p284
    %p286 = scmp.ne.s32.totalorder %s275, %s276
    %p287 = scmp.eq.s32.totalorder %s27, 0
    %p288 = por %p286, %p287
    %p289 = scmp.ne.s32.totalorder %s275, %s276
    %p290 = scmp.eq.s32.totalorder %s28, 1
    %p291 = por %p289, %p290
    %p293 = scmp.ne.s32.totalorder %s276, %s292
    %p294 = scmp.eq.s32.totalorder %s28, 0
    %p295 = por %p293, %p294
    %s296 = ssub.s32 %s22, %s29
    %p297 = scmp.eq.s32.totalorder %s296, 0
    %s299 = sadd.s32 %s298, 1
    %s300 = scalar_select %p297, %s298, %s299
    %p303 = pneg %p297
    %p304 = scmp.eq.s32.totalorder %s22, 1
    %p305 = por %p303, %p304
    %p306 = scmp.ne.s32.totalorder %s298, %s301
    %p307 = scmp.eq.s32.totalorder %s22, 0
    %p308 = por %p306, %p307
    %p309 = scmp.ne.s32.totalorder %s298, %s301
    %p310 = scmp.eq.s32.totalorder %s27, 1
    %p311 = por %p309, %p310
    %p312 = scmp.ne.s32.totalorder %s301, %s302
    %p313 = scmp.eq.s32.totalorder %s27, 0
    %p314 = por %p312, %p313
    %p315 = scmp.ne.s32.totalorder %s301, %s302
    %p316 = scmp.eq.s32.totalorder %s28, 1
    %p317 = por %p315, %p316
    %p319 = scmp.ne.s32.totalorder %s302, %s318
    %p320 = scmp.eq.s32.totalorder %s28, 0
    %p321 = por %p319, %p320
    %s322 = ssub.s32 %s22, %s29
    %p323 = scmp.eq.s32.totalorder %s322, 0
    %s325 = sadd.s32 %s324, 1
    %s326 = scalar_select %p323, %s324, %s325
    %p329 = pneg %p323
    %p330 = scmp.eq.s32.totalorder %s22, 1
    %p331 = por %p329, %p330
    %p332 = scmp.ne.s32.totalorder %s324, %s327
    %p333 = scmp.eq.s32.totalorder %s22, 0
    %p334 = por %p332, %p333
    %p335 = scmp.ne.s32.totalorder %s324, %s327
    %p336 = scmp.eq.s32.totalorder %s27, 1
    %p337 = por %p335, %p336
    %p338 = scmp.ne.s32.totalorder %s327, %s328
    %p339 = scmp.eq.s32.totalorder %s27, 0
    %p340 = por %p338, %p339
    %p341 = scmp.ne.s32.totalorder %s327, %s328
    %p342 = scmp.eq.s32.totalorder %s28, 1
    %p343 = por %p341, %p342
    %p345 = scmp.ne.s32.totalorder %s328, %s344
    %p346 = scmp.eq.s32.totalorder %s28, 0
    %p347 = por %p345, %p346
    %s348 = ssub.s32 %s22, %s29
    %p349 = scmp.eq.s32.totalorder %s348, 0
    %s351 = sadd.s32 %s350, 1
    %s352 = scalar_select %p349, %s350, %s351
    %p355 = pneg %p349
    %p356 = scmp.eq.s32.totalorder %s22, 1
    %p357 = por %p355, %p356
    %p358 = scmp.ne.s32.totalorder %s350, %s353
    %p359 = scmp.eq.s32.totalorder %s22, 0
    %p360 = por %p358, %p359
    %p361 = scmp.ne.s32.totalorder %s350, %s353
    %p362 = scmp.eq.s32.totalorder %s27, 1
    %p363 = por %p361, %p362
    %p364 = scmp.ne.s32.totalorder %s353, %s354
    %p365 = scmp.eq.s32.totalorder %s27, 0
    %p366 = por %p364, %p365
    %p367 = scmp.ne.s32.totalorder %s353, %s354
    %p368 = scmp.eq.s32.totalorder %s28, 1
    %p369 = por %p367, %p368
    %p371 = scmp.ne.s32.totalorder %s354, %s370
    %p372 = scmp.eq.s32.totalorder %s28, 0
    %p373 = por %p371, %p372
    %s374 = ssub.s32 %s22, %s29
    %p375 = scmp.eq.s32.totalorder %s374, 0
    %s377 = sadd.s32 %s376, 1
    %s378 = scalar_select %p375, %s376, %s377
    %p381 = pneg %p375
    %p382 = scmp.eq.s32.totalorder %s22, 1
    %p383 = por %p381, %p382
    %p384 = scmp.ne.s32.totalorder %s376, %s379
    %p385 = scmp.eq.s32.totalorder %s22, 0
    %p386 = por %p384, %p385
    %p387 = scmp.ne.s32.totalorder %s376, %s379
    %p388 = scmp.eq.s32.totalorder %s27, 1
    %p389 = por %p387, %p388
    %p390 = scmp.ne.s32.totalorder %s379, %s380
    %p391 = scmp.eq.s32.totalorder %s27, 0
    %p392 = por %p390, %p391
    %p393 = scmp.ne.s32.totalorder %s379, %s380
    %p394 = scmp.eq.s32.totalorder %s28, 1
    %p395 = por %p393, %p394
    %p397 = scmp.ne.s32.totalorder %s380, %s396
    %p398 = scmp.eq.s32.totalorder %s28, 0
    %p399 = por %p397, %p398
    %s400 = ssub.s32 %s22, %s29
    %p401 = scmp.eq.s32.totalorder %s400, 0
    %s403 = sadd.s32 %s402, 1
    %s404 = scalar_select %p401, %s402, %s403
    %p407 = pneg %p401
    %p408 = scmp.eq.s32.totalorder %s22, 1
    %p409 = por %p407, %p408
    %p410 = scmp.ne.s32.totalorder %s402, %s405
    %p411 = scmp.eq.s32.totalorder %s22, 0
    %p412 = por %p410, %p411
    %p413 = scmp.ne.s32.totalorder %s402, %s405
    %p414 = scmp.eq.s32.totalorder %s27, 1
    %p415 = por %p413, %p414
    %p416 = scmp.ne.s32.totalorder %s405, %s406
    %p417 = scmp.eq.s32.totalorder %s27, 0
    %p418 = por %p416, %p417
    %p419 = scmp.ne.s32.totalorder %s405, %s406
    %p420 = scmp.eq.s32.totalorder %s28, 1
    %p421 = por %p419, %p420
    %p423 = scmp.ne.s32.totalorder %s406, %s422
    %p424 = scmp.eq.s32.totalorder %s28, 0
    %p425 = por %p423, %p424
    %s427 = sadd.s32 %s426, 1
    %p430 = scmp.eq.s32.totalorder %s22, 1
    %p431 = scmp.ne.s32.totalorder %s426, %s428
    %p432 = scmp.eq.s32.totalorder %s22, 0
    %p433 = por %p431, %p432
    %p434 = scmp.ne.s32.totalorder %s426, %s428
    %p435 = scmp.eq.s32.totalorder %s27, 1
    %p436 = por %p434, %p435
    %p437 = scmp.ne.s32.totalorder %s428, %s429
    %p438 = scmp.eq.s32.totalorder %s27, 0
    %p439 = por %p437, %p438
    %p440 = scmp.ne.s32.totalorder %s428, %s429
    %p441 = scmp.eq.s32.totalorder %s28, 1
    %p442 = por %p440, %p441
    %p444 = scmp.ne.s32.totalorder %s429, %s443
    %p445 = scmp.eq.s32.totalorder %s28, 0
    %p446 = por %p444, %p445
    %p447 = scmp.le.s32.totalorder 1, %s22
    %p448 = scmp.lt.s32.totalorder %s22, 3
    %p449 = pnand %p447, %p448
    %p450 = pneg %p449
    // Predicated region
    $region9: #{albef_forward_train.5} parent=5 // pred_check
      _
    $region10: #{albef_forward_train.5} parent=5 // pred_check_branch
      %452 = sbr.rel (%p449) target = $region12
    $region11: #{albef_forward_train.5} parent=5 // pred_region
      %s453 = ssub.s32 %s22, 1
      // Predicated region
      $region13: #{albef_forward_train.5} parent=11 // pred_check
        %p454 = pneg %p43
      $region14: #{albef_forward_train.5} parent=11 // pred_check_branch
        %456 = sbr.rel (%p454) target = $region16
      $region15: #{albef_forward_train.5} parent=11 // pred_region
        _
      $region16: #{albef_forward_train.5} parent=11 // pred_fallthru
        _
      // Predicated region
      $region17: #{albef_forward_train.5} parent=11 // pred_check
        %p457 = pneg %p64
      $region18: #{albef_forward_train.5} parent=11 // pred_check_branch
        %459 = sbr.rel (%p457) target = $region20
      $region19: #{albef_forward_train.5} parent=11 // pred_region
        _
      $region20: #{albef_forward_train.5} parent=11 // pred_fallthru
        _
      // Predicated region
      $region21: #{albef_forward_train.5} parent=11 // pred_check
        %p460 = pneg %p85
      $region22: #{albef_forward_train.5} parent=11 // pred_check_branch
        %462 = sbr.rel (%p460) target = $region24
      $region23: #{albef_forward_train.5} parent=11 // pred_region
        _
      $region24: #{albef_forward_train.5} parent=11 // pred_fallthru
        _
      // Predicated region
      $region25: #{albef_forward_train.5} parent=11 // pred_check
        %p463 = pneg %p106
      $region26: #{albef_forward_train.5} parent=11 // pred_check_branch
        %465 = sbr.rel (%p463) target = $region28
      $region27: #{albef_forward_train.5} parent=11 // pred_region
        _
      $region28: #{albef_forward_train.5} parent=11 // pred_fallthru
        _
    $region12: #{albef_forward_train.5} parent=5 // pred_fallthru
      _
    %p466 = scmp.lt.s32.totalorder %s22, 2
    // Predicated region
    $region29: #{albef_forward_train.5} parent=5 // pred_check
      %p467 = pneg %p466
    $region30: #{albef_forward_train.5} parent=5 // pred_check_branch
      %469 = sbr.rel (%p467) target = $region32
    $region31: #{albef_forward_train.5} parent=5 // pred_region
      // Predicated region
      $region33: #{albef_forward_train.5} parent=31 // pred_check
        %p470 = pneg %p126
      $region34: #{albef_forward_train.5} parent=31 // pred_check_branch
        %472 = sbr.rel (%p470) target = $region36
      $region35: #{albef_forward_train.5} parent=31 // pred_region
        %p473 = scmp.lt.s32.totalorder %s22, 1
        %s474 = scalar_select %p473, %s22, 1
        %s475 = scalar_lea.vmem %s4, %s474
      $region36: #{albef_forward_train.5} parent=31 // pred_fallthru
        _
      // Predicated region
      $region37: #{albef_forward_train.5} parent=31 // pred_check
        %p476 = pneg %p152
      $region38: #{albef_forward_train.5} parent=31 // pred_check_branch
        %478 = sbr.rel (%p476) target = $region40
      $region39: #{albef_forward_train.5} parent=31 // pred_region
        %p479 = scmp.lt.s32.totalorder %s22, 1
        %s480 = scalar_select %p479, %s22, 1
        %s481 = scalar_lea.vmem %s5, %s480
      $region40: #{albef_forward_train.5} parent=31 // pred_fallthru
        _
      // Predicated region
      $region41: #{albef_forward_train.5} parent=31 // pred_check
        %p482 = pneg %p178
      $region42: #{albef_forward_train.5} parent=31 // pred_check_branch
        %484 = sbr.rel (%p482) target = $region44
      $region43: #{albef_forward_train.5} parent=31 // pred_region
        %p485 = scmp.lt.s32.totalorder %s22, 1
        %s486 = scalar_select %p485, %s22, 1
        %s487 = smul.addr %s486, 16
        %s488 = smul.addr %s487, 4
        %s489 = scalar_lea.vmem %s6, %s488
      $region44: #{albef_forward_train.5} parent=31 // pred_fallthru
        _
      // Predicated region
      $region45: #{albef_forward_train.5} parent=31 // pred_check
        %p490 = pneg %p204
      $region46: #{albef_forward_train.5} parent=31 // pred_check_branch
        %492 = sbr.rel (%p490) target = $region48
      $region47: #{albef_forward_train.5} parent=31 // pred_region
        %p493 = scmp.lt.s32.totalorder %s22, 1
        %s494 = scalar_select %p493, %s22, 1
        %s495 = smul.addr %s494, 2
        %s496 = scalar_lea.vmem %s7, %s495
      $region48: #{albef_forward_train.5} parent=31 // pred_fallthru
        _
      // Predicated region
      $region49: #{albef_forward_train.5} parent=31 // pred_check
        %p497 = pneg %p230
      $region50: #{albef_forward_train.5} parent=31 // pred_check_branch
        %499 = sbr.rel (%p497) target = $region52
      $region51: #{albef_forward_train.5} parent=31 // pred_region
        %p500 = scmp.lt.s32.totalorder %s22, 1
        %s501 = scalar_select %p500, %s22, 1
        %s502 = smul.addr %s501, 8
        %s503 = smul.addr %s502, 4
        %s504 = scalar_lea.vmem %s8, %s503
      $region52: #{albef_forward_train.5} parent=31 // pred_fallthru
        _
      // Predicated region
      $region53: #{albef_forward_train.5} parent=31 // pred_check
        %p505 = pneg %p256
      $region54: #{albef_forward_train.5} parent=31 // pred_check_branch
        %507 = sbr.rel (%p505) target = $region56
      $region55: #{albef_forward_train.5} parent=31 // pred_region
        %p508 = scmp.lt.s32.totalorder %s22, 1
        %s509 = scalar_select %p508, %s22, 1
        %s510 = scalar_lea.vmem %s9, %s509
      $region56: #{albef_forward_train.5} parent=31 // pred_fallthru
        _
      // Predicated region
      $region57: #{albef_forward_train.5} parent=31 // pred_check
        %p511 = pneg %p282
      $region58: #{albef_forward_train.5} parent=31 // pred_check_branch
        %513 = sbr.rel (%p511) target = $region60
      $region59: #{albef_forward_train.5} parent=31 // pred_region
        %p514 = scmp.lt.s32.totalorder %s22, 1
        %s515 = scalar_select %p514, %s22, 1
        %s516 = scalar_lea.vmem %s10, %s515
      $region60: #{albef_forward_train.5} parent=31 // pred_fallthru
        _
      // Predicated region
      $region61: #{albef_forward_train.5} parent=31 // pred_check
        %p517 = pneg %p308
      $region62: #{albef_forward_train.5} parent=31 // pred_check_branch
        %519 = sbr.rel (%p517) target = $region64
      $region63: #{albef_forward_train.5} parent=31 // pred_region
        %p520 = scmp.lt.s32.totalorder %s22, 1
        %s521 = scalar_select %p520, %s22, 1
        %s522 = scalar_lea.vmem %s11, %s521
      $region64: #{albef_forward_train.5} parent=31 // pred_fallthru
        _
      // Predicated region
      $region65: #{albef_forward_train.5} parent=31 // pred_check
        %p523 = pneg %p334
      $region66: #{albef_forward_train.5} parent=31 // pred_check_branch
        %525 = sbr.rel (%p523) target = $region68
      $region67: #{albef_forward_train.5} parent=31 // pred_region
        %p526 = scmp.lt.s32.totalorder %s22, 1
        %s527 = scalar_select %p526, %s22, 1
        %s528 = smul.addr %s527, 16
        %s529 = smul.addr %s528, 4
        %s530 = scalar_lea.vmem %s12, %s529
      $region68: #{albef_forward_train.5} parent=31 // pred_fallthru
        _
      // Predicated region
      $region69: #{albef_forward_train.5} parent=31 // pred_check
        %p531 = pneg %p360
      $region70: #{albef_forward_train.5} parent=31 // pred_check_branch
        %533 = sbr.rel (%p531) target = $region72
      $region71: #{albef_forward_train.5} parent=31 // pred_region
        %p534 = scmp.lt.s32.totalorder %s22, 1
        %s535 = scalar_select %p534, %s22, 1
        %s536 = smul.addr %s535, 2
        %s537 = scalar_lea.vmem %s13, %s536
      $region72: #{albef_forward_train.5} parent=31 // pred_fallthru
        _
      // Predicated region
      $region73: #{albef_forward_train.5} parent=31 // pred_check
        %p538 = pneg %p386
      $region74: #{albef_forward_train.5} parent=31 // pred_check_branch
        %540 = sbr.rel (%p538) target = $region76
      $region75: #{albef_forward_train.5} parent=31 // pred_region
        %p541 = scmp.lt.s32.totalorder %s22, 1
        %s542 = scalar_select %p541, %s22, 1
        %s543 = smul.addr %s542, 32
        %s544 = smul.addr %s543, 4
        %s545 = scalar_lea.vmem %s14, %s544
      $region76: #{albef_forward_train.5} parent=31 // pred_fallthru
        _
      // Predicated region
      $region77: #{albef_forward_train.5} parent=31 // pred_check
        %p546 = pneg %p412
      $region78: #{albef_forward_train.5} parent=31 // pred_check_branch
        %548 = sbr.rel (%p546) target = $region80
      $region79: #{albef_forward_train.5} parent=31 // pred_region
        %p549 = scmp.lt.s32.totalorder %s22, 1
        %s550 = scalar_select %p549, %s22, 1
        %s551 = scalar_lea.vmem %s15, %s550
      $region80: #{albef_forward_train.5} parent=31 // pred_fallthru
        _
    $region32: #{albef_forward_train.5} parent=5 // pred_fallthru
      _
    %p552 = scmp.le.s32.totalorder 1, %s22
    %p553 = scmp.lt.s32.totalorder %s22, 3
    %p554 = pnand %p552, %p553
    %p555 = pneg %p554
    // Predicated region
    $region81: #{albef_forward_train.5} parent=5 // pred_check
      _
    $region82: #{albef_forward_train.5} parent=5 // pred_check_branch
      %557 = sbr.rel (%p554) target = $region84
    $region83: #{albef_forward_train.5} parent=5 // pred_region
      %s558 = ssub.s32 %s22, 1
      %p559 = pneg %p43
      %p560 = pneg %p40
      %p561 = pneg %p64
      %p562 = pneg %p61
      %p563 = pneg %p85
      %p564 = pneg %p82
      %p565 = pneg %p106
      %p566 = pneg %p103
      %p567 = scmp.lt.s32.totalorder %s27, 1
      %s568 = scalar_select %p567, %s27, 1
      %s569 = scalar_lea.vmem %s4, %s568
      %p570 = pneg %p132
      %p571 = pneg %p129
      %p572 = scmp.lt.s32.totalorder %s27, 1
      %s573 = scalar_select %p572, %s27, 1
      %s574 = scalar_lea.vmem %s5, %s573
      %p575 = pneg %p158
      %p576 = pneg %p155
      %p577 = scmp.lt.s32.totalorder %s27, 1
      %s578 = scalar_select %p577, %s27, 1
      %s579 = smul.addr %s578, 16
      %s580 = smul.addr %s579, 4
      %s581 = scalar_lea.vmem %s6, %s580
      %p582 = pneg %p184
      %p583 = pneg %p181
      %p584 = scmp.lt.s32.totalorder %s27, 1
      %s585 = scalar_select %p584, %s27, 1
      %s586 = smul.addr %s585, 2
      %s587 = scalar_lea.vmem %s7, %s586
      %p588 = pneg %p210
      %p589 = pneg %p207
      %p590 = scmp.lt.s32.totalorder %s27, 1
      %s591 = scalar_select %p590, %s27, 1
      %s592 = smul.addr %s591, 8
      %s593 = smul.addr %s592, 4
      %s594 = scalar_lea.vmem %s8, %s593
      %p595 = pneg %p236
      %p596 = pneg %p233
      %p597 = scmp.lt.s32.totalorder %s27, 1
      %s598 = scalar_select %p597, %s27, 1
      %s599 = scalar_lea.vmem %s9, %s598
      %p600 = pneg %p262
      %p601 = pneg %p259
      %p602 = scmp.lt.s32.totalorder %s27, 1
      %s603 = scalar_select %p602, %s27, 1
      %s604 = scalar_lea.vmem %s10, %s603
      %p605 = pneg %p288
      %p606 = pneg %p285
      %p607 = scmp.lt.s32.totalorder %s27, 1
      %s608 = scalar_select %p607, %s27, 1
      %s609 = scalar_lea.vmem %s11, %s608
      %p610 = pneg %p314
      %p611 = pneg %p311
      %p612 = scmp.lt.s32.totalorder %s27, 1
      %s613 = scalar_select %p612, %s27, 1
      %s614 = smul.addr %s613, 16
      %s615 = smul.addr %s614, 4
      %s616 = scalar_lea.vmem %s12, %s615
      %p617 = pneg %p340
      %p618 = pneg %p337
      %p619 = scmp.lt.s32.totalorder %s27, 1
      %s620 = scalar_select %p619, %s27, 1
      %s621 = smul.addr %s620, 2
      %s622 = scalar_lea.vmem %s13, %s621
      %p623 = pneg %p366
      %p624 = pneg %p363
      %p625 = scmp.lt.s32.totalorder %s27, 1
      %s626 = scalar_select %p625, %s27, 1
      %s627 = smul.addr %s626, 32
      %s628 = smul.addr %s627, 4
      %s629 = scalar_lea.vmem %s14, %s628
      %p630 = pneg %p392
      %p631 = pneg %p389
      %p632 = scmp.lt.s32.totalorder %s27, 1
      %s633 = scalar_select %p632, %s27, 1
      %s634 = scalar_lea.vmem %s15, %s633
      %p635 = pneg %p418
      %p636 = pneg %p415
      %p637 = pneg %p439
      %p638 = pneg %p436
      %p639 = scmp.lt.s32.totalorder %s27, 1
      %s640 = scalar_select %p639, %s27, 1
      %s641 = scalar_lea.vmem %s4, %s640
      %p642 = scmp.lt.s32.totalorder %s27, 1
      %s643 = scalar_select %p642, %s27, 1
      %s644 = scalar_lea.vmem %s5, %s643
      %p645 = scmp.lt.s32.totalorder %s27, 1
      %s646 = scalar_select %p645, %s27, 1
      %s647 = smul.addr %s646, 16
      %s648 = smul.addr %s647, 4
      %s649 = scalar_lea.vmem %s6, %s648
      %p650 = scmp.lt.s32.totalorder %s27, 1
      %s651 = scalar_select %p650, %s27, 1
      %s652 = smul.addr %s651, 2
      %s653 = scalar_lea.vmem %s7, %s652
      %p654 = scmp.lt.s32.totalorder %s27, 1
      %s655 = scalar_select %p654, %s27, 1
      %s656 = smul.addr %s655, 8
      %s657 = smul.addr %s656, 4
      %s658 = scalar_lea.vmem %s8, %s657
      %p659 = scmp.lt.s32.totalorder %s27, 1
      %s660 = scalar_select %p659, %s27, 1
      %s661 = scalar_lea.vmem %s9, %s660
      %p662 = scmp.lt.s32.totalorder %s27, 1
      %s663 = scalar_select %p662, %s27, 1
      %s664 = scalar_lea.vmem %s10, %s663
      %p665 = scmp.lt.s32.totalorder %s27, 1
      %s666 = scalar_select %p665, %s27, 1
      %s667 = scalar_lea.vmem %s11, %s666
      %p668 = scmp.lt.s32.totalorder %s27, 1
      %s669 = scalar_select %p668, %s27, 1
      %s670 = smul.addr %s669, 16
      %s671 = smul.addr %s670, 4
      %s672 = scalar_lea.vmem %s12, %s671
      %p673 = scmp.lt.s32.totalorder %s27, 1
      %s674 = scalar_select %p673, %s27, 1
      %s675 = smul.addr %s674, 2
      %s676 = scalar_lea.vmem %s13, %s675
      %p677 = scmp.lt.s32.totalorder %s27, 1
      %s678 = scalar_select %p677, %s27, 1
      %s679 = smul.addr %s678, 32
      %s680 = smul.addr %s679, 4
      %s681 = scalar_lea.vmem %s14, %s680
      %p682 = scmp.lt.s32.totalorder %s27, 1
      %s683 = scalar_select %p682, %s27, 1
      %s684 = scalar_lea.vmem %s15, %s683
      %p686 = scmp.eq.s32.totalorder %s27, 0
      // Predicated region
      $region85: #{albef_forward_train.5} parent=83 // pred_check
        %p687 = pneg %p686
      $region86: #{albef_forward_train.5} parent=83 // pred_check_branch
        %689 = sbr.rel (%p687) target = $region88
      $region87: #{albef_forward_train.5} parent=83 // pred_region
        %v690 = vld [vmem:[%s0] sm:$0xff]
        %v691 = vld [vmem:[%s0 + $0x8] sm:$0x3]
        %vm692 = vcmask 523264
        %693 = vst.msk [vmem:[#allocation2] sm:$0xff] %vm692, %v690
        %vm694 = vcmask 517120
        %695 = vst.msk [vmem:[#allocation2 + $0x8] sm:$0x3] %vm694, %v691
      $region88: #{albef_forward_train.5} parent=83 // pred_fallthru
        _
      %v696 = vld [vmem:[#allocation2] sm:$0xff]
      %v697 = vld [vmem:[#allocation2 + $0x8] sm:$0x3]
      %v698 = vld [vmem:[%s641] sm:$0x1]
      %v699 = vld [vmem:[%s644] sm:$0x1]
      %vm700 = vcmask 523264
      %v701 = vsel %vm700, %v696, 0.0
      %702 = vadd.xlane.f32.xlu0 %v701
      %v703 = vpop.xlane.xlu0 %702
      %vm704 = vcmask 517120
      %v705 = vsel %vm704, %v697, 0.0
      %706 = vadd.xlane.f32.xlu0 %v705
      %v707 = vpop.xlane.xlu0 %706
      %v708 = vrcp.pop 64.0
      %v709 = vmul.f32 %v703, %v708
      %v710 = vmul.f32 %v707, %v708
      %v711 = vsub.f32 %v696, %v709
      %v712 = vsub.f32 %v697, %v710
      %v713 = vmul.f32 %v711, %v711
      %v714 = vmul.f32 %v712, %v712
      %v715 = vsel %vm700, %v713, 0.0
      %716 = vadd.xlane.f32.xlu0 %v715
      %v717 = vpop.xlane.xlu0 %716
      %v718 = vsel %vm704, %v714, 0.0
      %719 = vadd.xlane.f32.xlu0 %v718
      %v720 = vpop.xlane.xlu0 %719
      %v721 = vmul.f32 %v717, %v708
      %v722 = vmul.f32 %v720, %v708
      %v723 = vadd.f32 %v721, 1e-06
      %v724 = vadd.f32 %v722, 1e-06
      %v725 = vrsqrt.pop %v723
      %v726 = vrsqrt.pop %v724
      %v727 = vmul.f32 %v711, %v725
      %v728 = vmul.f32 %v712, %v726
      %v730 = vlaneseq
      %v731 = vshrl.u32 %v730, 7
      %v732 = vsub.s32 0, %v731
      %v733 = vrot.slane %v698, %v732
      %v735 = vmul.f32 %v727, %v733
      %v736 = vmul.f32 %v728, %v733
      %v738 = vlaneseq
      %v739 = vshrl.u32 %v738, 7
      %v740 = vsub.s32 0, %v739
      %v741 = vrot.slane %v699, %v740
      %v743 = vadd.f32 %v735, %v741
      %v744 = vadd.f32 %v736, %v741
      %v745 = vld [vmem:[%s649] sm:$0xff]
      %v746 = vld [vmem:[%s649 + $0x8] sm:$0xff]
      %v747 = vld [vmem:[%s649 + $0x10] sm:$0xff]
      %v748 = vld [vmem:[%s649 + $0x18] sm:$0xff]
      %v749 = vld [vmem:[%s649 + $0x20] sm:$0xff]
      %v750 = vld [vmem:[%s649 + $0x28] sm:$0xff]
      %v751 = vld [vmem:[%s649 + $0x30] sm:$0xff]
      %v752 = vld [vmem:[%s649 + $0x38] sm:$0xff]
      %v753 = vpack.c.bf16 %v744, %v743
      %v754 = vld [vmem:[%s653] sm:$0x3]
      %v756 = vlaneseq
      %v757 = vshrl.u32 %v756, 7
      %v758 = vsub.s32 0, %v757
      %v759 = vrot.slane %v754, %v758
      %v760 = vlaneseq
      %v761 = vshrl.u32 %v760, 7
      %v762 = vsub.s32 1, %v761
      %v763 = vrot.slane %v754, %v762
      %v774 = vunpack.c.l.b16 %v745
      %v775 = vunpack.c.h.b16 %v745
      %v776 = vunpack.c.l.b16 %v746
      %v777 = vunpack.c.h.b16 %v746
      %v778 = vunpack.c.l.b16 %v747
      %v779 = vunpack.c.h.b16 %v747
      %v780 = vunpack.c.l.b16 %v748
      %v781 = vunpack.c.h.b16 %v748
      %v782 = vunpack.c.l.b16 %v749
      %v783 = vunpack.c.h.b16 %v749
      %v784 = vunpack.c.l.b16 %v750
      %v785 = vunpack.c.h.b16 %v750
      %v786 = vunpack.c.l.b16 %v751
      %v787 = vunpack.c.h.b16 %v751
      %v788 = vunpack.c.l.b16 %v752
      %v789 = vunpack.c.h.b16 %v752
      %v790 = vpack.c.b16 %v776, %v774
      %v791 = vpack.c.b16 %v777, %v775
      %v792 = vpack.c.b16 %v780, %v778
      %v793 = vpack.c.b16 %v781, %v779
      %v794 = vpack.c.b16 %v784, %v782
      %v795 = vpack.c.b16 %v785, %v783
      %v796 = vpack.c.b16 %v788, %v786
      %v797 = vpack.c.b16 %v789, %v787
      %v807 = vsel %vm700, %v753, 0
      %809 = vmatprep.subr.bf16.mxu0 0
      %810 = vmatpush1.bf16.msra.mxu0 0
      %811 = vmatprep.subr.bf16.mxu0 0
      %812 = vmatpush1.bf16.msra.mxu0 0
      %813 = vmatprep.subr.bf16.mxu0 0
      %814 = vmatpush1.bf16.msra.mxu0 0
      %815 = vmatprep.subr.bf16.mxu0 0
      %816 = vmatpush1.bf16.msra.mxu0 0
      %817 = vmatprep.subr.bf16.mxu0 %v797
      %818 = vmatpush1.bf16.msra.mxu0 %v796
      %819 = vmatprep.subr.bf16.mxu0 %v795
      %820 = vmatpush1.bf16.msra.mxu0 %v794
      %821 = vmatprep.subr.bf16.mxu0 %v793
      %822 = vmatpush1.bf16.msra.mxu0 %v792
      %823 = vmatprep.subr.bf16.mxu0 %v791
      %824 = vmatpush1.bf16.msra.mxu0 %v790
      %825 = vmatprep.subr.bf16.mxu0 0
      %826 = vmatpush2.bf16.msra.mxu0 0
      %827 = vmatprep.subr.bf16.mxu0 0
      %828 = vmatpush2.bf16.msra.mxu0 0
      %829 = vmatprep.subr.bf16.mxu0 0
      %830 = vmatpush2.bf16.msra.mxu0 0
      %831 = vmatprep.subr.bf16.mxu0 0
      %832 = vmatpush2.bf16.msra.mxu0 0
      %833 = vmatprep.subr.bf16.mxu0 0
      %834 = vmatpush2.bf16.msra.mxu0 0
      %835 = vmatprep.subr.bf16.mxu0 0
      %836 = vmatpush2.bf16.msra.mxu0 0
      %837 = vmatprep.subr.bf16.mxu0 0
      %838 = vmatpush2.bf16.msra.mxu0 0
      %839 = vmatprep.subr.bf16.mxu0 0
      %840 = vmatpush2.bf16.msra.mxu0 0
      %841 = vmatprep.mubr.bf16.mxu0 0
      %842 = vmatmul.mubr.bf16.gmra.mxu0 %v807
      %v843 = vpop.f32.mrf.mxu0
      %v844 = vadd.f32 %v759, %v843
      %v845 = vpop.f32.mrf.mxu0
      %v846 = vadd.f32 %v763, %v845
      %v847 = vpop.f32.mrf.mxu0
      %v848 = vadd.f32 %v759, %v847
      %v849 = vpop.f32.mrf.mxu0
      %v850 = vadd.f32 %v763, %v849
      %851 = vdwg.mxu0
      %v852 = vld [vmem:[%s3] sm:$0xff]
      %v853 = vld [vmem:[%s3 + $0x8] sm:$0x3]
      %v854 = vpack.c.bf16 %v848, %v844
      %v855 = vpack.c.bf16 %v850, %v846
      %857 = vrot.lane.b32.xlu0 %v854, 64
      %v858 = vpop.permute.xlu0 %857
      %vm859 = vcmask 130048
      %v861 = vsel %vm859, %v854, 0
      %v864 = vsel %vm859, %v858, 0
      %866 = vmatprep.subr.bf16.mxu0 0
      %867 = vmatpush1.bf16.xpose.msra.mxu0 0
      %868 = vmatprep.subr.bf16.mxu0 0
      %869 = vmatpush1.bf16.xpose.msra.mxu0 0
      %870 = vmatprep.subr.bf16.mxu0 0
      %871 = vmatpush1.bf16.xpose.msra.mxu0 0
      %872 = vmatprep.subr.bf16.mxu0 0
      %873 = vmatpush1.bf16.xpose.msra.mxu0 0
      %874 = vmatprep.subr.bf16.mxu0 0
      %875 = vmatpush1.bf16.xpose.msra.mxu0 0
      %876 = vmatprep.subr.bf16.mxu0 0
      %877 = vmatpush1.bf16.xpose.msra.mxu0 0
      %878 = vmatprep.subr.bf16.mxu0 0
      %879 = vmatpush1.bf16.xpose.msra.mxu0 0
      %880 = vmatprep.subr.bf16.mxu0 0
      %881 = vmatpush1.bf16.xpose.msra.mxu0 %v864
      %882 = vmatprep.subr.bf16.mxu0 0
      %883 = vmatpush2.bf16.xpose.msra.mxu0 0
      %884 = vmatprep.subr.bf16.mxu0 0
      %885 = vmatpush2.bf16.xpose.msra.mxu0 0
      %886 = vmatprep.subr.bf16.mxu0 0
      %887 = vmatpush2.bf16.xpose.msra.mxu0 0
      %888 = vmatprep.subr.bf16.mxu0 0
      %889 = vmatpush2.bf16.xpose.msra.mxu0 0
      %890 = vmatprep.subr.bf16.mxu0 0
      %891 = vmatpush2.bf16.xpose.msra.mxu0 0
      %892 = vmatprep.subr.bf16.mxu0 0
      %893 = vmatpush2.bf16.xpose.msra.mxu0 0
      %894 = vmatprep.subr.bf16.mxu0 0
      %895 = vmatpush2.bf16.xpose.msra.mxu0 0
      %896 = vmatprep.subr.bf16.mxu0 0
      %897 = vmatpush2.bf16.xpose.msra.mxu0 0
      %898 = vmatprep.mubr.bf16.mxu0 0
      %899 = vmatmul.mubr.bf16.gmra.mxu0 %v861
      %v900 = vpop.f32.mrf.mxu0
      %v901 = vadd.f32 0.0, %v900
      %v902 = vpop.f32.mrf.mxu0
      %v903 = vpop.f32.mrf.mxu0
      %v904 = vadd.f32 0.0, %v903
      %v905 = vpop.f32.mrf.mxu0
      %906 = vdwg.mxu0
      %v907 = vmul.f32 %v901, 0.25
      %v908 = vmul.f32 %v904, 0.25
      %v909 = vadd.f32 %v907, %v852
      %v910 = vadd.f32 %v908, %v853
      %vm911 = vcmask 80896
      %v912 = vsel %vm911, %v909, -inf
      %913 = vmax.xlane.f32.xlu0 %v912
      %v914 = vpop.xlane.xlu0 %913
      %vm915 = vcmask 74752
      %v916 = vsel %vm915, %v910, -inf
      %917 = vmax.xlane.f32.xlu0 %v916
      %v918 = vpop.xlane.xlu0 %917
      %v919 = vsub.f32 %v909, %v914
      %v920 = vsub.f32 %v910, %v918
      %v921 = vmul.f32 %v919, 1.442695
      %v922 = vpow.pop %v921
      %v923 = vmul.f32 %v920, 1.442695
      %v924 = vpow.pop %v923
      %v925 = vsel %vm911, %v922, 0.0
      %926 = vadd.xlane.f32.xlu0 %v925
      %v927 = vpop.xlane.xlu0 %926
      %v928 = vsel %vm915, %v924, 0.0
      %929 = vadd.xlane.f32.xlu0 %v928
      %v930 = vpop.xlane.xlu0 %929
      %v931 = vrcp.pop %v927
      %v932 = vrcp.pop %v930
      %v933 = vmul.f32 %v922, %v931
      %v934 = vmul.f32 %v924, %v932
      %v935 = vpack.c.bf16 %v934, %v933
      %v937 = vsel %vm911, %v935, 0
      %vm939 = vcmask 1044480
      %v941 = vsel %vm939, %v855, 0
      %943 = vmatprep.subr.bf16.mxu0 0
      %944 = vmatpush1.bf16.msra.mxu0 0
      %945 = vmatprep.subr.bf16.mxu0 0
      %946 = vmatpush1.bf16.msra.mxu0 0
      %947 = vmatprep.subr.bf16.mxu0 0
      %948 = vmatpush1.bf16.msra.mxu0 0
      %949 = vmatprep.subr.bf16.mxu0 0
      %950 = vmatpush1.bf16.msra.mxu0 0
      %951 = vmatprep.subr.bf16.mxu0 0
      %952 = vmatpush1.bf16.msra.mxu0 0
      %953 = vmatprep.subr.bf16.mxu0 0
      %954 = vmatpush1.bf16.msra.mxu0 0
      %955 = vmatprep.subr.bf16.mxu0 0
      %956 = vmatpush1.bf16.msra.mxu0 0
      %957 = vmatprep.subr.bf16.mxu0 0
      %958 = vmatpush1.bf16.msra.mxu0 %v941
      %959 = vmatprep.subr.bf16.mxu0 0
      %960 = vmatpush2.bf16.msra.mxu0 0
      %961 = vmatprep.subr.bf16.mxu0 0
      %962 = vmatpush2.bf16.msra.mxu0 0
      %963 = vmatprep.subr.bf16.mxu0 0
      %964 = vmatpush2.bf16.msra.mxu0 0
      %965 = vmatprep.subr.bf16.mxu0 0
      %966 = vmatpush2.bf16.msra.mxu0 0
      %967 = vmatprep.subr.bf16.mxu0 0
      %968 = vmatpush2.bf16.msra.mxu0 0
      %969 = vmatprep.subr.bf16.mxu0 0
      %970 = vmatpush2.bf16.msra.mxu0 0
      %971 = vmatprep.subr.bf16.mxu0 0
      %972 = vmatpush2.bf16.msra.mxu0 0
      %973 = vmatprep.subr.bf16.mxu0 0
      %974 = vmatpush2.bf16.msra.mxu0 0
      %975 = vmatprep.mubr.bf16.mxu0 0
      %976 = vmatmul.mubr.bf16.gmra.mxu0 %v937
      %v977 = vpop.f32.mrf.mxu0
      %v978 = vadd.f32 0.0, %v977
      %v979 = vpop.f32.mrf.mxu0
      %v980 = vpop.f32.mrf.mxu0
      %v981 = vadd.f32 0.0, %v980
      %v982 = vpop.f32.mrf.mxu0
      %983 = vdwg.mxu0
      %984 = vrot.lane.b32.xlu0 %v854, 112
      %v985 = vpop.permute.xlu0 %984
      %986 = vrot.lane.b32.xlu0 %v854, 48
      %v987 = vpop.permute.xlu0 %986
      %v989 = vsel %vm859, %v985, 0
      %v992 = vsel %vm859, %v987, 0
      %994 = vmatprep.subr.bf16.mxu0 0
      %995 = vmatpush1.bf16.xpose.msra.mxu0 0
      %996 = vmatprep.subr.bf16.mxu0 0
      %997 = vmatpush1.bf16.xpose.msra.mxu0 0
      %998 = vmatprep.subr.bf16.mxu0 0
      %999 = vmatpush1.bf16.xpose.msra.mxu0 0
      %1000 = vmatprep.subr.bf16.mxu0 0
      %1001 = vmatpush1.bf16.xpose.msra.mxu0 0
      %1002 = vmatprep.subr.bf16.mxu0 0
      %1003 = vmatpush1.bf16.xpose.msra.mxu0 0
      %1004 = vmatprep.subr.bf16.mxu0 0
      %1005 = vmatpush1.bf16.xpose.msra.mxu0 0
      %1006 = vmatprep.subr.bf16.mxu0 0
      %1007 = vmatpush1.bf16.xpose.msra.mxu0 0
      %1008 = vmatprep.subr.bf16.mxu0 0
      %1009 = vmatpush1.bf16.xpose.msra.mxu0 %v992
      %1010 = vmatprep.subr.bf16.mxu0 0
      %1011 = vmatpush2.bf16.xpose.msra.mxu0 0
      %1012 = vmatprep.subr.bf16.mxu0 0
      %1013 = vmatpush2.bf16.xpose.msra.mxu0 0
      %1014 = vmatprep.subr.bf16.mxu0 0
      %1015 = vmatpush2.bf16.xpose.msra.mxu0 0
      %1016 = vmatprep.subr.bf16.mxu0 0
      %1017 = vmatpush2.bf16.xpose.msra.mxu0 0
      %1018 = vmatprep.subr.bf16.mxu0 0
      %1019 = vmatpush2.bf16.xpose.msra.mxu0 0
      %1020 = vmatprep.subr.bf16.mxu0 0
      %1021 = vmatpush2.bf16.xpose.msra.mxu0 0
      %1022 = vmatprep.subr.bf16.mxu0 0
      %1023 = vmatpush2.bf16.xpose.msra.mxu0 0
      %1024 = vmatprep.subr.bf16.mxu0 0
      %1025 = vmatpush2.bf16.xpose.msra.mxu0 0
      %1026 = vmatprep.mubr.bf16.mxu0 0
      %1027 = vmatmul.mubr.bf16.gmra.mxu0 %v989
      %v1028 = vpop.f32.mrf.mxu0
      %v1029 = vadd.f32 0.0, %v1028
      %v1030 = vpop.f32.mrf.mxu0
      %v1031 = vpop.f32.mrf.mxu0
      %v1032 = vadd.f32 0.0, %v1031
      %v1033 = vpop.f32.mrf.mxu0
      %1034 = vdwg.mxu0
      %v1035 = vmul.f32 %v1029, 0.25
      %v1036 = vmul.f32 %v1032, 0.25
      %v1037 = vadd.f32 %v1035, %v852
      %v1038 = vadd.f32 %v1036, %v853
      %v1039 = vsel %vm911, %v1037, -inf
      %1040 = vmax.xlane.f32.xlu0 %v1039
      %v1041 = vpop.xlane.xlu0 %1040
      %v1042 = vsel %vm915, %v1038, -inf
      %1043 = vmax.xlane.f32.xlu0 %v1042
      %v1044 = vpop.xlane.xlu0 %1043
      %v1045 = vsub.f32 %v1037, %v1041
      %v1046 = vsub.f32 %v1038, %v1044
      %v1047 = vmul.f32 %v1045, 1.442695
      %v1048 = vpow.pop %v1047
      %v1049 = vmul.f32 %v1046, 1.442695
      %v1050 = vpow.pop %v1049
      %v1051 = vsel %vm911, %v1048, 0.0
      %1052 = vadd.xlane.f32.xlu0 %v1051
      %v1053 = vpop.xlane.xlu0 %1052
      %v1054 = vsel %vm915, %v1050, 0.0
      %1055 = vadd.xlane.f32.xlu0 %v1054
      %v1056 = vpop.xlane.xlu0 %1055
      %v1057 = vrcp.pop %v1053
      %v1058 = vrcp.pop %v1056
      %v1059 = vmul.f32 %v1048, %v1057
      %v1060 = vmul.f32 %v1050, %v1058
      %v1061 = vpack.c.bf16 %v1060, %v1059
      %1063 = vrot.lane.b32.xlu0 %v855, 112
      %v1064 = vpop.permute.xlu0 %1063
      %v1066 = vsel %vm911, %v1061, 0
      %v1069 = vsel %vm939, %v1064, 0
      %1071 = vmatprep.subr.bf16.mxu0 0
      %1072 = vmatpush1.bf16.msra.mxu0 0
      %1073 = vmatprep.subr.bf16.mxu0 0
      %1074 = vmatpush1.bf16.msra.mxu0 0
      %1075 = vmatprep.subr.bf16.mxu0 0
      %1076 = vmatpush1.bf16.msra.mxu0 0
      %1077 = vmatprep.subr.bf16.mxu0 0
      %1078 = vmatpush1.bf16.msra.mxu0 0
      %1079 = vmatprep.subr.bf16.mxu0 0
      %1080 = vmatpush1.bf16.msra.mxu0 0
      %1081 = vmatprep.subr.bf16.mxu0 0
      %1082 = vmatpush1.bf16.msra.mxu0 0
      %1083 = vmatprep.subr.bf16.mxu0 0
      %1084 = vmatpush1.bf16.msra.mxu0 0
      %1085 = vmatprep.subr.bf16.mxu0 0
      %1086 = vmatpush1.bf16.msra.mxu0 %v1069
      %1087 = vmatprep.subr.bf16.mxu0 0
      %1088 = vmatpush2.bf16.msra.mxu0 0
      %1089 = vmatprep.subr.bf16.mxu0 0
      %1090 = vmatpush2.bf16.msra.mxu0 0
      %1091 = vmatprep.subr.bf16.mxu0 0
      %1092 = vmatpush2.bf16.msra.mxu0 0
      %1093 = vmatprep.subr.bf16.mxu0 0
      %1094 = vmatpush2.bf16.msra.mxu0 0
      %1095 = vmatprep.subr.bf16.mxu0 0
      %1096 = vmatpush2.bf16.msra.mxu0 0
      %1097 = vmatprep.subr.bf16.mxu0 0
      %1098 = vmatpush2.bf16.msra.mxu0 0
      %1099 = vmatprep.subr.bf16.mxu0 0
      %1100 = vmatpush2.bf16.msra.mxu0 0
      %1101 = vmatprep.subr.bf16.mxu0 0
      %1102 = vmatpush2.bf16.msra.mxu0 0
      %1103 = vmatprep.mubr.bf16.mxu0 0
      %1104 = vmatmul.mubr.bf16.gmra.mxu0 %v1066
      %v1105 = vpop.f32.mrf.mxu0
      %v1106 = vadd.f32 0.0, %v1105
      %v1107 = vpop.f32.mrf.mxu0
      %v1108 = vpop.f32.mrf.mxu0
      %v1109 = vadd.f32 0.0, %v1108
      %v1110 = vpop.f32.mrf.mxu0
      %1111 = vdwg.mxu0
      %1112 = vrot.lane.b32.xlu0 %v854, 96
      %v1113 = vpop.permute.xlu0 %1112
      %1114 = vrot.lane.b32.xlu0 %v854, 32
      %v1115 = vpop.permute.xlu0 %1114
      %v1117 = vsel %vm859, %v1113, 0
      %v1120 = vsel %vm859, %v1115, 0
      %1122 = vmatprep.subr.bf16.mxu0 0
      %1123 = vmatpush1.bf16.xpose.msra.mxu0 0
      %1124 = vmatprep.subr.bf16.mxu0 0
      %1125 = vmatpush1.bf16.xpose.msra.mxu0 0
      %1126 = vmatprep.subr.bf16.mxu0 0
      %1127 = vmatpush1.bf16.xpose.msra.mxu0 0
      %1128 = vmatprep.subr.bf16.mxu0 0
      %1129 = vmatpush1.bf16.xpose.msra.mxu0 0
      %1130 = vmatprep.subr.bf16.mxu0 0
      %1131 = vmatpush1.bf16.xpose.msra.mxu0 0
      %1132 = vmatprep.subr.bf16.mxu0 0
      %1133 = vmatpush1.bf16.xpose.msra.mxu0 0
      %1134 = vmatprep.subr.bf16.mxu0 0
      %1135 = vmatpush1.bf16.xpose.msra.mxu0 0
      %1136 = vmatprep.subr.bf16.mxu0 0
      %1137 = vmatpush1.bf16.xpose.msra.mxu0 %v1120
      %1138 = vmatprep.subr.bf16.mxu0 0
      %1139 = vmatpush2.bf16.xpose.msra.mxu0 0
      %1140 = vmatprep.subr.bf16.mxu0 0
      %1141 = vmatpush2.bf16.xpose.msra.mxu0 0
      %1142 = vmatprep.subr.bf16.mxu0 0
      %1143 = vmatpush2.bf16.xpose.msra.mxu0 0
      %1144 = vmatprep.subr.bf16.mxu0 0
      %1145 = vmatpush2.bf16.xpose.msra.mxu0 0
      %1146 = vmatprep.subr.bf16.mxu0 0
      %1147 = vmatpush2.bf16.xpose.msra.mxu0 0
      %1148 = vmatprep.subr.bf16.mxu0 0
      %1149 = vmatpush2.bf16.xpose.msra.mxu0 0
      %1150 = vmatprep.subr.bf16.mxu0 0
      %1151 = vmatpush2.bf16.xpose.msra.mxu0 0
      %1152 = vmatprep.subr.bf16.mxu0 0
      %1153 = vmatpush2.bf16.xpose.msra.mxu0 0
      %1154 = vmatprep.mubr.bf16.mxu0 0
      %1155 = vmatmul.mubr.bf16.gmra.mxu0 %v1117
      %v1156 = vpop.f32.mrf.mxu0
      %v1157 = vadd.f32 0.0, %v1156
      %v1158 = vpop.f32.mrf.mxu0
      %v1159 = vpop.f32.mrf.mxu0
      %v1160 = vadd.f32 0.0, %v1159
      %v1161 = vpop.f32.mrf.mxu0
      %1162 = vdwg.mxu0
      %v1163 = vmul.f32 %v1157, 0.25
      %v1164 = vmul.f32 %v1160, 0.25
      %v1165 = vadd.f32 %v1163, %v852
      %v1166 = vadd.f32 %v1164, %v853
      %v1167 = vsel %vm911, %v1165, -inf
      %1168 = vmax.xlane.f32.xlu0 %v1167
      %v1169 = vpop.xlane.xlu0 %1168
      %v1170 = vsel %vm915, %v1166, -inf
      %1171 = vmax.xlane.f32.xlu0 %v1170
      %v1172 = vpop.xlane.xlu0 %1171
      %v1173 = vsub.f32 %v1165, %v1169
      %v1174 = vsub.f32 %v1166, %v1172
      %v1175 = vmul.f32 %v1173, 1.442695
      %v1176 = vpow.pop %v1175
      %v1177 = vmul.f32 %v1174, 1.442695
      %v1178 = vpow.pop %v1177
      %v1179 = vsel %vm911, %v1176, 0.0
      %1180 = vadd.xlane.f32.xlu0 %v1179
      %v1181 = vpop.xlane.xlu0 %1180
      %v1182 = vsel %vm915, %v1178, 0.0
      %1183 = vadd.xlane.f32.xlu0 %v1182
      %v1184 = vpop.xlane.xlu0 %1183
      %v1185 = vrcp.pop %v1181
      %v1186 = vrcp.pop %v1184
      %v1187 = vmul.f32 %v1176, %v1185
      %v1188 = vmul.f32 %v1178, %v1186
      %v1189 = vpack.c.bf16 %v1188, %v1187
      %1190 = vrot.lane.b32.xlu0 %v855, 96
      %v1191 = vpop.permute.xlu0 %1190
      %v1193 = vsel %vm911, %v1189, 0
      %v1196 = vsel %vm939, %v1191, 0
      %1198 = vmatprep.subr.bf16.mxu0 0
      %1199 = vmatpush1.bf16.msra.mxu0 0
      %1200 = vmatprep.subr.bf16.mxu0 0
      %1201 = vmatpush1.bf16.msra.mxu0 0
      %1202 = vmatprep.subr.bf16.mxu0 0
      %1203 = vmatpush1.bf16.msra.mxu0 0
      %1204 = vmatprep.subr.bf16.mxu0 0
      %1205 = vmatpush1.bf16.msra.mxu0 0
      %1206 = vmatprep.subr.bf16.mxu0 0
      %1207 = vmatpush1.bf16.msra.mxu0 0
      %1208 = vmatprep.subr.bf16.mxu0 0
      %1209 = vmatpush1.bf16.msra.mxu0 0
      %1210 = vmatprep.subr.bf16.mxu0 0
      %1211 = vmatpush1.bf16.msra.mxu0 0
      %1212 = vmatprep.subr.bf16.mxu0 0
      %1213 = vmatpush1.bf16.msra.mxu0 %v1196
      %1214 = vmatprep.subr.bf16.mxu0 0
      %1215 = vmatpush2.bf16.msra.mxu0 0
      %1216 = vmatprep.subr.bf16.mxu0 0
      %1217 = vmatpush2.bf16.msra.mxu0 0
      %1218 = vmatprep.subr.bf16.mxu0 0
      %1219 = vmatpush2.bf16.msra.mxu0 0
      %1220 = vmatprep.subr.bf16.mxu0 0
      %1221 = vmatpush2.bf16.msra.mxu0 0
      %1222 = vmatprep.subr.bf16.mxu0 0
      %1223 = vmatpush2.bf16.msra.mxu0 0
      %1224 = vmatprep.subr.bf16.mxu0 0
      %1225 = vmatpush2.bf16.msra.mxu0 0
      %1226 = vmatprep.subr.bf16.mxu0 0
      %1227 = vmatpush2.bf16.msra.mxu0 0
      %1228 = vmatprep.subr.bf16.mxu0 0
      %1229 = vmatpush2.bf16.msra.mxu0 0
      %1230 = vmatprep.mubr.bf16.mxu0 0
      %1231 = vmatmul.mubr.bf16.gmra.mxu0 %v1193
      %v1232 = vpop.f32.mrf.mxu0
      %v1233 = vadd.f32 0.0, %v1232
      %v1234 = vpop.f32.mrf.mxu0
      %v1235 = vpop.f32.mrf.mxu0
      %v1236 = vadd.f32 0.0, %v1235
      %v1237 = vpop.f32.mrf.mxu0
      %1238 = vdwg.mxu0
      %1239 = vrot.lane.b32.xlu0 %v854, 80
      %v1240 = vpop.permute.xlu0 %1239
      %1241 = vrot.lane.b32.xlu0 %v854, 16
      %v1242 = vpop.permute.xlu0 %1241
      %v1244 = vsel %vm859, %v1240, 0
      %v1247 = vsel %vm859, %v1242, 0
      %1249 = vmatprep.subr.bf16.mxu0 0
      %1250 = vmatpush1.bf16.xpose.msra.mxu0 0
      %1251 = vmatprep.subr.bf16.mxu0 0
      %1252 = vmatpush1.bf16.xpose.msra.mxu0 0
      %1253 = vmatprep.subr.bf16.mxu0 0
      %1254 = vmatpush1.bf16.xpose.msra.mxu0 0
      %1255 = vmatprep.subr.bf16.mxu0 0
      %1256 = vmatpush1.bf16.xpose.msra.mxu0 0
      %1257 = vmatprep.subr.bf16.mxu0 0
      %1258 = vmatpush1.bf16.xpose.msra.mxu0 0
      %1259 = vmatprep.subr.bf16.mxu0 0
      %1260 = vmatpush1.bf16.xpose.msra.mxu0 0
      %1261 = vmatprep.subr.bf16.mxu0 0
      %1262 = vmatpush1.bf16.xpose.msra.mxu0 0
      %1263 = vmatprep.subr.bf16.mxu0 0
      %1264 = vmatpush1.bf16.xpose.msra.mxu0 %v1247
      %1265 = vmatprep.subr.bf16.mxu0 0
      %1266 = vmatpush2.bf16.xpose.msra.mxu0 0
      %1267 = vmatprep.subr.bf16.mxu0 0
      %1268 = vmatpush2.bf16.xpose.msra.mxu0 0
      %1269 = vmatprep.subr.bf16.mxu0 0
      %1270 = vmatpush2.bf16.xpose.msra.mxu0 0
      %1271 = vmatprep.subr.bf16.mxu0 0
      %1272 = vmatpush2.bf16.xpose.msra.mxu0 0
      %1273 = vmatprep.subr.bf16.mxu0 0
      %1274 = vmatpush2.bf16.xpose.msra.mxu0 0
      %1275 = vmatprep.subr.bf16.mxu0 0
      %1276 = vmatpush2.bf16.xpose.msra.mxu0 0
      %1277 = vmatprep.subr.bf16.mxu0 0
      %1278 = vmatpush2.bf16.xpose.msra.mxu0 0
      %1279 = vmatprep.subr.bf16.mxu0 0
      %1280 = vmatpush2.bf16.xpose.msra.mxu0 0
      %1281 = vmatprep.mubr.bf16.mxu0 0
      %1282 = vmatmul.mubr.bf16.gmra.mxu0 %v1244
      %v1283 = vpop.f32.mrf.mxu0
      %v1284 = vadd.f32 0.0, %v1283
      %v1285 = vpop.f32.mrf.mxu0
      %v1286 = vpop.f32.mrf.mxu0
      %v1287 = vadd.f32 0.0, %v1286
      %v1288 = vpop.f32.mrf.mxu0
      %1289 = vdwg.mxu0
      %v1290 = vmul.f32 %v1284, 0.25
      %v1291 = vmul.f32 %v1287, 0.25
      %v1292 = vadd.f32 %v1290, %v852
      %v1293 = vadd.f32 %v1291, %v853
      %v1294 = vsel %vm911, %v1292, -inf
      %1295 = vmax.xlane.f32.xlu0 %v1294
      %v1296 = vpop.xlane.xlu0 %1295
      %v1297 = vsel %vm915, %v1293, -inf
      %1298 = vmax.xlane.f32.xlu0 %v1297
      %v1299 = vpop.xlane.xlu0 %1298
      %v1300 = vsub.f32 %v1292, %v1296
      %v1301 = vsub.f32 %v1293, %v1299
      %v1302 = vmul.f32 %v1300, 1.442695
      %v1303 = vpow.pop %v1302
      %v1304 = vmul.f32 %v1301, 1.442695
      %v1305 = vpow.pop %v1304
      %v1306 = vsel %vm911, %v1303, 0.0
      %1307 = vadd.xlane.f32.xlu0 %v1306
      %v1308 = vpop.xlane.xlu0 %1307
      %v1309 = vsel %vm915, %v1305, 0.0
      %1310 = vadd.xlane.f32.xlu0 %v1309
      %v1311 = vpop.xlane.xlu0 %1310
      %v1312 = vrcp.pop %v1308
      %v1313 = vrcp.pop %v1311
      %v1314 = vmul.f32 %v1303, %v1312
      %v1315 = vmul.f32 %v1305, %v1313
      %v1316 = vpack.c.bf16 %v1315, %v1314
      %1317 = vrot.lane.b32.xlu0 %v855, 80
      %v1318 = vpop.permute.xlu0 %1317
      %v1320 = vsel %vm911, %v1316, 0
      %v1323 = vsel %vm939, %v1318, 0
      %1325 = vmatprep.subr.bf16.mxu0 0
      %1326 = vmatpush1.bf16.msra.mxu0 0
      %1327 = vmatprep.subr.bf16.mxu0 0
      %1328 = vmatpush1.bf16.msra.mxu0 0
      %1329 = vmatprep.subr.bf16.mxu0 0
      %1330 = vmatpush1.bf16.msra.mxu0 0
      %1331 = vmatprep.subr.bf16.mxu0 0
      %1332 = vmatpush1.bf16.msra.mxu0 0
      %1333 = vmatprep.subr.bf16.mxu0 0
      %1334 = vmatpush1.bf16.msra.mxu0 0
      %1335 = vmatprep.subr.bf16.mxu0 0
      %1336 = vmatpush1.bf16.msra.mxu0 0
      %1337 = vmatprep.subr.bf16.mxu0 0
      %1338 = vmatpush1.bf16.msra.mxu0 0
      %1339 = vmatprep.subr.bf16.mxu0 0
      %1340 = vmatpush1.bf16.msra.mxu0 %v1323
      %1341 = vmatprep.subr.bf16.mxu0 0
      %1342 = vmatpush2.bf16.msra.mxu0 0
      %1343 = vmatprep.subr.bf16.mxu0 0
      %1344 = vmatpush2.bf16.msra.mxu0 0
      %1345 = vmatprep.subr.bf16.mxu0 0
      %1346 = vmatpush2.bf16.msra.mxu0 0
      %1347 = vmatprep.subr.bf16.mxu0 0
      %1348 = vmatpush2.bf16.msra.mxu0 0
      %1349 = vmatprep.subr.bf16.mxu0 0
      %1350 = vmatpush2.bf16.msra.mxu0 0
      %1351 = vmatprep.subr.bf16.mxu0 0
      %1352 = vmatpush2.bf16.msra.mxu0 0
      %1353 = vmatprep.subr.bf16.mxu0 0
      %1354 = vmatpush2.bf16.msra.mxu0 0
      %1355 = vmatprep.subr.bf16.mxu0 0
      %1356 = vmatpush2.bf16.msra.mxu0 0
      %1357 = vmatprep.mubr.bf16.mxu0 0
      %1358 = vmatmul.mubr.bf16.gmra.mxu0 %v1320
      %v1359 = vpop.f32.mrf.mxu0
      %v1360 = vadd.f32 0.0, %v1359
      %v1361 = vpop.f32.mrf.mxu0
      %v1362 = vpop.f32.mrf.mxu0
      %v1363 = vadd.f32 0.0, %v1362
      %v1364 = vpop.f32.mrf.mxu0
      %1365 = vdwg.mxu0
      %1368 = vrot.lane.b32.xlu0 %v1106, 16
      %v1369 = vpop.permute.xlu0 %1368
      %1370 = vrot.lane.b32.xlu0 %v1109, 16
      %v1371 = vpop.permute.xlu0 %1370
      %1376 = vrot.lane.b32.xlu0 %v1233, 32
      %v1377 = vpop.permute.xlu0 %1376
      %1378 = vrot.lane.b32.xlu0 %v1236, 32
      %v1379 = vpop.permute.xlu0 %1378
      %1384 = vrot.lane.b32.xlu0 %v1360, 48
      %v1385 = vpop.permute.xlu0 %1384
      %1386 = vrot.lane.b32.xlu0 %v1363, 48
      %v1387 = vpop.permute.xlu0 %1386
      %v1390 = vsel %vm859, %v978, %v1369
      %v1391 = vsel %vm859, %v981, %v1371
      %vm1392 = vcmask 261120
      %v1393 = vsel %vm1392, %v1390, %v1377
      %v1394 = vsel %vm1392, %v1391, %v1379
      %vm1395 = vcmask 392192
      %v1396 = vsel %vm1395, %v1393, %v1385
      %v1397 = vsel %vm1395, %v1394, %v1387
      %v1398 = vld [vmem:[%s658] sm:$0xf]
      %v1399 = vld [vmem:[%s658 + $0x4] sm:$0xf]
      %v1400 = vld [vmem:[%s658 + $0x8] sm:$0xf]
      %v1401 = vld [vmem:[%s658 + $0xc] sm:$0xf]
      %v1402 = vld [vmem:[%s658 + $0x10] sm:$0xf]
      %v1403 = vld [vmem:[%s658 + $0x14] sm:$0xf]
      %v1404 = vld [vmem:[%s658 + $0x18] sm:$0xf]
      %v1405 = vld [vmem:[%s658 + $0x1c] sm:$0xf]
      %v1406 = vpack.c.bf16 %v1397, %v1396
      %v1415 = vunpack.c.l.b16 %v1398
      %v1416 = vunpack.c.l.b16 %v1399
      %v1417 = vunpack.c.l.b16 %v1400
      %v1418 = vunpack.c.l.b16 %v1401
      %v1419 = vunpack.c.l.b16 %v1402
      %v1420 = vunpack.c.l.b16 %v1403
      %v1421 = vunpack.c.l.b16 %v1404
      %v1422 = vunpack.c.l.b16 %v1405
      %v1423 = vpack.c.b16 %v1416, %v1415
      %v1424 = vpack.c.b16 %v1418, %v1417
      %v1425 = vpack.c.b16 %v1420, %v1419
      %v1426 = vpack.c.b16 %v1422, %v1421
      %v1432 = vsel %vm700, %v1406, 0
      %1434 = vmatprep.subr.bf16.mxu0 0
      %1435 = vmatpush1.bf16.msra.mxu0 0
      %1436 = vmatprep.subr.bf16.mxu0 0
      %1437 = vmatpush1.bf16.msra.mxu0 0
      %1438 = vmatprep.subr.bf16.mxu0 0
      %1439 = vmatpush1.bf16.msra.mxu0 0
      %1440 = vmatprep.subr.bf16.mxu0 0
      %1441 = vmatpush1.bf16.msra.mxu0 0
      %1442 = vmatprep.subr.bf16.mxu0 0
      %1443 = vmatpush1.bf16.msra.mxu0 %v1426
      %1444 = vmatprep.subr.bf16.mxu0 0
      %1445 = vmatpush1.bf16.msra.mxu0 %v1425
      %1446 = vmatprep.subr.bf16.mxu0 0
      %1447 = vmatpush1.bf16.msra.mxu0 %v1424
      %1448 = vmatprep.subr.bf16.mxu0 0
      %1449 = vmatpush1.bf16.msra.mxu0 %v1423
      %1450 = vmatprep.subr.bf16.mxu0 0
      %1451 = vmatpush2.bf16.msra.mxu0 0
      %1452 = vmatprep.subr.bf16.mxu0 0
      %1453 = vmatpush2.bf16.msra.mxu0 0
      %1454 = vmatprep.subr.bf16.mxu0 0
      %1455 = vmatpush2.bf16.msra.mxu0 0
      %1456 = vmatprep.subr.bf16.mxu0 0
      %1457 = vmatpush2.bf16.msra.mxu0 0
      %1458 = vmatprep.subr.bf16.mxu0 0
      %1459 = vmatpush2.bf16.msra.mxu0 0
      %1460 = vmatprep.subr.bf16.mxu0 0
      %1461 = vmatpush2.bf16.msra.mxu0 0
      %1462 = vmatprep.subr.bf16.mxu0 0
      %1463 = vmatpush2.bf16.msra.mxu0 0
      %1464 = vmatprep.subr.bf16.mxu0 0
      %1465 = vmatpush2.bf16.msra.mxu0 0
      %1466 = vmatprep.mubr.bf16.mxu0 0
      %1467 = vmatmul.mubr.bf16.gmra.mxu0 %v1432
      %v1468 = vpop.f32.mrf.mxu0
      %v1469 = vadd.f32 0.0, %v1468
      %v1470 = vpop.f32.mrf.mxu0
      %v1471 = vpop.f32.mrf.mxu0
      %v1472 = vadd.f32 0.0, %v1471
      %v1473 = vpop.f32.mrf.mxu0
      %1474 = vdwg.mxu0
      %v1475 = vadd.f32 %v696, %v1469
      %v1476 = vadd.f32 %v697, %v1472
      %v1477 = vld [vmem:[%s661] sm:$0x1]
      %v1479 = vlaneseq
      %v1480 = vshrl.u32 %v1479, 7
      %v1481 = vsub.s32 0, %v1480
      %v1482 = vrot.slane %v1477, %v1481
      %v1484 = vadd.f32 %v1475, %v1482
      %v1485 = vadd.f32 %v1476, %v1482
      %v1486 = vld [vmem:[%s664] sm:$0x1]
      %v1487 = vld [vmem:[%s667] sm:$0x1]
      %v1488 = vsel %vm700, %v1484, 0.0
      %1489 = vadd.xlane.f32.xlu0 %v1488
      %v1490 = vpop.xlane.xlu0 %1489
      %v1491 = vsel %vm704, %v1485, 0.0
      %1492 = vadd.xlane.f32.xlu0 %v1491
      %v1493 = vpop.xlane.xlu0 %1492
      %v1494 = vmul.f32 %v1490, %v708
      %v1495 = vmul.f32 %v1493, %v708
      %v1496 = vsub.f32 %v1484, %v1494
      %v1497 = vsub.f32 %v1485, %v1495
      %v1498 = vmul.f32 %v1496, %v1496
      %v1499 = vmul.f32 %v1497, %v1497
      %v1500 = vsel %vm700, %v1498, 0.0
      %1501 = vadd.xlane.f32.xlu0 %v1500
      %v1502 = vpop.xlane.xlu0 %1501
      %v1503 = vsel %vm704, %v1499, 0.0
      %1504 = vadd.xlane.f32.xlu0 %v1503
      %v1505 = vpop.xlane.xlu0 %1504
      %v1506 = vmul.f32 %v1502, %v708
      %v1507 = vmul.f32 %v1505, %v708
      %v1508 = vadd.f32 %v1506, 1e-06
      %v1509 = vadd.f32 %v1507, 1e-06
      %v1510 = vrsqrt.pop %v1508
      %v1511 = vrsqrt.pop %v1509
      %v1512 = vmul.f32 %v1496, %v1510
      %v1513 = vmul.f32 %v1497, %v1511
      %v1515 = vlaneseq
      %v1516 = vshrl.u32 %v1515, 7
      %v1517 = vsub.s32 0, %v1516
      %v1518 = vrot.slane %v1486, %v1517
      %v1520 = vmul.f32 %v1512, %v1518
      %v1521 = vmul.f32 %v1513, %v1518
      %v1523 = vlaneseq
      %v1524 = vshrl.u32 %v1523, 7
      %v1525 = vsub.s32 0, %v1524
      %v1526 = vrot.slane %v1487, %v1525
      %v1528 = vadd.f32 %v1520, %v1526
      %v1529 = vadd.f32 %v1521, %v1526
      %v1530 = vld [vmem:[%s672] sm:$0xff]
      %v1531 = vld [vmem:[%s672 + $0x8] sm:$0xff]
      %v1532 = vld [vmem:[%s672 + $0x10] sm:$0xff]
      %v1533 = vld [vmem:[%s672 + $0x18] sm:$0xff]
      %v1534 = vld [vmem:[%s672 + $0x20] sm:$0xff]
      %v1535 = vld [vmem:[%s672 + $0x28] sm:$0xff]
      %v1536 = vld [vmem:[%s672 + $0x30] sm:$0xff]
      %v1537 = vld [vmem:[%s672 + $0x38] sm:$0xff]
      %v1538 = vpack.c.bf16 %v1529, %v1528
      %v1539 = vld [vmem:[%s676] sm:$0x3]
      %v1541 = vlaneseq
      %v1542 = vshrl.u32 %v1541, 7
      %v1543 = vsub.s32 0, %v1542
      %v1544 = vrot.slane %v1539, %v1543
      %v1545 = vlaneseq
      %v1546 = vshrl.u32 %v1545, 7
      %v1547 = vsub.s32 1, %v1546
      %v1548 = vrot.slane %v1539, %v1547
      %v1559 = vunpack.c.l.b16 %v1530
      %v1560 = vunpack.c.h.b16 %v1530
      %v1561 = vunpack.c.l.b16 %v1531
      %v1562 = vunpack.c.h.b16 %v1531
      %v1563 = vunpack.c.l.b16 %v1532
      %v1564 = vunpack.c.h.b16 %v1532
      %v1565 = vunpack.c.l.b16 %v1533
      %v1566 = vunpack.c.h.b16 %v1533
      %v1567 = vunpack.c.l.b16 %v1534
      %v1568 = vunpack.c.h.b16 %v1534
      %v1569 = vunpack.c.l.b16 %v1535
      %v1570 = vunpack.c.h.b16 %v1535
      %v1571 = vunpack.c.l.b16 %v1536
      %v1572 = vunpack.c.h.b16 %v1536
      %v1573 = vunpack.c.l.b16 %v1537
      %v1574 = vunpack.c.h.b16 %v1537
      %v1575 = vpack.c.b16 %v1561, %v1559
      %v1576 = vpack.c.b16 %v1562, %v1560
      %v1577 = vpack.c.b16 %v1565, %v1563
      %v1578 = vpack.c.b16 %v1566, %v1564
      %v1579 = vpack.c.b16 %v1569, %v1567
      %v1580 = vpack.c.b16 %v1570, %v1568
      %v1581 = vpack.c.b16 %v1573, %v1571
      %v1582 = vpack.c.b16 %v1574, %v1572
      %v1592 = vsel %vm700, %v1538, 0
      %1594 = vmatprep.subr.bf16.mxu0 0
      %1595 = vmatpush1.bf16.msra.mxu0 0
      %1596 = vmatprep.subr.bf16.mxu0 0
      %1597 = vmatpush1.bf16.msra.mxu0 0
      %1598 = vmatprep.subr.bf16.mxu0 0
      %1599 = vmatpush1.bf16.msra.mxu0 0
      %1600 = vmatprep.subr.bf16.mxu0 0
      %1601 = vmatpush1.bf16.msra.mxu0 0
      %1602 = vmatprep.subr.bf16.mxu0 %v1582
      %1603 = vmatpush1.bf16.msra.mxu0 %v1581
      %1604 = vmatprep.subr.bf16.mxu0 %v1580
      %1605 = vmatpush1.bf16.msra.mxu0 %v1579
      %1606 = vmatprep.subr.bf16.mxu0 %v1578
      %1607 = vmatpush1.bf16.msra.mxu0 %v1577
      %1608 = vmatprep.subr.bf16.mxu0 %v1576
      %1609 = vmatpush1.bf16.msra.mxu0 %v1575
      %1610 = vmatprep.subr.bf16.mxu0 0
      %1611 = vmatpush2.bf16.msra.mxu0 0
      %1612 = vmatprep.subr.bf16.mxu0 0
      %1613 = vmatpush2.bf16.msra.mxu0 0
      %1614 = vmatprep.subr.bf16.mxu0 0
      %1615 = vmatpush2.bf16.msra.mxu0 0
      %1616 = vmatprep.subr.bf16.mxu0 0
      %1617 = vmatpush2.bf16.msra.mxu0 0
      %1618 = vmatprep.subr.bf16.mxu0 0
      %1619 = vmatpush2.bf16.msra.mxu0 0
      %1620 = vmatprep.subr.bf16.mxu0 0
      %1621 = vmatpush2.bf16.msra.mxu0 0
      %1622 = vmatprep.subr.bf16.mxu0 0
      %1623 = vmatpush2.bf16.msra.mxu0 0
      %1624 = vmatprep.subr.bf16.mxu0 0
      %1625 = vmatpush2.bf16.msra.mxu0 0
      %1626 = vmatprep.mubr.bf16.mxu0 0
      %1627 = vmatmul.mubr.bf16.gmra.mxu0 %v1592
      %v1628 = vpop.f32.mrf.mxu0
      %v1629 = vadd.f32 %v1544, %v1628
      %v1630 = vpop.f32.mrf.mxu0
      %v1631 = vadd.f32 %v1548, %v1630
      %v1632 = vpop.f32.mrf.mxu0
      %v1633 = vadd.f32 %v1544, %v1632
      %v1634 = vpop.f32.mrf.mxu0
      %v1635 = vadd.f32 %v1548, %v1634
      %1636 = vdwg.mxu0
      %v1637 = vmul.f32 %v1629, 0.5
      %v1638 = vmul.f32 %v1631, 0.5
      %v1639 = vmul.f32 %v1633, 0.5
      %v1640 = vmul.f32 %v1635, 0.5
      %v1641 = vmul.f32 %v1629, 0.044715
      %v1642 = vmul.f32 %v1631, 0.044715
      %v1643 = vmul.f32 %v1633, 0.044715
      %v1644 = vmul.f32 %v1635, 0.044715
      %v1645 = vmul.f32 %v1641, %v1629
      %v1646 = vmul.f32 %v1642, %v1631
      %v1647 = vmul.f32 %v1643, %v1633
      %v1648 = vmul.f32 %v1644, %v1635
      %v1649 = vmul.f32 %v1645, %v1629
      %v1650 = vmul.f32 %v1646, %v1631
      %v1651 = vmul.f32 %v1647, %v1633
      %v1652 = vmul.f32 %v1648, %v1635
      %v1653 = vadd.f32 %v1629, %v1649
      %v1654 = vadd.f32 %v1631, %v1650
      %v1655 = vadd.f32 %v1633, %v1651
      %v1656 = vadd.f32 %v1635, %v1652
      %v1657 = vmul.f32 %v1653, 0.7978846
      %v1658 = vmul.f32 %v1654, 0.7978846
      %v1659 = vmul.f32 %v1655, 0.7978846
      %v1660 = vmul.f32 %v1656, 0.7978846
      %v1661 = vtanh.pop %v1657
      %v1662 = vtanh.pop %v1658
      %v1663 = vtanh.pop %v1659
      %v1664 = vtanh.pop %v1660
      %v1665 = vadd.f32 %v1661, 1.0
      %v1666 = vadd.f32 %v1662, 1.0
      %v1667 = vadd.f32 %v1663, 1.0
      %v1668 = vadd.f32 %v1664, 1.0
      %v1669 = vmul.f32 %v1637, %v1665
      %v1670 = vmul.f32 %v1638, %v1666
      %v1671 = vmul.f32 %v1639, %v1667
      %v1672 = vmul.f32 %v1640, %v1668
      %v1673 = vld [vmem:[%s681] sm:$0xf]
      %v1674 = vld [vmem:[%s681 + $0x4] sm:$0xf]
      %v1675 = vld [vmem:[%s681 + $0x8] sm:$0xf]
      %v1676 = vld [vmem:[%s681 + $0xc] sm:$0xf]
      %v1677 = vld [vmem:[%s681 + $0x10] sm:$0xf]
      %v1678 = vld [vmem:[%s681 + $0x14] sm:$0xf]
      %v1679 = vld [vmem:[%s681 + $0x18] sm:$0xf]
      %v1680 = vld [vmem:[%s681 + $0x1c] sm:$0xf]
      %v1681 = vld [vmem:[%s681 + $0x20] sm:$0xf]
      %v1682 = vld [vmem:[%s681 + $0x24] sm:$0xf]
      %v1683 = vld [vmem:[%s681 + $0x28] sm:$0xf]
      %v1684 = vld [vmem:[%s681 + $0x2c] sm:$0xf]
      %v1685 = vld [vmem:[%s681 + $0x30] sm:$0xf]
      %v1686 = vld [vmem:[%s681 + $0x34] sm:$0xf]
      %v1687 = vld [vmem:[%s681 + $0x38] sm:$0xf]
      %v1688 = vld [vmem:[%s681 + $0x3c] sm:$0xf]
      %v1689 = vld [vmem:[%s681 + $0x40] sm:$0xf]
      %v1690 = vld [vmem:[%s681 + $0x44] sm:$0xf]
      %v1691 = vld [vmem:[%s681 + $0x48] sm:$0xf]
      %v1692 = vld [vmem:[%s681 + $0x4c] sm:$0xf]
      %v1693 = vld [vmem:[%s681 + $0x50] sm:$0xf]
      %v1694 = vld [vmem:[%s681 + $0x54] sm:$0xf]
      %v1695 = vld [vmem:[%s681 + $0x58] sm:$0xf]
      %v1696 = vld [vmem:[%s681 + $0x5c] sm:$0xf]
      %v1697 = vld [vmem:[%s681 + $0x60] sm:$0xf]
      %v1698 = vld [vmem:[%s681 + $0x64] sm:$0xf]
      %v1699 = vld [vmem:[%s681 + $0x68] sm:$0xf]
      %v1700 = vld [vmem:[%s681 + $0x6c] sm:$0xf]
      %v1701 = vld [vmem:[%s681 + $0x70] sm:$0xf]
      %v1702 = vld [vmem:[%s681 + $0x74] sm:$0xf]
      %v1703 = vld [vmem:[%s681 + $0x78] sm:$0xf]
      %v1704 = vld [vmem:[%s681 + $0x7c] sm:$0xf]
      %v1705 = vpack.c.bf16 %v1671, %v1669
      %v1706 = vpack.c.bf16 %v1672, %v1670
      %v1739 = vunpack.c.l.b16 %v1673
      %v1740 = vunpack.c.l.b16 %v1674
      %v1741 = vunpack.c.l.b16 %v1675
      %v1742 = vunpack.c.l.b16 %v1676
      %v1743 = vunpack.c.l.b16 %v1677
      %v1744 = vunpack.c.l.b16 %v1678
      %v1745 = vunpack.c.l.b16 %v1679
      %v1746 = vunpack.c.l.b16 %v1680
      %v1747 = vunpack.c.l.b16 %v1681
      %v1748 = vunpack.c.l.b16 %v1682
      %v1749 = vunpack.c.l.b16 %v1683
      %v1750 = vunpack.c.l.b16 %v1684
      %v1751 = vunpack.c.l.b16 %v1685
      %v1752 = vunpack.c.l.b16 %v1686
      %v1753 = vunpack.c.l.b16 %v1687
      %v1754 = vunpack.c.l.b16 %v1688
      %v1755 = vunpack.c.l.b16 %v1689
      %v1756 = vunpack.c.l.b16 %v1690
      %v1757 = vunpack.c.l.b16 %v1691
      %v1758 = vunpack.c.l.b16 %v1692
      %v1759 = vunpack.c.l.b16 %v1693
      %v1760 = vunpack.c.l.b16 %v1694
      %v1761 = vunpack.c.l.b16 %v1695
      %v1762 = vunpack.c.l.b16 %v1696
      %v1763 = vunpack.c.l.b16 %v1697
      %v1764 = vunpack.c.l.b16 %v1698
      %v1765 = vunpack.c.l.b16 %v1699
      %v1766 = vunpack.c.l.b16 %v1700
      %v1767 = vunpack.c.l.b16 %v1701
      %v1768 = vunpack.c.l.b16 %v1702
      %v1769 = vunpack.c.l.b16 %v1703
      %v1770 = vunpack.c.l.b16 %v1704
      %v1771 = vpack.c.b16 %v1740, %v1739
      %v1772 = vpack.c.b16 %v1742, %v1741
      %v1773 = vpack.c.b16 %v1744, %v1743
      %v1774 = vpack.c.b16 %v1746, %v1745
      %v1775 = vpack.c.b16 %v1748, %v1747
      %v1776 = vpack.c.b16 %v1750, %v1749
      %v1777 = vpack.c.b16 %v1752, %v1751
      %v1778 = vpack.c.b16 %v1754, %v1753
      %v1779 = vpack.c.b16 %v1756, %v1755
      %v1780 = vpack.c.b16 %v1758, %v1757
      %v1781 = vpack.c.b16 %v1760, %v1759
      %v1782 = vpack.c.b16 %v1762, %v1761
      %v1783 = vpack.c.b16 %v1764, %v1763
      %v1784 = vpack.c.b16 %v1766, %v1765
      %v1785 = vpack.c.b16 %v1768, %v1767
      %v1786 = vpack.c.b16 %v1770, %v1769
      %1803 = vmatprep.subr.bf16.mxu0 0
      %1804 = vmatpush1.bf16.msra.mxu0 %v1778
      %1805 = vmatprep.subr.bf16.mxu0 0
      %1806 = vmatpush1.bf16.msra.mxu0 %v1777
      %1807 = vmatprep.subr.bf16.mxu0 0
      %1808 = vmatpush1.bf16.msra.mxu0 %v1776
      %1809 = vmatprep.subr.bf16.mxu0 0
      %1810 = vmatpush1.bf16.msra.mxu0 %v1775
      %1811 = vmatprep.subr.bf16.mxu0 0
      %1812 = vmatpush1.bf16.msra.mxu0 %v1774
      %1813 = vmatprep.subr.bf16.mxu0 0
      %1814 = vmatpush1.bf16.msra.mxu0 %v1773
      %1815 = vmatprep.subr.bf16.mxu0 0
      %1816 = vmatpush1.bf16.msra.mxu0 %v1772
      %1817 = vmatprep.subr.bf16.mxu0 0
      %1818 = vmatpush1.bf16.msra.mxu0 %v1771
      %1819 = vmatprep.subr.bf16.mxu0 0
      %1820 = vmatpush2.bf16.msra.mxu0 %v1786
      %1821 = vmatprep.subr.bf16.mxu0 0
      %1822 = vmatpush2.bf16.msra.mxu0 %v1785
      %1823 = vmatprep.subr.bf16.mxu0 0
      %1824 = vmatpush2.bf16.msra.mxu0 %v1784
      %1825 = vmatprep.subr.bf16.mxu0 0
      %1826 = vmatpush2.bf16.msra.mxu0 %v1783
      %1827 = vmatprep.subr.bf16.mxu0 0
      %1828 = vmatpush2.bf16.msra.mxu0 %v1782
      %1829 = vmatprep.subr.bf16.mxu0 0
      %1830 = vmatpush2.bf16.msra.mxu0 %v1781
      %1831 = vmatprep.subr.bf16.mxu0 0
      %1832 = vmatpush2.bf16.msra.mxu0 %v1780
      %1833 = vmatprep.subr.bf16.mxu0 0
      %1834 = vmatpush2.bf16.msra.mxu0 %v1779
      %1835 = vmatprep.mubr.bf16.mxu0 %v1706
      %1836 = vmatmul.mubr.bf16.gmra.mxu0 %v1705
      %v1837 = vpop.f32.mrf.mxu0
      %v1838 = vadd.f32 0.0, %v1837
      %v1839 = vpop.f32.mrf.mxu0
      %v1840 = vpop.f32.mrf.mxu0
      %v1841 = vadd.f32 0.0, %v1840
      %v1842 = vpop.f32.mrf.mxu0
      %1843 = vdwg.mxu0
      %v1844 = vadd.f32 %v1484, %v1838
      %v1845 = vadd.f32 %v1485, %v1841
      %v1846 = vld [vmem:[%s684] sm:$0x1]
      %v1848 = vlaneseq
      %v1849 = vshrl.u32 %v1848, 7
      %v1850 = vsub.s32 0, %v1849
      %v1851 = vrot.slane %v1846, %v1850
      %v1853 = vadd.f32 %v1844, %v1851
      %v1854 = vadd.f32 %v1845, %v1851
      %1855 = vst.msk [vmem:[#allocation2] sm:$0xff] %vm700, %v1853
      %1856 = vst.msk [vmem:[#allocation2 + $0x8] sm:$0x3] %vm704, %v1854
      %p1857 = scmp.eq.s32.totalorder %s27, 1
      // Predicated region
      $region89: #{albef_forward_train.5} parent=83 // pred_check
        %p1858 = pneg %p1857
      $region90: #{albef_forward_train.5} parent=83 // pred_check_branch
        %1860 = sbr.rel (%p1858) target = $region92
      $region91: #{albef_forward_train.5} parent=83 // pred_region
        %v1861 = vld [vmem:[%s1] sm:$0x1]
        %v1862 = vld [vmem:[%s2] sm:$0x1]
        %v1863 = vsel %vm700, %v1853, 0.0
        %1864 = vadd.xlane.f32.xlu0 %v1863
        %v1865 = vpop.xlane.xlu0 %1864
        %v1866 = vsel %vm704, %v1854, 0.0
        %1867 = vadd.xlane.f32.xlu0 %v1866
        %v1868 = vpop.xlane.xlu0 %1867
        %v1869 = vmul.f32 %v1865, %v708
        %v1870 = vmul.f32 %v1868, %v708
        %v1871 = vsub.f32 %v1853, %v1869
        %v1872 = vsub.f32 %v1854, %v1870
        %v1873 = vmul.f32 %v1871, %v1871
        %v1874 = vmul.f32 %v1872, %v1872
        %v1875 = vsel %vm700, %v1873, 0.0
        %1876 = vadd.xlane.f32.xlu0 %v1875
        %v1877 = vpop.xlane.xlu0 %1876
        %v1878 = vsel %vm704, %v1874, 0.0
        %1879 = vadd.xlane.f32.xlu0 %v1878
        %v1880 = vpop.xlane.xlu0 %1879
        %v1881 = vmul.f32 %v1877, %v708
        %v1882 = vmul.f32 %v1880, %v708
        %v1883 = vadd.f32 %v1881, 1e-06
        %v1884 = vadd.f32 %v1882, 1e-06
        %v1885 = vrsqrt.pop %v1883
        %v1886 = vrsqrt.pop %v1884
        %v1887 = vmul.f32 %v1871, %v1885
        %v1888 = vmul.f32 %v1872, %v1886
        %v1890 = vlaneseq
        %v1891 = vshrl.u32 %v1890, 7
        %v1892 = vsub.s32 0, %v1891
        %v1893 = vrot.slane %v1861, %v1892
        %v1895 = vmul.f32 %v1887, %v1893
        %v1896 = vmul.f32 %v1888, %v1893
        %v1898 = vlaneseq
        %v1899 = vshrl.u32 %v1898, 7
        %v1900 = vsub.s32 0, %v1899
        %v1901 = vrot.slane %v1862, %v1900
        %v1903 = vadd.f32 %v1895, %v1901
        %v1904 = vadd.f32 %v1896, %v1901
        %v1905 = vpack.c.bf16 %v1904, %v1903
        %v1907 = vunpack.c.l.b16 %v1905
        %v1908 = vunpack.c.h.b16 %v1905
        %v1909 = vpack.c.b16 %v1907, %v1907
        %v1910 = vpack.c.b16 %v1908, %v1908
        %vm1913 = vcmask 519168
        %1914 = vst.msk [vmem:[%s16] sm:$0xf] %vm1913, %v1909
        %vm1915 = vcmask 516096
        %1916 = vst.msk [vmem:[%s16 + $0x4] sm:$0x1] %vm1915, %v1910
      $region92: #{albef_forward_train.5} parent=83 // pred_fallthru
        _
      // Predicated region
      $region93: #{albef_forward_train.5} parent=83 // pred_check
        %p1917 = pneg %p436
      $region94: #{albef_forward_train.5} parent=83 // pred_check_branch
        %1919 = sbr.rel (%p1917) target = $region96
      $region95: #{albef_forward_train.5} parent=83 // pred_region
        _
      $region96: #{albef_forward_train.5} parent=83 // pred_fallthru
        _
      // Predicated region
      $region97: #{albef_forward_train.5} parent=83 // pred_check
        %p1920 = pneg %p436
      $region98: #{albef_forward_train.5} parent=83 // pred_check_branch
        %1922 = sbr.rel (%p1920) target = $region100
      $region99: #{albef_forward_train.5} parent=83 // pred_region
        _
      $region100: #{albef_forward_train.5} parent=83 // pred_fallthru
        _
    $region84: #{albef_forward_train.5} parent=5 // pred_fallthru
      _
    %p1923 = scmp.le.s32.totalorder 2, %s22
    // Predicated region
    $region101: #{albef_forward_train.5} parent=5 // pred_check
      %p1924 = pneg %p1923
    $region102: #{albef_forward_train.5} parent=5 // pred_check_branch
      %1926 = sbr.rel (%p1924) target = $region104
    $region103: #{albef_forward_train.5} parent=5 // pred_region
      %s1927 = ssub.s32 %s22, 2
    $region104: #{albef_forward_train.5} parent=5 // pred_fallthru
      _
  $region6: #{albef_forward_train.5} parent=0 // loop_footer
    %s26 = sadd.s32 1, %s22
  $region7: #{albef_forward_train.5} parent=0 // loop_footer_branch
    %21 = sbr.rel target = $region3
  $region8: #{albef_forward_train.5} parent=0 // loop_exit
    _

// kernel: albef_forward_train.6
$region0: #{albef_forward_train.6}
  #allocation0 [shape = 'u32[]', space=smem, size = 0x4, offset = 0x4, fixed_abs, tag = 'smem constant byte address 0x4 - core index']
  #allocation1 [shape = 'u32[144,128]{1,0:T(1,128)}', space=vmem, size = 0x12000, scoped, tag = 'internal scratch']
  #allocation2 [shape = 'f32[16,64]{1,0:T(8,128)}', space=vmem, size = 0x2000, scoped, tag = 'scratch operand']
  %s0 = inlined_call_operand.vmem [shape: f32[16,64], index: 0, kind: input, shape index: {}]
  %s1 = inlined_call_operand.vmem [shape: f32[1,64], index: 1, kind: input, shape index: {}]
  %s2 = inlined_call_operand.hbm [shape: f32[1,64], index: 2, kind: input, shape index: {}]
  %s3 = inlined_call_operand.vmem [shape: bf16[10,64], index: 3, kind: input, shape index: {}]
  %s4 = inlined_call_operand.vmem [shape: f32[16,16], index: 4, kind: input, shape index: {}]
  %s5 = inlined_call_operand.vmem [shape: f32[16,10], index: 5, kind: input, shape index: {}]
  %s6 = inlined_call_operand.vmem [shape: bf16[2,64,192], index: 6, kind: input, shape index: {}]
  %s7 = inlined_call_operand.vmem [shape: f32[2,1,192], index: 7, kind: input, shape index: {}]
  %s8 = inlined_call_operand.vmem [shape: bf16[2,64,64], index: 8, kind: input, shape index: {}]
  %s9 = inlined_call_operand.vmem [shape: f32[2,1,64], index: 9, kind: input, shape index: {}]
  %s10 = inlined_call_operand.vmem [shape: f32[2,1,64], index: 10, kind: input, shape index: {}]
  %s11 = inlined_call_operand.vmem [shape: f32[2,1,64], index: 11, kind: input, shape index: {}]
  %s12 = inlined_call_operand.vmem [shape: bf16[2,64,64], index: 12, kind: input, shape index: {}]
  %s13 = inlined_call_operand.vmem [shape: f32[2,1,64], index: 13, kind: input, shape index: {}]
  %s14 = inlined_call_operand.vmem [shape: bf16[2,64,128], index: 14, kind: input, shape index: {}]
  %s15 = inlined_call_operand.vmem [shape: f32[2,1,128], index: 15, kind: input, shape index: {}]
  %s16 = inlined_call_operand.vmem [shape: bf16[2,64,64], index: 16, kind: input, shape index: {}]
  %s17 = inlined_call_operand.vmem [shape: f32[2,1,64], index: 17, kind: input, shape index: {}]
  %s18 = inlined_call_operand.vmem [shape: f32[2,1,64], index: 18, kind: input, shape index: {}]
  %s19 = inlined_call_operand.vmem [shape: f32[2,1,64], index: 19, kind: input, shape index: {}]
  %s20 = inlined_call_operand.vmem [shape: bf16[2,64,256], index: 20, kind: input, shape index: {}]
  %s21 = inlined_call_operand.vmem [shape: f32[2,1,256], index: 21, kind: input, shape index: {}]
  %s22 = inlined_call_operand.vmem [shape: bf16[2,256,64], index: 22, kind: input, shape index: {}]
  %s23 = inlined_call_operand.vmem [shape: f32[2,1,64], index: 23, kind: input, shape index: {}]
  %s24 = inlined_call_operand.vmem [shape: f32[2,1,64], index: 24, kind: input, shape index: {}]
  %s25 = inlined_call_operand.vmem [shape: f32[2,1,64], index: 25, kind: input, shape index: {}]
  %s26 = inlined_call_operand.vmem [shape: bf16[16,64], index: 26, kind: output, shape index: {}]
  %s27 = sld [smem:[#allocation0]]
  $region149: #{albef_forward_train.6} parent=0
    _
  %s29 = ssub.s32 1, %s27
  %s30 = scalar_select 0, %s29, %s27
  $region1: #{albef_forward_train.6} parent=0
    #allocation3 [shape = 'u8[512]{0}', space=vmem, size = 0x400, scoped, tag = 'input window, operand 2, single buffered']
    #allocation4 [shape = 's32[2]{0}', space=sflag, size = 0x8, scoped, tag = 'scoped memory for albef_forward_train.6']
    %31 = vsyncpa [#allocation4], 0
    loop: start=0, step=1, limit=4
    $region2: #{albef_forward_train.6} parent=1 // loop_pre_header
      _
    $region3: #{albef_forward_train.6} parent=1 // loop_header
      %s33 = sphi 0, %s37
      %p34 = scmp.ge.s32.totalorder %s33, 4
      %s41 = sphi 0, %s41
      %s43 = sphi 0, %s41
      %s44 = sphi 0, %s43
      %s58 = sphi 0, %s44
      %s62 = sphi 0, %s62
      %s64 = sphi 0, %s62
      %s65 = sphi 0, %s64
      %s79 = sphi 0, %s65
      %s83 = sphi 0, %s83
      %s85 = sphi 0, %s83
      %s86 = sphi 0, %s85
      %s100 = sphi 0, %s86
      %s104 = sphi 0, %s104
      %s106 = sphi 0, %s104
      %s107 = sphi 0, %s106
      %s121 = sphi 0, %s107
      %s125 = sphi 0, %s125
      %s127 = sphi 0, %s125
      %s128 = sphi 0, %s127
      %s142 = sphi 0, %s128
      %s146 = sphi 0, %s146
      %s148 = sphi 0, %s146
      %s149 = sphi 0, %s148
      %s163 = sphi 0, %s149
      %s169 = sphi 0, %s171
      %s172 = sphi 0, %s169
      %s173 = sphi 0, %s172
      %s189 = sphi 0, %s173
      %s195 = sphi 0, %s197
      %s198 = sphi 0, %s195
      %s199 = sphi 0, %s198
      %s215 = sphi 0, %s199
      %s221 = sphi 0, %s223
      %s224 = sphi 0, %s221
      %s225 = sphi 0, %s224
      %s241 = sphi 0, %s225
      %s247 = sphi 0, %s249
      %s250 = sphi 0, %s247
      %s251 = sphi 0, %s250
      %s267 = sphi 0, %s251
      %s273 = sphi 0, %s275
      %s276 = sphi 0, %s273
      %s277 = sphi 0, %s276
      %s293 = sphi 0, %s277
      %s299 = sphi 0, %s301
      %s302 = sphi 0, %s299
      %s303 = sphi 0, %s302
      %s319 = sphi 0, %s303
      %s325 = sphi 0, %s327
      %s328 = sphi 0, %s325
      %s329 = sphi 0, %s328
      %s345 = sphi 0, %s329
      %s351 = sphi 0, %s353
      %s354 = sphi 0, %s351
      %s355 = sphi 0, %s354
      %s371 = sphi 0, %s355
      %s377 = sphi 0, %s379
      %s380 = sphi 0, %s377
      %s381 = sphi 0, %s380
      %s397 = sphi 0, %s381
      %s403 = sphi 0, %s405
      %s406 = sphi 0, %s403
      %s407 = sphi 0, %s406
      %s423 = sphi 0, %s407
      %s429 = sphi 0, %s431
      %s432 = sphi 0, %s429
      %s433 = sphi 0, %s432
      %s449 = sphi 0, %s433
      %s455 = sphi 0, %s457
      %s458 = sphi 0, %s455
      %s459 = sphi 0, %s458
      %s475 = sphi 0, %s459
      %s481 = sphi 0, %s483
      %s484 = sphi 0, %s481
      %s485 = sphi 0, %s484
      %s501 = sphi 0, %s485
      %s507 = sphi 0, %s509
      %s510 = sphi 0, %s507
      %s511 = sphi 0, %s510
      %s527 = sphi 0, %s511
      %s533 = sphi 0, %s535
      %s536 = sphi 0, %s533
      %s537 = sphi 0, %s536
      %s553 = sphi 0, %s537
      %s559 = sphi 0, %s561
      %s562 = sphi 0, %s559
      %s563 = sphi 0, %s562
      %s579 = sphi 0, %s563
      %s585 = sphi 0, %s587
      %s588 = sphi 0, %s585
      %s589 = sphi 0, %s588
      %s605 = sphi 0, %s589
      %s611 = sphi 0, %s613
      %s614 = sphi 0, %s611
      %s615 = sphi 0, %s614
      %s631 = sphi 0, %s615
      %s637 = sphi 0, %s639
      %s640 = sphi 0, %s637
      %s641 = sphi 0, %s640
      %s657 = sphi 0, %s641
      %s663 = sphi 0, %s665
      %s666 = sphi 0, %s663
      %s667 = sphi 0, %s666
      %s683 = sphi 0, %s667
      %s687 = sphi 0, %s687
      %s689 = sphi 0, %s687
      %s690 = sphi 0, %s689
      %s704 = sphi 0, %s690
    $region4: #{albef_forward_train.6} parent=1 // loop_header_branch
      %36 = sbr.rel (%p34) target = $region8
    $region5: #{albef_forward_train.6} parent=1 // loop_body
      %s38 = ssub.s32 %s33, 1
      %s39 = ssub.s32 %s33, 2
      %s40 = sadd.s32 %s33, 1
      %s42 = sadd.s32 %s41, 1
      %p45 = scmp.eq.s32.totalorder %s33, 1
      %p46 = scmp.ne.s32.totalorder %s41, %s43
      %p47 = scmp.eq.s32.totalorder %s33, 0
      %p48 = por %p46, %p47
      %p49 = scmp.ne.s32.totalorder %s41, %s43
      %p50 = scmp.eq.s32.totalorder %s38, 1
      %p51 = por %p49, %p50
      %p52 = scmp.ne.s32.totalorder %s43, %s44
      %p53 = scmp.eq.s32.totalorder %s38, 0
      %p54 = por %p52, %p53
      %p55 = scmp.ne.s32.totalorder %s43, %s44
      %p56 = scmp.eq.s32.totalorder %s39, 1
      %p57 = por %p55, %p56
      %p59 = scmp.ne.s32.totalorder %s44, %s58
      %p60 = scmp.eq.s32.totalorder %s39, 0
      %p61 = por %p59, %p60
      %s63 = sadd.s32 %s62, 1
      %p66 = scmp.eq.s32.totalorder %s33, 1
      %p67 = scmp.ne.s32.totalorder %s62, %s64
      %p68 = scmp.eq.s32.totalorder %s33, 0
      %p69 = por %p67, %p68
      %p70 = scmp.ne.s32.totalorder %s62, %s64
      %p71 = scmp.eq.s32.totalorder %s38, 1
      %p72 = por %p70, %p71
      %p73 = scmp.ne.s32.totalorder %s64, %s65
      %p74 = scmp.eq.s32.totalorder %s38, 0
      %p75 = por %p73, %p74
      %p76 = scmp.ne.s32.totalorder %s64, %s65
      %p77 = scmp.eq.s32.totalorder %s39, 1
      %p78 = por %p76, %p77
      %p80 = scmp.ne.s32.totalorder %s65, %s79
      %p81 = scmp.eq.s32.totalorder %s39, 0
      %p82 = por %p80, %p81
      %s84 = sadd.s32 %s83, 1
      %p87 = scmp.eq.s32.totalorder %s33, 1
      %p88 = scmp.ne.s32.totalorder %s83, %s85
      %p89 = scmp.eq.s32.totalorder %s33, 0
      %p90 = por %p88, %p89
      %p91 = scmp.ne.s32.totalorder %s83, %s85
      %p92 = scmp.eq.s32.totalorder %s38, 1
      %p93 = por %p91, %p92
      %p94 = scmp.ne.s32.totalorder %s85, %s86
      %p95 = scmp.eq.s32.totalorder %s38, 0
      %p96 = por %p94, %p95
      %p97 = scmp.ne.s32.totalorder %s85, %s86
      %p98 = scmp.eq.s32.totalorder %s39, 1
      %p99 = por %p97, %p98
      %p101 = scmp.ne.s32.totalorder %s86, %s100
      %p102 = scmp.eq.s32.totalorder %s39, 0
      %p103 = por %p101, %p102
      %s105 = sadd.s32 %s104, 1
      %p108 = scmp.eq.s32.totalorder %s33, 1
      %p109 = scmp.ne.s32.totalorder %s104, %s106
      %p110 = scmp.eq.s32.totalorder %s33, 0
      %p111 = por %p109, %p110
      %p112 = scmp.ne.s32.totalorder %s104, %s106
      %p113 = scmp.eq.s32.totalorder %s38, 1
      %p114 = por %p112, %p113
      %p115 = scmp.ne.s32.totalorder %s106, %s107
      %p116 = scmp.eq.s32.totalorder %s38, 0
      %p117 = por %p115, %p116
      %p118 = scmp.ne.s32.totalorder %s106, %s107
      %p119 = scmp.eq.s32.totalorder %s39, 1
      %p120 = por %p118, %p119
      %p122 = scmp.ne.s32.totalorder %s107, %s121
      %p123 = scmp.eq.s32.totalorder %s39, 0
      %p124 = por %p122, %p123
      %s126 = sadd.s32 %s125, 1
      %p129 = scmp.eq.s32.totalorder %s33, 1
      %p130 = scmp.ne.s32.totalorder %s125, %s127
      %p131 = scmp.eq.s32.totalorder %s33, 0
      %p132 = por %p130, %p131
      %p133 = scmp.ne.s32.totalorder %s125, %s127
      %p134 = scmp.eq.s32.totalorder %s38, 1
      %p135 = por %p133, %p134
      %p136 = scmp.ne.s32.totalorder %s127, %s128
      %p137 = scmp.eq.s32.totalorder %s38, 0
      %p138 = por %p136, %p137
      %p139 = scmp.ne.s32.totalorder %s127, %s128
      %p140 = scmp.eq.s32.totalorder %s39, 1
      %p141 = por %p139, %p140
      %p143 = scmp.ne.s32.totalorder %s128, %s142
      %p144 = scmp.eq.s32.totalorder %s39, 0
      %p145 = por %p143, %p144
      %s147 = sadd.s32 %s146, 1
      %p150 = scmp.eq.s32.totalorder %s33, 1
      %p151 = scmp.ne.s32.totalorder %s146, %s148
      %p152 = scmp.eq.s32.totalorder %s33, 0
      %p153 = por %p151, %p152
      %p154 = scmp.ne.s32.totalorder %s146, %s148
      %p155 = scmp.eq.s32.totalorder %s38, 1
      %p156 = por %p154, %p155
      %p157 = scmp.ne.s32.totalorder %s148, %s149
      %p158 = scmp.eq.s32.totalorder %s38, 0
      %p159 = por %p157, %p158
      %p160 = scmp.ne.s32.totalorder %s148, %s149
      %p161 = scmp.eq.s32.totalorder %s39, 1
      %p162 = por %p160, %p161
      %p164 = scmp.ne.s32.totalorder %s149, %s163
      %p165 = scmp.eq.s32.totalorder %s39, 0
      %p166 = por %p164, %p165
      %s167 = ssub.s32 %s33, %s40
      %p168 = scmp.eq.s32.totalorder %s167, 0
      %s170 = sadd.s32 %s169, 1
      %s171 = scalar_select %p168, %s169, %s170
      %p174 = pneg %p168
      %p175 = scmp.eq.s32.totalorder %s33, 1
      %p176 = por %p174, %p175
      %p177 = scmp.ne.s32.totalorder %s169, %s172
      %p178 = scmp.eq.s32.totalorder %s33, 0
      %p179 = por %p177, %p178
      %p180 = scmp.ne.s32.totalorder %s169, %s172
      %p181 = scmp.eq.s32.totalorder %s38, 1
      %p182 = por %p180, %p181
      %p183 = scmp.ne.s32.totalorder %s172, %s173
      %p184 = scmp.eq.s32.totalorder %s38, 0
      %p185 = por %p183, %p184
      %p186 = scmp.ne.s32.totalorder %s172, %s173
      %p187 = scmp.eq.s32.totalorder %s39, 1
      %p188 = por %p186, %p187
      %p190 = scmp.ne.s32.totalorder %s173, %s189
      %p191 = scmp.eq.s32.totalorder %s39, 0
      %p192 = por %p190, %p191
      %s193 = ssub.s32 %s33, %s40
      %p194 = scmp.eq.s32.totalorder %s193, 0
      %s196 = sadd.s32 %s195, 1
      %s197 = scalar_select %p194, %s195, %s196
      %p200 = pneg %p194
      %p201 = scmp.eq.s32.totalorder %s33, 1
      %p202 = por %p200, %p201
      %p203 = scmp.ne.s32.totalorder %s195, %s198
      %p204 = scmp.eq.s32.totalorder %s33, 0
      %p205 = por %p203, %p204
      %p206 = scmp.ne.s32.totalorder %s195, %s198
      %p207 = scmp.eq.s32.totalorder %s38, 1
      %p208 = por %p206, %p207
      %p209 = scmp.ne.s32.totalorder %s198, %s199
      %p210 = scmp.eq.s32.totalorder %s38, 0
      %p211 = por %p209, %p210
      %p212 = scmp.ne.s32.totalorder %s198, %s199
      %p213 = scmp.eq.s32.totalorder %s39, 1
      %p214 = por %p212, %p213
      %p216 = scmp.ne.s32.totalorder %s199, %s215
      %p217 = scmp.eq.s32.totalorder %s39, 0
      %p218 = por %p216, %p217
      %s219 = ssub.s32 %s33, %s40
      %p220 = scmp.eq.s32.totalorder %s219, 0
      %s222 = sadd.s32 %s221, 1
      %s223 = scalar_select %p220, %s221, %s222
      %p226 = pneg %p220
      %p227 = scmp.eq.s32.totalorder %s33, 1
      %p228 = por %p226, %p227
      %p229 = scmp.ne.s32.totalorder %s221, %s224
      %p230 = scmp.eq.s32.totalorder %s33, 0
      %p231 = por %p229, %p230
      %p232 = scmp.ne.s32.totalorder %s221, %s224
      %p233 = scmp.eq.s32.totalorder %s38, 1
      %p234 = por %p232, %p233
      %p235 = scmp.ne.s32.totalorder %s224, %s225
      %p236 = scmp.eq.s32.totalorder %s38, 0
      %p237 = por %p235, %p236
      %p238 = scmp.ne.s32.totalorder %s224, %s225
      %p239 = scmp.eq.s32.totalorder %s39, 1
      %p240 = por %p238, %p239
      %p242 = scmp.ne.s32.totalorder %s225, %s241
      %p243 = scmp.eq.s32.totalorder %s39, 0
      %p244 = por %p242, %p243
      %s245 = ssub.s32 %s33, %s40
      %p246 = scmp.eq.s32.totalorder %s245, 0
      %s248 = sadd.s32 %s247, 1
      %s249 = scalar_select %p246, %s247, %s248
      %p252 = pneg %p246
      %p253 = scmp.eq.s32.totalorder %s33, 1
      %p254 = por %p252, %p253
      %p255 = scmp.ne.s32.totalorder %s247, %s250
      %p256 = scmp.eq.s32.totalorder %s33, 0
      %p257 = por %p255, %p256
      %p258 = scmp.ne.s32.totalorder %s247, %s250
      %p259 = scmp.eq.s32.totalorder %s38, 1
      %p260 = por %p258, %p259
      %p261 = scmp.ne.s32.totalorder %s250, %s251
      %p262 = scmp.eq.s32.totalorder %s38, 0
      %p263 = por %p261, %p262
      %p264 = scmp.ne.s32.totalorder %s250, %s251
      %p265 = scmp.eq.s32.totalorder %s39, 1
      %p266 = por %p264, %p265
      %p268 = scmp.ne.s32.totalorder %s251, %s267
      %p269 = scmp.eq.s32.totalorder %s39, 0
      %p270 = por %p268, %p269
      %s271 = ssub.s32 %s33, %s40
      %p272 = scmp.eq.s32.totalorder %s271, 0
      %s274 = sadd.s32 %s273, 1
      %s275 = scalar_select %p272, %s273, %s274
      %p278 = pneg %p272
      %p279 = scmp.eq.s32.totalorder %s33, 1
      %p280 = por %p278, %p279
      %p281 = scmp.ne.s32.totalorder %s273, %s276
      %p282 = scmp.eq.s32.totalorder %s33, 0
      %p283 = por %p281, %p282
      %p284 = scmp.ne.s32.totalorder %s273, %s276
      %p285 = scmp.eq.s32.totalorder %s38, 1
      %p286 = por %p284, %p285
      %p287 = scmp.ne.s32.totalorder %s276, %s277
      %p288 = scmp.eq.s32.totalorder %s38, 0
      %p289 = por %p287, %p288
      %p290 = scmp.ne.s32.totalorder %s276, %s277
      %p291 = scmp.eq.s32.totalorder %s39, 1
      %p292 = por %p290, %p291
      %p294 = scmp.ne.s32.totalorder %s277, %s293
      %p295 = scmp.eq.s32.totalorder %s39, 0
      %p296 = por %p294, %p295
      %s297 = ssub.s32 %s33, %s40
      %p298 = scmp.eq.s32.totalorder %s297, 0
      %s300 = sadd.s32 %s299, 1
      %s301 = scalar_select %p298, %s299, %s300
      %p304 = pneg %p298
      %p305 = scmp.eq.s32.totalorder %s33, 1
      %p306 = por %p304, %p305
      %p307 = scmp.ne.s32.totalorder %s299, %s302
      %p308 = scmp.eq.s32.totalorder %s33, 0
      %p309 = por %p307, %p308
      %p310 = scmp.ne.s32.totalorder %s299, %s302
      %p311 = scmp.eq.s32.totalorder %s38, 1
      %p312 = por %p310, %p311
      %p313 = scmp.ne.s32.totalorder %s302, %s303
      %p314 = scmp.eq.s32.totalorder %s38, 0
      %p315 = por %p313, %p314
      %p316 = scmp.ne.s32.totalorder %s302, %s303
      %p317 = scmp.eq.s32.totalorder %s39, 1
      %p318 = por %p316, %p317
      %p320 = scmp.ne.s32.totalorder %s303, %s319
      %p321 = scmp.eq.s32.totalorder %s39, 0
      %p322 = por %p320, %p321
      %s323 = ssub.s32 %s33, %s40
      %p324 = scmp.eq.s32.totalorder %s323, 0
      %s326 = sadd.s32 %s325, 1
      %s327 = scalar_select %p324, %s325, %s326
      %p330 = pneg %p324
      %p331 = scmp.eq.s32.totalorder %s33, 1
      %p332 = por %p330, %p331
      %p333 = scmp.ne.s32.totalorder %s325, %s328
      %p334 = scmp.eq.s32.totalorder %s33, 0
      %p335 = por %p333, %p334
      %p336 = scmp.ne.s32.totalorder %s325, %s328
      %p337 = scmp.eq.s32.totalorder %s38, 1
      %p338 = por %p336, %p337
      %p339 = scmp.ne.s32.totalorder %s328, %s329
      %p340 = scmp.eq.s32.totalorder %s38, 0
      %p341 = por %p339, %p340
      %p342 = scmp.ne.s32.totalorder %s328, %s329
      %p343 = scmp.eq.s32.totalorder %s39, 1
      %p344 = por %p342, %p343
      %p346 = scmp.ne.s32.totalorder %s329, %s345
      %p347 = scmp.eq.s32.totalorder %s39, 0
      %p348 = por %p346, %p347
      %s349 = ssub.s32 %s33, %s40
      %p350 = scmp.eq.s32.totalorder %s349, 0
      %s352 = sadd.s32 %s351, 1
      %s353 = scalar_select %p350, %s351, %s352
      %p356 = pneg %p350
      %p357 = scmp.eq.s32.totalorder %s33, 1
      %p358 = por %p356, %p357
      %p359 = scmp.ne.s32.totalorder %s351, %s354
      %p360 = scmp.eq.s32.totalorder %s33, 0
      %p361 = por %p359, %p360
      %p362 = scmp.ne.s32.totalorder %s351, %s354
      %p363 = scmp.eq.s32.totalorder %s38, 1
      %p364 = por %p362, %p363
      %p365 = scmp.ne.s32.totalorder %s354, %s355
      %p366 = scmp.eq.s32.totalorder %s38, 0
      %p367 = por %p365, %p366
      %p368 = scmp.ne.s32.totalorder %s354, %s355
      %p369 = scmp.eq.s32.totalorder %s39, 1
      %p370 = por %p368, %p369
      %p372 = scmp.ne.s32.totalorder %s355, %s371
      %p373 = scmp.eq.s32.totalorder %s39, 0
      %p374 = por %p372, %p373
      %s375 = ssub.s32 %s33, %s40
      %p376 = scmp.eq.s32.totalorder %s375, 0
      %s378 = sadd.s32 %s377, 1
      %s379 = scalar_select %p376, %s377, %s378
      %p382 = pneg %p376
      %p383 = scmp.eq.s32.totalorder %s33, 1
      %p384 = por %p382, %p383
      %p385 = scmp.ne.s32.totalorder %s377, %s380
      %p386 = scmp.eq.s32.totalorder %s33, 0
      %p387 = por %p385, %p386
      %p388 = scmp.ne.s32.totalorder %s377, %s380
      %p389 = scmp.eq.s32.totalorder %s38, 1
      %p390 = por %p388, %p389
      %p391 = scmp.ne.s32.totalorder %s380, %s381
      %p392 = scmp.eq.s32.totalorder %s38, 0
      %p393 = por %p391, %p392
      %p394 = scmp.ne.s32.totalorder %s380, %s381
      %p395 = scmp.eq.s32.totalorder %s39, 1
      %p396 = por %p394, %p395
      %p398 = scmp.ne.s32.totalorder %s381, %s397
      %p399 = scmp.eq.s32.totalorder %s39, 0
      %p400 = por %p398, %p399
      %s401 = ssub.s32 %s33, %s40
      %p402 = scmp.eq.s32.totalorder %s401, 0
      %s404 = sadd.s32 %s403, 1
      %s405 = scalar_select %p402, %s403, %s404
      %p408 = pneg %p402
      %p409 = scmp.eq.s32.totalorder %s33, 1
      %p410 = por %p408, %p409
      %p411 = scmp.ne.s32.totalorder %s403, %s406
      %p412 = scmp.eq.s32.totalorder %s33, 0
      %p413 = por %p411, %p412
      %p414 = scmp.ne.s32.totalorder %s403, %s406
      %p415 = scmp.eq.s32.totalorder %s38, 1
      %p416 = por %p414, %p415
      %p417 = scmp.ne.s32.totalorder %s406, %s407
      %p418 = scmp.eq.s32.totalorder %s38, 0
      %p419 = por %p417, %p418
      %p420 = scmp.ne.s32.totalorder %s406, %s407
      %p421 = scmp.eq.s32.totalorder %s39, 1
      %p422 = por %p420, %p421
      %p424 = scmp.ne.s32.totalorder %s407, %s423
      %p425 = scmp.eq.s32.totalorder %s39, 0
      %p426 = por %p424, %p425
      %s427 = ssub.s32 %s33, %s40
      %p428 = scmp.eq.s32.totalorder %s427, 0
      %s430 = sadd.s32 %s429, 1
      %s431 = scalar_select %p428, %s429, %s430
      %p434 = pneg %p428
      %p435 = scmp.eq.s32.totalorder %s33, 1
      %p436 = por %p434, %p435
      %p437 = scmp.ne.s32.totalorder %s429, %s432
      %p438 = scmp.eq.s32.totalorder %s33, 0
      %p439 = por %p437, %p438
      %p440 = scmp.ne.s32.totalorder %s429, %s432
      %p441 = scmp.eq.s32.totalorder %s38, 1
      %p442 = por %p440, %p441
      %p443 = scmp.ne.s32.totalorder %s432, %s433
      %p444 = scmp.eq.s32.totalorder %s38, 0
      %p445 = por %p443, %p444
      %p446 = scmp.ne.s32.totalorder %s432, %s433
      %p447 = scmp.eq.s32.totalorder %s39, 1
      %p448 = por %p446, %p447
      %p450 = scmp.ne.s32.totalorder %s433, %s449
      %p451 = scmp.eq.s32.totalorder %s39, 0
      %p452 = por %p450, %p451
      %s453 = ssub.s32 %s33, %s40
      %p454 = scmp.eq.s32.totalorder %s453, 0
      %s456 = sadd.s32 %s455, 1
      %s457 = scalar_select %p454, %s455, %s456
      %p460 = pneg %p454
      %p461 = scmp.eq.s32.totalorder %s33, 1
      %p462 = por %p460, %p461
      %p463 = scmp.ne.s32.totalorder %s455, %s458
      %p464 = scmp.eq.s32.totalorder %s33, 0
      %p465 = por %p463, %p464
      %p466 = scmp.ne.s32.totalorder %s455, %s458
      %p467 = scmp.eq.s32.totalorder %s38, 1
      %p468 = por %p466, %p467
      %p469 = scmp.ne.s32.totalorder %s458, %s459
      %p470 = scmp.eq.s32.totalorder %s38, 0
      %p471 = por %p469, %p470
      %p472 = scmp.ne.s32.totalorder %s458, %s459
      %p473 = scmp.eq.s32.totalorder %s39, 1
      %p474 = por %p472, %p473
      %p476 = scmp.ne.s32.totalorder %s459, %s475
      %p477 = scmp.eq.s32.totalorder %s39, 0
      %p478 = por %p476, %p477
      %s479 = ssub.s32 %s33, %s40
      %p480 = scmp.eq.s32.totalorder %s479, 0
      %s482 = sadd.s32 %s481, 1
      %s483 = scalar_select %p480, %s481, %s482
      %p486 = pneg %p480
      %p487 = scmp.eq.s32.totalorder %s33, 1
      %p488 = por %p486, %p487
      %p489 = scmp.ne.s32.totalorder %s481, %s484
      %p490 = scmp.eq.s32.totalorder %s33, 0
      %p491 = por %p489, %p490
      %p492 = scmp.ne.s32.totalorder %s481, %s484
      %p493 = scmp.eq.s32.totalorder %s38, 1
      %p494 = por %p492, %p493
      %p495 = scmp.ne.s32.totalorder %s484, %s485
      %p496 = scmp.eq.s32.totalorder %s38, 0
      %p497 = por %p495, %p496
      %p498 = scmp.ne.s32.totalorder %s484, %s485
      %p499 = scmp.eq.s32.totalorder %s39, 1
      %p500 = por %p498, %p499
      %p502 = scmp.ne.s32.totalorder %s485, %s501
      %p503 = scmp.eq.s32.totalorder %s39, 0
      %p504 = por %p502, %p503
      %s505 = ssub.s32 %s33, %s40
      %p506 = scmp.eq.s32.totalorder %s505, 0
      %s508 = sadd.s32 %s507, 1
      %s509 = scalar_select %p506, %s507, %s508
      %p512 = pneg %p506
      %p513 = scmp.eq.s32.totalorder %s33, 1
      %p514 = por %p512, %p513
      %p515 = scmp.ne.s32.totalorder %s507, %s510
      %p516 = scmp.eq.s32.totalorder %s33, 0
      %p517 = por %p515, %p516
      %p518 = scmp.ne.s32.totalorder %s507, %s510
      %p519 = scmp.eq.s32.totalorder %s38, 1
      %p520 = por %p518, %p519
      %p521 = scmp.ne.s32.totalorder %s510, %s511
      %p522 = scmp.eq.s32.totalorder %s38, 0
      %p523 = por %p521, %p522
      %p524 = scmp.ne.s32.totalorder %s510, %s511
      %p525 = scmp.eq.s32.totalorder %s39, 1
      %p526 = por %p524, %p525
      %p528 = scmp.ne.s32.totalorder %s511, %s527
      %p529 = scmp.eq.s32.totalorder %s39, 0
      %p530 = por %p528, %p529
      %s531 = ssub.s32 %s33, %s40
      %p532 = scmp.eq.s32.totalorder %s531, 0
      %s534 = sadd.s32 %s533, 1
      %s535 = scalar_select %p532, %s533, %s534
      %p538 = pneg %p532
      %p539 = scmp.eq.s32.totalorder %s33, 1
      %p540 = por %p538, %p539
      %p541 = scmp.ne.s32.totalorder %s533, %s536
      %p542 = scmp.eq.s32.totalorder %s33, 0
      %p543 = por %p541, %p542
      %p544 = scmp.ne.s32.totalorder %s533, %s536
      %p545 = scmp.eq.s32.totalorder %s38, 1
      %p546 = por %p544, %p545
      %p547 = scmp.ne.s32.totalorder %s536, %s537
      %p548 = scmp.eq.s32.totalorder %s38, 0
      %p549 = por %p547, %p548
      %p550 = scmp.ne.s32.totalorder %s536, %s537
      %p551 = scmp.eq.s32.totalorder %s39, 1
      %p552 = por %p550, %p551
      %p554 = scmp.ne.s32.totalorder %s537, %s553
      %p555 = scmp.eq.s32.totalorder %s39, 0
      %p556 = por %p554, %p555
      %s557 = ssub.s32 %s33, %s40
      %p558 = scmp.eq.s32.totalorder %s557, 0
      %s560 = sadd.s32 %s559, 1
      %s561 = scalar_select %p558, %s559, %s560
      %p564 = pneg %p558
      %p565 = scmp.eq.s32.totalorder %s33, 1
      %p566 = por %p564, %p565
      %p567 = scmp.ne.s32.totalorder %s559, %s562
      %p568 = scmp.eq.s32.totalorder %s33, 0
      %p569 = por %p567, %p568
      %p570 = scmp.ne.s32.totalorder %s559, %s562
      %p571 = scmp.eq.s32.totalorder %s38, 1
      %p572 = por %p570, %p571
      %p573 = scmp.ne.s32.totalorder %s562, %s563
      %p574 = scmp.eq.s32.totalorder %s38, 0
      %p575 = por %p573, %p574
      %p576 = scmp.ne.s32.totalorder %s562, %s563
      %p577 = scmp.eq.s32.totalorder %s39, 1
      %p578 = por %p576, %p577
      %p580 = scmp.ne.s32.totalorder %s563, %s579
      %p581 = scmp.eq.s32.totalorder %s39, 0
      %p582 = por %p580, %p581
      %s583 = ssub.s32 %s33, %s40
      %p584 = scmp.eq.s32.totalorder %s583, 0
      %s586 = sadd.s32 %s585, 1
      %s587 = scalar_select %p584, %s585, %s586
      %p590 = pneg %p584
      %p591 = scmp.eq.s32.totalorder %s33, 1
      %p592 = por %p590, %p591
      %p593 = scmp.ne.s32.totalorder %s585, %s588
      %p594 = scmp.eq.s32.totalorder %s33, 0
      %p595 = por %p593, %p594
      %p596 = scmp.ne.s32.totalorder %s585, %s588
      %p597 = scmp.eq.s32.totalorder %s38, 1
      %p598 = por %p596, %p597
      %p599 = scmp.ne.s32.totalorder %s588, %s589
      %p600 = scmp.eq.s32.totalorder %s38, 0
      %p601 = por %p599, %p600
      %p602 = scmp.ne.s32.totalorder %s588, %s589
      %p603 = scmp.eq.s32.totalorder %s39, 1
      %p604 = por %p602, %p603
      %p606 = scmp.ne.s32.totalorder %s589, %s605
      %p607 = scmp.eq.s32.totalorder %s39, 0
      %p608 = por %p606, %p607
      %s609 = ssub.s32 %s33, %s40
      %p610 = scmp.eq.s32.totalorder %s609, 0
      %s612 = sadd.s32 %s611, 1
      %s613 = scalar_select %p610, %s611, %s612
      %p616 = pneg %p610
      %p617 = scmp.eq.s32.totalorder %s33, 1
      %p618 = por %p616, %p617
      %p619 = scmp.ne.s32.totalorder %s611, %s614
      %p620 = scmp.eq.s32.totalorder %s33, 0
      %p621 = por %p619, %p620
      %p622 = scmp.ne.s32.totalorder %s611, %s614
      %p623 = scmp.eq.s32.totalorder %s38, 1
      %p624 = por %p622, %p623
      %p625 = scmp.ne.s32.totalorder %s614, %s615
      %p626 = scmp.eq.s32.totalorder %s38, 0
      %p627 = por %p625, %p626
      %p628 = scmp.ne.s32.totalorder %s614, %s615
      %p629 = scmp.eq.s32.totalorder %s39, 1
      %p630 = por %p628, %p629
      %p632 = scmp.ne.s32.totalorder %s615, %s631
      %p633 = scmp.eq.s32.totalorder %s39, 0
      %p634 = por %p632, %p633
      %s635 = ssub.s32 %s33, %s40
      %p636 = scmp.eq.s32.totalorder %s635, 0
      %s638 = sadd.s32 %s637, 1
      %s639 = scalar_select %p636, %s637, %s638
      %p642 = pneg %p636
      %p643 = scmp.eq.s32.totalorder %s33, 1
      %p644 = por %p642, %p643
      %p645 = scmp.ne.s32.totalorder %s637, %s640
      %p646 = scmp.eq.s32.totalorder %s33, 0
      %p647 = por %p645, %p646
      %p648 = scmp.ne.s32.totalorder %s637, %s640
      %p649 = scmp.eq.s32.totalorder %s38, 1
      %p650 = por %p648, %p649
      %p651 = scmp.ne.s32.totalorder %s640, %s641
      %p652 = scmp.eq.s32.totalorder %s38, 0
      %p653 = por %p651, %p652
      %p654 = scmp.ne.s32.totalorder %s640, %s641
      %p655 = scmp.eq.s32.totalorder %s39, 1
      %p656 = por %p654, %p655
      %p658 = scmp.ne.s32.totalorder %s641, %s657
      %p659 = scmp.eq.s32.totalorder %s39, 0
      %p660 = por %p658, %p659
      %s661 = ssub.s32 %s33, %s40
      %p662 = scmp.eq.s32.totalorder %s661, 0
      %s664 = sadd.s32 %s663, 1
      %s665 = scalar_select %p662, %s663, %s664
      %p668 = pneg %p662
      %p669 = scmp.eq.s32.totalorder %s33, 1
      %p670 = por %p668, %p669
      %p671 = scmp.ne.s32.totalorder %s663, %s666
      %p672 = scmp.eq.s32.totalorder %s33, 0
      %p673 = por %p671, %p672
      %p674 = scmp.ne.s32.totalorder %s663, %s666
      %p675 = scmp.eq.s32.totalorder %s38, 1
      %p676 = por %p674, %p675
      %p677 = scmp.ne.s32.totalorder %s666, %s667
      %p678 = scmp.eq.s32.totalorder %s38, 0
      %p679 = por %p677, %p678
      %p680 = scmp.ne.s32.totalorder %s666, %s667
      %p681 = scmp.eq.s32.totalorder %s39, 1
      %p682 = por %p680, %p681
      %p684 = scmp.ne.s32.totalorder %s667, %s683
      %p685 = scmp.eq.s32.totalorder %s39, 0
      %p686 = por %p684, %p685
      %s688 = sadd.s32 %s687, 1
      %p691 = scmp.eq.s32.totalorder %s33, 1
      %p692 = scmp.ne.s32.totalorder %s687, %s689
      %p693 = scmp.eq.s32.totalorder %s33, 0
      %p694 = por %p692, %p693
      %p695 = scmp.ne.s32.totalorder %s687, %s689
      %p696 = scmp.eq.s32.totalorder %s38, 1
      %p697 = por %p695, %p696
      %p698 = scmp.ne.s32.totalorder %s689, %s690
      %p699 = scmp.eq.s32.totalorder %s38, 0
      %p700 = por %p698, %p699
      %p701 = scmp.ne.s32.totalorder %s689, %s690
      %p702 = scmp.eq.s32.totalorder %s39, 1
      %p703 = por %p701, %p702
      %p705 = scmp.ne.s32.totalorder %s690, %s704
      %p706 = scmp.eq.s32.totalorder %s39, 0
      %p707 = por %p705, %p706
      %p708 = scmp.le.s32.totalorder 1, %s33
      %p709 = scmp.lt.s32.totalorder %s33, 3
      %p710 = pnand %p708, %p709
      %p711 = pneg %p710
      // Predicated region
      $region9: #{albef_forward_train.6} parent=5 // pred_check
        _
      $region10: #{albef_forward_train.6} parent=5 // pred_check_branch
        %713 = sbr.rel (%p710) target = $region12
      $region11: #{albef_forward_train.6} parent=5 // pred_region
        %s714 = ssub.s32 %s33, 1
        // Predicated region
        $region13: #{albef_forward_train.6} parent=11 // pred_check
          %p715 = pneg %p54
        $region14: #{albef_forward_train.6} parent=11 // pred_check_branch
          %717 = sbr.rel (%p715) target = $region16
        $region15: #{albef_forward_train.6} parent=11 // pred_region
          _
        $region16: #{albef_forward_train.6} parent=11 // pred_fallthru
          _
        // Predicated region
        $region17: #{albef_forward_train.6} parent=11 // pred_check
          %p718 = pneg %p75
        $region18: #{albef_forward_train.6} parent=11 // pred_check_branch
          %720 = sbr.rel (%p718) target = $region20
        $region19: #{albef_forward_train.6} parent=11 // pred_region
          _
        $region20: #{albef_forward_train.6} parent=11 // pred_fallthru
          _
        // Predicated region
        $region21: #{albef_forward_train.6} parent=11 // pred_check
          %p721 = pneg %p96
        $region22: #{albef_forward_train.6} parent=11 // pred_check_branch
          %723 = sbr.rel (%p721) target = $region24
        $region23: #{albef_forward_train.6} parent=11 // pred_region
          %s725 = ssub.s32 16, 16
          %726 = vsyncadd [#allocation4], %s725
          %s728 = sshll.u32 [#allocation3], 4
          %s729 = int_to_ptr.vmem [resolvable:$true] %s728
          %731 = dma.hbm_to_vmem [thread:$0]  %s2, 16, %s729, [#allocation4]
        $region24: #{albef_forward_train.6} parent=11 // pred_fallthru
          _
        // Predicated region
        $region25: #{albef_forward_train.6} parent=11 // pred_check
          %p732 = pneg %p117
        $region26: #{albef_forward_train.6} parent=11 // pred_check_branch
          %734 = sbr.rel (%p732) target = $region28
        $region27: #{albef_forward_train.6} parent=11 // pred_region
          _
        $region28: #{albef_forward_train.6} parent=11 // pred_fallthru
          _
        // Predicated region
        $region29: #{albef_forward_train.6} parent=11 // pred_check
          %p735 = pneg %p138
        $region30: #{albef_forward_train.6} parent=11 // pred_check_branch
          %737 = sbr.rel (%p735) target = $region32
        $region31: #{albef_forward_train.6} parent=11 // pred_region
          _
        $region32: #{albef_forward_train.6} parent=11 // pred_fallthru
          _
        // Predicated region
        $region33: #{albef_forward_train.6} parent=11 // pred_check
          %p738 = pneg %p159
        $region34: #{albef_forward_train.6} parent=11 // pred_check_branch
          %740 = sbr.rel (%p738) target = $region36
        $region35: #{albef_forward_train.6} parent=11 // pred_region
          _
        $region36: #{albef_forward_train.6} parent=11 // pred_fallthru
          _
      $region12: #{albef_forward_train.6} parent=5 // pred_fallthru
        _
      %p741 = scmp.lt.s32.totalorder %s33, 2
      // Predicated region
      $region37: #{albef_forward_train.6} parent=5 // pred_check
        %p742 = pneg %p741
      $region38: #{albef_forward_train.6} parent=5 // pred_check_branch
        %744 = sbr.rel (%p742) target = $region40
      $region39: #{albef_forward_train.6} parent=5 // pred_region
        // Predicated region
        $region41: #{albef_forward_train.6} parent=39 // pred_check
          %p745 = pneg %p179
        $region42: #{albef_forward_train.6} parent=39 // pred_check_branch
          %747 = sbr.rel (%p745) target = $region44
        $region43: #{albef_forward_train.6} parent=39 // pred_region
          %p748 = scmp.lt.s32.totalorder %s33, 1
          %s749 = scalar_select %p748, %s33, 1
          %s750 = smul.addr %s749, 16
          %s751 = smul.addr %s750, 4
          %s752 = scalar_lea.vmem %s6, %s751
        $region44: #{albef_forward_train.6} parent=39 // pred_fallthru
          _
        // Predicated region
        $region45: #{albef_forward_train.6} parent=39 // pred_check
          %p753 = pneg %p205
        $region46: #{albef_forward_train.6} parent=39 // pred_check_branch
          %755 = sbr.rel (%p753) target = $region48
        $region47: #{albef_forward_train.6} parent=39 // pred_region
          %p756 = scmp.lt.s32.totalorder %s33, 1
          %s757 = scalar_select %p756, %s33, 1
          %s758 = smul.addr %s757, 2
          %s759 = scalar_lea.vmem %s7, %s758
        $region48: #{albef_forward_train.6} parent=39 // pred_fallthru
          _
        // Predicated region
        $region49: #{albef_forward_train.6} parent=39 // pred_check
          %p760 = pneg %p231
        $region50: #{albef_forward_train.6} parent=39 // pred_check_branch
          %762 = sbr.rel (%p760) target = $region52
        $region51: #{albef_forward_train.6} parent=39 // pred_region
          %p763 = scmp.lt.s32.totalorder %s33, 1
          %s764 = scalar_select %p763, %s33, 1
          %s765 = smul.addr %s764, 8
          %s766 = smul.addr %s765, 4
          %s767 = scalar_lea.vmem %s8, %s766
        $region52: #{albef_forward_train.6} parent=39 // pred_fallthru
          _
        // Predicated region
        $region53: #{albef_forward_train.6} parent=39 // pred_check
          %p768 = pneg %p257
        $region54: #{albef_forward_train.6} parent=39 // pred_check_branch
          %770 = sbr.rel (%p768) target = $region56
        $region55: #{albef_forward_train.6} parent=39 // pred_region
          %p771 = scmp.lt.s32.totalorder %s33, 1
          %s772 = scalar_select %p771, %s33, 1
          %s773 = scalar_lea.vmem %s9, %s772
        $region56: #{albef_forward_train.6} parent=39 // pred_fallthru
          _
        // Predicated region
        $region57: #{albef_forward_train.6} parent=39 // pred_check
          %p774 = pneg %p283
        $region58: #{albef_forward_train.6} parent=39 // pred_check_branch
          %776 = sbr.rel (%p774) target = $region60
        $region59: #{albef_forward_train.6} parent=39 // pred_region
          %p777 = scmp.lt.s32.totalorder %s33, 1
          %s778 = scalar_select %p777, %s33, 1
          %s779 = scalar_lea.vmem %s10, %s778
        $region60: #{albef_forward_train.6} parent=39 // pred_fallthru
          _
        // Predicated region
        $region61: #{albef_forward_train.6} parent=39 // pred_check
          %p780 = pneg %p309
        $region62: #{albef_forward_train.6} parent=39 // pred_check_branch
          %782 = sbr.rel (%p780) target = $region64
        $region63: #{albef_forward_train.6} parent=39 // pred_region
          %p783 = scmp.lt.s32.totalorder %s33, 1
          %s784 = scalar_select %p783, %s33, 1
          %s785 = scalar_lea.vmem %s11, %s784
        $region64: #{albef_forward_train.6} parent=39 // pred_fallthru
          _
        // Predicated region
        $region65: #{albef_forward_train.6} parent=39 // pred_check
          %p786 = pneg %p335
        $region66: #{albef_forward_train.6} parent=39 // pred_check_branch
          %788 = sbr.rel (%p786) target = $region68
        $region67: #{albef_forward_train.6} parent=39 // pred_region
          %p789 = scmp.lt.s32.totalorder %s33, 1
          %s790 = scalar_select %p789, %s33, 1
          %s791 = smul.addr %s790, 8
          %s792 = smul.addr %s791, 4
          %s793 = scalar_lea.vmem %s12, %s792
        $region68: #{albef_forward_train.6} parent=39 // pred_fallthru
          _
        // Predicated region
        $region69: #{albef_forward_train.6} parent=39 // pred_check
          %p794 = pneg %p361
        $region70: #{albef_forward_train.6} parent=39 // pred_check_branch
          %796 = sbr.rel (%p794) target = $region72
        $region71: #{albef_forward_train.6} parent=39 // pred_region
          %p797 = scmp.lt.s32.totalorder %s33, 1
          %s798 = scalar_select %p797, %s33, 1
          %s799 = scalar_lea.vmem %s13, %s798
        $region72: #{albef_forward_train.6} parent=39 // pred_fallthru
          _
        // Predicated region
        $region73: #{albef_forward_train.6} parent=39 // pred_check
          %p800 = pneg %p387
        $region74: #{albef_forward_train.6} parent=39 // pred_check_branch
          %802 = sbr.rel (%p800) target = $region76
        $region75: #{albef_forward_train.6} parent=39 // pred_region
          %p803 = scmp.lt.s32.totalorder %s33, 1
          %s804 = scalar_select %p803, %s33, 1
          %s805 = smul.addr %s804, 8
          %s806 = smul.addr %s805, 4
          %s807 = scalar_lea.vmem %s14, %s806
        $region76: #{albef_forward_train.6} parent=39 // pred_fallthru
          _
        // Predicated region
        $region77: #{albef_forward_train.6} parent=39 // pred_check
          %p808 = pneg %p413
        $region78: #{albef_forward_train.6} parent=39 // pred_check_branch
          %810 = sbr.rel (%p808) target = $region80
        $region79: #{albef_forward_train.6} parent=39 // pred_region
          %p811 = scmp.lt.s32.totalorder %s33, 1
          %s812 = scalar_select %p811, %s33, 1
          %s813 = scalar_lea.vmem %s15, %s812
        $region80: #{albef_forward_train.6} parent=39 // pred_fallthru
          _
        // Predicated region
        $region81: #{albef_forward_train.6} parent=39 // pred_check
          %p814 = pneg %p439
        $region82: #{albef_forward_train.6} parent=39 // pred_check_branch
          %816 = sbr.rel (%p814) target = $region84
        $region83: #{albef_forward_train.6} parent=39 // pred_region
          %p817 = scmp.lt.s32.totalorder %s33, 1
          %s818 = scalar_select %p817, %s33, 1
          %s819 = smul.addr %s818, 8
          %s820 = smul.addr %s819, 4
          %s821 = scalar_lea.vmem %s16, %s820
        $region84: #{albef_forward_train.6} parent=39 // pred_fallthru
          _
        // Predicated region
        $region85: #{albef_forward_train.6} parent=39 // pred_check
          %p822 = pneg %p465
        $region86: #{albef_forward_train.6} parent=39 // pred_check_branch
          %824 = sbr.rel (%p822) target = $region88
        $region87: #{albef_forward_train.6} parent=39 // pred_region
          %p825 = scmp.lt.s32.totalorder %s33, 1
          %s826 = scalar_select %p825, %s33, 1
          %s827 = scalar_lea.vmem %s17, %s826
        $region88: #{albef_forward_train.6} parent=39 // pred_fallthru
          _
        // Predicated region
        $region89: #{albef_forward_train.6} parent=39 // pred_check
          %p828 = pneg %p491
        $region90: #{albef_forward_train.6} parent=39 // pred_check_branch
          %830 = sbr.rel (%p828) target = $region92
        $region91: #{albef_forward_train.6} parent=39 // pred_region
          %p831 = scmp.lt.s32.totalorder %s33, 1
          %s832 = scalar_select %p831, %s33, 1
          %s833 = scalar_lea.vmem %s18, %s832
        $region92: #{albef_forward_train.6} parent=39 // pred_fallthru
          _
        // Predicated region
        $region93: #{albef_forward_train.6} parent=39 // pred_check
          %p834 = pneg %p517
        $region94: #{albef_forward_train.6} parent=39 // pred_check_branch
          %836 = sbr.rel (%p834) target = $region96
        $region95: #{albef_forward_train.6} parent=39 // pred_region
          %p837 = scmp.lt.s32.totalorder %s33, 1
          %s838 = scalar_select %p837, %s33, 1
          %s839 = scalar_lea.vmem %s19, %s838
        $region96: #{albef_forward_train.6} parent=39 // pred_fallthru
          _
        // Predicated region
        $region97: #{albef_forward_train.6} parent=39 // pred_check
          %p840 = pneg %p543
        $region98: #{albef_forward_train.6} parent=39 // pred_check_branch
          %842 = sbr.rel (%p840) target = $region100
        $region99: #{albef_forward_train.6} parent=39 // pred_region
          %p843 = scmp.lt.s32.totalorder %s33, 1
          %s844 = scalar_select %p843, %s33, 1
          %s845 = smul.addr %s844, 16
          %s846 = smul.addr %s845, 4
          %s847 = scalar_lea.vmem %s20, %s846
        $region100: #{albef_forward_train.6} parent=39 // pred_fallthru
          _
        // Predicated region
        $region101: #{albef_forward_train.6} parent=39 // pred_check
          %p848 = pneg %p569
        $region102: #{albef_forward_train.6} parent=39 // pred_check_branch
          %850 = sbr.rel (%p848) target = $region104
        $region103: #{albef_forward_train.6} parent=39 // pred_region
          %p851 = scmp.lt.s32.totalorder %s33, 1
          %s852 = scalar_select %p851, %s33, 1
          %s853 = smul.addr %s852, 2
          %s854 = scalar_lea.vmem %s21, %s853
        $region104: #{albef_forward_train.6} parent=39 // pred_fallthru
          _
        // Predicated region
        $region105: #{albef_forward_train.6} parent=39 // pred_check
          %p855 = pneg %p595
        $region106: #{albef_forward_train.6} parent=39 // pred_check_branch
          %857 = sbr.rel (%p855) target = $region108
        $region107: #{albef_forward_train.6} parent=39 // pred_region
          %p858 = scmp.lt.s32.totalorder %s33, 1
          %s859 = scalar_select %p858, %s33, 1
          %s860 = smul.addr %s859, 32
          %s861 = smul.addr %s860, 4
          %s862 = scalar_lea.vmem %s22, %s861
        $region108: #{albef_forward_train.6} parent=39 // pred_fallthru
          _
        // Predicated region
        $region109: #{albef_forward_train.6} parent=39 // pred_check
          %p863 = pneg %p621
        $region110: #{albef_forward_train.6} parent=39 // pred_check_branch
          %865 = sbr.rel (%p863) target = $region112
        $region111: #{albef_forward_train.6} parent=39 // pred_region
          %p866 = scmp.lt.s32.totalorder %s33, 1
          %s867 = scalar_select %p866, %s33, 1
          %s868 = scalar_lea.vmem %s23, %s867
        $region112: #{albef_forward_train.6} parent=39 // pred_fallthru
          _
        // Predicated region
        $region113: #{albef_forward_train.6} parent=39 // pred_check
          %p869 = pneg %p647
        $region114: #{albef_forward_train.6} parent=39 // pred_check_branch
          %871 = sbr.rel (%p869) target = $region116
        $region115: #{albef_forward_train.6} parent=39 // pred_region
          %p872 = scmp.lt.s32.totalorder %s33, 1
          %s873 = scalar_select %p872, %s33, 1
          %s874 = scalar_lea.vmem %s24, %s873
        $region116: #{albef_forward_train.6} parent=39 // pred_fallthru
          _
        // Predicated region
        $region117: #{albef_forward_train.6} parent=39 // pred_check
          %p875 = pneg %p673
        $region118: #{albef_forward_train.6} parent=39 // pred_check_branch
          %877 = sbr.rel (%p875) target = $region120
        $region119: #{albef_forward_train.6} parent=39 // pred_region
          %p878 = scmp.lt.s32.totalorder %s33, 1
          %s879 = scalar_select %p878, %s33, 1
          %s880 = scalar_lea.vmem %s25, %s879
        $region120: #{albef_forward_train.6} parent=39 // pred_fallthru
          _
      $region40: #{albef_forward_train.6} parent=5 // pred_fallthru
        _
      %p881 = scmp.le.s32.totalorder 1, %s33
      %p882 = scmp.lt.s32.totalorder %s33, 3
      %p883 = pnand %p881, %p882
      %p884 = pneg %p883
      // Predicated region
      $region121: #{albef_forward_train.6} parent=5 // pred_check
        _
      $region122: #{albef_forward_train.6} parent=5 // pred_check_branch
        %886 = sbr.rel (%p883) target = $region124
      $region123: #{albef_forward_train.6} parent=5 // pred_region
        %s887 = ssub.s32 %s33, 1
        // Predicated region
        $region125: #{albef_forward_train.6} parent=123 // pred_check
          %p888 = pneg %p96
        $region126: #{albef_forward_train.6} parent=123 // pred_check_branch
          %890 = sbr.rel (%p888) target = $region128
        $region127: #{albef_forward_train.6} parent=123 // pred_region
          %891 = dma.done [#allocation4], 16
        $region128: #{albef_forward_train.6} parent=123 // pred_fallthru
          _
        %p892 = pneg %p54
        %p893 = pneg %p51
        %p894 = pneg %p75
        %p895 = pneg %p72
        %p896 = pneg %p96
        %p897 = pneg %p93
        %p898 = pneg %p117
        %p899 = pneg %p114
        %p900 = pneg %p138
        %p901 = pneg %p135
        %p902 = pneg %p159
        %p903 = pneg %p156
        %p904 = scmp.lt.s32.totalorder %s38, 1
        %s905 = scalar_select %p904, %s38, 1
        %s906 = smul.addr %s905, 16
        %s907 = smul.addr %s906, 4
        %s908 = scalar_lea.vmem %s6, %s907
        %p909 = pneg %p185
        %p910 = pneg %p182
        %p911 = scmp.lt.s32.totalorder %s38, 1
        %s912 = scalar_select %p911, %s38, 1
        %s913 = smul.addr %s912, 2
        %s914 = scalar_lea.vmem %s7, %s913
        %p915 = pneg %p211
        %p916 = pneg %p208
        %p917 = scmp.lt.s32.totalorder %s38, 1
        %s918 = scalar_select %p917, %s38, 1
        %s919 = smul.addr %s918, 8
        %s920 = smul.addr %s919, 4
        %s921 = scalar_lea.vmem %s8, %s920
        %p922 = pneg %p237
        %p923 = pneg %p234
        %p924 = scmp.lt.s32.totalorder %s38, 1
        %s925 = scalar_select %p924, %s38, 1
        %s926 = scalar_lea.vmem %s9, %s925
        %p927 = pneg %p263
        %p928 = pneg %p260
        %p929 = scmp.lt.s32.totalorder %s38, 1
        %s930 = scalar_select %p929, %s38, 1
        %s931 = scalar_lea.vmem %s10, %s930
        %p932 = pneg %p289
        %p933 = pneg %p286
        %p934 = scmp.lt.s32.totalorder %s38, 1
        %s935 = scalar_select %p934, %s38, 1
        %s936 = scalar_lea.vmem %s11, %s935
        %p937 = pneg %p315
        %p938 = pneg %p312
        %p939 = scmp.lt.s32.totalorder %s38, 1
        %s940 = scalar_select %p939, %s38, 1
        %s941 = smul.addr %s940, 8
        %s942 = smul.addr %s941, 4
        %s943 = scalar_lea.vmem %s12, %s942
        %p944 = pneg %p341
        %p945 = pneg %p338
        %p946 = scmp.lt.s32.totalorder %s38, 1
        %s947 = scalar_select %p946, %s38, 1
        %s948 = scalar_lea.vmem %s13, %s947
        %p949 = pneg %p367
        %p950 = pneg %p364
        %p951 = scmp.lt.s32.totalorder %s38, 1
        %s952 = scalar_select %p951, %s38, 1
        %s953 = smul.addr %s952, 8
        %s954 = smul.addr %s953, 4
        %s955 = scalar_lea.vmem %s14, %s954
        %p956 = pneg %p393
        %p957 = pneg %p390
        %p958 = scmp.lt.s32.totalorder %s38, 1
        %s959 = scalar_select %p958, %s38, 1
        %s960 = scalar_lea.vmem %s15, %s959
        %p961 = pneg %p419
        %p962 = pneg %p416
        %p963 = scmp.lt.s32.totalorder %s38, 1
        %s964 = scalar_select %p963, %s38, 1
        %s965 = smul.addr %s964, 8
        %s966 = smul.addr %s965, 4
        %s967 = scalar_lea.vmem %s16, %s966
        %p968 = pneg %p445
        %p969 = pneg %p442
        %p970 = scmp.lt.s32.totalorder %s38, 1
        %s971 = scalar_select %p970, %s38, 1
        %s972 = scalar_lea.vmem %s17, %s971
        %p973 = pneg %p471
        %p974 = pneg %p468
        %p975 = scmp.lt.s32.totalorder %s38, 1
        %s976 = scalar_select %p975, %s38, 1
        %s977 = scalar_lea.vmem %s18, %s976
        %p978 = pneg %p497
        %p979 = pneg %p494
        %p980 = scmp.lt.s32.totalorder %s38, 1
        %s981 = scalar_select %p980, %s38, 1
        %s982 = scalar_lea.vmem %s19, %s981
        %p983 = pneg %p523
        %p984 = pneg %p520
        %p985 = scmp.lt.s32.totalorder %s38, 1
        %s986 = scalar_select %p985, %s38, 1
        %s987 = smul.addr %s986, 16
        %s988 = smul.addr %s987, 4
        %s989 = scalar_lea.vmem %s20, %s988
        %p990 = pneg %p549
        %p991 = pneg %p546
        %p992 = scmp.lt.s32.totalorder %s38, 1
        %s993 = scalar_select %p992, %s38, 1
        %s994 = smul.addr %s993, 2
        %s995 = scalar_lea.vmem %s21, %s994
        %p996 = pneg %p575
        %p997 = pneg %p572
        %p998 = scmp.lt.s32.totalorder %s38, 1
        %s999 = scalar_select %p998, %s38, 1
        %s1000 = smul.addr %s999, 32
        %s1001 = smul.addr %s1000, 4
        %s1002 = scalar_lea.vmem %s22, %s1001
        %p1003 = pneg %p601
        %p1004 = pneg %p598
        %p1005 = scmp.lt.s32.totalorder %s38, 1
        %s1006 = scalar_select %p1005, %s38, 1
        %s1007 = scalar_lea.vmem %s23, %s1006
        %p1008 = pneg %p627
        %p1009 = pneg %p624
        %p1010 = scmp.lt.s32.totalorder %s38, 1
        %s1011 = scalar_select %p1010, %s38, 1
        %s1012 = scalar_lea.vmem %s24, %s1011
        %p1013 = pneg %p653
        %p1014 = pneg %p650
        %p1015 = scmp.lt.s32.totalorder %s38, 1
        %s1016 = scalar_select %p1015, %s38, 1
        %s1017 = scalar_lea.vmem %s25, %s1016
        %p1018 = pneg %p679
        %p1019 = pneg %p676
        %p1020 = pneg %p700
        %p1021 = pneg %p697
        %p1022 = scmp.lt.s32.totalorder %s38, 1
        %s1023 = scalar_select %p1022, %s38, 1
        %s1024 = smul.addr %s1023, 16
        %s1025 = smul.addr %s1024, 4
        %s1026 = scalar_lea.vmem %s6, %s1025
        %p1027 = scmp.lt.s32.totalorder %s38, 1
        %s1028 = scalar_select %p1027, %s38, 1
        %s1029 = smul.addr %s1028, 2
        %s1030 = scalar_lea.vmem %s7, %s1029
        %p1031 = scmp.lt.s32.totalorder %s38, 1
        %s1032 = scalar_select %p1031, %s38, 1
        %s1033 = smul.addr %s1032, 8
        %s1034 = smul.addr %s1033, 4
        %s1035 = scalar_lea.vmem %s8, %s1034
        %p1036 = scmp.lt.s32.totalorder %s38, 1
        %s1037 = scalar_select %p1036, %s38, 1
        %s1038 = scalar_lea.vmem %s9, %s1037
        %p1039 = scmp.lt.s32.totalorder %s38, 1
        %s1040 = scalar_select %p1039, %s38, 1
        %s1041 = scalar_lea.vmem %s10, %s1040
        %p1042 = scmp.lt.s32.totalorder %s38, 1
        %s1043 = scalar_select %p1042, %s38, 1
        %s1044 = scalar_lea.vmem %s11, %s1043
        %p1045 = scmp.lt.s32.totalorder %s38, 1
        %s1046 = scalar_select %p1045, %s38, 1
        %s1047 = smul.addr %s1046, 8
        %s1048 = smul.addr %s1047, 4
        %s1049 = scalar_lea.vmem %s12, %s1048
        %p1050 = scmp.lt.s32.totalorder %s38, 1
        %s1051 = scalar_select %p1050, %s38, 1
        %s1052 = scalar_lea.vmem %s13, %s1051
        %p1053 = scmp.lt.s32.totalorder %s38, 1
        %s1054 = scalar_select %p1053, %s38, 1
        %s1055 = smul.addr %s1054, 8
        %s1056 = smul.addr %s1055, 4
        %s1057 = scalar_lea.vmem %s14, %s1056
        %p1058 = scmp.lt.s32.totalorder %s38, 1
        %s1059 = scalar_select %p1058, %s38, 1
        %s1060 = scalar_lea.vmem %s15, %s1059
        %p1061 = scmp.lt.s32.totalorder %s38, 1
        %s1062 = scalar_select %p1061, %s38, 1
        %s1063 = smul.addr %s1062, 8
        %s1064 = smul.addr %s1063, 4
        %s1065 = scalar_lea.vmem %s16, %s1064
        %p1066 = scmp.lt.s32.totalorder %s38, 1
        %s1067 = scalar_select %p1066, %s38, 1
        %s1068 = scalar_lea.vmem %s17, %s1067
        %p1069 = scmp.lt.s32.totalorder %s38, 1
        %s1070 = scalar_select %p1069, %s38, 1
        %s1071 = scalar_lea.vmem %s18, %s1070
        %p1072 = scmp.lt.s32.totalorder %s38, 1
        %s1073 = scalar_select %p1072, %s38, 1
        %s1074 = scalar_lea.vmem %s19, %s1073
        %p1075 = scmp.lt.s32.totalorder %s38, 1
        %s1076 = scalar_select %p1075, %s38, 1
        %s1077 = smul.addr %s1076, 16
        %s1078 = smul.addr %s1077, 4
        %s1079 = scalar_lea.vmem %s20, %s1078
        %p1080 = scmp.lt.s32.totalorder %s38, 1
        %s1081 = scalar_select %p1080, %s38, 1
        %s1082 = smul.addr %s1081, 2
        %s1083 = scalar_lea.vmem %s21, %s1082
        %p1084 = scmp.lt.s32.totalorder %s38, 1
        %s1085 = scalar_select %p1084, %s38, 1
        %s1086 = smul.addr %s1085, 32
        %s1087 = smul.addr %s1086, 4
        %s1088 = scalar_lea.vmem %s22, %s1087
        %p1089 = scmp.lt.s32.totalorder %s38, 1
        %s1090 = scalar_select %p1089, %s38, 1
        %s1091 = scalar_lea.vmem %s23, %s1090
        %p1092 = scmp.lt.s32.totalorder %s38, 1
        %s1093 = scalar_select %p1092, %s38, 1
        %s1094 = scalar_lea.vmem %s24, %s1093
        %p1095 = scmp.lt.s32.totalorder %s38, 1
        %s1096 = scalar_select %p1095, %s38, 1
        %s1097 = scalar_lea.vmem %s25, %s1096
        %p1099 = scmp.eq.s32.totalorder %s38, 0
        // Predicated region
        $region129: #{albef_forward_train.6} parent=123 // pred_check
          %p1100 = pneg %p1099
        $region130: #{albef_forward_train.6} parent=123 // pred_check_branch
          %1102 = sbr.rel (%p1100) target = $region132
        $region131: #{albef_forward_train.6} parent=123 // pred_region
          %v1103 = vld [vmem:[%s0] sm:$0xff]
          %v1104 = vld [vmem:[%s0 + $0x8] sm:$0xff]
          %v1105 = vld [vmem:[%s1] sm:$0x1]
          %v1106 = vld [vmem:[#allocation3] sm:$0x1]
          %vm1107 = vcmask 523264
          %v1108 = vsel %vm1107, %v1103, 0.0
          %1109 = vadd.xlane.f32.xlu0 %v1108
          %v1110 = vpop.xlane.xlu0 %1109
          %v1111 = vsel %vm1107, %v1104, 0.0
          %1112 = vadd.xlane.f32.xlu0 %v1111
          %v1113 = vpop.xlane.xlu0 %1112
          %v1114 = vrcp.pop 64.0
          %v1115 = vmul.f32 %v1110, %v1114
          %v1116 = vmul.f32 %v1113, %v1114
          %v1117 = vsub.f32 %v1103, %v1115
          %v1118 = vsub.f32 %v1104, %v1116
          %v1119 = vmul.f32 %v1117, %v1117
          %v1120 = vmul.f32 %v1118, %v1118
          %v1121 = vsel %vm1107, %v1119, 0.0
          %1122 = vadd.xlane.f32.xlu0 %v1121
          %v1123 = vpop.xlane.xlu0 %1122
          %v1124 = vsel %vm1107, %v1120, 0.0
          %1125 = vadd.xlane.f32.xlu0 %v1124
          %v1126 = vpop.xlane.xlu0 %1125
          %v1127 = vmul.f32 %v1123, %v1114
          %v1128 = vmul.f32 %v1126, %v1114
          %v1129 = vadd.f32 %v1127, 1e-12
          %v1130 = vadd.f32 %v1128, 1e-12
          %v1131 = vrsqrt.pop %v1129
          %v1132 = vrsqrt.pop %v1130
          %v1133 = vmul.f32 %v1117, %v1131
          %v1134 = vmul.f32 %v1118, %v1132
          %v1136 = vlaneseq
          %v1137 = vshrl.u32 %v1136, 7
          %v1138 = vsub.s32 0, %v1137
          %v1139 = vrot.slane %v1105, %v1138
          %v1141 = vmul.f32 %v1133, %v1139
          %v1142 = vmul.f32 %v1134, %v1139
          %v1144 = vlaneseq
          %v1145 = vshrl.u32 %v1144, 7
          %v1146 = vsub.s32 0, %v1145
          %v1147 = vrot.slane %v1106, %v1146
          %v1149 = vadd.f32 %v1141, %v1147
          %v1150 = vadd.f32 %v1142, %v1147
          %1151 = vst.msk [vmem:[#allocation2] sm:$0xff] %vm1107, %v1149
          %1152 = vst.msk [vmem:[#allocation2 + $0x8] sm:$0xff] %vm1107, %v1150
        $region132: #{albef_forward_train.6} parent=123 // pred_fallthru
          _
        %v1153 = vld [vmem:[#allocation2] sm:$0xff]
        %v1154 = vld [vmem:[#allocation2 + $0x8] sm:$0xff]
        %v1155 = vld [vmem:[%s3] sm:$0xf]
        %v1156 = vld [vmem:[%s3 + $0x4] sm:$0x1]
        %v1157 = vld [vmem:[%s1026] sm:$0xff]
        %v1158 = vld [vmem:[%s1026 + $0x8] sm:$0xff]
        %v1159 = vld [vmem:[%s1026 + $0x10] sm:$0xff]
        %v1160 = vld [vmem:[%s1026 + $0x18] sm:$0xff]
        %v1161 = vld [vmem:[%s1026 + $0x20] sm:$0xff]
        %v1162 = vld [vmem:[%s1026 + $0x28] sm:$0xff]
        %v1163 = vld [vmem:[%s1026 + $0x30] sm:$0xff]
        %v1164 = vld [vmem:[%s1026 + $0x38] sm:$0xff]
        %v1165 = vpack.c.bf16 %v1154, %v1153
        %v1166 = vld [vmem:[%s1030] sm:$0x3]
        %v1168 = vlaneseq
        %v1169 = vshrl.u32 %v1168, 7
        %v1170 = vsub.s32 0, %v1169
        %v1171 = vrot.slane %v1166, %v1170
        %v1172 = vlaneseq
        %v1173 = vshrl.u32 %v1172, 7
        %v1174 = vsub.s32 1, %v1173
        %v1175 = vrot.slane %v1166, %v1174
        %v1186 = vunpack.c.l.b16 %v1157
        %v1187 = vunpack.c.h.b16 %v1157
        %v1188 = vunpack.c.l.b16 %v1158
        %v1189 = vunpack.c.h.b16 %v1158
        %v1190 = vunpack.c.l.b16 %v1159
        %v1191 = vunpack.c.h.b16 %v1159
        %v1192 = vunpack.c.l.b16 %v1160
        %v1193 = vunpack.c.h.b16 %v1160
        %v1194 = vunpack.c.l.b16 %v1161
        %v1195 = vunpack.c.h.b16 %v1161
        %v1196 = vunpack.c.l.b16 %v1162
        %v1197 = vunpack.c.h.b16 %v1162
        %v1198 = vunpack.c.l.b16 %v1163
        %v1199 = vunpack.c.h.b16 %v1163
        %v1200 = vunpack.c.l.b16 %v1164
        %v1201 = vunpack.c.h.b16 %v1164
        %v1202 = vpack.c.b16 %v1188, %v1186
        %v1203 = vpack.c.b16 %v1189, %v1187
        %v1204 = vpack.c.b16 %v1192, %v1190
        %v1205 = vpack.c.b16 %v1193, %v1191
        %v1206 = vpack.c.b16 %v1196, %v1194
        %v1207 = vpack.c.b16 %v1197, %v1195
        %v1208 = vpack.c.b16 %v1200, %v1198
        %v1209 = vpack.c.b16 %v1201, %v1199
        %vm1218 = vcmask 523264
        %v1220 = vsel %vm1218, %v1165, 0
        %1222 = vmatprep.subr.bf16.mxu0 0
        %1223 = vmatpush1.bf16.msra.mxu0 0
        %1224 = vmatprep.subr.bf16.mxu0 0
        %1225 = vmatpush1.bf16.msra.mxu0 0
        %1226 = vmatprep.subr.bf16.mxu0 0
        %1227 = vmatpush1.bf16.msra.mxu0 0
        %1228 = vmatprep.subr.bf16.mxu0 0
        %1229 = vmatpush1.bf16.msra.mxu0 0
        %1230 = vmatprep.subr.bf16.mxu0 %v1209
        %1231 = vmatpush1.bf16.msra.mxu0 %v1208
        %1232 = vmatprep.subr.bf16.mxu0 %v1207
        %1233 = vmatpush1.bf16.msra.mxu0 %v1206
        %1234 = vmatprep.subr.bf16.mxu0 %v1205
        %1235 = vmatpush1.bf16.msra.mxu0 %v1204
        %1236 = vmatprep.subr.bf16.mxu0 %v1203
        %1237 = vmatpush1.bf16.msra.mxu0 %v1202
        %1238 = vmatprep.subr.bf16.mxu0 0
        %1239 = vmatpush2.bf16.msra.mxu0 0
        %1240 = vmatprep.subr.bf16.mxu0 0
        %1241 = vmatpush2.bf16.msra.mxu0 0
        %1242 = vmatprep.subr.bf16.mxu0 0
        %1243 = vmatpush2.bf16.msra.mxu0 0
        %1244 = vmatprep.subr.bf16.mxu0 0
        %1245 = vmatpush2.bf16.msra.mxu0 0
        %1246 = vmatprep.subr.bf16.mxu0 0
        %1247 = vmatpush2.bf16.msra.mxu0 0
        %1248 = vmatprep.subr.bf16.mxu0 0
        %1249 = vmatpush2.bf16.msra.mxu0 0
        %1250 = vmatprep.subr.bf16.mxu0 0
        %1251 = vmatpush2.bf16.msra.mxu0 0
        %1252 = vmatprep.subr.bf16.mxu0 0
        %1253 = vmatpush2.bf16.msra.mxu0 0
        %1254 = vmatprep.mubr.bf16.mxu0 0
        %1255 = vmatmul.mubr.bf16.gmra.mxu0 %v1220
        %v1256 = vpop.f32.mrf.mxu0
        %v1257 = vadd.f32 %v1171, %v1256
        %v1258 = vpop.f32.mrf.mxu0
        %v1259 = vadd.f32 %v1175, %v1258
        %v1260 = vpop.f32.mrf.mxu0
        %v1261 = vadd.f32 %v1171, %v1260
        %v1262 = vpop.f32.mrf.mxu0
        %v1263 = vadd.f32 %v1175, %v1262
        %1264 = vdwg.mxu0
        %v1265 = vld [vmem:[%s4] sm:$0xff]
        %v1266 = vld [vmem:[%s4 + $0x8] sm:$0xff]
        %v1267 = vpack.c.bf16 %v1261, %v1257
        %v1268 = vpack.c.bf16 %v1263, %v1259
        %1270 = vrot.lane.b32.xlu0 %v1267, 64
        %v1271 = vpop.permute.xlu0 %1270
        %vm1272 = vcmask 130048
        %v1274 = vsel %vm1272, %v1267, 0
        %v1277 = vsel %vm1272, %v1271, 0
        %1279 = vmatprep.subr.bf16.mxu0 0
        %1280 = vmatpush1.bf16.xpose.msra.mxu0 0
        %1281 = vmatprep.subr.bf16.mxu0 0
        %1282 = vmatpush1.bf16.xpose.msra.mxu0 0
        %1283 = vmatprep.subr.bf16.mxu0 0
        %1284 = vmatpush1.bf16.xpose.msra.mxu0 0
        %1285 = vmatprep.subr.bf16.mxu0 0
        %1286 = vmatpush1.bf16.xpose.msra.mxu0 0
        %1287 = vmatprep.subr.bf16.mxu0 0
        %1288 = vmatpush1.bf16.xpose.msra.mxu0 0
        %1289 = vmatprep.subr.bf16.mxu0 0
        %1290 = vmatpush1.bf16.xpose.msra.mxu0 0
        %1291 = vmatprep.subr.bf16.mxu0 0
        %1292 = vmatpush1.bf16.xpose.msra.mxu0 0
        %1293 = vmatprep.subr.bf16.mxu0 0
        %1294 = vmatpush1.bf16.xpose.msra.mxu0 %v1277
        %1295 = vmatprep.subr.bf16.mxu0 0
        %1296 = vmatpush2.bf16.xpose.msra.mxu0 0
        %1297 = vmatprep.subr.bf16.mxu0 0
        %1298 = vmatpush2.bf16.xpose.msra.mxu0 0
        %1299 = vmatprep.subr.bf16.mxu0 0
        %1300 = vmatpush2.bf16.xpose.msra.mxu0 0
        %1301 = vmatprep.subr.bf16.mxu0 0
        %1302 = vmatpush2.bf16.xpose.msra.mxu0 0
        %1303 = vmatprep.subr.bf16.mxu0 0
        %1304 = vmatpush2.bf16.xpose.msra.mxu0 0
        %1305 = vmatprep.subr.bf16.mxu0 0
        %1306 = vmatpush2.bf16.xpose.msra.mxu0 0
        %1307 = vmatprep.subr.bf16.mxu0 0
        %1308 = vmatpush2.bf16.xpose.msra.mxu0 0
        %1309 = vmatprep.subr.bf16.mxu0 0
        %1310 = vmatpush2.bf16.xpose.msra.mxu0 0
        %1311 = vmatprep.mubr.bf16.mxu0 0
        %1312 = vmatmul.mubr.bf16.gmra.mxu0 %v1274
        %v1313 = vpop.f32.mrf.mxu0
        %v1314 = vadd.f32 0.0, %v1313
        %v1315 = vpop.f32.mrf.mxu0
        %v1316 = vpop.f32.mrf.mxu0
        %v1317 = vadd.f32 0.0, %v1316
        %v1318 = vpop.f32.mrf.mxu0
        %1319 = vdwg.mxu0
        %v1320 = vmul.f32 %v1314, 0.25
        %v1321 = vmul.f32 %v1317, 0.25
        %v1322 = vadd.f32 %v1320, %v1265
        %v1323 = vadd.f32 %v1321, %v1266
        %v1324 = vsel %vm1272, %v1322, -inf
        %1325 = vmax.xlane.f32.xlu0 %v1324
        %v1326 = vpop.xlane.xlu0 %1325
        %v1327 = vsel %vm1272, %v1323, -inf
        %1328 = vmax.xlane.f32.xlu0 %v1327
        %v1329 = vpop.xlane.xlu0 %1328
        %v1330 = vsub.f32 %v1322, %v1326
        %v1331 = vsub.f32 %v1323, %v1329
        %v1332 = vmul.f32 %v1330, 1.442695
        %v1333 = vpow.pop %v1332
        %v1334 = vmul.f32 %v1331, 1.442695
        %v1335 = vpow.pop %v1334
        %v1336 = vsel %vm1272, %v1333, 0.0
        %1337 = vadd.xlane.f32.xlu0 %v1336
        %v1338 = vpop.xlane.xlu0 %1337
        %v1339 = vsel %vm1272, %v1335, 0.0
        %1340 = vadd.xlane.f32.xlu0 %v1339
        %v1341 = vpop.xlane.xlu0 %1340
        %v1342 = vrcp.pop %v1338
        %v1343 = vrcp.pop %v1341
        %v1344 = vmul.f32 %v1333, %v1342
        %v1345 = vmul.f32 %v1335, %v1343
        %v1346 = vpack.c.bf16 %v1345, %v1344
        %v1348 = vsel %vm1272, %v1346, 0
        %1350 = vmatprep.subr.bf16.mxu0 0
        %1351 = vmatpush1.bf16.msra.mxu0 0
        %1352 = vmatprep.subr.bf16.mxu0 0
        %1353 = vmatpush1.bf16.msra.mxu0 0
        %1354 = vmatprep.subr.bf16.mxu0 0
        %1355 = vmatpush1.bf16.msra.mxu0 0
        %1356 = vmatprep.subr.bf16.mxu0 0
        %1357 = vmatpush1.bf16.msra.mxu0 0
        %1358 = vmatprep.subr.bf16.mxu0 0
        %1359 = vmatpush1.bf16.msra.mxu0 0
        %1360 = vmatprep.subr.bf16.mxu0 0
        %1361 = vmatpush1.bf16.msra.mxu0 0
        %1362 = vmatprep.subr.bf16.mxu0 0
        %1363 = vmatpush1.bf16.msra.mxu0 0
        %1364 = vmatprep.subr.bf16.mxu0 0
        %1365 = vmatpush1.bf16.msra.mxu0 %v1268
        %1366 = vmatprep.subr.bf16.mxu0 0
        %1367 = vmatpush2.bf16.msra.mxu0 0
        %1368 = vmatprep.subr.bf16.mxu0 0
        %1369 = vmatpush2.bf16.msra.mxu0 0
        %1370 = vmatprep.subr.bf16.mxu0 0
        %1371 = vmatpush2.bf16.msra.mxu0 0
        %1372 = vmatprep.subr.bf16.mxu0 0
        %1373 = vmatpush2.bf16.msra.mxu0 0
        %1374 = vmatprep.subr.bf16.mxu0 0
        %1375 = vmatpush2.bf16.msra.mxu0 0
        %1376 = vmatprep.subr.bf16.mxu0 0
        %1377 = vmatpush2.bf16.msra.mxu0 0
        %1378 = vmatprep.subr.bf16.mxu0 0
        %1379 = vmatpush2.bf16.msra.mxu0 0
        %1380 = vmatprep.subr.bf16.mxu0 0
        %1381 = vmatpush2.bf16.msra.mxu0 0
        %1382 = vmatprep.mubr.bf16.mxu0 0
        %1383 = vmatmul.mubr.bf16.gmra.mxu0 %v1348
        %v1384 = vpop.f32.mrf.mxu0
        %v1385 = vadd.f32 0.0, %v1384
        %v1386 = vpop.f32.mrf.mxu0
        %v1387 = vpop.f32.mrf.mxu0
        %v1388 = vadd.f32 0.0, %v1387
        %v1389 = vpop.f32.mrf.mxu0
        %1390 = vdwg.mxu0
        %1391 = vrot.lane.b32.xlu0 %v1267, 112
        %v1392 = vpop.permute.xlu0 %1391
        %1393 = vrot.lane.b32.xlu0 %v1267, 48
        %v1394 = vpop.permute.xlu0 %1393
        %v1396 = vsel %vm1272, %v1392, 0
        %v1399 = vsel %vm1272, %v1394, 0
        %1401 = vmatprep.subr.bf16.mxu0 0
        %1402 = vmatpush1.bf16.xpose.msra.mxu0 0
        %1403 = vmatprep.subr.bf16.mxu0 0
        %1404 = vmatpush1.bf16.xpose.msra.mxu0 0
        %1405 = vmatprep.subr.bf16.mxu0 0
        %1406 = vmatpush1.bf16.xpose.msra.mxu0 0
        %1407 = vmatprep.subr.bf16.mxu0 0
        %1408 = vmatpush1.bf16.xpose.msra.mxu0 0
        %1409 = vmatprep.subr.bf16.mxu0 0
        %1410 = vmatpush1.bf16.xpose.msra.mxu0 0
        %1411 = vmatprep.subr.bf16.mxu0 0
        %1412 = vmatpush1.bf16.xpose.msra.mxu0 0
        %1413 = vmatprep.subr.bf16.mxu0 0
        %1414 = vmatpush1.bf16.xpose.msra.mxu0 0
        %1415 = vmatprep.subr.bf16.mxu0 0
        %1416 = vmatpush1.bf16.xpose.msra.mxu0 %v1399
        %1417 = vmatprep.subr.bf16.mxu0 0
        %1418 = vmatpush2.bf16.xpose.msra.mxu0 0
        %1419 = vmatprep.subr.bf16.mxu0 0
        %1420 = vmatpush2.bf16.xpose.msra.mxu0 0
        %1421 = vmatprep.subr.bf16.mxu0 0
        %1422 = vmatpush2.bf16.xpose.msra.mxu0 0
        %1423 = vmatprep.subr.bf16.mxu0 0
        %1424 = vmatpush2.bf16.xpose.msra.mxu0 0
        %1425 = vmatprep.subr.bf16.mxu0 0
        %1426 = vmatpush2.bf16.xpose.msra.mxu0 0
        %1427 = vmatprep.subr.bf16.mxu0 0
        %1428 = vmatpush2.bf16.xpose.msra.mxu0 0
        %1429 = vmatprep.subr.bf16.mxu0 0
        %1430 = vmatpush2.bf16.xpose.msra.mxu0 0
        %1431 = vmatprep.subr.bf16.mxu0 0
        %1432 = vmatpush2.bf16.xpose.msra.mxu0 0
        %1433 = vmatprep.mubr.bf16.mxu0 0
        %1434 = vmatmul.mubr.bf16.gmra.mxu0 %v1396
        %v1435 = vpop.f32.mrf.mxu0
        %v1436 = vadd.f32 0.0, %v1435
        %v1437 = vpop.f32.mrf.mxu0
        %v1438 = vpop.f32.mrf.mxu0
        %v1439 = vadd.f32 0.0, %v1438
        %v1440 = vpop.f32.mrf.mxu0
        %1441 = vdwg.mxu0
        %v1442 = vmul.f32 %v1436, 0.25
        %v1443 = vmul.f32 %v1439, 0.25
        %v1444 = vadd.f32 %v1442, %v1265
        %v1445 = vadd.f32 %v1443, %v1266
        %v1446 = vsel %vm1272, %v1444, -inf
        %1447 = vmax.xlane.f32.xlu0 %v1446
        %v1448 = vpop.xlane.xlu0 %1447
        %v1449 = vsel %vm1272, %v1445, -inf
        %1450 = vmax.xlane.f32.xlu0 %v1449
        %v1451 = vpop.xlane.xlu0 %1450
        %v1452 = vsub.f32 %v1444, %v1448
        %v1453 = vsub.f32 %v1445, %v1451
        %v1454 = vmul.f32 %v1452, 1.442695
        %v1455 = vpow.pop %v1454
        %v1456 = vmul.f32 %v1453, 1.442695
        %v1457 = vpow.pop %v1456
        %v1458 = vsel %vm1272, %v1455, 0.0
        %1459 = vadd.xlane.f32.xlu0 %v1458
        %v1460 = vpop.xlane.xlu0 %1459
        %v1461 = vsel %vm1272, %v1457, 0.0
        %1462 = vadd.xlane.f32.xlu0 %v1461
        %v1463 = vpop.xlane.xlu0 %1462
        %v1464 = vrcp.pop %v1460
        %v1465 = vrcp.pop %v1463
        %v1466 = vmul.f32 %v1455, %v1464
        %v1467 = vmul.f32 %v1457, %v1465
        %v1468 = vpack.c.bf16 %v1467, %v1466
        %1470 = vrot.lane.b32.xlu0 %v1268, 112
        %v1471 = vpop.permute.xlu0 %1470
        %v1474 = vsel %vm1272, %v1468, 0
        %1476 = vmatprep.subr.bf16.mxu0 0
        %1477 = vmatpush1.bf16.msra.mxu0 0
        %1478 = vmatprep.subr.bf16.mxu0 0
        %1479 = vmatpush1.bf16.msra.mxu0 0
        %1480 = vmatprep.subr.bf16.mxu0 0
        %1481 = vmatpush1.bf16.msra.mxu0 0
        %1482 = vmatprep.subr.bf16.mxu0 0
        %1483 = vmatpush1.bf16.msra.mxu0 0
        %1484 = vmatprep.subr.bf16.mxu0 0
        %1485 = vmatpush1.bf16.msra.mxu0 0
        %1486 = vmatprep.subr.bf16.mxu0 0
        %1487 = vmatpush1.bf16.msra.mxu0 0
        %1488 = vmatprep.subr.bf16.mxu0 0
        %1489 = vmatpush1.bf16.msra.mxu0 0
        %1490 = vmatprep.subr.bf16.mxu0 0
        %1491 = vmatpush1.bf16.msra.mxu0 %v1471
        %1492 = vmatprep.subr.bf16.mxu0 0
        %1493 = vmatpush2.bf16.msra.mxu0 0
        %1494 = vmatprep.subr.bf16.mxu0 0
        %1495 = vmatpush2.bf16.msra.mxu0 0
        %1496 = vmatprep.subr.bf16.mxu0 0
        %1497 = vmatpush2.bf16.msra.mxu0 0
        %1498 = vmatprep.subr.bf16.mxu0 0
        %1499 = vmatpush2.bf16.msra.mxu0 0
        %1500 = vmatprep.subr.bf16.mxu0 0
        %1501 = vmatpush2.bf16.msra.mxu0 0
        %1502 = vmatprep.subr.bf16.mxu0 0
        %1503 = vmatpush2.bf16.msra.mxu0 0
        %1504 = vmatprep.subr.bf16.mxu0 0
        %1505 = vmatpush2.bf16.msra.mxu0 0
        %1506 = vmatprep.subr.bf16.mxu0 0
        %1507 = vmatpush2.bf16.msra.mxu0 0
        %1508 = vmatprep.mubr.bf16.mxu0 0
        %1509 = vmatmul.mubr.bf16.gmra.mxu0 %v1474
        %v1510 = vpop.f32.mrf.mxu0
        %v1511 = vadd.f32 0.0, %v1510
        %v1512 = vpop.f32.mrf.mxu0
        %v1513 = vpop.f32.mrf.mxu0
        %v1514 = vadd.f32 0.0, %v1513
        %v1515 = vpop.f32.mrf.mxu0
        %1516 = vdwg.mxu0
        %1517 = vrot.lane.b32.xlu0 %v1267, 96
        %v1518 = vpop.permute.xlu0 %1517
        %1519 = vrot.lane.b32.xlu0 %v1267, 32
        %v1520 = vpop.permute.xlu0 %1519
        %v1522 = vsel %vm1272, %v1518, 0
        %v1525 = vsel %vm1272, %v1520, 0
        %1527 = vmatprep.subr.bf16.mxu0 0
        %1528 = vmatpush1.bf16.xpose.msra.mxu0 0
        %1529 = vmatprep.subr.bf16.mxu0 0
        %1530 = vmatpush1.bf16.xpose.msra.mxu0 0
        %1531 = vmatprep.subr.bf16.mxu0 0
        %1532 = vmatpush1.bf16.xpose.msra.mxu0 0
        %1533 = vmatprep.subr.bf16.mxu0 0
        %1534 = vmatpush1.bf16.xpose.msra.mxu0 0
        %1535 = vmatprep.subr.bf16.mxu0 0
        %1536 = vmatpush1.bf16.xpose.msra.mxu0 0
        %1537 = vmatprep.subr.bf16.mxu0 0
        %1538 = vmatpush1.bf16.xpose.msra.mxu0 0
        %1539 = vmatprep.subr.bf16.mxu0 0
        %1540 = vmatpush1.bf16.xpose.msra.mxu0 0
        %1541 = vmatprep.subr.bf16.mxu0 0
        %1542 = vmatpush1.bf16.xpose.msra.mxu0 %v1525
        %1543 = vmatprep.subr.bf16.mxu0 0
        %1544 = vmatpush2.bf16.xpose.msra.mxu0 0
        %1545 = vmatprep.subr.bf16.mxu0 0
        %1546 = vmatpush2.bf16.xpose.msra.mxu0 0
        %1547 = vmatprep.subr.bf16.mxu0 0
        %1548 = vmatpush2.bf16.xpose.msra.mxu0 0
        %1549 = vmatprep.subr.bf16.mxu0 0
        %1550 = vmatpush2.bf16.xpose.msra.mxu0 0
        %1551 = vmatprep.subr.bf16.mxu0 0
        %1552 = vmatpush2.bf16.xpose.msra.mxu0 0
        %1553 = vmatprep.subr.bf16.mxu0 0
        %1554 = vmatpush2.bf16.xpose.msra.mxu0 0
        %1555 = vmatprep.subr.bf16.mxu0 0
        %1556 = vmatpush2.bf16.xpose.msra.mxu0 0
        %1557 = vmatprep.subr.bf16.mxu0 0
        %1558 = vmatpush2.bf16.xpose.msra.mxu0 0
        %1559 = vmatprep.mubr.bf16.mxu0 0
        %1560 = vmatmul.mubr.bf16.gmra.mxu0 %v1522
        %v1561 = vpop.f32.mrf.mxu0
        %v1562 = vadd.f32 0.0, %v1561
        %v1563 = vpop.f32.mrf.mxu0
        %v1564 = vpop.f32.mrf.mxu0
        %v1565 = vadd.f32 0.0, %v1564
        %v1566 = vpop.f32.mrf.mxu0
        %1567 = vdwg.mxu0
        %v1568 = vmul.f32 %v1562, 0.25
        %v1569 = vmul.f32 %v1565, 0.25
        %v1570 = vadd.f32 %v1568, %v1265
        %v1571 = vadd.f32 %v1569, %v1266
        %v1572 = vsel %vm1272, %v1570, -inf
        %1573 = vmax.xlane.f32.xlu0 %v1572
        %v1574 = vpop.xlane.xlu0 %1573
        %v1575 = vsel %vm1272, %v1571, -inf
        %1576 = vmax.xlane.f32.xlu0 %v1575
        %v1577 = vpop.xlane.xlu0 %1576
        %v1578 = vsub.f32 %v1570, %v1574
        %v1579 = vsub.f32 %v1571, %v1577
        %v1580 = vmul.f32 %v1578, 1.442695
        %v1581 = vpow.pop %v1580
        %v1582 = vmul.f32 %v1579, 1.442695
        %v1583 = vpow.pop %v1582
        %v1584 = vsel %vm1272, %v1581, 0.0
        %1585 = vadd.xlane.f32.xlu0 %v1584
        %v1586 = vpop.xlane.xlu0 %1585
        %v1587 = vsel %vm1272, %v1583, 0.0
        %1588 = vadd.xlane.f32.xlu0 %v1587
        %v1589 = vpop.xlane.xlu0 %1588
        %v1590 = vrcp.pop %v1586
        %v1591 = vrcp.pop %v1589
        %v1592 = vmul.f32 %v1581, %v1590
        %v1593 = vmul.f32 %v1583, %v1591
        %v1594 = vpack.c.bf16 %v1593, %v1592
        %1595 = vrot.lane.b32.xlu0 %v1268, 96
        %v1596 = vpop.permute.xlu0 %1595
        %v1599 = vsel %vm1272, %v1594, 0
        %1601 = vmatprep.subr.bf16.mxu0 0
        %1602 = vmatpush1.bf16.msra.mxu0 0
        %1603 = vmatprep.subr.bf16.mxu0 0
        %1604 = vmatpush1.bf16.msra.mxu0 0
        %1605 = vmatprep.subr.bf16.mxu0 0
        %1606 = vmatpush1.bf16.msra.mxu0 0
        %1607 = vmatprep.subr.bf16.mxu0 0
        %1608 = vmatpush1.bf16.msra.mxu0 0
        %1609 = vmatprep.subr.bf16.mxu0 0
        %1610 = vmatpush1.bf16.msra.mxu0 0
        %1611 = vmatprep.subr.bf16.mxu0 0
        %1612 = vmatpush1.bf16.msra.mxu0 0
        %1613 = vmatprep.subr.bf16.mxu0 0
        %1614 = vmatpush1.bf16.msra.mxu0 0
        %1615 = vmatprep.subr.bf16.mxu0 0
        %1616 = vmatpush1.bf16.msra.mxu0 %v1596
        %1617 = vmatprep.subr.bf16.mxu0 0
        %1618 = vmatpush2.bf16.msra.mxu0 0
        %1619 = vmatprep.subr.bf16.mxu0 0
        %1620 = vmatpush2.bf16.msra.mxu0 0
        %1621 = vmatprep.subr.bf16.mxu0 0
        %1622 = vmatpush2.bf16.msra.mxu0 0
        %1623 = vmatprep.subr.bf16.mxu0 0
        %1624 = vmatpush2.bf16.msra.mxu0 0
        %1625 = vmatprep.subr.bf16.mxu0 0
        %1626 = vmatpush2.bf16.msra.mxu0 0
        %1627 = vmatprep.subr.bf16.mxu0 0
        %1628 = vmatpush2.bf16.msra.mxu0 0
        %1629 = vmatprep.subr.bf16.mxu0 0
        %1630 = vmatpush2.bf16.msra.mxu0 0
        %1631 = vmatprep.subr.bf16.mxu0 0
        %1632 = vmatpush2.bf16.msra.mxu0 0
        %1633 = vmatprep.mubr.bf16.mxu0 0
        %1634 = vmatmul.mubr.bf16.gmra.mxu0 %v1599
        %v1635 = vpop.f32.mrf.mxu0
        %v1636 = vadd.f32 0.0, %v1635
        %v1637 = vpop.f32.mrf.mxu0
        %v1638 = vpop.f32.mrf.mxu0
        %v1639 = vadd.f32 0.0, %v1638
        %v1640 = vpop.f32.mrf.mxu0
        %1641 = vdwg.mxu0
        %1642 = vrot.lane.b32.xlu0 %v1267, 80
        %v1643 = vpop.permute.xlu0 %1642
        %1644 = vrot.lane.b32.xlu0 %v1267, 16
        %v1645 = vpop.permute.xlu0 %1644
        %v1647 = vsel %vm1272, %v1643, 0
        %v1650 = vsel %vm1272, %v1645, 0
        %1652 = vmatprep.subr.bf16.mxu0 0
        %1653 = vmatpush1.bf16.xpose.msra.mxu0 0
        %1654 = vmatprep.subr.bf16.mxu0 0
        %1655 = vmatpush1.bf16.xpose.msra.mxu0 0
        %1656 = vmatprep.subr.bf16.mxu0 0
        %1657 = vmatpush1.bf16.xpose.msra.mxu0 0
        %1658 = vmatprep.subr.bf16.mxu0 0
        %1659 = vmatpush1.bf16.xpose.msra.mxu0 0
        %1660 = vmatprep.subr.bf16.mxu0 0
        %1661 = vmatpush1.bf16.xpose.msra.mxu0 0
        %1662 = vmatprep.subr.bf16.mxu0 0
        %1663 = vmatpush1.bf16.xpose.msra.mxu0 0
        %1664 = vmatprep.subr.bf16.mxu0 0
        %1665 = vmatpush1.bf16.xpose.msra.mxu0 0
        %1666 = vmatprep.subr.bf16.mxu0 0
        %1667 = vmatpush1.bf16.xpose.msra.mxu0 %v1650
        %1668 = vmatprep.subr.bf16.mxu0 0
        %1669 = vmatpush2.bf16.xpose.msra.mxu0 0
        %1670 = vmatprep.subr.bf16.mxu0 0
        %1671 = vmatpush2.bf16.xpose.msra.mxu0 0
        %1672 = vmatprep.subr.bf16.mxu0 0
        %1673 = vmatpush2.bf16.xpose.msra.mxu0 0
        %1674 = vmatprep.subr.bf16.mxu0 0
        %1675 = vmatpush2.bf16.xpose.msra.mxu0 0
        %1676 = vmatprep.subr.bf16.mxu0 0
        %1677 = vmatpush2.bf16.xpose.msra.mxu0 0
        %1678 = vmatprep.subr.bf16.mxu0 0
        %1679 = vmatpush2.bf16.xpose.msra.mxu0 0
        %1680 = vmatprep.subr.bf16.mxu0 0
        %1681 = vmatpush2.bf16.xpose.msra.mxu0 0
        %1682 = vmatprep.subr.bf16.mxu0 0
        %1683 = vmatpush2.bf16.xpose.msra.mxu0 0
        %1684 = vmatprep.mubr.bf16.mxu0 0
        %1685 = vmatmul.mubr.bf16.gmra.mxu0 %v1647
        %v1686 = vpop.f32.mrf.mxu0
        %v1687 = vadd.f32 0.0, %v1686
        %v1688 = vpop.f32.mrf.mxu0
        %v1689 = vpop.f32.mrf.mxu0
        %v1690 = vadd.f32 0.0, %v1689
        %v1691 = vpop.f32.mrf.mxu0
        %1692 = vdwg.mxu0
        %v1693 = vmul.f32 %v1687, 0.25
        %v1694 = vmul.f32 %v1690, 0.25
        %v1695 = vadd.f32 %v1693, %v1265
        %v1696 = vadd.f32 %v1694, %v1266
        %v1697 = vsel %vm1272, %v1695, -inf
        %1698 = vmax.xlane.f32.xlu0 %v1697
        %v1699 = vpop.xlane.xlu0 %1698
        %v1700 = vsel %vm1272, %v1696, -inf
        %1701 = vmax.xlane.f32.xlu0 %v1700
        %v1702 = vpop.xlane.xlu0 %1701
        %v1703 = vsub.f32 %v1695, %v1699
        %v1704 = vsub.f32 %v1696, %v1702
        %v1705 = vmul.f32 %v1703, 1.442695
        %v1706 = vpow.pop %v1705
        %v1707 = vmul.f32 %v1704, 1.442695
        %v1708 = vpow.pop %v1707
        %v1709 = vsel %vm1272, %v1706, 0.0
        %1710 = vadd.xlane.f32.xlu0 %v1709
        %v1711 = vpop.xlane.xlu0 %1710
        %v1712 = vsel %vm1272, %v1708, 0.0
        %1713 = vadd.xlane.f32.xlu0 %v1712
        %v1714 = vpop.xlane.xlu0 %1713
        %v1715 = vrcp.pop %v1711
        %v1716 = vrcp.pop %v1714
        %v1717 = vmul.f32 %v1706, %v1715
        %v1718 = vmul.f32 %v1708, %v1716
        %v1719 = vpack.c.bf16 %v1718, %v1717
        %1720 = vrot.lane.b32.xlu0 %v1268, 80
        %v1721 = vpop.permute.xlu0 %1720
        %v1724 = vsel %vm1272, %v1719, 0
        %1726 = vmatprep.subr.bf16.mxu0 0
        %1727 = vmatpush1.bf16.msra.mxu0 0
        %1728 = vmatprep.subr.bf16.mxu0 0
        %1729 = vmatpush1.bf16.msra.mxu0 0
        %1730 = vmatprep.subr.bf16.mxu0 0
        %1731 = vmatpush1.bf16.msra.mxu0 0
        %1732 = vmatprep.subr.bf16.mxu0 0
        %1733 = vmatpush1.bf16.msra.mxu0 0
        %1734 = vmatprep.subr.bf16.mxu0 0
        %1735 = vmatpush1.bf16.msra.mxu0 0
        %1736 = vmatprep.subr.bf16.mxu0 0
        %1737 = vmatpush1.bf16.msra.mxu0 0
        %1738 = vmatprep.subr.bf16.mxu0 0
        %1739 = vmatpush1.bf16.msra.mxu0 0
        %1740 = vmatprep.subr.bf16.mxu0 0
        %1741 = vmatpush1.bf16.msra.mxu0 %v1721
        %1742 = vmatprep.subr.bf16.mxu0 0
        %1743 = vmatpush2.bf16.msra.mxu0 0
        %1744 = vmatprep.subr.bf16.mxu0 0
        %1745 = vmatpush2.bf16.msra.mxu0 0
        %1746 = vmatprep.subr.bf16.mxu0 0
        %1747 = vmatpush2.bf16.msra.mxu0 0
        %1748 = vmatprep.subr.bf16.mxu0 0
        %1749 = vmatpush2.bf16.msra.mxu0 0
        %1750 = vmatprep.subr.bf16.mxu0 0
        %1751 = vmatpush2.bf16.msra.mxu0 0
        %1752 = vmatprep.subr.bf16.mxu0 0
        %1753 = vmatpush2.bf16.msra.mxu0 0
        %1754 = vmatprep.subr.bf16.mxu0 0
        %1755 = vmatpush2.bf16.msra.mxu0 0
        %1756 = vmatprep.subr.bf16.mxu0 0
        %1757 = vmatpush2.bf16.msra.mxu0 0
        %1758 = vmatprep.mubr.bf16.mxu0 0
        %1759 = vmatmul.mubr.bf16.gmra.mxu0 %v1724
        %v1760 = vpop.f32.mrf.mxu0
        %v1761 = vadd.f32 0.0, %v1760
        %v1762 = vpop.f32.mrf.mxu0
        %v1763 = vpop.f32.mrf.mxu0
        %v1764 = vadd.f32 0.0, %v1763
        %v1765 = vpop.f32.mrf.mxu0
        %1766 = vdwg.mxu0
        %1769 = vrot.lane.b32.xlu0 %v1511, 16
        %v1770 = vpop.permute.xlu0 %1769
        %1771 = vrot.lane.b32.xlu0 %v1514, 16
        %v1772 = vpop.permute.xlu0 %1771
        %1777 = vrot.lane.b32.xlu0 %v1636, 32
        %v1778 = vpop.permute.xlu0 %1777
        %1779 = vrot.lane.b32.xlu0 %v1639, 32
        %v1780 = vpop.permute.xlu0 %1779
        %1785 = vrot.lane.b32.xlu0 %v1761, 48
        %v1786 = vpop.permute.xlu0 %1785
        %1787 = vrot.lane.b32.xlu0 %v1764, 48
        %v1788 = vpop.permute.xlu0 %1787
        %v1791 = vsel %vm1272, %v1385, %v1770
        %v1792 = vsel %vm1272, %v1388, %v1772
        %vm1793 = vcmask 261120
        %v1794 = vsel %vm1793, %v1791, %v1778
        %v1795 = vsel %vm1793, %v1792, %v1780
        %vm1796 = vcmask 392192
        %v1797 = vsel %vm1796, %v1794, %v1786
        %v1798 = vsel %vm1796, %v1795, %v1788
        %v1799 = vld [vmem:[%s1035] sm:$0xf]
        %v1800 = vld [vmem:[%s1035 + $0x4] sm:$0xf]
        %v1801 = vld [vmem:[%s1035 + $0x8] sm:$0xf]
        %v1802 = vld [vmem:[%s1035 + $0xc] sm:$0xf]
        %v1803 = vld [vmem:[%s1035 + $0x10] sm:$0xf]
        %v1804 = vld [vmem:[%s1035 + $0x14] sm:$0xf]
        %v1805 = vld [vmem:[%s1035 + $0x18] sm:$0xf]
        %v1806 = vld [vmem:[%s1035 + $0x1c] sm:$0xf]
        %v1807 = vpack.c.bf16 %v1798, %v1797
        %v1816 = vunpack.c.l.b16 %v1799
        %v1817 = vunpack.c.l.b16 %v1800
        %v1818 = vunpack.c.l.b16 %v1801
        %v1819 = vunpack.c.l.b16 %v1802
        %v1820 = vunpack.c.l.b16 %v1803
        %v1821 = vunpack.c.l.b16 %v1804
        %v1822 = vunpack.c.l.b16 %v1805
        %v1823 = vunpack.c.l.b16 %v1806
        %v1824 = vpack.c.b16 %v1817, %v1816
        %v1825 = vpack.c.b16 %v1819, %v1818
        %v1826 = vpack.c.b16 %v1821, %v1820
        %v1827 = vpack.c.b16 %v1823, %v1822
        %v1833 = vsel %vm1218, %v1807, 0
        %1835 = vmatprep.subr.bf16.mxu0 0
        %1836 = vmatpush1.bf16.msra.mxu0 0
        %1837 = vmatprep.subr.bf16.mxu0 0
        %1838 = vmatpush1.bf16.msra.mxu0 0
        %1839 = vmatprep.subr.bf16.mxu0 0
        %1840 = vmatpush1.bf16.msra.mxu0 0
        %1841 = vmatprep.subr.bf16.mxu0 0
        %1842 = vmatpush1.bf16.msra.mxu0 0
        %1843 = vmatprep.subr.bf16.mxu0 0
        %1844 = vmatpush1.bf16.msra.mxu0 %v1827
        %1845 = vmatprep.subr.bf16.mxu0 0
        %1846 = vmatpush1.bf16.msra.mxu0 %v1826
        %1847 = vmatprep.subr.bf16.mxu0 0
        %1848 = vmatpush1.bf16.msra.mxu0 %v1825
        %1849 = vmatprep.subr.bf16.mxu0 0
        %1850 = vmatpush1.bf16.msra.mxu0 %v1824
        %1851 = vmatprep.subr.bf16.mxu0 0
        %1852 = vmatpush2.bf16.msra.mxu0 0
        %1853 = vmatprep.subr.bf16.mxu0 0
        %1854 = vmatpush2.bf16.msra.mxu0 0
        %1855 = vmatprep.subr.bf16.mxu0 0
        %1856 = vmatpush2.bf16.msra.mxu0 0
        %1857 = vmatprep.subr.bf16.mxu0 0
        %1858 = vmatpush2.bf16.msra.mxu0 0
        %1859 = vmatprep.subr.bf16.mxu0 0
        %1860 = vmatpush2.bf16.msra.mxu0 0
        %1861 = vmatprep.subr.bf16.mxu0 0
        %1862 = vmatpush2.bf16.msra.mxu0 0
        %1863 = vmatprep.subr.bf16.mxu0 0
        %1864 = vmatpush2.bf16.msra.mxu0 0
        %1865 = vmatprep.subr.bf16.mxu0 0
        %1866 = vmatpush2.bf16.msra.mxu0 0
        %1867 = vmatprep.mubr.bf16.mxu0 0
        %1868 = vmatmul.mubr.bf16.gmra.mxu0 %v1833
        %v1869 = vpop.f32.mrf.mxu0
        %v1870 = vadd.f32 0.0, %v1869
        %v1871 = vpop.f32.mrf.mxu0
        %v1872 = vpop.f32.mrf.mxu0
        %v1873 = vadd.f32 0.0, %v1872
        %v1874 = vpop.f32.mrf.mxu0
        %1875 = vdwg.mxu0
        %v1876 = vadd.f32 %v1153, %v1870
        %v1877 = vadd.f32 %v1154, %v1873
        %v1878 = vld [vmem:[%s1038] sm:$0x1]
        %v1880 = vlaneseq
        %v1881 = vshrl.u32 %v1880, 7
        %v1882 = vsub.s32 0, %v1881
        %v1883 = vrot.slane %v1878, %v1882
        %v1885 = vadd.f32 %v1876, %v1883
        %v1886 = vadd.f32 %v1877, %v1883
        %v1887 = vld [vmem:[%s1041] sm:$0x1]
        %v1888 = vld [vmem:[%s1044] sm:$0x1]
        %v1889 = vsel %vm1218, %v1885, 0.0
        %1890 = vadd.xlane.f32.xlu0 %v1889
        %v1891 = vpop.xlane.xlu0 %1890
        %v1892 = vsel %vm1218, %v1886, 0.0
        %1893 = vadd.xlane.f32.xlu0 %v1892
        %v1894 = vpop.xlane.xlu0 %1893
        %v1895 = vrcp.pop 64.0
        %v1896 = vmul.f32 %v1891, %v1895
        %v1897 = vmul.f32 %v1894, %v1895
        %v1898 = vsub.f32 %v1885, %v1896
        %v1899 = vsub.f32 %v1886, %v1897
        %v1900 = vmul.f32 %v1898, %v1898
        %v1901 = vmul.f32 %v1899, %v1899
        %v1902 = vsel %vm1218, %v1900, 0.0
        %1903 = vadd.xlane.f32.xlu0 %v1902
        %v1904 = vpop.xlane.xlu0 %1903
        %v1905 = vsel %vm1218, %v1901, 0.0
        %1906 = vadd.xlane.f32.xlu0 %v1905
        %v1907 = vpop.xlane.xlu0 %1906
        %v1908 = vmul.f32 %v1904, %v1895
        %v1909 = vmul.f32 %v1907, %v1895
        %v1910 = vadd.f32 %v1908, 1e-12
        %v1911 = vadd.f32 %v1909, 1e-12
        %v1912 = vrsqrt.pop %v1910
        %v1913 = vrsqrt.pop %v1911
        %v1914 = vmul.f32 %v1898, %v1912
        %v1915 = vmul.f32 %v1899, %v1913
        %v1917 = vlaneseq
        %v1918 = vshrl.u32 %v1917, 7
        %v1919 = vsub.s32 0, %v1918
        %v1920 = vrot.slane %v1887, %v1919
        %v1922 = vmul.f32 %v1914, %v1920
        %v1923 = vmul.f32 %v1915, %v1920
        %v1925 = vlaneseq
        %v1926 = vshrl.u32 %v1925, 7
        %v1927 = vsub.s32 0, %v1926
        %v1928 = vrot.slane %v1888, %v1927
        %v1930 = vadd.f32 %v1922, %v1928
        %v1931 = vadd.f32 %v1923, %v1928
        %v1932 = vld [vmem:[%s1049] sm:$0xf]
        %v1933 = vld [vmem:[%s1049 + $0x4] sm:$0xf]
        %v1934 = vld [vmem:[%s1049 + $0x8] sm:$0xf]
        %v1935 = vld [vmem:[%s1049 + $0xc] sm:$0xf]
        %v1936 = vld [vmem:[%s1049 + $0x10] sm:$0xf]
        %v1937 = vld [vmem:[%s1049 + $0x14] sm:$0xf]
        %v1938 = vld [vmem:[%s1049 + $0x18] sm:$0xf]
        %v1939 = vld [vmem:[%s1049 + $0x1c] sm:$0xf]
        %v1940 = vpack.c.bf16 %v1931, %v1930
        %v1941 = vld [vmem:[%s1052] sm:$0x1]
        %v1943 = vlaneseq
        %v1944 = vshrl.u32 %v1943, 7
        %v1945 = vsub.s32 0, %v1944
        %v1946 = vrot.slane %v1941, %v1945
        %v1956 = vunpack.c.l.b16 %v1932
        %v1957 = vunpack.c.l.b16 %v1933
        %v1958 = vunpack.c.l.b16 %v1934
        %v1959 = vunpack.c.l.b16 %v1935
        %v1960 = vunpack.c.l.b16 %v1936
        %v1961 = vunpack.c.l.b16 %v1937
        %v1962 = vunpack.c.l.b16 %v1938
        %v1963 = vunpack.c.l.b16 %v1939
        %v1964 = vpack.c.b16 %v1957, %v1956
        %v1965 = vpack.c.b16 %v1959, %v1958
        %v1966 = vpack.c.b16 %v1961, %v1960
        %v1967 = vpack.c.b16 %v1963, %v1962
        %v1973 = vsel %vm1218, %v1940, 0
        %1975 = vmatprep.subr.bf16.mxu0 0
        %1976 = vmatpush1.bf16.msra.mxu0 0
        %1977 = vmatprep.subr.bf16.mxu0 0
        %1978 = vmatpush1.bf16.msra.mxu0 0
        %1979 = vmatprep.subr.bf16.mxu0 0
        %1980 = vmatpush1.bf16.msra.mxu0 0
        %1981 = vmatprep.subr.bf16.mxu0 0
        %1982 = vmatpush1.bf16.msra.mxu0 0
        %1983 = vmatprep.subr.bf16.mxu0 0
        %1984 = vmatpush1.bf16.msra.mxu0 %v1967
        %1985 = vmatprep.subr.bf16.mxu0 0
        %1986 = vmatpush1.bf16.msra.mxu0 %v1966
        %1987 = vmatprep.subr.bf16.mxu0 0
        %1988 = vmatpush1.bf16.msra.mxu0 %v1965
        %1989 = vmatprep.subr.bf16.mxu0 0
        %1990 = vmatpush1.bf16.msra.mxu0 %v1964
        %1991 = vmatprep.subr.bf16.mxu0 0
        %1992 = vmatpush2.bf16.msra.mxu0 0
        %1993 = vmatprep.subr.bf16.mxu0 0
        %1994 = vmatpush2.bf16.msra.mxu0 0
        %1995 = vmatprep.subr.bf16.mxu0 0
        %1996 = vmatpush2.bf16.msra.mxu0 0
        %1997 = vmatprep.subr.bf16.mxu0 0
        %1998 = vmatpush2.bf16.msra.mxu0 0
        %1999 = vmatprep.subr.bf16.mxu0 0
        %2000 = vmatpush2.bf16.msra.mxu0 0
        %2001 = vmatprep.subr.bf16.mxu0 0
        %2002 = vmatpush2.bf16.msra.mxu0 0
        %2003 = vmatprep.subr.bf16.mxu0 0
        %2004 = vmatpush2.bf16.msra.mxu0 0
        %2005 = vmatprep.subr.bf16.mxu0 0
        %2006 = vmatpush2.bf16.msra.mxu0 0
        %2007 = vmatprep.mubr.bf16.mxu0 0
        %2008 = vmatmul.mubr.bf16.gmra.mxu0 %v1973
        %v2009 = vpop.f32.mrf.mxu0
        %v2010 = vadd.f32 %v1946, %v2009
        %v2011 = vpop.f32.mrf.mxu0
        %v2012 = vpop.f32.mrf.mxu0
        %v2013 = vadd.f32 %v1946, %v2012
        %v2014 = vpop.f32.mrf.mxu0
        %2015 = vdwg.mxu0
        %v2016 = vld [vmem:[%s1057] sm:$0xf]
        %v2017 = vld [vmem:[%s1057 + $0x4] sm:$0xf]
        %v2018 = vld [vmem:[%s1057 + $0x8] sm:$0xf]
        %v2019 = vld [vmem:[%s1057 + $0xc] sm:$0xf]
        %v2020 = vld [vmem:[%s1057 + $0x10] sm:$0xf]
        %v2021 = vld [vmem:[%s1057 + $0x14] sm:$0xf]
        %v2022 = vld [vmem:[%s1057 + $0x18] sm:$0xf]
        %v2023 = vld [vmem:[%s1057 + $0x1c] sm:$0xf]
        %v2024 = vld [vmem:[%s1060] sm:$0x1]
        %v2026 = vlaneseq
        %v2027 = vshrl.u32 %v2026, 7
        %v2028 = vsub.s32 0, %v2027
        %v2029 = vrot.slane %v2024, %v2028
        %v2033 = vunpack.c.l.b16 %v1155
        %v2034 = vunpack.c.l.b16 %v1156
        %v2035 = vpack.c.b16 %v2034, %v2033
        %v2044 = vunpack.c.l.b16 %v2016
        %v2045 = vunpack.c.l.b16 %v2017
        %v2046 = vunpack.c.l.b16 %v2018
        %v2047 = vunpack.c.l.b16 %v2019
        %v2048 = vunpack.c.l.b16 %v2020
        %v2049 = vunpack.c.l.b16 %v2021
        %v2050 = vunpack.c.l.b16 %v2022
        %v2051 = vunpack.c.l.b16 %v2023
        %v2052 = vpack.c.b16 %v2045, %v2044
        %v2053 = vpack.c.b16 %v2047, %v2046
        %v2054 = vpack.c.b16 %v2049, %v2048
        %v2055 = vpack.c.b16 %v2051, %v2050
        %v2061 = vsel %vm1218, %v2035, 0
        %2063 = vmatprep.subr.bf16.mxu0 0
        %2064 = vmatpush1.bf16.msra.mxu0 0
        %2065 = vmatprep.subr.bf16.mxu0 0
        %2066 = vmatpush1.bf16.msra.mxu0 0
        %2067 = vmatprep.subr.bf16.mxu0 0
        %2068 = vmatpush1.bf16.msra.mxu0 0
        %2069 = vmatprep.subr.bf16.mxu0 0
        %2070 = vmatpush1.bf16.msra.mxu0 0
        %2071 = vmatprep.subr.bf16.mxu0 0
        %2072 = vmatpush1.bf16.msra.mxu0 %v2055
        %2073 = vmatprep.subr.bf16.mxu0 0
        %2074 = vmatpush1.bf16.msra.mxu0 %v2054
        %2075 = vmatprep.subr.bf16.mxu0 0
        %2076 = vmatpush1.bf16.msra.mxu0 %v2053
        %2077 = vmatprep.subr.bf16.mxu0 0
        %2078 = vmatpush1.bf16.msra.mxu0 %v2052
        %2079 = vmatprep.subr.bf16.mxu0 0
        %2080 = vmatpush2.bf16.msra.mxu0 0
        %2081 = vmatprep.subr.bf16.mxu0 0
        %2082 = vmatpush2.bf16.msra.mxu0 0
        %2083 = vmatprep.subr.bf16.mxu0 0
        %2084 = vmatpush2.bf16.msra.mxu0 0
        %2085 = vmatprep.subr.bf16.mxu0 0
        %2086 = vmatpush2.bf16.msra.mxu0 0
        %2087 = vmatprep.subr.bf16.mxu0 0
        %2088 = vmatpush2.bf16.msra.mxu0 0
        %2089 = vmatprep.subr.bf16.mxu0 0
        %2090 = vmatpush2.bf16.msra.mxu0 0
        %2091 = vmatprep.subr.bf16.mxu0 0
        %2092 = vmatpush2.bf16.msra.mxu0 0
        %2093 = vmatprep.subr.bf16.mxu0 0
        %2094 = vmatpush2.bf16.msra.mxu0 0
        %2095 = vmatprep.mubr.bf16.mxu0 0
        %2096 = vmatmul.mubr.bf16.gmra.mxu0 %v2061
        %v2097 = vpop.f32.mrf.mxu0
        %v2098 = vadd.f32 %v2029, %v2097
        %v2099 = vpop.f32.mrf.mxu0
        %v2100 = vpop.f32.mrf.mxu0
        %v2101 = vadd.f32 %v2029, %v2100
        %v2102 = vpop.f32.mrf.mxu0
        %2103 = vdwg.mxu0
        %v2104 = vld [vmem:[%s5] sm:$0xff]
        %v2105 = vld [vmem:[%s5 + $0x8] sm:$0xff]
        %v2106 = vpack.c.bf16 %v2013, %v2010
        %v2107 = vpack.c.bf16 %v2101, %v2098
        %v2109 = vsel %vm1272, %v2106, 0
        %v2112 = vsel %vm1272, %v2107, 0
        %2114 = vmatprep.subr.bf16.mxu0 0
        %2115 = vmatpush1.bf16.xpose.msra.mxu0 0
        %2116 = vmatprep.subr.bf16.mxu0 0
        %2117 = vmatpush1.bf16.xpose.msra.mxu0 0
        %2118 = vmatprep.subr.bf16.mxu0 0
        %2119 = vmatpush1.bf16.xpose.msra.mxu0 0
        %2120 = vmatprep.subr.bf16.mxu0 0
        %2121 = vmatpush1.bf16.xpose.msra.mxu0 0
        %2122 = vmatprep.subr.bf16.mxu0 0
        %2123 = vmatpush1.bf16.xpose.msra.mxu0 0
        %2124 = vmatprep.subr.bf16.mxu0 0
        %2125 = vmatpush1.bf16.xpose.msra.mxu0 0
        %2126 = vmatprep.subr.bf16.mxu0 0
        %2127 = vmatpush1.bf16.xpose.msra.mxu0 0
        %2128 = vmatprep.subr.bf16.mxu0 0
        %2129 = vmatpush1.bf16.xpose.msra.mxu0 %v2112
        %2130 = vmatprep.subr.bf16.mxu0 0
        %2131 = vmatpush2.bf16.xpose.msra.mxu0 0
        %2132 = vmatprep.subr.bf16.mxu0 0
        %2133 = vmatpush2.bf16.xpose.msra.mxu0 0
        %2134 = vmatprep.subr.bf16.mxu0 0
        %2135 = vmatpush2.bf16.xpose.msra.mxu0 0
        %2136 = vmatprep.subr.bf16.mxu0 0
        %2137 = vmatpush2.bf16.xpose.msra.mxu0 0
        %2138 = vmatprep.subr.bf16.mxu0 0
        %2139 = vmatpush2.bf16.xpose.msra.mxu0 0
        %2140 = vmatprep.subr.bf16.mxu0 0
        %2141 = vmatpush2.bf16.xpose.msra.mxu0 0
        %2142 = vmatprep.subr.bf16.mxu0 0
        %2143 = vmatpush2.bf16.xpose.msra.mxu0 0
        %2144 = vmatprep.subr.bf16.mxu0 0
        %2145 = vmatpush2.bf16.xpose.msra.mxu0 0
        %2146 = vmatprep.mubr.bf16.mxu0 0
        %2147 = vmatmul.mubr.bf16.gmra.mxu0 %v2109
        %v2148 = vpop.f32.mrf.mxu0
        %v2149 = vadd.f32 0.0, %v2148
        %v2150 = vpop.f32.mrf.mxu0
        %v2151 = vpop.f32.mrf.mxu0
        %v2152 = vadd.f32 0.0, %v2151
        %v2153 = vpop.f32.mrf.mxu0
        %2154 = vdwg.mxu0
        %v2155 = vmul.f32 %v2149, 0.25
        %v2156 = vmul.f32 %v2152, 0.25
        %v2157 = vadd.f32 %v2155, %v2104
        %v2158 = vadd.f32 %v2156, %v2105
        %vm2159 = vcmask 80896
        %v2160 = vsel %vm2159, %v2157, -inf
        %2161 = vmax.xlane.f32.xlu0 %v2160
        %v2162 = vpop.xlane.xlu0 %2161
        %v2163 = vsel %vm2159, %v2158, -inf
        %2164 = vmax.xlane.f32.xlu0 %v2163
        %v2165 = vpop.xlane.xlu0 %2164
        %v2166 = vsub.f32 %v2157, %v2162
        %v2167 = vsub.f32 %v2158, %v2165
        %v2168 = vmul.f32 %v2166, 1.442695
        %v2169 = vpow.pop %v2168
        %v2170 = vmul.f32 %v2167, 1.442695
        %v2171 = vpow.pop %v2170
        %v2172 = vsel %vm2159, %v2169, 0.0
        %2173 = vadd.xlane.f32.xlu0 %v2172
        %v2174 = vpop.xlane.xlu0 %2173
        %v2175 = vsel %vm2159, %v2171, 0.0
        %2176 = vadd.xlane.f32.xlu0 %v2175
        %v2177 = vpop.xlane.xlu0 %2176
        %v2178 = vrcp.pop %v2174
        %v2179 = vrcp.pop %v2177
        %v2180 = vmul.f32 %v2169, %v2178
        %v2181 = vmul.f32 %v2171, %v2179
        %v2182 = vpack.c.bf16 %v2181, %v2180
        %2184 = vrot.lane.b32.xlu0 %v2107, 64
        %v2185 = vpop.permute.xlu0 %2184
        %v2187 = vsel %vm2159, %v2182, 0
        %vm2189 = vcmask 1044480
        %v2191 = vsel %vm2189, %v2185, 0
        %2193 = vmatprep.subr.bf16.mxu0 0
        %2194 = vmatpush1.bf16.msra.mxu0 0
        %2195 = vmatprep.subr.bf16.mxu0 0
        %2196 = vmatpush1.bf16.msra.mxu0 0
        %2197 = vmatprep.subr.bf16.mxu0 0
        %2198 = vmatpush1.bf16.msra.mxu0 0
        %2199 = vmatprep.subr.bf16.mxu0 0
        %2200 = vmatpush1.bf16.msra.mxu0 0
        %2201 = vmatprep.subr.bf16.mxu0 0
        %2202 = vmatpush1.bf16.msra.mxu0 0
        %2203 = vmatprep.subr.bf16.mxu0 0
        %2204 = vmatpush1.bf16.msra.mxu0 0
        %2205 = vmatprep.subr.bf16.mxu0 0
        %2206 = vmatpush1.bf16.msra.mxu0 0
        %2207 = vmatprep.subr.bf16.mxu0 0
        %2208 = vmatpush1.bf16.msra.mxu0 %v2191
        %2209 = vmatprep.subr.bf16.mxu0 0
        %2210 = vmatpush2.bf16.msra.mxu0 0
        %2211 = vmatprep.subr.bf16.mxu0 0
        %2212 = vmatpush2.bf16.msra.mxu0 0
        %2213 = vmatprep.subr.bf16.mxu0 0
        %2214 = vmatpush2.bf16.msra.mxu0 0
        %2215 = vmatprep.subr.bf16.mxu0 0
        %2216 = vmatpush2.bf16.msra.mxu0 0
        %2217 = vmatprep.subr.bf16.mxu0 0
        %2218 = vmatpush2.bf16.msra.mxu0 0
        %2219 = vmatprep.subr.bf16.mxu0 0
        %2220 = vmatpush2.bf16.msra.mxu0 0
        %2221 = vmatprep.subr.bf16.mxu0 0
        %2222 = vmatpush2.bf16.msra.mxu0 0
        %2223 = vmatprep.subr.bf16.mxu0 0
        %2224 = vmatpush2.bf16.msra.mxu0 0
        %2225 = vmatprep.mubr.bf16.mxu0 0
        %2226 = vmatmul.mubr.bf16.gmra.mxu0 %v2187
        %v2227 = vpop.f32.mrf.mxu0
        %v2228 = vadd.f32 0.0, %v2227
        %v2229 = vpop.f32.mrf.mxu0
        %v2230 = vpop.f32.mrf.mxu0
        %v2231 = vadd.f32 0.0, %v2230
        %v2232 = vpop.f32.mrf.mxu0
        %2233 = vdwg.mxu0
        %2235 = vrot.lane.b32.xlu0 %v2106, 112
        %v2236 = vpop.permute.xlu0 %2235
        %2237 = vrot.lane.b32.xlu0 %v2107, 112
        %v2238 = vpop.permute.xlu0 %2237
        %v2240 = vsel %vm1272, %v2236, 0
        %v2243 = vsel %vm1272, %v2238, 0
        %2245 = vmatprep.subr.bf16.mxu0 0
        %2246 = vmatpush1.bf16.xpose.msra.mxu0 0
        %2247 = vmatprep.subr.bf16.mxu0 0
        %2248 = vmatpush1.bf16.xpose.msra.mxu0 0
        %2249 = vmatprep.subr.bf16.mxu0 0
        %2250 = vmatpush1.bf16.xpose.msra.mxu0 0
        %2251 = vmatprep.subr.bf16.mxu0 0
        %2252 = vmatpush1.bf16.xpose.msra.mxu0 0
        %2253 = vmatprep.subr.bf16.mxu0 0
        %2254 = vmatpush1.bf16.xpose.msra.mxu0 0
        %2255 = vmatprep.subr.bf16.mxu0 0
        %2256 = vmatpush1.bf16.xpose.msra.mxu0 0
        %2257 = vmatprep.subr.bf16.mxu0 0
        %2258 = vmatpush1.bf16.xpose.msra.mxu0 0
        %2259 = vmatprep.subr.bf16.mxu0 0
        %2260 = vmatpush1.bf16.xpose.msra.mxu0 %v2243
        %2261 = vmatprep.subr.bf16.mxu0 0
        %2262 = vmatpush2.bf16.xpose.msra.mxu0 0
        %2263 = vmatprep.subr.bf16.mxu0 0
        %2264 = vmatpush2.bf16.xpose.msra.mxu0 0
        %2265 = vmatprep.subr.bf16.mxu0 0
        %2266 = vmatpush2.bf16.xpose.msra.mxu0 0
        %2267 = vmatprep.subr.bf16.mxu0 0
        %2268 = vmatpush2.bf16.xpose.msra.mxu0 0
        %2269 = vmatprep.subr.bf16.mxu0 0
        %2270 = vmatpush2.bf16.xpose.msra.mxu0 0
        %2271 = vmatprep.subr.bf16.mxu0 0
        %2272 = vmatpush2.bf16.xpose.msra.mxu0 0
        %2273 = vmatprep.subr.bf16.mxu0 0
        %2274 = vmatpush2.bf16.xpose.msra.mxu0 0
        %2275 = vmatprep.subr.bf16.mxu0 0
        %2276 = vmatpush2.bf16.xpose.msra.mxu0 0
        %2277 = vmatprep.mubr.bf16.mxu0 0
        %2278 = vmatmul.mubr.bf16.gmra.mxu0 %v2240
        %v2279 = vpop.f32.mrf.mxu0
        %v2280 = vadd.f32 0.0, %v2279
        %v2281 = vpop.f32.mrf.mxu0
        %v2282 = vpop.f32.mrf.mxu0
        %v2283 = vadd.f32 0.0, %v2282
        %v2284 = vpop.f32.mrf.mxu0
        %2285 = vdwg.mxu0
        %v2286 = vmul.f32 %v2280, 0.25
        %v2287 = vmul.f32 %v2283, 0.25
        %v2288 = vadd.f32 %v2286, %v2104
        %v2289 = vadd.f32 %v2287, %v2105
        %v2290 = vsel %vm2159, %v2288, -inf
        %2291 = vmax.xlane.f32.xlu0 %v2290
        %v2292 = vpop.xlane.xlu0 %2291
        %v2293 = vsel %vm2159, %v2289, -inf
        %2294 = vmax.xlane.f32.xlu0 %v2293
        %v2295 = vpop.xlane.xlu0 %2294
        %v2296 = vsub.f32 %v2288, %v2292
        %v2297 = vsub.f32 %v2289, %v2295
        %v2298 = vmul.f32 %v2296, 1.442695
        %v2299 = vpow.pop %v2298
        %v2300 = vmul.f32 %v2297, 1.442695
        %v2301 = vpow.pop %v2300
        %v2302 = vsel %vm2159, %v2299, 0.0
        %2303 = vadd.xlane.f32.xlu0 %v2302
        %v2304 = vpop.xlane.xlu0 %2303
        %v2305 = vsel %vm2159, %v2301, 0.0
        %2306 = vadd.xlane.f32.xlu0 %v2305
        %v2307 = vpop.xlane.xlu0 %2306
        %v2308 = vrcp.pop %v2304
        %v2309 = vrcp.pop %v2307
        %v2310 = vmul.f32 %v2299, %v2308
        %v2311 = vmul.f32 %v2301, %v2309
        %v2312 = vpack.c.bf16 %v2311, %v2310
        %2313 = vrot.lane.b32.xlu0 %v2107, 48
        %v2314 = vpop.permute.xlu0 %2313
        %v2316 = vsel %vm2159, %v2312, 0
        %v2319 = vsel %vm2189, %v2314, 0
        %2321 = vmatprep.subr.bf16.mxu0 0
        %2322 = vmatpush1.bf16.msra.mxu0 0
        %2323 = vmatprep.subr.bf16.mxu0 0
        %2324 = vmatpush1.bf16.msra.mxu0 0
        %2325 = vmatprep.subr.bf16.mxu0 0
        %2326 = vmatpush1.bf16.msra.mxu0 0
        %2327 = vmatprep.subr.bf16.mxu0 0
        %2328 = vmatpush1.bf16.msra.mxu0 0
        %2329 = vmatprep.subr.bf16.mxu0 0
        %2330 = vmatpush1.bf16.msra.mxu0 0
        %2331 = vmatprep.subr.bf16.mxu0 0
        %2332 = vmatpush1.bf16.msra.mxu0 0
        %2333 = vmatprep.subr.bf16.mxu0 0
        %2334 = vmatpush1.bf16.msra.mxu0 0
        %2335 = vmatprep.subr.bf16.mxu0 0
        %2336 = vmatpush1.bf16.msra.mxu0 %v2319
        %2337 = vmatprep.subr.bf16.mxu0 0
        %2338 = vmatpush2.bf16.msra.mxu0 0
        %2339 = vmatprep.subr.bf16.mxu0 0
        %2340 = vmatpush2.bf16.msra.mxu0 0
        %2341 = vmatprep.subr.bf16.mxu0 0
        %2342 = vmatpush2.bf16.msra.mxu0 0
        %2343 = vmatprep.subr.bf16.mxu0 0
        %2344 = vmatpush2.bf16.msra.mxu0 0
        %2345 = vmatprep.subr.bf16.mxu0 0
        %2346 = vmatpush2.bf16.msra.mxu0 0
        %2347 = vmatprep.subr.bf16.mxu0 0
        %2348 = vmatpush2.bf16.msra.mxu0 0
        %2349 = vmatprep.subr.bf16.mxu0 0
        %2350 = vmatpush2.bf16.msra.mxu0 0
        %2351 = vmatprep.subr.bf16.mxu0 0
        %2352 = vmatpush2.bf16.msra.mxu0 0
        %2353 = vmatprep.mubr.bf16.mxu0 0
        %2354 = vmatmul.mubr.bf16.gmra.mxu0 %v2316
        %v2355 = vpop.f32.mrf.mxu0
        %v2356 = vadd.f32 0.0, %v2355
        %v2357 = vpop.f32.mrf.mxu0
        %v2358 = vpop.f32.mrf.mxu0
        %v2359 = vadd.f32 0.0, %v2358
        %v2360 = vpop.f32.mrf.mxu0
        %2361 = vdwg.mxu0
        %2362 = vrot.lane.b32.xlu0 %v2106, 96
        %v2363 = vpop.permute.xlu0 %2362
        %2364 = vrot.lane.b32.xlu0 %v2107, 96
        %v2365 = vpop.permute.xlu0 %2364
        %v2367 = vsel %vm1272, %v2363, 0
        %v2370 = vsel %vm1272, %v2365, 0
        %2372 = vmatprep.subr.bf16.mxu0 0
        %2373 = vmatpush1.bf16.xpose.msra.mxu0 0
        %2374 = vmatprep.subr.bf16.mxu0 0
        %2375 = vmatpush1.bf16.xpose.msra.mxu0 0
        %2376 = vmatprep.subr.bf16.mxu0 0
        %2377 = vmatpush1.bf16.xpose.msra.mxu0 0
        %2378 = vmatprep.subr.bf16.mxu0 0
        %2379 = vmatpush1.bf16.xpose.msra.mxu0 0
        %2380 = vmatprep.subr.bf16.mxu0 0
        %2381 = vmatpush1.bf16.xpose.msra.mxu0 0
        %2382 = vmatprep.subr.bf16.mxu0 0
        %2383 = vmatpush1.bf16.xpose.msra.mxu0 0
        %2384 = vmatprep.subr.bf16.mxu0 0
        %2385 = vmatpush1.bf16.xpose.msra.mxu0 0
        %2386 = vmatprep.subr.bf16.mxu0 0
        %2387 = vmatpush1.bf16.xpose.msra.mxu0 %v2370
        %2388 = vmatprep.subr.bf16.mxu0 0
        %2389 = vmatpush2.bf16.xpose.msra.mxu0 0
        %2390 = vmatprep.subr.bf16.mxu0 0
        %2391 = vmatpush2.bf16.xpose.msra.mxu0 0
        %2392 = vmatprep.subr.bf16.mxu0 0
        %2393 = vmatpush2.bf16.xpose.msra.mxu0 0
        %2394 = vmatprep.subr.bf16.mxu0 0
        %2395 = vmatpush2.bf16.xpose.msra.mxu0 0
        %2396 = vmatprep.subr.bf16.mxu0 0
        %2397 = vmatpush2.bf16.xpose.msra.mxu0 0
        %2398 = vmatprep.subr.bf16.mxu0 0
        %2399 = vmatpush2.bf16.xpose.msra.mxu0 0
        %2400 = vmatprep.subr.bf16.mxu0 0
        %2401 = vmatpush2.bf16.xpose.msra.mxu0 0
        %2402 = vmatprep.subr.bf16.mxu0 0
        %2403 = vmatpush2.bf16.xpose.msra.mxu0 0
        %2404 = vmatprep.mubr.bf16.mxu0 0
        %2405 = vmatmul.mubr.bf16.gmra.mxu0 %v2367
        %v2406 = vpop.f32.mrf.mxu0
        %v2407 = vadd.f32 0.0, %v2406
        %v2408 = vpop.f32.mrf.mxu0
        %v2409 = vpop.f32.mrf.mxu0
        %v2410 = vadd.f32 0.0, %v2409
        %v2411 = vpop.f32.mrf.mxu0
        %2412 = vdwg.mxu0
        %v2413 = vmul.f32 %v2407, 0.25
        %v2414 = vmul.f32 %v2410, 0.25
        %v2415 = vadd.f32 %v2413, %v2104
        %v2416 = vadd.f32 %v2414, %v2105
        %v2417 = vsel %vm2159, %v2415, -inf
        %2418 = vmax.xlane.f32.xlu0 %v2417
        %v2419 = vpop.xlane.xlu0 %2418
        %v2420 = vsel %vm2159, %v2416, -inf
        %2421 = vmax.xlane.f32.xlu0 %v2420
        %v2422 = vpop.xlane.xlu0 %2421
        %v2423 = vsub.f32 %v2415, %v2419
        %v2424 = vsub.f32 %v2416, %v2422
        %v2425 = vmul.f32 %v2423, 1.442695
        %v2426 = vpow.pop %v2425
        %v2427 = vmul.f32 %v2424, 1.442695
        %v2428 = vpow.pop %v2427
        %v2429 = vsel %vm2159, %v2426, 0.0
        %2430 = vadd.xlane.f32.xlu0 %v2429
        %v2431 = vpop.xlane.xlu0 %2430
        %v2432 = vsel %vm2159, %v2428, 0.0
        %2433 = vadd.xlane.f32.xlu0 %v2432
        %v2434 = vpop.xlane.xlu0 %2433
        %v2435 = vrcp.pop %v2431
        %v2436 = vrcp.pop %v2434
        %v2437 = vmul.f32 %v2426, %v2435
        %v2438 = vmul.f32 %v2428, %v2436
        %v2439 = vpack.c.bf16 %v2438, %v2437
        %2440 = vrot.lane.b32.xlu0 %v2107, 32
        %v2441 = vpop.permute.xlu0 %2440
        %v2443 = vsel %vm2159, %v2439, 0
        %v2446 = vsel %vm2189, %v2441, 0
        %2448 = vmatprep.subr.bf16.mxu0 0
        %2449 = vmatpush1.bf16.msra.mxu0 0
        %2450 = vmatprep.subr.bf16.mxu0 0
        %2451 = vmatpush1.bf16.msra.mxu0 0
        %2452 = vmatprep.subr.bf16.mxu0 0
        %2453 = vmatpush1.bf16.msra.mxu0 0
        %2454 = vmatprep.subr.bf16.mxu0 0
        %2455 = vmatpush1.bf16.msra.mxu0 0
        %2456 = vmatprep.subr.bf16.mxu0 0
        %2457 = vmatpush1.bf16.msra.mxu0 0
        %2458 = vmatprep.subr.bf16.mxu0 0
        %2459 = vmatpush1.bf16.msra.mxu0 0
        %2460 = vmatprep.subr.bf16.mxu0 0
        %2461 = vmatpush1.bf16.msra.mxu0 0
        %2462 = vmatprep.subr.bf16.mxu0 0
        %2463 = vmatpush1.bf16.msra.mxu0 %v2446
        %2464 = vmatprep.subr.bf16.mxu0 0
        %2465 = vmatpush2.bf16.msra.mxu0 0
        %2466 = vmatprep.subr.bf16.mxu0 0
        %2467 = vmatpush2.bf16.msra.mxu0 0
        %2468 = vmatprep.subr.bf16.mxu0 0
        %2469 = vmatpush2.bf16.msra.mxu0 0
        %2470 = vmatprep.subr.bf16.mxu0 0
        %2471 = vmatpush2.bf16.msra.mxu0 0
        %2472 = vmatprep.subr.bf16.mxu0 0
        %2473 = vmatpush2.bf16.msra.mxu0 0
        %2474 = vmatprep.subr.bf16.mxu0 0
        %2475 = vmatpush2.bf16.msra.mxu0 0
        %2476 = vmatprep.subr.bf16.mxu0 0
        %2477 = vmatpush2.bf16.msra.mxu0 0
        %2478 = vmatprep.subr.bf16.mxu0 0
        %2479 = vmatpush2.bf16.msra.mxu0 0
        %2480 = vmatprep.mubr.bf16.mxu0 0
        %2481 = vmatmul.mubr.bf16.gmra.mxu0 %v2443
        %v2482 = vpop.f32.mrf.mxu0
        %v2483 = vadd.f32 0.0, %v2482
        %v2484 = vpop.f32.mrf.mxu0
        %v2485 = vpop.f32.mrf.mxu0
        %v2486 = vadd.f32 0.0, %v2485
        %v2487 = vpop.f32.mrf.mxu0
        %2488 = vdwg.mxu0
        %2489 = vrot.lane.b32.xlu0 %v2106, 80
        %v2490 = vpop.permute.xlu0 %2489
        %2491 = vrot.lane.b32.xlu0 %v2107, 80
        %v2492 = vpop.permute.xlu0 %2491
        %v2494 = vsel %vm1272, %v2490, 0
        %v2497 = vsel %vm1272, %v2492, 0
        %2499 = vmatprep.subr.bf16.mxu0 0
        %2500 = vmatpush1.bf16.xpose.msra.mxu0 0
        %2501 = vmatprep.subr.bf16.mxu0 0
        %2502 = vmatpush1.bf16.xpose.msra.mxu0 0
        %2503 = vmatprep.subr.bf16.mxu0 0
        %2504 = vmatpush1.bf16.xpose.msra.mxu0 0
        %2505 = vmatprep.subr.bf16.mxu0 0
        %2506 = vmatpush1.bf16.xpose.msra.mxu0 0
        %2507 = vmatprep.subr.bf16.mxu0 0
        %2508 = vmatpush1.bf16.xpose.msra.mxu0 0
        %2509 = vmatprep.subr.bf16.mxu0 0
        %2510 = vmatpush1.bf16.xpose.msra.mxu0 0
        %2511 = vmatprep.subr.bf16.mxu0 0
        %2512 = vmatpush1.bf16.xpose.msra.mxu0 0
        %2513 = vmatprep.subr.bf16.mxu0 0
        %2514 = vmatpush1.bf16.xpose.msra.mxu0 %v2497
        %2515 = vmatprep.subr.bf16.mxu0 0
        %2516 = vmatpush2.bf16.xpose.msra.mxu0 0
        %2517 = vmatprep.subr.bf16.mxu0 0
        %2518 = vmatpush2.bf16.xpose.msra.mxu0 0
        %2519 = vmatprep.subr.bf16.mxu0 0
        %2520 = vmatpush2.bf16.xpose.msra.mxu0 0
        %2521 = vmatprep.subr.bf16.mxu0 0
        %2522 = vmatpush2.bf16.xpose.msra.mxu0 0
        %2523 = vmatprep.subr.bf16.mxu0 0
        %2524 = vmatpush2.bf16.xpose.msra.mxu0 0
        %2525 = vmatprep.subr.bf16.mxu0 0
        %2526 = vmatpush2.bf16.xpose.msra.mxu0 0
        %2527 = vmatprep.subr.bf16.mxu0 0
        %2528 = vmatpush2.bf16.xpose.msra.mxu0 0
        %2529 = vmatprep.subr.bf16.mxu0 0
        %2530 = vmatpush2.bf16.xpose.msra.mxu0 0
        %2531 = vmatprep.mubr.bf16.mxu0 0
        %2532 = vmatmul.mubr.bf16.gmra.mxu0 %v2494
        %v2533 = vpop.f32.mrf.mxu0
        %v2534 = vadd.f32 0.0, %v2533
        %v2535 = vpop.f32.mrf.mxu0
        %v2536 = vpop.f32.mrf.mxu0
        %v2537 = vadd.f32 0.0, %v2536
        %v2538 = vpop.f32.mrf.mxu0
        %2539 = vdwg.mxu0
        %v2540 = vmul.f32 %v2534, 0.25
        %v2541 = vmul.f32 %v2537, 0.25
        %v2542 = vadd.f32 %v2540, %v2104
        %v2543 = vadd.f32 %v2541, %v2105
        %v2544 = vsel %vm2159, %v2542, -inf
        %2545 = vmax.xlane.f32.xlu0 %v2544
        %v2546 = vpop.xlane.xlu0 %2545
        %v2547 = vsel %vm2159, %v2543, -inf
        %2548 = vmax.xlane.f32.xlu0 %v2547
        %v2549 = vpop.xlane.xlu0 %2548
        %v2550 = vsub.f32 %v2542, %v2546
        %v2551 = vsub.f32 %v2543, %v2549
        %v2552 = vmul.f32 %v2550, 1.442695
        %v2553 = vpow.pop %v2552
        %v2554 = vmul.f32 %v2551, 1.442695
        %v2555 = vpow.pop %v2554
        %v2556 = vsel %vm2159, %v2553, 0.0
        %2557 = vadd.xlane.f32.xlu0 %v2556
        %v2558 = vpop.xlane.xlu0 %2557
        %v2559 = vsel %vm2159, %v2555, 0.0
        %2560 = vadd.xlane.f32.xlu0 %v2559
        %v2561 = vpop.xlane.xlu0 %2560
        %v2562 = vrcp.pop %v2558
        %v2563 = vrcp.pop %v2561
        %v2564 = vmul.f32 %v2553, %v2562
        %v2565 = vmul.f32 %v2555, %v2563
        %v2566 = vpack.c.bf16 %v2565, %v2564
        %2567 = vrot.lane.b32.xlu0 %v2107, 16
        %v2568 = vpop.permute.xlu0 %2567
        %v2570 = vsel %vm2159, %v2566, 0
        %v2573 = vsel %vm2189, %v2568, 0
        %2575 = vmatprep.subr.bf16.mxu0 0
        %2576 = vmatpush1.bf16.msra.mxu0 0
        %2577 = vmatprep.subr.bf16.mxu0 0
        %2578 = vmatpush1.bf16.msra.mxu0 0
        %2579 = vmatprep.subr.bf16.mxu0 0
        %2580 = vmatpush1.bf16.msra.mxu0 0
        %2581 = vmatprep.subr.bf16.mxu0 0
        %2582 = vmatpush1.bf16.msra.mxu0 0
        %2583 = vmatprep.subr.bf16.mxu0 0
        %2584 = vmatpush1.bf16.msra.mxu0 0
        %2585 = vmatprep.subr.bf16.mxu0 0
        %2586 = vmatpush1.bf16.msra.mxu0 0
        %2587 = vmatprep.subr.bf16.mxu0 0
        %2588 = vmatpush1.bf16.msra.mxu0 0
        %2589 = vmatprep.subr.bf16.mxu0 0
        %2590 = vmatpush1.bf16.msra.mxu0 %v2573
        %2591 = vmatprep.subr.bf16.mxu0 0
        %2592 = vmatpush2.bf16.msra.mxu0 0
        %2593 = vmatprep.subr.bf16.mxu0 0
        %2594 = vmatpush2.bf16.msra.mxu0 0
        %2595 = vmatprep.subr.bf16.mxu0 0
        %2596 = vmatpush2.bf16.msra.mxu0 0
        %2597 = vmatprep.subr.bf16.mxu0 0
        %2598 = vmatpush2.bf16.msra.mxu0 0
        %2599 = vmatprep.subr.bf16.mxu0 0
        %2600 = vmatpush2.bf16.msra.mxu0 0
        %2601 = vmatprep.subr.bf16.mxu0 0
        %2602 = vmatpush2.bf16.msra.mxu0 0
        %2603 = vmatprep.subr.bf16.mxu0 0
        %2604 = vmatpush2.bf16.msra.mxu0 0
        %2605 = vmatprep.subr.bf16.mxu0 0
        %2606 = vmatpush2.bf16.msra.mxu0 0
        %2607 = vmatprep.mubr.bf16.mxu0 0
        %2608 = vmatmul.mubr.bf16.gmra.mxu0 %v2570
        %v2609 = vpop.f32.mrf.mxu0
        %v2610 = vadd.f32 0.0, %v2609
        %v2611 = vpop.f32.mrf.mxu0
        %v2612 = vpop.f32.mrf.mxu0
        %v2613 = vadd.f32 0.0, %v2612
        %v2614 = vpop.f32.mrf.mxu0
        %2615 = vdwg.mxu0
        %2618 = vrot.lane.b32.xlu0 %v2356, 16
        %v2619 = vpop.permute.xlu0 %2618
        %2620 = vrot.lane.b32.xlu0 %v2359, 16
        %v2621 = vpop.permute.xlu0 %2620
        %2626 = vrot.lane.b32.xlu0 %v2483, 32
        %v2627 = vpop.permute.xlu0 %2626
        %2628 = vrot.lane.b32.xlu0 %v2486, 32
        %v2629 = vpop.permute.xlu0 %2628
        %2634 = vrot.lane.b32.xlu0 %v2610, 48
        %v2635 = vpop.permute.xlu0 %2634
        %2636 = vrot.lane.b32.xlu0 %v2613, 48
        %v2637 = vpop.permute.xlu0 %2636
        %v2640 = vsel %vm1272, %v2228, %v2619
        %v2641 = vsel %vm1272, %v2231, %v2621
        %v2642 = vsel %vm1793, %v2640, %v2627
        %v2643 = vsel %vm1793, %v2641, %v2629
        %v2644 = vsel %vm1796, %v2642, %v2635
        %v2645 = vsel %vm1796, %v2643, %v2637
        %v2646 = vld [vmem:[%s1065] sm:$0xf]
        %v2647 = vld [vmem:[%s1065 + $0x4] sm:$0xf]
        %v2648 = vld [vmem:[%s1065 + $0x8] sm:$0xf]
        %v2649 = vld [vmem:[%s1065 + $0xc] sm:$0xf]
        %v2650 = vld [vmem:[%s1065 + $0x10] sm:$0xf]
        %v2651 = vld [vmem:[%s1065 + $0x14] sm:$0xf]
        %v2652 = vld [vmem:[%s1065 + $0x18] sm:$0xf]
        %v2653 = vld [vmem:[%s1065 + $0x1c] sm:$0xf]
        %v2654 = vpack.c.bf16 %v2645, %v2644
        %v2663 = vunpack.c.l.b16 %v2646
        %v2664 = vunpack.c.l.b16 %v2647
        %v2665 = vunpack.c.l.b16 %v2648
        %v2666 = vunpack.c.l.b16 %v2649
        %v2667 = vunpack.c.l.b16 %v2650
        %v2668 = vunpack.c.l.b16 %v2651
        %v2669 = vunpack.c.l.b16 %v2652
        %v2670 = vunpack.c.l.b16 %v2653
        %v2671 = vpack.c.b16 %v2664, %v2663
        %v2672 = vpack.c.b16 %v2666, %v2665
        %v2673 = vpack.c.b16 %v2668, %v2667
        %v2674 = vpack.c.b16 %v2670, %v2669
        %v2680 = vsel %vm1218, %v2654, 0
        %2682 = vmatprep.subr.bf16.mxu0 0
        %2683 = vmatpush1.bf16.msra.mxu0 0
        %2684 = vmatprep.subr.bf16.mxu0 0
        %2685 = vmatpush1.bf16.msra.mxu0 0
        %2686 = vmatprep.subr.bf16.mxu0 0
        %2687 = vmatpush1.bf16.msra.mxu0 0
        %2688 = vmatprep.subr.bf16.mxu0 0
        %2689 = vmatpush1.bf16.msra.mxu0 0
        %2690 = vmatprep.subr.bf16.mxu0 0
        %2691 = vmatpush1.bf16.msra.mxu0 %v2674
        %2692 = vmatprep.subr.bf16.mxu0 0
        %2693 = vmatpush1.bf16.msra.mxu0 %v2673
        %2694 = vmatprep.subr.bf16.mxu0 0
        %2695 = vmatpush1.bf16.msra.mxu0 %v2672
        %2696 = vmatprep.subr.bf16.mxu0 0
        %2697 = vmatpush1.bf16.msra.mxu0 %v2671
        %2698 = vmatprep.subr.bf16.mxu0 0
        %2699 = vmatpush2.bf16.msra.mxu0 0
        %2700 = vmatprep.subr.bf16.mxu0 0
        %2701 = vmatpush2.bf16.msra.mxu0 0
        %2702 = vmatprep.subr.bf16.mxu0 0
        %2703 = vmatpush2.bf16.msra.mxu0 0
        %2704 = vmatprep.subr.bf16.mxu0 0
        %2705 = vmatpush2.bf16.msra.mxu0 0
        %2706 = vmatprep.subr.bf16.mxu0 0
        %2707 = vmatpush2.bf16.msra.mxu0 0
        %2708 = vmatprep.subr.bf16.mxu0 0
        %2709 = vmatpush2.bf16.msra.mxu0 0
        %2710 = vmatprep.subr.bf16.mxu0 0
        %2711 = vmatpush2.bf16.msra.mxu0 0
        %2712 = vmatprep.subr.bf16.mxu0 0
        %2713 = vmatpush2.bf16.msra.mxu0 0
        %2714 = vmatprep.mubr.bf16.mxu0 0
        %2715 = vmatmul.mubr.bf16.gmra.mxu0 %v2680
        %v2716 = vpop.f32.mrf.mxu0
        %v2717 = vadd.f32 0.0, %v2716
        %v2718 = vpop.f32.mrf.mxu0
        %v2719 = vpop.f32.mrf.mxu0
        %v2720 = vadd.f32 0.0, %v2719
        %v2721 = vpop.f32.mrf.mxu0
        %2722 = vdwg.mxu0
        %v2723 = vadd.f32 %v1930, %v2717
        %v2724 = vadd.f32 %v1931, %v2720
        %v2725 = vld [vmem:[%s1068] sm:$0x1]
        %v2727 = vlaneseq
        %v2728 = vshrl.u32 %v2727, 7
        %v2729 = vsub.s32 0, %v2728
        %v2730 = vrot.slane %v2725, %v2729
        %v2732 = vadd.f32 %v2723, %v2730
        %v2733 = vadd.f32 %v2724, %v2730
        %v2734 = vld [vmem:[%s1071] sm:$0x1]
        %v2735 = vld [vmem:[%s1074] sm:$0x1]
        %v2736 = vsel %vm1218, %v2732, 0.0
        %2737 = vadd.xlane.f32.xlu0 %v2736
        %v2738 = vpop.xlane.xlu0 %2737
        %v2739 = vsel %vm1218, %v2733, 0.0
        %2740 = vadd.xlane.f32.xlu0 %v2739
        %v2741 = vpop.xlane.xlu0 %2740
        %v2742 = vmul.f32 %v2738, %v1895
        %v2743 = vmul.f32 %v2741, %v1895
        %v2744 = vsub.f32 %v2732, %v2742
        %v2745 = vsub.f32 %v2733, %v2743
        %v2746 = vmul.f32 %v2744, %v2744
        %v2747 = vmul.f32 %v2745, %v2745
        %v2748 = vsel %vm1218, %v2746, 0.0
        %2749 = vadd.xlane.f32.xlu0 %v2748
        %v2750 = vpop.xlane.xlu0 %2749
        %v2751 = vsel %vm1218, %v2747, 0.0
        %2752 = vadd.xlane.f32.xlu0 %v2751
        %v2753 = vpop.xlane.xlu0 %2752
        %v2754 = vmul.f32 %v2750, %v1895
        %v2755 = vmul.f32 %v2753, %v1895
        %v2756 = vadd.f32 %v2754, 1e-12
        %v2757 = vadd.f32 %v2755, 1e-12
        %v2758 = vrsqrt.pop %v2756
        %v2759 = vrsqrt.pop %v2757
        %v2760 = vmul.f32 %v2744, %v2758
        %v2761 = vmul.f32 %v2745, %v2759
        %v2763 = vlaneseq
        %v2764 = vshrl.u32 %v2763, 7
        %v2765 = vsub.s32 0, %v2764
        %v2766 = vrot.slane %v2734, %v2765
        %v2768 = vmul.f32 %v2760, %v2766
        %v2769 = vmul.f32 %v2761, %v2766
        %v2771 = vlaneseq
        %v2772 = vshrl.u32 %v2771, 7
        %v2773 = vsub.s32 0, %v2772
        %v2774 = vrot.slane %v2735, %v2773
        %v2776 = vadd.f32 %v2768, %v2774
        %v2777 = vadd.f32 %v2769, %v2774
        %v2778 = vld [vmem:[%s1079] sm:$0xff]
        %v2779 = vld [vmem:[%s1079 + $0x8] sm:$0xff]
        %v2780 = vld [vmem:[%s1079 + $0x10] sm:$0xff]
        %v2781 = vld [vmem:[%s1079 + $0x18] sm:$0xff]
        %v2782 = vld [vmem:[%s1079 + $0x20] sm:$0xff]
        %v2783 = vld [vmem:[%s1079 + $0x28] sm:$0xff]
        %v2784 = vld [vmem:[%s1079 + $0x30] sm:$0xff]
        %v2785 = vld [vmem:[%s1079 + $0x38] sm:$0xff]
        %v2786 = vpack.c.bf16 %v2777, %v2776
        %v2787 = vld [vmem:[%s1083] sm:$0x3]
        %v2789 = vlaneseq
        %v2790 = vshrl.u32 %v2789, 7
        %v2791 = vsub.s32 0, %v2790
        %v2792 = vrot.slane %v2787, %v2791
        %v2793 = vlaneseq
        %v2794 = vshrl.u32 %v2793, 7
        %v2795 = vsub.s32 1, %v2794
        %v2796 = vrot.slane %v2787, %v2795
        %v2807 = vunpack.c.l.b16 %v2778
        %v2808 = vunpack.c.h.b16 %v2778
        %v2809 = vunpack.c.l.b16 %v2779
        %v2810 = vunpack.c.h.b16 %v2779
        %v2811 = vunpack.c.l.b16 %v2780
        %v2812 = vunpack.c.h.b16 %v2780
        %v2813 = vunpack.c.l.b16 %v2781
        %v2814 = vunpack.c.h.b16 %v2781
        %v2815 = vunpack.c.l.b16 %v2782
        %v2816 = vunpack.c.h.b16 %v2782
        %v2817 = vunpack.c.l.b16 %v2783
        %v2818 = vunpack.c.h.b16 %v2783
        %v2819 = vunpack.c.l.b16 %v2784
        %v2820 = vunpack.c.h.b16 %v2784
        %v2821 = vunpack.c.l.b16 %v2785
        %v2822 = vunpack.c.h.b16 %v2785
        %v2823 = vpack.c.b16 %v2809, %v2807
        %v2824 = vpack.c.b16 %v2810, %v2808
        %v2825 = vpack.c.b16 %v2813, %v2811
        %v2826 = vpack.c.b16 %v2814, %v2812
        %v2827 = vpack.c.b16 %v2817, %v2815
        %v2828 = vpack.c.b16 %v2818, %v2816
        %v2829 = vpack.c.b16 %v2821, %v2819
        %v2830 = vpack.c.b16 %v2822, %v2820
        %v2840 = vsel %vm1218, %v2786, 0
        %2842 = vmatprep.subr.bf16.mxu0 0
        %2843 = vmatpush1.bf16.msra.mxu0 0
        %2844 = vmatprep.subr.bf16.mxu0 0
        %2845 = vmatpush1.bf16.msra.mxu0 0
        %2846 = vmatprep.subr.bf16.mxu0 0
        %2847 = vmatpush1.bf16.msra.mxu0 0
        %2848 = vmatprep.subr.bf16.mxu0 0
        %2849 = vmatpush1.bf16.msra.mxu0 0
        %2850 = vmatprep.subr.bf16.mxu0 %v2830
        %2851 = vmatpush1.bf16.msra.mxu0 %v2829
        %2852 = vmatprep.subr.bf16.mxu0 %v2828
        %2853 = vmatpush1.bf16.msra.mxu0 %v2827
        %2854 = vmatprep.subr.bf16.mxu0 %v2826
        %2855 = vmatpush1.bf16.msra.mxu0 %v2825
        %2856 = vmatprep.subr.bf16.mxu0 %v2824
        %2857 = vmatpush1.bf16.msra.mxu0 %v2823
        %2858 = vmatprep.subr.bf16.mxu0 0
        %2859 = vmatpush2.bf16.msra.mxu0 0
        %2860 = vmatprep.subr.bf16.mxu0 0
        %2861 = vmatpush2.bf16.msra.mxu0 0
        %2862 = vmatprep.subr.bf16.mxu0 0
        %2863 = vmatpush2.bf16.msra.mxu0 0
        %2864 = vmatprep.subr.bf16.mxu0 0
        %2865 = vmatpush2.bf16.msra.mxu0 0
        %2866 = vmatprep.subr.bf16.mxu0 0
        %2867 = vmatpush2.bf16.msra.mxu0 0
        %2868 = vmatprep.subr.bf16.mxu0 0
        %2869 = vmatpush2.bf16.msra.mxu0 0
        %2870 = vmatprep.subr.bf16.mxu0 0
        %2871 = vmatpush2.bf16.msra.mxu0 0
        %2872 = vmatprep.subr.bf16.mxu0 0
        %2873 = vmatpush2.bf16.msra.mxu0 0
        %2874 = vmatprep.mubr.bf16.mxu0 0
        %2875 = vmatmul.mubr.bf16.gmra.mxu0 %v2840
        %v2876 = vpop.f32.mrf.mxu0
        %v2877 = vadd.f32 %v2792, %v2876
        %v2878 = vpop.f32.mrf.mxu0
        %v2879 = vadd.f32 %v2796, %v2878
        %v2880 = vpop.f32.mrf.mxu0
        %v2881 = vadd.f32 %v2792, %v2880
        %v2882 = vpop.f32.mrf.mxu0
        %v2883 = vadd.f32 %v2796, %v2882
        %2884 = vdwg.mxu0
        %v2885 = vmul.f32 %v2877, 0.5
        %v2886 = vmul.f32 %v2879, 0.5
        %v2887 = vmul.f32 %v2881, 0.5
        %v2888 = vmul.f32 %v2883, 0.5
        %v2889 = vmul.f32 %v2877, 0.044715
        %v2890 = vmul.f32 %v2879, 0.044715
        %v2891 = vmul.f32 %v2881, 0.044715
        %v2892 = vmul.f32 %v2883, 0.044715
        %v2893 = vmul.f32 %v2889, %v2877
        %v2894 = vmul.f32 %v2890, %v2879
        %v2895 = vmul.f32 %v2891, %v2881
        %v2896 = vmul.f32 %v2892, %v2883
        %v2897 = vmul.f32 %v2893, %v2877
        %v2898 = vmul.f32 %v2894, %v2879
        %v2899 = vmul.f32 %v2895, %v2881
        %v2900 = vmul.f32 %v2896, %v2883
        %v2901 = vadd.f32 %v2877, %v2897
        %v2902 = vadd.f32 %v2879, %v2898
        %v2903 = vadd.f32 %v2881, %v2899
        %v2904 = vadd.f32 %v2883, %v2900
        %v2905 = vmul.f32 %v2901, 0.7978846
        %v2906 = vmul.f32 %v2902, 0.7978846
        %v2907 = vmul.f32 %v2903, 0.7978846
        %v2908 = vmul.f32 %v2904, 0.7978846
        %v2909 = vtanh.pop %v2905
        %v2910 = vtanh.pop %v2906
        %v2911 = vtanh.pop %v2907
        %v2912 = vtanh.pop %v2908
        %v2913 = vadd.f32 %v2909, 1.0
        %v2914 = vadd.f32 %v2910, 1.0
        %v2915 = vadd.f32 %v2911, 1.0
        %v2916 = vadd.f32 %v2912, 1.0
        %v2917 = vmul.f32 %v2885, %v2913
        %v2918 = vmul.f32 %v2886, %v2914
        %v2919 = vmul.f32 %v2887, %v2915
        %v2920 = vmul.f32 %v2888, %v2916
        %v2921 = vld [vmem:[%s1088] sm:$0xf]
        %v2922 = vld [vmem:[%s1088 + $0x4] sm:$0xf]
        %v2923 = vld [vmem:[%s1088 + $0x8] sm:$0xf]
        %v2924 = vld [vmem:[%s1088 + $0xc] sm:$0xf]
        %v2925 = vld [vmem:[%s1088 + $0x10] sm:$0xf]
        %v2926 = vld [vmem:[%s1088 + $0x14] sm:$0xf]
        %v2927 = vld [vmem:[%s1088 + $0x18] sm:$0xf]
        %v2928 = vld [vmem:[%s1088 + $0x1c] sm:$0xf]
        %v2929 = vld [vmem:[%s1088 + $0x20] sm:$0xf]
        %v2930 = vld [vmem:[%s1088 + $0x24] sm:$0xf]
        %v2931 = vld [vmem:[%s1088 + $0x28] sm:$0xf]
        %v2932 = vld [vmem:[%s1088 + $0x2c] sm:$0xf]
        %v2933 = vld [vmem:[%s1088 + $0x30] sm:$0xf]
        %v2934 = vld [vmem:[%s1088 + $0x34] sm:$0xf]
        %v2935 = vld [vmem:[%s1088 + $0x38] sm:$0xf]
        %v2936 = vld [vmem:[%s1088 + $0x3c] sm:$0xf]
        %v2937 = vld [vmem:[%s1088 + $0x40] sm:$0xf]
        %v2938 = vld [vmem:[%s1088 + $0x44] sm:$0xf]
        %v2939 = vld [vmem:[%s1088 + $0x48] sm:$0xf]
        %v2940 = vld [vmem:[%s1088 + $0x4c] sm:$0xf]
        %v2941 = vld [vmem:[%s1088 + $0x50] sm:$0xf]
        %v2942 = vld [vmem:[%s1088 + $0x54] sm:$0xf]
        %v2943 = vld [vmem:[%s1088 + $0x58] sm:$0xf]
        %v2944 = vld [vmem:[%s1088 + $0x5c] sm:$0xf]
        %v2945 = vld [vmem:[%s1088 + $0x60] sm:$0xf]
        %v2946 = vld [vmem:[%s1088 + $0x64] sm:$0xf]
        %v2947 = vld [vmem:[%s1088 + $0x68] sm:$0xf]
        %v2948 = vld [vmem:[%s1088 + $0x6c] sm:$0xf]
        %v2949 = vld [vmem:[%s1088 + $0x70] sm:$0xf]
        %v2950 = vld [vmem:[%s1088 + $0x74] sm:$0xf]
        %v2951 = vld [vmem:[%s1088 + $0x78] sm:$0xf]
        %v2952 = vld [vmem:[%s1088 + $0x7c] sm:$0xf]
        %v2953 = vpack.c.bf16 %v2919, %v2917
        %v2954 = vpack.c.bf16 %v2920, %v2918
        %v2987 = vunpack.c.l.b16 %v2921
        %v2988 = vunpack.c.l.b16 %v2922
        %v2989 = vunpack.c.l.b16 %v2923
        %v2990 = vunpack.c.l.b16 %v2924
        %v2991 = vunpack.c.l.b16 %v2925
        %v2992 = vunpack.c.l.b16 %v2926
        %v2993 = vunpack.c.l.b16 %v2927
        %v2994 = vunpack.c.l.b16 %v2928
        %v2995 = vunpack.c.l.b16 %v2929
        %v2996 = vunpack.c.l.b16 %v2930
        %v2997 = vunpack.c.l.b16 %v2931
        %v2998 = vunpack.c.l.b16 %v2932
        %v2999 = vunpack.c.l.b16 %v2933
        %v3000 = vunpack.c.l.b16 %v2934
        %v3001 = vunpack.c.l.b16 %v2935
        %v3002 = vunpack.c.l.b16 %v2936
        %v3003 = vunpack.c.l.b16 %v2937
        %v3004 = vunpack.c.l.b16 %v2938
        %v3005 = vunpack.c.l.b16 %v2939
        %v3006 = vunpack.c.l.b16 %v2940
        %v3007 = vunpack.c.l.b16 %v2941
        %v3008 = vunpack.c.l.b16 %v2942
        %v3009 = vunpack.c.l.b16 %v2943
        %v3010 = vunpack.c.l.b16 %v2944
        %v3011 = vunpack.c.l.b16 %v2945
        %v3012 = vunpack.c.l.b16 %v2946
        %v3013 = vunpack.c.l.b16 %v2947
        %v3014 = vunpack.c.l.b16 %v2948
        %v3015 = vunpack.c.l.b16 %v2949
        %v3016 = vunpack.c.l.b16 %v2950
        %v3017 = vunpack.c.l.b16 %v2951
        %v3018 = vunpack.c.l.b16 %v2952
        %v3019 = vpack.c.b16 %v2988, %v2987
        %v3020 = vpack.c.b16 %v2990, %v2989
        %v3021 = vpack.c.b16 %v2992, %v2991
        %v3022 = vpack.c.b16 %v2994, %v2993
        %v3023 = vpack.c.b16 %v2996, %v2995
        %v3024 = vpack.c.b16 %v2998, %v2997
        %v3025 = vpack.c.b16 %v3000, %v2999
        %v3026 = vpack.c.b16 %v3002, %v3001
        %v3027 = vpack.c.b16 %v3004, %v3003
        %v3028 = vpack.c.b16 %v3006, %v3005
        %v3029 = vpack.c.b16 %v3008, %v3007
        %v3030 = vpack.c.b16 %v3010, %v3009
        %v3031 = vpack.c.b16 %v3012, %v3011
        %v3032 = vpack.c.b16 %v3014, %v3013
        %v3033 = vpack.c.b16 %v3016, %v3015
        %v3034 = vpack.c.b16 %v3018, %v3017
        %3051 = vmatprep.subr.bf16.mxu0 0
        %3052 = vmatpush1.bf16.msra.mxu0 %v3026
        %3053 = vmatprep.subr.bf16.mxu0 0
        %3054 = vmatpush1.bf16.msra.mxu0 %v3025
        %3055 = vmatprep.subr.bf16.mxu0 0
        %3056 = vmatpush1.bf16.msra.mxu0 %v3024
        %3057 = vmatprep.subr.bf16.mxu0 0
        %3058 = vmatpush1.bf16.msra.mxu0 %v3023
        %3059 = vmatprep.subr.bf16.mxu0 0
        %3060 = vmatpush1.bf16.msra.mxu0 %v3022
        %3061 = vmatprep.subr.bf16.mxu0 0
        %3062 = vmatpush1.bf16.msra.mxu0 %v3021
        %3063 = vmatprep.subr.bf16.mxu0 0
        %3064 = vmatpush1.bf16.msra.mxu0 %v3020
        %3065 = vmatprep.subr.bf16.mxu0 0
        %3066 = vmatpush1.bf16.msra.mxu0 %v3019
        %3067 = vmatprep.subr.bf16.mxu0 0
        %3068 = vmatpush2.bf16.msra.mxu0 %v3034
        %3069 = vmatprep.subr.bf16.mxu0 0
        %3070 = vmatpush2.bf16.msra.mxu0 %v3033
        %3071 = vmatprep.subr.bf16.mxu0 0
        %3072 = vmatpush2.bf16.msra.mxu0 %v3032
        %3073 = vmatprep.subr.bf16.mxu0 0
        %3074 = vmatpush2.bf16.msra.mxu0 %v3031
        %3075 = vmatprep.subr.bf16.mxu0 0
        %3076 = vmatpush2.bf16.msra.mxu0 %v3030
        %3077 = vmatprep.subr.bf16.mxu0 0
        %3078 = vmatpush2.bf16.msra.mxu0 %v3029
        %3079 = vmatprep.subr.bf16.mxu0 0
        %3080 = vmatpush2.bf16.msra.mxu0 %v3028
        %3081 = vmatprep.subr.bf16.mxu0 0
        %3082 = vmatpush2.bf16.msra.mxu0 %v3027
        %3083 = vmatprep.mubr.bf16.mxu0 %v2954
        %3084 = vmatmul.mubr.bf16.gmra.mxu0 %v2953
        %v3085 = vpop.f32.mrf.mxu0
        %v3086 = vadd.f32 0.0, %v3085
        %v3087 = vpop.f32.mrf.mxu0
        %v3088 = vpop.f32.mrf.mxu0
        %v3089 = vadd.f32 0.0, %v3088
        %v3090 = vpop.f32.mrf.mxu0
        %3091 = vdwg.mxu0
        %v3092 = vadd.f32 %v2776, %v3086
        %v3093 = vadd.f32 %v2777, %v3089
        %v3094 = vld [vmem:[%s1091] sm:$0x1]
        %v3096 = vlaneseq
        %v3097 = vshrl.u32 %v3096, 7
        %v3098 = vsub.s32 0, %v3097
        %v3099 = vrot.slane %v3094, %v3098
        %v3101 = vadd.f32 %v3092, %v3099
        %v3102 = vadd.f32 %v3093, %v3099
        %v3103 = vld [vmem:[%s1094] sm:$0x1]
        %v3104 = vld [vmem:[%s1097] sm:$0x1]
        %v3105 = vsel %vm1218, %v3101, 0.0
        %3106 = vadd.xlane.f32.xlu0 %v3105
        %v3107 = vpop.xlane.xlu0 %3106
        %v3108 = vsel %vm1218, %v3102, 0.0
        %3109 = vadd.xlane.f32.xlu0 %v3108
        %v3110 = vpop.xlane.xlu0 %3109
        %v3111 = vmul.f32 %v3107, %v1895
        %v3112 = vmul.f32 %v3110, %v1895
        %v3113 = vsub.f32 %v3101, %v3111
        %v3114 = vsub.f32 %v3102, %v3112
        %v3115 = vmul.f32 %v3113, %v3113
        %v3116 = vmul.f32 %v3114, %v3114
        %v3117 = vsel %vm1218, %v3115, 0.0
        %3118 = vadd.xlane.f32.xlu0 %v3117
        %v3119 = vpop.xlane.xlu0 %3118
        %v3120 = vsel %vm1218, %v3116, 0.0
        %3121 = vadd.xlane.f32.xlu0 %v3120
        %v3122 = vpop.xlane.xlu0 %3121
        %v3123 = vmul.f32 %v3119, %v1895
        %v3124 = vmul.f32 %v3122, %v1895
        %v3125 = vadd.f32 %v3123, 1e-12
        %v3126 = vadd.f32 %v3124, 1e-12
        %v3127 = vrsqrt.pop %v3125
        %v3128 = vrsqrt.pop %v3126
        %v3129 = vmul.f32 %v3113, %v3127
        %v3130 = vmul.f32 %v3114, %v3128
        %v3132 = vlaneseq
        %v3133 = vshrl.u32 %v3132, 7
        %v3134 = vsub.s32 0, %v3133
        %v3135 = vrot.slane %v3103, %v3134
        %v3137 = vmul.f32 %v3129, %v3135
        %v3138 = vmul.f32 %v3130, %v3135
        %v3140 = vlaneseq
        %v3141 = vshrl.u32 %v3140, 7
        %v3142 = vsub.s32 0, %v3141
        %v3143 = vrot.slane %v3104, %v3142
        %v3145 = vadd.f32 %v3137, %v3143
        %v3146 = vadd.f32 %v3138, %v3143
        %3147 = vst.msk [vmem:[#allocation2] sm:$0xff] %vm1218, %v3145
        %3148 = vst.msk [vmem:[#allocation2 + $0x8] sm:$0xff] %vm1218, %v3146
        %p3149 = scmp.eq.s32.totalorder %s38, 1
        // Predicated region
        $region133: #{albef_forward_train.6} parent=123 // pred_check
          %p3150 = pneg %p3149
        $region134: #{albef_forward_train.6} parent=123 // pred_check_branch
          %3152 = sbr.rel (%p3150) target = $region136
        $region135: #{albef_forward_train.6} parent=123 // pred_region
          %v3153 = vpack.c.bf16 %v3146, %v3145
          %v3155 = vunpack.c.l.b16 %v3153
          %v3156 = vunpack.c.h.b16 %v3153
          %v3157 = vpack.c.b16 %v3155, %v3155
          %v3158 = vpack.c.b16 %v3156, %v3156
          %vm3161 = vcmask 519168
          %3162 = vst.msk [vmem:[%s26] sm:$0xf] %vm3161, %v3157
          %3163 = vst.msk [vmem:[%s26 + $0x4] sm:$0xf] %vm3161, %v3158
        $region136: #{albef_forward_train.6} parent=123 // pred_fallthru
          _
        // Predicated region
        $region137: #{albef_forward_train.6} parent=123 // pred_check
          %p3164 = pneg %p697
        $region138: #{albef_forward_train.6} parent=123 // pred_check_branch
          %3166 = sbr.rel (%p3164) target = $region140
        $region139: #{albef_forward_train.6} parent=123 // pred_region
          _
        $region140: #{albef_forward_train.6} parent=123 // pred_fallthru
          _
        // Predicated region
        $region141: #{albef_forward_train.6} parent=123 // pred_check
          %p3167 = pneg %p697
        $region142: #{albef_forward_train.6} parent=123 // pred_check_branch
          %3169 = sbr.rel (%p3167) target = $region144
        $region143: #{albef_forward_train.6} parent=123 // pred_region
          _
        $region144: #{albef_forward_train.6} parent=123 // pred_fallthru
          _
      $region124: #{albef_forward_train.6} parent=5 // pred_fallthru
        _
      %p3170 = scmp.le.s32.totalorder 2, %s33
      // Predicated region
      $region145: #{albef_forward_train.6} parent=5 // pred_check
        %p3171 = pneg %p3170
      $region146: #{albef_forward_train.6} parent=5 // pred_check_branch
        %3173 = sbr.rel (%p3171) target = $region148
      $region147: #{albef_forward_train.6} parent=5 // pred_region
        %s3174 = ssub.s32 %s33, 2
      $region148: #{albef_forward_train.6} parent=5 // pred_fallthru
        _
    $region6: #{albef_forward_train.6} parent=1 // loop_footer
      %s37 = sadd.s32 1, %s33
    $region7: #{albef_forward_train.6} parent=1 // loop_footer_branch
      %32 = sbr.rel target = $region3
    $region8: #{albef_forward_train.6} parent=1 // loop_exit
      _
    %3175 = vsyncpa [#allocation4], 1
    %s3176 = scalar_lea.sflag [#allocation4], 1
    %3177 = vsyncpa %s3176, 1

</llo_original>
